<compile_context>
chip_gen: v6e
topology: v6e:2x2x1
jax: 0.10.0
libtpu: 0.0.40
codegen_flags: <defaults>
</compile_context>

<pallas_src>
import math
import numpy as np
import jax
import jax.numpy as jnp
from jax import lax
from jax.experimental import pallas as pl
from jax.experimental.pallas import tpu as pltpu


# ----------------------------------------------------------------------------
# Fused kernel: DWT -> wavelet depthwise conv -> _ScaleModule -> IWT, base
# depthwise conv (+bias, *_ScaleModule), residual add, 1x1 pointwise — all in
# the polyphase domain, one pallas_call, no HBM round-trips.
# ----------------------------------------------------------------------------
def _fused_wtconv_kernel(xp_ref, fd_ref, fr_ref, ww_ref, ws_ref,
                         bw_ref, bb_ref, bs_ref, pw_ref,
                         out_ref, pad_ref, y_ref):
    # xp_ref : (4, Hh, Wh, C)   polyphase of x (p = 2*i + j), channel-last
    # fd_ref : SMEM (16,)       analysis Haar filters, flat index k*4 + p
    # fr_ref : SMEM (16,)       synthesis Haar filters, flat index k*4 + p
    # ww_ref : (4, 9, C)        wavelet depthwise conv weights (subband, tap, C)
    # ws_ref : (4, C)           wavelet scale (_ScaleModule, init 0.1)
    # bw_ref : (9, C)           base depthwise conv weights (tap, C)
    # bb_ref : (1, C)           base conv bias
    # bs_ref : (1, C)           base scale (_ScaleModule, init 1.0)
    # pw_ref : (C, Cout)        pointwise 1x1 weight (transposed)
    # out_ref: (4, Hh, Wh, Cout) polyphase of the output
    # pad_ref: VMEM (8, Hh+2, Wh+2, C): slots 0..3 padded x phases,
    #                                   slots 4..7 padded DWT sub-bands
    # y_ref  : VMEM (4, Hh, Wh, C)  base+residual staging before the pointwise
    _, hh, wh, c = xp_ref.shape
    cout = out_ref.shape[3]
    nslots = pad_ref.shape[0]

    # Zero only the 1-pixel border of the pad scratch; interiors are fully
    # overwritten below every grid step.  Borders are re-zeroed every step (not
    # only at program_id==0) so the kernel stays correct when the batch axis is
    # sharded across TensorCores ("parallel" semantics on v7x).
    pad_ref[:, 0:1, :, :] = jnp.zeros((nslots, 1, wh + 2, c), jnp.float32)
    pad_ref[:, hh + 1:hh + 2, :, :] = jnp.zeros((nslots, 1, wh + 2, c), jnp.float32)
    pad_ref[:, :, 0:1, :] = jnp.zeros((nslots, hh + 2, 1, c), jnp.float32)
    pad_ref[:, :, wh + 1:wh + 2, :] = jnp.zeros((nslots, hh + 2, 1, c), jnp.float32)

    # Stage padded x polyphase (slots 0..3).
    x_all = xp_ref[...]                                    # (4, hh, wh, c)
    for p in range(4):
        pad_ref[p, 1:hh + 1, 1:wh + 1, :] = x_all[p]

    # Haar DWT (stride-2 grouped conv == per-subband polyphase combination),
    # staged padded into slots 4..7 for the 'same' 3x3 conv.
    for k in range(4):
        sub = (fd_ref[4 * k + 0] * x_all[0] + fd_ref[4 * k + 1] * x_all[1]
               + fd_ref[4 * k + 2] * x_all[2] + fd_ref[4 * k + 3] * x_all[3])
        pad_ref[4 + k, 1:hh + 1, 1:wh + 1, :] = sub

    # Depthwise 3x3 'same' conv on each sub-band, then the _ScaleModule
    # multiply (wavelet_scale, broadcast over the channel/lane dim).
    conv_sub = []
    for k in range(4):
        acc = jnp.zeros((hh, wh, c), jnp.float32)
        for a in range(3):
            for b in range(3):
                wv = ww_ref[k, 3 * a + b, :]                     # (c,)
                acc = acc + wv * pad_ref[4 + k, a:a + hh, b:b + wh, :]
        conv_sub.append(acc * ws_ref[k, :])                      # _ScaleModule

    # Haar inverse DWT -> x_tag polyphase, kept in registers/VMEM (no HBM trip).
    tag = []
    for p in range(4):
        tag.append(fr_ref[0 + p] * conv_sub[0] + fr_ref[4 + p] * conv_sub[1]
                   + fr_ref[8 + p] * conv_sub[2] + fr_ref[12 + p] * conv_sub[3])

    # Base depthwise 3x3 'same' conv evaluated directly in the polyphase
    # domain:  base_poly[2i+j][y,x] = sum_{a,b} bw[a,b] *
    #          x_poly[((i+a-1)%2)*2 + (j+b-1)%2][y + (i+a-1)//2, x + (j+b-1)//2]
    # followed by +bias, *scale (_ScaleModule) and residual add; all four
    # phases staged into y_ref so the pointwise conv + store run once.
    bb = bb_ref[...]                                       # (1, c)
    bs = bs_ref[...]                                       # (1, c)
    for i in range(2):
        for j in range(2):
            p_out = 2 * i + j
            acc = jnp.zeros((hh, wh, c), jnp.float32)
            for a in range(3):
                u = i + a - 1
                iy, qy = u % 2, u // 2
                for b in range(3):
                    v = j + b - 1
                    jx, qx = v % 2, v // 2
                    p_in = 2 * iy + jx
                    wv = bw_ref[3 * a + b, :]                    # (c,)
                    acc = acc + wv * pad_ref[p_in,
                                             1 + qy:1 + qy + hh,
                                             1 + qx:1 + qx + wh, :]
            y_ref[p_out] = (acc + bb) * bs + tag[p_out]          # _ScaleModule

    # 1x1 pointwise conv over all 4 phases at once + single full-block store.
    y_all = y_ref[...]                                     # (4, hh, wh, c)
    if c >= 128:
        # Wide-channel path: one MXU matmul, bf16 inputs, f32 accumulation.
        y2 = jnp.dot(y_all.reshape(4 * hh * wh, c).astype(jnp.bfloat16),
                     pw_ref[...].astype(jnp.bfloat16),
                     preferred_element_type=jnp.float32)
        out_ref[...] = y2.reshape(4, hh, wh, cout)
    else:
        # Tiny-C path (test C=4): K=C reduction would use <4% of the MXU, so
        # do Cout-wide broadcast MACs on the VPU over the stacked block.
        o = jnp.zeros((4, hh, wh, cout), jnp.float32)
        for cc in range(c):
            o = o + y_all[:, :, :, cc:cc + 1] * pw_ref[cc, :]
        out_ref[...] = o


# ----------------------------------------------------------------------------
# Parameters (deterministic, synthetic — shapes follow the module __init__)
# ----------------------------------------------------------------------------
def make_params(C, Cout, key):
    k1, k2, k3, k4 = jax.random.split(key, 4)
    sq = 1.0 / math.sqrt(2.0)
    # db1 (Haar), following create_wavelet_filter (pywt coeffs, reversed)
    d_lo = jnp.array([sq, sq], jnp.float32)
    d_hi = jnp.array([sq, -sq], jnp.float32)
    r_lo = jnp.array([sq, sq], jnp.float32)
    r_hi = jnp.array([sq, -sq], jnp.float32)
    fd = jnp.stack([d_lo[None, :] * d_lo[:, None],
                    d_lo[None, :] * d_hi[:, None],
                    d_hi[None, :] * d_lo[:, None],
                    d_hi[None, :] * d_hi[:, None]])          # (4, 2, 2)
    fr = jnp.stack([r_lo[None, :] * r_lo[:, None],
                    r_lo[None, :] * r_hi[:, None],
                    r_hi[None, :] * r_lo[:, None],
                    r_hi[None, :] * r_hi[:, None]])          # (4, 2, 2)
    return dict(
        fd=fd, fr=fr,
        ww=0.2 * jax.random.normal(k1, (C, 4, 3, 3), jnp.float32),  # wavelet_convs[0]
        ws=jnp.full((C, 4), 0.1, jnp.float32),                      # wavelet_scale[0] (_ScaleModule 0.1)
        bw=0.2 * jax.random.normal(k2, (C, 3, 3), jnp.float32),     # base_conv weight
        bb=0.1 * jax.random.normal(k3, (C,), jnp.float32),          # base_conv bias
        bs=jnp.ones((C,), jnp.float32),                             # base_scale (_ScaleModule 1.0)
        pw=0.2 * jax.random.normal(k4, (Cout, C), jnp.float32),     # pointwise weight
    )


# ----------------------------------------------------------------------------
# Forward pass: one fused pallas_call + two layout-glue transposes
# ----------------------------------------------------------------------------
def forward(x, params):
    B, C, H, W = x.shape
    # TODO(synk): odd H/W F.pad-to-even branch of WTConv2d not implemented
    assert H % 2 == 0 and W % 2 == 0
    Hh, Wh = H // 2, W // 2
    Cout = params['pw'].shape[0]

    # glue 1: NCHW -> channel-last polyphase (B, 4, Hh, Wh, C), p = 2*i + j
    xp = x.reshape(B, C, Hh, 2, Wh, 2).transpose(0, 3, 5, 2, 4, 1)
    xp = xp.reshape(B, 4, Hh, Wh, C)

    fd_flat = params['fd'].reshape(16)
    fr_flat = params['fr'].reshape(16)
    ww_t = params['ww'].transpose(1, 2, 3, 0).reshape(4, 9, C)   # (subband, tap, C)
    ws_t = params['ws'].T                                        # (4, C)
    bw_t = params['bw'].transpose(1, 2, 0).reshape(9, C)         # (tap, C)
    bb = params['bb'].reshape(1, C)
    bs = params['bs'].reshape(1, C)
    pw_t = params['pw'].T                                        # (C, Cout)

    out_poly = pl.pallas_call(
        _fused_wtconv_kernel,
        out_shape=jax.ShapeDtypeStruct((B, 4, Hh, Wh, Cout), jnp.float32),
        grid=(B,),
        in_specs=[
            pl.BlockSpec((None, 4, Hh, Wh, C), lambda b: (b, 0, 0, 0, 0)),
            pl.BlockSpec(memory_space=pltpu.MemorySpace.SMEM),   # fd
            pl.BlockSpec(memory_space=pltpu.MemorySpace.SMEM),   # fr
            pl.BlockSpec((4, 9, C), lambda b: (0, 0, 0)),        # ww
            pl.BlockSpec((4, C), lambda b: (0, 0)),              # ws
            pl.BlockSpec((9, C), lambda b: (0, 0)),              # bw
            pl.BlockSpec((1, C), lambda b: (0, 0)),              # bb
            pl.BlockSpec((1, C), lambda b: (0, 0)),              # bs
            pl.BlockSpec((C, Cout), lambda b: (0, 0)),           # pw
        ],
        out_specs=pl.BlockSpec((None, 4, Hh, Wh, Cout), lambda b: (b, 0, 0, 0, 0)),
        scratch_shapes=[pltpu.VMEM((8, Hh + 2, Wh + 2, C), jnp.float32),
                        pltpu.VMEM((4, Hh, Wh, C), jnp.float32)],
        compiler_params=pltpu.CompilerParams(
            dimension_semantics=("parallel",)),
    )(xp, fd_flat, fr_flat, ww_t, ws_t, bw_t, bb, bs, pw_t)

    # glue 2: polyphase channel-last -> NCHW output
    out = out_poly.reshape(B, 2, 2, Hh, Wh, Cout).transpose(0, 5, 3, 1, 4, 2)
    return out.reshape(B, Cout, H, W)


# ----------------------------------------------------------------------------
# Pure-JAX reference (mirrors the PyTorch forward with lax convolutions)
# ----------------------------------------------------------------------------
def reference(x, params):
    B, C, H, W = x.shape
    hi = lax.Precision.HIGHEST
    dn = ('NCHW', 'OIHW', 'NCHW')
    wt_filter = jnp.tile(params['fd'][:, None], (C, 1, 1, 1))   # (4C, 1, 2, 2)
    iwt_filter = jnp.tile(params['fr'][:, None], (C, 1, 1, 1))  # (4C, 1, 2, 2)

    # wavelet_transform (grouped conv, stride 2, pad 0)
    cur = lax.conv_general_dilated(x, wt_filter, (2, 2), 'VALID',
                                   feature_group_count=C, dimension_numbers=dn,
                                   precision=hi)
    # wavelet depthwise 3x3 'same' conv + wavelet scale (_ScaleModule)
    wconv_w = params['ww'].reshape(C * 4, 1, 3, 3)
    cur_tag = lax.conv_general_dilated(cur, wconv_w, (1, 1), 'SAME',
                                       feature_group_count=C * 4,
                                       dimension_numbers=dn, precision=hi)
    cur_tag = cur_tag * params['ws'].reshape(1, C * 4, 1, 1)
    # inverse_wavelet_transform == grouped conv_transpose(stride 2, pad 0)
    w_fwd = iwt_filter.reshape(C, 4, 2, 2)[:, :, ::-1, ::-1]
    x_tag = lax.conv_general_dilated(cur_tag, w_fwd, (1, 1), [(1, 1), (1, 1)],
                                     lhs_dilation=(2, 2), feature_group_count=C,
                                     dimension_numbers=dn, precision=hi)
    # base depthwise conv + bias + scale (_ScaleModule), residual, pointwise 1x1
    base = lax.conv_general_dilated(x, params['bw'].reshape(C, 1, 3, 3), (1, 1),
                                    'SAME', feature_group_count=C,
                                    dimension_numbers=dn, precision=hi)
    base = (base + params['bb'].reshape(1, C, 1, 1)) * params['bs'].reshape(1, C, 1, 1)
    y = base + x_tag
    return jnp.einsum('oc,bchw->bohw', params['pw'], y, precision=hi)


if __name__ == "__main__":
    B, C, Cout, H, W = 2, 4, 8, 16, 16
    x = jax.random.normal(jax.random.PRNGKey(0), (B, C, H, W), jnp.float32)
    params = make_params(C, Cout, jax.random.PRNGKey(42))

    out = jax.jit(forward)(x, params)
    out = jax.block_until_ready(out)

    ref = reference(x, params)
    np.testing.assert_allclose(np.asarray(out), np.asarray(ref),
                               rtol=1e-3, atol=1e-3)
    print("KERNEL_OK")
</pallas_src>

<mosaic_0001>
module attributes {stable_mosaic.version = 11 : i64} {
  func.func @_fused_wtconv_kernel(%arg0: i32, %arg1: memref<1x4x8x8x4xf32, #tpu.memory_space<vmem>>, %arg2: memref<16xf32, #tpu.memory_space<smem>>, %arg3: memref<16xf32, #tpu.memory_space<smem>>, %arg4: memref<4x9x4xf32, #tpu.memory_space<vmem>>, %arg5: memref<4x4xf32, #tpu.memory_space<vmem>>, %arg6: memref<9x4xf32, #tpu.memory_space<vmem>>, %arg7: memref<1x4xf32, #tpu.memory_space<vmem>>, %arg8: memref<1x4xf32, #tpu.memory_space<vmem>>, %arg9: memref<4x8xf32, #tpu.memory_space<vmem>>, %arg10: memref<1x4x8x8x8xf32, #tpu.memory_space<vmem>>, %arg11: memref<8x10x10x4xf32, #tpu.memory_space<vmem>>, %arg12: memref<4x8x8x4xf32, #tpu.memory_space<vmem>>) attributes {dimension_semantics = [#tpu.dimension_semantics<parallel>], iteration_bounds = array<i64: 2>, scalar_prefetch = 0 : i64, scratch_operands = 2 : i64, tpu.core_type = #tpu.core_type<tc>, window_params = [{transform_indices = @transform_0, window_bounds = array<i64: 1, 4, 8, 8, 4>}, {transform_indices = @transform_1, window_bounds = array<i64: 16>}, {transform_indices = @transform_2, window_bounds = array<i64: 16>}, {pipeline_mode = #tpu.pipeline_mode<synchronous>, transform_indices = @transform_3, window_bounds = array<i64: 4, 9, 4>}, {pipeline_mode = #tpu.pipeline_mode<synchronous>, transform_indices = @transform_4, window_bounds = array<i64: 4, 4>}, {pipeline_mode = #tpu.pipeline_mode<synchronous>, transform_indices = @transform_5, window_bounds = array<i64: 9, 4>}, {pipeline_mode = #tpu.pipeline_mode<synchronous>, transform_indices = @transform_6, window_bounds = array<i64: 1, 4>}, {pipeline_mode = #tpu.pipeline_mode<synchronous>, transform_indices = @transform_7, window_bounds = array<i64: 1, 4>}, {pipeline_mode = #tpu.pipeline_mode<synchronous>, transform_indices = @transform_8, window_bounds = array<i64: 4, 8>}, {transform_indices = @transform_9, window_bounds = array<i64: 1, 4, 8, 8, 8>}]} {
    %cst = arith.constant 0.000000e+00 : f32
    %0 = vector.broadcast %cst : f32 to vector<8x1x10x4xf32>
    %c0 = arith.constant 0 : index
    %c0_0 = arith.constant 0 : index
    %c0_1 = arith.constant 0 : index
    %c0_2 = arith.constant 0 : index
    %1 = vector.load %arg11[%c0, %c0_0, %c0_1, %c0_2] : memref<8x10x10x4xf32, #tpu.memory_space<vmem>>, vector<8x1x10x4xf32>
    tpu.vector_store %arg11[%c0, %c0_0, %c0_1, %c0_2], %0 {strides = array<i32>} : memref<8x10x10x4xf32, #tpu.memory_space<vmem>>, vector<8x1x10x4xf32>,
    %cst_3 = arith.constant 0.000000e+00 : f32
    %2 = vector.broadcast %cst_3 : f32 to vector<8x1x10x4xf32>
    %c0_4 = arith.constant 0 : index
    %c9 = arith.constant 9 : index
    %c0_5 = arith.constant 0 : index
    %c0_6 = arith.constant 0 : index
    %3 = vector.load %arg11[%c0_4, %c9, %c0_5, %c0_6] : memref<8x10x10x4xf32, #tpu.memory_space<vmem>>, vector<8x1x10x4xf32>
    tpu.vector_store %arg11[%c0_4, %c9, %c0_5, %c0_6], %2 {strides = array<i32>} : memref<8x10x10x4xf32, #tpu.memory_space<vmem>>, vector<8x1x10x4xf32>,
    %cst_7 = arith.constant 0.000000e+00 : f32
    %4 = vector.broadcast %cst_7 : f32 to vector<8x10x1x4xf32>
    %c0_8 = arith.constant 0 : index
    %c0_9 = arith.constant 0 : index
    %c0_10 = arith.constant 0 : index
    %c0_11 = arith.constant 0 : index
    %5 = vector.load %arg11[%c0_8, %c0_9, %c0_10, %c0_11] : memref<8x10x10x4xf32, #tpu.memory_space<vmem>>, vector<8x10x1x4xf32>
    tpu.vector_store %arg11[%c0_8, %c0_9, %c0_10, %c0_11], %4 {strides = array<i32>} : memref<8x10x10x4xf32, #tpu.memory_space<vmem>>, vector<8x10x1x4xf32>,
    %cst_12 = arith.constant 0.000000e+00 : f32
    %6 = vector.broadcast %cst_12 : f32 to vector<8x10x1x4xf32>
    %c0_13 = arith.constant 0 : index
    %c0_14 = arith.constant 0 : index
    %c9_15 = arith.constant 9 : index
    %c0_16 = arith.constant 0 : index
    %7 = vector.load %arg11[%c0_13, %c0_14, %c9_15, %c0_16] : memref<8x10x10x4xf32, #tpu.memory_space<vmem>>, vector<8x10x1x4xf32>
    tpu.vector_store %arg11[%c0_13, %c0_14, %c9_15, %c0_16], %6 {strides = array<i32>} : memref<8x10x10x4xf32, #tpu.memory_space<vmem>>, vector<8x10x1x4xf32>,
    %c0_17 = arith.constant 0 : index
    %c0_18 = arith.constant 0 : index
    %c0_19 = arith.constant 0 : index
    %c0_20 = arith.constant 0 : index
    %c0_21 = arith.constant 0 : index
    %8 = vector.load %arg1[%c0_17, %c0_18, %c0_19, %c0_20, %c0_21] : memref<1x4x8x8x4xf32, #tpu.memory_space<vmem>>, vector<1x4x8x8x4xf32>
    %9 = vector.shape_cast %8 : vector<1x4x8x8x4xf32> to vector<4x8x8x4xf32>
    %10 = vector.extract_strided_slice %9 {offsets = [0, 0, 0, 0], sizes = [1, 8, 8, 4], strides = [1, 1, 1, 1]} : vector<4x8x8x4xf32> to vector<1x8x8x4xf32>
    %11 = vector.shape_cast %10 : vector<1x8x8x4xf32> to vector<8x8x4xf32>
    %c0_22 = arith.constant 0 : index
    %c1 = arith.constant 1 : index
    %c1_23 = arith.constant 1 : index
    %c0_24 = arith.constant 0 : index
    %12 = vector.load %arg11[%c0_22, %c1, %c1_23, %c0_24] : memref<8x10x10x4xf32, #tpu.memory_space<vmem>>, vector<1x8x8x4xf32>
    %13 = vector.shape_cast %12 : vector<1x8x8x4xf32> to vector<8x8x4xf32>
    %14 = vector.shape_cast %11 : vector<8x8x4xf32> to vector<1x8x8x4xf32>
    tpu.vector_store %arg11[%c0_22, %c1, %c1_23, %c0_24], %14 {strides = array<i32>} : memref<8x10x10x4xf32, #tpu.memory_space<vmem>>, vector<1x8x8x4xf32>,
    %15 = vector.extract_strided_slice %9 {offsets = [1, 0, 0, 0], sizes = [1, 8, 8, 4], strides = [1, 1, 1, 1]} : vector<4x8x8x4xf32> to vector<1x8x8x4xf32>
    %16 = vector.shape_cast %15 : vector<1x8x8x4xf32> to vector<8x8x4xf32>
    %c1_25 = arith.constant 1 : index
    %c1_26 = arith.constant 1 : index
    %c1_27 = arith.constant 1 : index
    %c0_28 = arith.constant 0 : index
    %17 = vector.load %arg11[%c1_25, %c1_26, %c1_27, %c0_28] : memref<8x10x10x4xf32, #tpu.memory_space<vmem>>, vector<1x8x8x4xf32>
    %18 = vector.shape_cast %17 : vector<1x8x8x4xf32> to vector<8x8x4xf32>
    %19 = vector.shape_cast %16 : vector<8x8x4xf32> to vector<1x8x8x4xf32>
    tpu.vector_store %arg11[%c1_25, %c1_26, %c1_27, %c0_28], %19 {strides = array<i32>} : memref<8x10x10x4xf32, #tpu.memory_space<vmem>>, vector<1x8x8x4xf32>,
    %20 = vector.extract_strided_slice %9 {offsets = [2, 0, 0, 0], sizes = [1, 8, 8, 4], strides = [1, 1, 1, 1]} : vector<4x8x8x4xf32> to vector<1x8x8x4xf32>
    %21 = vector.shape_cast %20 : vector<1x8x8x4xf32> to vector<8x8x4xf32>
    %c2 = arith.constant 2 : index
    %c1_29 = arith.constant 1 : index
    %c1_30 = arith.constant 1 : index
    %c0_31 = arith.constant 0 : index
    %22 = vector.load %arg11[%c2, %c1_29, %c1_30, %c0_31] : memref<8x10x10x4xf32, #tpu.memory_space<vmem>>, vector<1x8x8x4xf32>
    %23 = vector.shape_cast %22 : vector<1x8x8x4xf32> to vector<8x8x4xf32>
    %24 = vector.shape_cast %21 : vector<8x8x4xf32> to vector<1x8x8x4xf32>
    tpu.vector_store %arg11[%c2, %c1_29, %c1_30, %c0_31], %24 {strides = array<i32>} : memref<8x10x10x4xf32, #tpu.memory_space<vmem>>, vector<1x8x8x4xf32>,
    %25 = vector.extract_strided_slice %9 {offsets = [3, 0, 0, 0], sizes = [1, 8, 8, 4], strides = [1, 1, 1, 1]} : vector<4x8x8x4xf32> to vector<1x8x8x4xf32>
    %26 = vector.shape_cast %25 : vector<1x8x8x4xf32> to vector<8x8x4xf32>
    %c3 = arith.constant 3 : index
    %c1_32 = arith.constant 1 : index
    %c1_33 = arith.constant 1 : index
    %c0_34 = arith.constant 0 : index
    %27 = vector.load %arg11[%c3, %c1_32, %c1_33, %c0_34] : memref<8x10x10x4xf32, #tpu.memory_space<vmem>>, vector<1x8x8x4xf32>
    %28 = vector.shape_cast %27 : vector<1x8x8x4xf32> to vector<8x8x4xf32>
    %29 = vector.shape_cast %26 : vector<8x8x4xf32> to vector<1x8x8x4xf32>
    tpu.vector_store %arg11[%c3, %c1_32, %c1_33, %c0_34], %29 {strides = array<i32>} : memref<8x10x10x4xf32, #tpu.memory_space<vmem>>, vector<1x8x8x4xf32>,
    %c0_35 = arith.constant 0 : index
    %30 = memref.load %arg2[%c0_35] : memref<16xf32, #tpu.memory_space<smem>>
    %31 = vector.extract_strided_slice %9 {offsets = [0, 0, 0, 0], sizes = [1, 8, 8, 4], strides = [1, 1, 1, 1]} : vector<4x8x8x4xf32> to vector<1x8x8x4xf32>
    %32 = vector.shape_cast %31 : vector<1x8x8x4xf32> to vector<8x8x4xf32>
    %33 = vector.broadcast %30 : f32 to vector<8x8x4xf32>
    %34 = arith.mulf %33, %32 : vector<8x8x4xf32>
    %c1_36 = arith.constant 1 : index
    %35 = memref.load %arg2[%c1_36] : memref<16xf32, #tpu.memory_space<smem>>
    %36 = vector.extract_strided_slice %9 {offsets = [1, 0, 0, 0], sizes = [1, 8, 8, 4], strides = [1, 1, 1, 1]} : vector<4x8x8x4xf32> to vector<1x8x8x4xf32>
    %37 = vector.shape_cast %36 : vector<1x8x8x4xf32> to vector<8x8x4xf32>
    %38 = vector.broadcast %35 : f32 to vector<8x8x4xf32>
    %39 = arith.mulf %38, %37 : vector<8x8x4xf32>
    %40 = arith.addf %34, %39 : vector<8x8x4xf32>
    %c2_37 = arith.constant 2 : index
    %41 = memref.load %arg2[%c2_37] : memref<16xf32, #tpu.memory_space<smem>>
    %42 = vector.extract_strided_slice %9 {offsets = [2, 0, 0, 0], sizes = [1, 8, 8, 4], strides = [1, 1, 1, 1]} : vector<4x8x8x4xf32> to vector<1x8x8x4xf32>
    %43 = vector.shape_cast %42 : vector<1x8x8x4xf32> to vector<8x8x4xf32>
    %44 = vector.broadcast %41 : f32 to vector<8x8x4xf32>
    %45 = arith.mulf %44, %43 : vector<8x8x4xf32>
    %46 = arith.addf %40, %45 : vector<8x8x4xf32>
    %c3_38 = arith.constant 3 : index
    %47 = memref.load %arg2[%c3_38] : memref<16xf32, #tpu.memory_space<smem>>
    %48 = vector.extract_strided_slice %9 {offsets = [3, 0, 0, 0], sizes = [1, 8, 8, 4], strides = [1, 1, 1, 1]} : vector<4x8x8x4xf32> to vector<1x8x8x4xf32>
    %49 = vector.shape_cast %48 : vector<1x8x8x4xf32> to vector<8x8x4xf32>
    %50 = vector.broadcast %47 : f32 to vector<8x8x4xf32>
    %51 = arith.mulf %50, %49 : vector<8x8x4xf32>
    %52 = arith.addf %46, %51 : vector<8x8x4xf32>
    %c4 = arith.constant 4 : index
    %c1_39 = arith.constant 1 : index
    %c1_40 = arith.constant 1 : index
    %c0_41 = arith.constant 0 : index
    %53 = vector.load %arg11[%c4, %c1_39, %c1_40, %c0_41] : memref<8x10x10x4xf32, #tpu.memory_space<vmem>>, vector<1x8x8x4xf32>
    %54 = vector.shape_cast %53 : vector<1x8x8x4xf32> to vector<8x8x4xf32>
    %55 = vector.shape_cast %52 : vector<8x8x4xf32> to vector<1x8x8x4xf32>
    tpu.vector_store %arg11[%c4, %c1_39, %c1_40, %c0_41], %55 {strides = array<i32>} : memref<8x10x10x4xf32, #tpu.memory_space<vmem>>, vector<1x8x8x4xf32>,
    %c4_42 = arith.constant 4 : index
    %56 = memref.load %arg2[%c4_42] : memref<16xf32, #tpu.memory_space<smem>>
    %57 = vector.extract_strided_slice %9 {offsets = [0, 0, 0, 0], sizes = [1, 8, 8, 4], strides = [1, 1, 1, 1]} : vector<4x8x8x4xf32> to vector<1x8x8x4xf32>
    %58 = vector.shape_cast %57 : vector<1x8x8x4xf32> to vector<8x8x4xf32>
    %59 = vector.broadcast %56 : f32 to vector<8x8x4xf32>
    %60 = arith.mulf %59, %58 : vector<8x8x4xf32>
    %c5 = arith.constant 5 : index
    %61 = memref.load %arg2[%c5] : memref<16xf32, #tpu.memory_space<smem>>
    %62 = vector.extract_strided_slice %9 {offsets = [1, 0, 0, 0], sizes = [1, 8, 8, 4], strides = [1, 1, 1, 1]} : vector<4x8x8x4xf32> to vector<1x8x8x4xf32>
    %63 = vector.shape_cast %62 : vector<1x8x8x4xf32> to vector<8x8x4xf32>
    %64 = vector.broadcast %61 : f32 to vector<8x8x4xf32>
    %65 = arith.mulf %64, %63 : vector<8x8x4xf32>
    %66 = arith.addf %60, %65 : vector<8x8x4xf32>
    %c6 = arith.constant 6 : index
    %67 = memref.load %arg2[%c6] : memref<16xf32, #tpu.memory_space<smem>>
    %68 = vector.extract_strided_slice %9 {offsets = [2, 0, 0, 0], sizes = [1, 8, 8, 4], strides = [1, 1, 1, 1]} : vector<4x8x8x4xf32> to vector<1x8x8x4xf32>
    %69 = vector.shape_cast %68 : vector<1x8x8x4xf32> to vector<8x8x4xf32>
    %70 = vector.broadcast %67 : f32 to vector<8x8x4xf32>
    %71 = arith.mulf %70, %69 : vector<8x8x4xf32>
    %72 = arith.addf %66, %71 : vector<8x8x4xf32>
    %c7 = arith.constant 7 : index
    %73 = memref.load %arg2[%c7] : memref<16xf32, #tpu.memory_space<smem>>
    %74 = vector.extract_strided_slice %9 {offsets = [3, 0, 0, 0], sizes = [1, 8, 8, 4], strides = [1, 1, 1, 1]} : vector<4x8x8x4xf32> to vector<1x8x8x4xf32>
    %75 = vector.shape_cast %74 : vector<1x8x8x4xf32> to vector<8x8x4xf32>
    %76 = vector.broadcast %73 : f32 to vector<8x8x4xf32>
    %77 = arith.mulf %76, %75 : vector<8x8x4xf32>
    %78 = arith.addf %72, %77 : vector<8x8x4xf32>
    %c5_43 = arith.constant 5 : index
    %c1_44 = arith.constant 1 : index
    %c1_45 = arith.constant 1 : index
    %c0_46 = arith.constant 0 : index
    %79 = vector.load %arg11[%c5_43, %c1_44, %c1_45, %c0_46] : memref<8x10x10x4xf32, #tpu.memory_space<vmem>>, vector<1x8x8x4xf32>
    %80 = vector.shape_cast %79 : vector<1x8x8x4xf32> to vector<8x8x4xf32>
    %81 = vector.shape_cast %78 : vector<8x8x4xf32> to vector<1x8x8x4xf32>
    tpu.vector_store %arg11[%c5_43, %c1_44, %c1_45, %c0_46], %81 {strides = array<i32>} : memref<8x10x10x4xf32, #tpu.memory_space<vmem>>, vector<1x8x8x4xf32>,
    %c8 = arith.constant 8 : index
    %82 = memref.load %arg2[%c8] : memref<16xf32, #tpu.memory_space<smem>>
    %83 = vector.extract_strided_slice %9 {offsets = [0, 0, 0, 0], sizes = [1, 8, 8, 4], strides = [1, 1, 1, 1]} : vector<4x8x8x4xf32> to vector<1x8x8x4xf32>
    %84 = vector.shape_cast %83 : vector<1x8x8x4xf32> to vector<8x8x4xf32>
    %85 = vector.broadcast %82 : f32 to vector<8x8x4xf32>
    %86 = arith.mulf %85, %84 : vector<8x8x4xf32>
    %c9_47 = arith.constant 9 : index
    %87 = memref.load %arg2[%c9_47] : memref<16xf32, #tpu.memory_space<smem>>
    %88 = vector.extract_strided_slice %9 {offsets = [1, 0, 0, 0], sizes = [1, 8, 8, 4], strides = [1, 1, 1, 1]} : vector<4x8x8x4xf32> to vector<1x8x8x4xf32>
    %89 = vector.shape_cast %88 : vector<1x8x8x4xf32> to vector<8x8x4xf32>
    %90 = vector.broadcast %87 : f32 to vector<8x8x4xf32>
    %91 = arith.mulf %90, %89 : vector<8x8x4xf32>
    %92 = arith.addf %86, %91 : vector<8x8x4xf32>
    %c10 = arith.constant 10 : index
    %93 = memref.load %arg2[%c10] : memref<16xf32, #tpu.memory_space<smem>>
    %94 = vector.extract_strided_slice %9 {offsets = [2, 0, 0, 0], sizes = [1, 8, 8, 4], strides = [1, 1, 1, 1]} : vector<4x8x8x4xf32> to vector<1x8x8x4xf32>
    %95 = vector.shape_cast %94 : vector<1x8x8x4xf32> to vector<8x8x4xf32>
    %96 = vector.broadcast %93 : f32 to vector<8x8x4xf32>
    %97 = arith.mulf %96, %95 : vector<8x8x4xf32>
    %98 = arith.addf %92, %97 : vector<8x8x4xf32>
    %c11 = arith.constant 11 : index
    %99 = memref.load %arg2[%c11] : memref<16xf32, #tpu.memory_space<smem>>
    %100 = vector.extract_strided_slice %9 {offsets = [3, 0, 0, 0], sizes = [1, 8, 8, 4], strides = [1, 1, 1, 1]} : vector<4x8x8x4xf32> to vector<1x8x8x4xf32>
    %101 = vector.shape_cast %100 : vector<1x8x8x4xf32> to vector<8x8x4xf32>
    %102 = vector.broadcast %99 : f32 to vector<8x8x4xf32>
    %103 = arith.mulf %102, %101 : vector<8x8x4xf32>
    %104 = arith.addf %98, %103 : vector<8x8x4xf32>
    %c6_48 = arith.constant 6 : index
    %c1_49 = arith.constant 1 : index
    %c1_50 = arith.constant 1 : index
    %c0_51 = arith.constant 0 : index
    %105 = vector.load %arg11[%c6_48, %c1_49, %c1_50, %c0_51] : memref<8x10x10x4xf32, #tpu.memory_space<vmem>>, vector<1x8x8x4xf32>
    %106 = vector.shape_cast %105 : vector<1x8x8x4xf32> to vector<8x8x4xf32>
    %107 = vector.shape_cast %104 : vector<8x8x4xf32> to vector<1x8x8x4xf32>
    tpu.vector_store %arg11[%c6_48, %c1_49, %c1_50, %c0_51], %107 {strides = array<i32>} : memref<8x10x10x4xf32, #tpu.memory_space<vmem>>, vector<1x8x8x4xf32>,
    %c12 = arith.constant 12 : index
    %108 = memref.load %arg2[%c12] : memref<16xf32, #tpu.memory_space<smem>>
    %109 = vector.extract_strided_slice %9 {offsets = [0, 0, 0, 0], sizes = [1, 8, 8, 4], strides = [1, 1, 1, 1]} : vector<4x8x8x4xf32> to vector<1x8x8x4xf32>
    %110 = vector.shape_cast %109 : vector<1x8x8x4xf32> to vector<8x8x4xf32>
    %111 = vector.broadcast %108 : f32 to vector<8x8x4xf32>
    %112 = arith.mulf %111, %110 : vector<8x8x4xf32>
    %c13 = arith.constant 13 : index
    %113 = memref.load %arg2[%c13] : memref<16xf32, #tpu.memory_space<smem>>
    %114 = vector.extract_strided_slice %9 {offsets = [1, 0, 0, 0], sizes = [1, 8, 8, 4], strides = [1, 1, 1, 1]} : vector<4x8x8x4xf32> to vector<1x8x8x4xf32>
    %115 = vector.shape_cast %114 : vector<1x8x8x4xf32> to vector<8x8x4xf32>
    %116 = vector.broadcast %113 : f32 to vector<8x8x4xf32>
    %117 = arith.mulf %116, %115 : vector<8x8x4xf32>
    %118 = arith.addf %112, %117 : vector<8x8x4xf32>
    %c14 = arith.constant 14 : index
    %119 = memref.load %arg2[%c14] : memref<16xf32, #tpu.memory_space<smem>>
    %120 = vector.extract_strided_slice %9 {offsets = [2, 0, 0, 0], sizes = [1, 8, 8, 4], strides = [1, 1, 1, 1]} : vector<4x8x8x4xf32> to vector<1x8x8x4xf32>
    %121 = vector.shape_cast %120 : vector<1x8x8x4xf32> to vector<8x8x4xf32>
    %122 = vector.broadcast %119 : f32 to vector<8x8x4xf32>
    %123 = arith.mulf %122, %121 : vector<8x8x4xf32>
    %124 = arith.addf %118, %123 : vector<8x8x4xf32>
    %c15 = arith.constant 15 : index
    %125 = memref.load %arg2[%c15] : memref<16xf32, #tpu.memory_space<smem>>
    %126 = vector.extract_strided_slice %9 {offsets = [3, 0, 0, 0], sizes = [1, 8, 8, 4], strides = [1, 1, 1, 1]} : vector<4x8x8x4xf32> to vector<1x8x8x4xf32>
    %127 = vector.shape_cast %126 : vector<1x8x8x4xf32> to vector<8x8x4xf32>
    %128 = vector.broadcast %125 : f32 to vector<8x8x4xf32>
    %129 = arith.mulf %128, %127 : vector<8x8x4xf32>
    %130 = arith.addf %124, %129 : vector<8x8x4xf32>
    %c7_52 = arith.constant 7 : index
    %c1_53 = arith.constant 1 : index
    %c1_54 = arith.constant 1 : index
    %c0_55 = arith.constant 0 : index
    %131 = vector.load %arg11[%c7_52, %c1_53, %c1_54, %c0_55] : memref<8x10x10x4xf32, #tpu.memory_space<vmem>>, vector<1x8x8x4xf32>
    %132 = vector.shape_cast %131 : vector<1x8x8x4xf32> to vector<8x8x4xf32>
    %133 = vector.shape_cast %130 : vector<8x8x4xf32> to vector<1x8x8x4xf32>
    tpu.vector_store %arg11[%c7_52, %c1_53, %c1_54, %c0_55], %133 {strides = array<i32>} : memref<8x10x10x4xf32, #tpu.memory_space<vmem>>, vector<1x8x8x4xf32>,
    %cst_56 = arith.constant 0.000000e+00 : f32
    %134 = vector.broadcast %cst_56 : f32 to vector<8x8x4xf32>
    %c0_57 = arith.constant 0 : index
    %c0_58 = arith.constant 0 : index
    %c0_59 = arith.constant 0 : index
    %135 = vector.load %arg4[%c0_57, %c0_58, %c0_59] : memref<4x9x4xf32, #tpu.memory_space<vmem>>, vector<1x1x4xf32>
    %136 = vector.shape_cast %135 : vector<1x1x4xf32> to vector<4xf32>
    %c4_60 = arith.constant 4 : index
    %c0_61 = arith.constant 0 : index
    %c0_62 = arith.constant 0 : index
    %c0_63 = arith.constant 0 : index
    %137 = vector.load %arg11[%c4_60, %c0_61, %c0_62, %c0_63] : memref<8x10x10x4xf32, #tpu.memory_space<vmem>>, vector<1x8x8x4xf32>
    %138 = vector.shape_cast %137 : vector<1x8x8x4xf32> to vector<8x8x4xf32>
    %139 = vector.shape_cast %136 : vector<4xf32> to vector<1x1x4xf32>
    %140 = vector.broadcast %139 : vector<1x1x4xf32> to vector<8x8x4xf32>
    %141 = arith.mulf %140, %138 : vector<8x8x4xf32>
    %142 = arith.addf %134, %141 : vector<8x8x4xf32>
    %c0_64 = arith.constant 0 : index
    %c1_65 = arith.constant 1 : index
    %c0_66 = arith.constant 0 : index
    %143 = vector.load %arg4[%c0_64, %c1_65, %c0_66] : memref<4x9x4xf32, #tpu.memory_space<vmem>>, vector<1x1x4xf32>
    %144 = vector.shape_cast %143 : vector<1x1x4xf32> to vector<4xf32>
    %c4_67 = arith.constant 4 : index
    %c0_68 = arith.constant 0 : index
    %c1_69 = arith.constant 1 : index
    %c0_70 = arith.constant 0 : index
    %145 = vector.load %arg11[%c4_67, %c0_68, %c1_69, %c0_70] : memref<8x10x10x4xf32, #tpu.memory_space<vmem>>, vector<1x8x8x4xf32>
    %146 = vector.shape_cast %145 : vector<1x8x8x4xf32> to vector<8x8x4xf32>
    %147 = vector.shape_cast %144 : vector<4xf32> to vector<1x1x4xf32>
    %148 = vector.broadcast %147 : vector<1x1x4xf32> to vector<8x8x4xf32>
    %149 = arith.mulf %148, %146 : vector<8x8x4xf32>
    %150 = arith.addf %142, %149 : vector<8x8x4xf32>
    %c0_71 = arith.constant 0 : index
    %c2_72 = arith.constant 2 : index
    %c0_73 = arith.constant 0 : index
    %151 = vector.load %arg4[%c0_71, %c2_72, %c0_73] : memref<4x9x4xf32, #tpu.memory_space<vmem>>, vector<1x1x4xf32>
    %152 = vector.shape_cast %151 : vector<1x1x4xf32> to vector<4xf32>
    %c4_74 = arith.constant 4 : index
    %c0_75 = arith.constant 0 : index
    %c2_76 = arith.constant 2 : index
    %c0_77 = arith.constant 0 : index
    %153 = vector.load %arg11[%c4_74, %c0_75, %c2_76, %c0_77] : memref<8x10x10x4xf32, #tpu.memory_space<vmem>>, vector<1x8x8x4xf32>
    %154 = vector.shape_cast %153 : vector<1x8x8x4xf32> to vector<8x8x4xf32>
    %155 = vector.shape_cast %152 : vector<4xf32> to vector<1x1x4xf32>
    %156 = vector.broadcast %155 : vector<1x1x4xf32> to vector<8x8x4xf32>
    %157 = arith.mulf %156, %154 : vector<8x8x4xf32>
    %158 = arith.addf %150, %157 : vector<8x8x4xf32>
    %c0_78 = arith.constant 0 : index
    %c3_79 = arith.constant 3 : index
    %c0_80 = arith.constant 0 : index
    %159 = vector.load %arg4[%c0_78, %c3_79, %c0_80] : memref<4x9x4xf32, #tpu.memory_space<vmem>>, vector<1x1x4xf32>
    %160 = vector.shape_cast %159 : vector<1x1x4xf32> to vector<4xf32>
    %c4_81 = arith.constant 4 : index
    %c1_82 = arith.constant 1 : index
    %c0_83 = arith.constant 0 : index
    %c0_84 = arith.constant 0 : index
    %161 = vector.load %arg11[%c4_81, %c1_82, %c0_83, %c0_84] : memref<8x10x10x4xf32, #tpu.memory_space<vmem>>, vector<1x8x8x4xf32>
    %162 = vector.shape_cast %161 : vector<1x8x8x4xf32> to vector<8x8x4xf32>
    %163 = vector.shape_cast %160 : vector<4xf32> to vector<1x1x4xf32>
    %164 = vector.broadcast %163 : vector<1x1x4xf32> to vector<8x8x4xf32>
    %165 = arith.mulf %164, %162 : vector<8x8x4xf32>
    %166 = arith.addf %158, %165 : vector<8x8x4xf32>
    %c0_85 = arith.constant 0 : index
    %c4_86 = arith.constant 4 : index
    %c0_87 = arith.constant 0 : index
    %167 = vector.load %arg4[%c0_85, %c4_86, %c0_87] : memref<4x9x4xf32, #tpu.memory_space<vmem>>, vector<1x1x4xf32>
    %168 = vector.shape_cast %167 : vector<1x1x4xf32> to vector<4xf32>
    %c4_88 = arith.constant 4 : index
    %c1_89 = arith.constant 1 : index
    %c1_90 = arith.constant 1 : index
    %c0_91 = arith.constant 0 : index
    %169 = vector.load %arg11[%c4_88, %c1_89, %c1_90, %c0_91] : memref<8x10x10x4xf32, #tpu.memory_space<vmem>>, vector<1x8x8x4xf32>
    %170 = vector.shape_cast %169 : vector<1x8x8x4xf32> to vector<8x8x4xf32>
    %171 = vector.shape_cast %168 : vector<4xf32> to vector<1x1x4xf32>
    %172 = vector.broadcast %171 : vector<1x1x4xf32> to vector<8x8x4xf32>
    %173 = arith.mulf %172, %170 : vector<8x8x4xf32>
    %174 = arith.addf %166, %173 : vector<8x8x4xf32>
    %c0_92 = arith.constant 0 : index
    %c5_93 = arith.constant 5 : index
    %c0_94 = arith.constant 0 : index
    %175 = vector.load %arg4[%c0_92, %c5_93, %c0_94] : memref<4x9x4xf32, #tpu.memory_space<vmem>>, vector<1x1x4xf32>
    %176 = vector.shape_cast %175 : vector<1x1x4xf32> to vector<4xf32>
    %c4_95 = arith.constant 4 : index
    %c1_96 = arith.constant 1 : index
    %c2_97 = arith.constant 2 : index
    %c0_98 = arith.constant 0 : index
    %177 = vector.load %arg11[%c4_95, %c1_96, %c2_97, %c0_98] : memref<8x10x10x4xf32, #tpu.memory_space<vmem>>, vector<1x8x8x4xf32>
    %178 = vector.shape_cast %177 : vector<1x8x8x4xf32> to vector<8x8x4xf32>
    %179 = vector.shape_cast %176 : vector<4xf32> to vector<1x1x4xf32>
    %180 = vector.broadcast %179 : vector<1x1x4xf32> to vector<8x8x4xf32>
    %181 = arith.mulf %180, %178 : vector<8x8x4xf32>
    %182 = arith.addf %174, %181 : vector<8x8x4xf32>
    %c0_99 = arith.constant 0 : index
    %c6_100 = arith.constant 6 : index
    %c0_101 = arith.constant 0 : index
    %183 = vector.load %arg4[%c0_99, %c6_100, %c0_101] : memref<4x9x4xf32, #tpu.memory_space<vmem>>, vector<1x1x4xf32>
    %184 = vector.shape_cast %183 : vector<1x1x4xf32> to vector<4xf32>
    %c4_102 = arith.constant 4 : index
    %c2_103 = arith.constant 2 : index
    %c0_104 = arith.constant 0 : index
    %c0_105 = arith.constant 0 : index
    %185 = vector.load %arg11[%c4_102, %c2_103, %c0_104, %c0_105] : memref<8x10x10x4xf32, #tpu.memory_space<vmem>>, vector<1x8x8x4xf32>
    %186 = vector.shape_cast %185 : vector<1x8x8x4xf32> to vector<8x8x4xf32>
    %187 = vector.shape_cast %184 : vector<4xf32> to vector<1x1x4xf32>
    %188 = vector.broadcast %187 : vector<1x1x4xf32> to vector<8x8x4xf32>
    %189 = arith.mulf %188, %186 : vector<8x8x4xf32>
    %190 = arith.addf %182, %189 : vector<8x8x4xf32>
    %c0_106 = arith.constant 0 : index
    %c7_107 = arith.constant 7 : index
    %c0_108 = arith.constant 0 : index
    %191 = vector.load %arg4[%c0_106, %c7_107, %c0_108] : memref<4x9x4xf32, #tpu.memory_space<vmem>>, vector<1x1x4xf32>
    %192 = vector.shape_cast %191 : vector<1x1x4xf32> to vector<4xf32>
    %c4_109 = arith.constant 4 : index
    %c2_110 = arith.constant 2 : index
    %c1_111 = arith.constant 1 : index
    %c0_112 = arith.constant 0 : index
    %193 = vector.load %arg11[%c4_109, %c2_110, %c1_111, %c0_112] : memref<8x10x10x4xf32, #tpu.memory_space<vmem>>, vector<1x8x8x4xf32>
    %194 = vector.shape_cast %193 : vector<1x8x8x4xf32> to vector<8x8x4xf32>
    %195 = vector.shape_cast %192 : vector<4xf32> to vector<1x1x4xf32>
    %196 = vector.broadcast %195 : vector<1x1x4xf32> to vector<8x8x4xf32>
    %197 = arith.mulf %196, %194 : vector<8x8x4xf32>
    %198 = arith.addf %190, %197 : vector<8x8x4xf32>
    %c0_113 = arith.constant 0 : index
    %c8_114 = arith.constant 8 : index
    %c0_115 = arith.constant 0 : index
    %199 = vector.load %arg4[%c0_113, %c8_114, %c0_115] : memref<4x9x4xf32, #tpu.memory_space<vmem>>, vector<1x1x4xf32>
    %200 = vector.shape_cast %199 : vector<1x1x4xf32> to vector<4xf32>
    %c4_116 = arith.constant 4 : index
    %c2_117 = arith.constant 2 : index
    %c2_118 = arith.constant 2 : index
    %c0_119 = arith.constant 0 : index
    %201 = vector.load %arg11[%c4_116, %c2_117, %c2_118, %c0_119] : memref<8x10x10x4xf32, #tpu.memory_space<vmem>>, vector<1x8x8x4xf32>
    %202 = vector.shape_cast %201 : vector<1x8x8x4xf32> to vector<8x8x4xf32>
    %203 = vector.shape_cast %200 : vector<4xf32> to vector<1x1x4xf32>
    %204 = vector.broadcast %203 : vector<1x1x4xf32> to vector<8x8x4xf32>
    %205 = arith.mulf %204, %202 : vector<8x8x4xf32>
    %206 = arith.addf %198, %205 : vector<8x8x4xf32>
    %c0_120 = arith.constant 0 : index
    %c0_121 = arith.constant 0 : index
    %207 = vector.load %arg5[%c0_120, %c0_121] : memref<4x4xf32, #tpu.memory_space<vmem>>, vector<1x4xf32>
    %208 = vector.shape_cast %207 : vector<1x4xf32> to vector<4xf32>
    %209 = vector.shape_cast %208 : vector<4xf32> to vector<1x1x4xf32>
    %210 = vector.broadcast %209 : vector<1x1x4xf32> to vector<8x8x4xf32>
    %211 = arith.mulf %206, %210 : vector<8x8x4xf32>
    %cst_122 = arith.constant 0.000000e+00 : f32
    %212 = vector.broadcast %cst_122 : f32 to vector<8x8x4xf32>
    %c1_123 = arith.constant 1 : index
    %c0_124 = arith.constant 0 : index
    %c0_125 = arith.constant 0 : index
    %213 = vector.load %arg4[%c1_123, %c0_124, %c0_125] : memref<4x9x4xf32, #tpu.memory_space<vmem>>, vector<1x1x4xf32>
    %214 = vector.shape_cast %213 : vector<1x1x4xf32> to vector<4xf32>
    %c5_126 = arith.constant 5 : index
    %c0_127 = arith.constant 0 : index
    %c0_128 = arith.constant 0 : index
    %c0_129 = arith.constant 0 : index
    %215 = vector.load %arg11[%c5_126, %c0_127, %c0_128, %c0_129] : memref<8x10x10x4xf32, #tpu.memory_space<vmem>>, vector<1x8x8x4xf32>
    %216 = vector.shape_cast %215 : vector<1x8x8x4xf32> to vector<8x8x4xf32>
    %217 = vector.shape_cast %214 : vector<4xf32> to vector<1x1x4xf32>
    %218 = vector.broadcast %217 : vector<1x1x4xf32> to vector<8x8x4xf32>
    %219 = arith.mulf %218, %216 : vector<8x8x4xf32>
    %220 = arith.addf %212, %219 : vector<8x8x4xf32>
    %c1_130 = arith.constant 1 : index
    %c1_131 = arith.constant 1 : index
    %c0_132 = arith.constant 0 : index
    %221 = vector.load %arg4[%c1_130, %c1_131, %c0_132] : memref<4x9x4xf32, #tpu.memory_space<vmem>>, vector<1x1x4xf32>
    %222 = vector.shape_cast %221 : vector<1x1x4xf32> to vector<4xf32>
    %c5_133 = arith.constant 5 : index
    %c0_134 = arith.constant 0 : index
    %c1_135 = arith.constant 1 : index
    %c0_136 = arith.constant 0 : index
    %223 = vector.load %arg11[%c5_133, %c0_134, %c1_135, %c0_136] : memref<8x10x10x4xf32, #tpu.memory_space<vmem>>, vector<1x8x8x4xf32>
    %224 = vector.shape_cast %223 : vector<1x8x8x4xf32> to vector<8x8x4xf32>
    %225 = vector.shape_cast %222 : vector<4xf32> to vector<1x1x4xf32>
    %226 = vector.broadcast %225 : vector<1x1x4xf32> to vector<8x8x4xf32>
    %227 = arith.mulf %226, %224 : vector<8x8x4xf32>
    %228 = arith.addf %220, %227 : vector<8x8x4xf32>
    %c1_137 = arith.constant 1 : index
    %c2_138 = arith.constant 2 : index
    %c0_139 = arith.constant 0 : index
    %229 = vector.load %arg4[%c1_137, %c2_138, %c0_139] : memref<4x9x4xf32, #tpu.memory_space<vmem>>, vector<1x1x4xf32>
    %230 = vector.shape_cast %229 : vector<1x1x4xf32> to vector<4xf32>
    %c5_140 = arith.constant 5 : index
    %c0_141 = arith.constant 0 : index
    %c2_142 = arith.constant 2 : index
    %c0_143 = arith.constant 0 : index
    %231 = vector.load %arg11[%c5_140, %c0_141, %c2_142, %c0_143] : memref<8x10x10x4xf32, #tpu.memory_space<vmem>>, vector<1x8x8x4xf32>
    %232 = vector.shape_cast %231 : vector<1x8x8x4xf32> to vector<8x8x4xf32>
    %233 = vector.shape_cast %230 : vector<4xf32> to vector<1x1x4xf32>
    %234 = vector.broadcast %233 : vector<1x1x4xf32> to vector<8x8x4xf32>
    %235 = arith.mulf %234, %232 : vector<8x8x4xf32>
    %236 = arith.addf %228, %235 : vector<8x8x4xf32>
    %c1_144 = arith.constant 1 : index
    %c3_145 = arith.constant 3 : index
    %c0_146 = arith.constant 0 : index
    %237 = vector.load %arg4[%c1_144, %c3_145, %c0_146] : memref<4x9x4xf32, #tpu.memory_space<vmem>>, vector<1x1x4xf32>
    %238 = vector.shape_cast %237 : vector<1x1x4xf32> to vector<4xf32>
    %c5_147 = arith.constant 5 : index
    %c1_148 = arith.constant 1 : index
    %c0_149 = arith.constant 0 : index
    %c0_150 = arith.constant 0 : index
    %239 = vector.load %arg11[%c5_147, %c1_148, %c0_149, %c0_150] : memref<8x10x10x4xf32, #tpu.memory_space<vmem>>, vector<1x8x8x4xf32>
    %240 = vector.shape_cast %239 : vector<1x8x8x4xf32> to vector<8x8x4xf32>
    %241 = vector.shape_cast %238 : vector<4xf32> to vector<1x1x4xf32>
    %242 = vector.broadcast %241 : vector<1x1x4xf32> to vector<8x8x4xf32>
    %243 = arith.mulf %242, %240 : vector<8x8x4xf32>
    %244 = arith.addf %236, %243 : vector<8x8x4xf32>
    %c1_151 = arith.constant 1 : index
    %c4_152 = arith.constant 4 : index
    %c0_153 = arith.constant 0 : index
    %245 = vector.load %arg4[%c1_151, %c4_152, %c0_153] : memref<4x9x4xf32, #tpu.memory_space<vmem>>, vector<1x1x4xf32>
    %246 = vector.shape_cast %245 : vector<1x1x4xf32> to vector<4xf32>
    %c5_154 = arith.constant 5 : index
    %c1_155 = arith.constant 1 : index
    %c1_156 = arith.constant 1 : index
    %c0_157 = arith.constant 0 : index
    %247 = vector.load %arg11[%c5_154, %c1_155, %c1_156, %c0_157] : memref<8x10x10x4xf32, #tpu.memory_space<vmem>>, vector<1x8x8x4xf32>
    %248 = vector.shape_cast %247 : vector<1x8x8x4xf32> to vector<8x8x4xf32>
    %249 = vector.shape_cast %246 : vector<4xf32> to vector<1x1x4xf32>
    %250 = vector.broadcast %249 : vector<1x1x4xf32> to vector<8x8x4xf32>
    %251 = arith.mulf %250, %248 : vector<8x8x4xf32>
    %252 = arith.addf %244, %251 : vector<8x8x4xf32>
    %c1_158 = arith.constant 1 : index
    %c5_159 = arith.constant 5 : index
    %c0_160 = arith.constant 0 : index
    %253 = vector.load %arg4[%c1_158, %c5_159, %c0_160] : memref<4x9x4xf32, #tpu.memory_space<vmem>>, vector<1x1x4xf32>
    %254 = vector.shape_cast %253 : vector<1x1x4xf32> to vector<4xf32>
    %c5_161 = arith.constant 5 : index
    %c1_162 = arith.constant 1 : index
    %c2_163 = arith.constant 2 : index
    %c0_164 = arith.constant 0 : index
    %255 = vector.load %arg11[%c5_161, %c1_162, %c2_163, %c0_164] : memref<8x10x10x4xf32, #tpu.memory_space<vmem>>, vector<1x8x8x4xf32>
    %256 = vector.shape_cast %255 : vector<1x8x8x4xf32> to vector<8x8x4xf32>
    %257 = vector.shape_cast %254 : vector<4xf32> to vector<1x1x4xf32>
    %258 = vector.broadcast %257 : vector<1x1x4xf32> to vector<8x8x4xf32>
    %259 = arith.mulf %258, %256 : vector<8x8x4xf32>
    %260 = arith.addf %252, %259 : vector<8x8x4xf32>
    %c1_165 = arith.constant 1 : index
    %c6_166 = arith.constant 6 : index
    %c0_167 = arith.constant 0 : index
    %261 = vector.load %arg4[%c1_165, %c6_166, %c0_167] : memref<4x9x4xf32, #tpu.memory_space<vmem>>, vector<1x1x4xf32>
    %262 = vector.shape_cast %261 : vector<1x1x4xf32> to vector<4xf32>
    %c5_168 = arith.constant 5 : index
    %c2_169 = arith.constant 2 : index
    %c0_170 = arith.constant 0 : index
    %c0_171 = arith.constant 0 : index
    %263 = vector.load %arg11[%c5_168, %c2_169, %c0_170, %c0_171] : memref<8x10x10x4xf32, #tpu.memory_space<vmem>>, vector<1x8x8x4xf32>
    %264 = vector.shape_cast %263 : vector<1x8x8x4xf32> to vector<8x8x4xf32>
    %265 = vector.shape_cast %262 : vector<4xf32> to vector<1x1x4xf32>
    %266 = vector.broadcast %265 : vector<1x1x4xf32> to vector<8x8x4xf32>
    %267 = arith.mulf %266, %264 : vector<8x8x4xf32>
    %268 = arith.addf %260, %267 : vector<8x8x4xf32>
    %c1_172 = arith.constant 1 : index
    %c7_173 = arith.constant 7 : index
    %c0_174 = arith.constant 0 : index
    %269 = vector.load %arg4[%c1_172, %c7_173, %c0_174] : memref<4x9x4xf32, #tpu.memory_space<vmem>>, vector<1x1x4xf32>
    %270 = vector.shape_cast %269 : vector<1x1x4xf32> to vector<4xf32>
    %c5_175 = arith.constant 5 : index
    %c2_176 = arith.constant 2 : index
    %c1_177 = arith.constant 1 : index
    %c0_178 = arith.constant 0 : index
    %271 = vector.load %arg11[%c5_175, %c2_176, %c1_177, %c0_178] : memref<8x10x10x4xf32, #tpu.memory_space<vmem>>, vector<1x8x8x4xf32>
    %272 = vector.shape_cast %271 : vector<1x8x8x4xf32> to vector<8x8x4xf32>
    %273 = vector.shape_cast %270 : vector<4xf32> to vector<1x1x4xf32>
    %274 = vector.broadcast %273 : vector<1x1x4xf32> to vector<8x8x4xf32>
    %275 = arith.mulf %274, %272 : vector<8x8x4xf32>
    %276 = arith.addf %268, %275 : vector<8x8x4xf32>
    %c1_179 = arith.constant 1 : index
    %c8_180 = arith.constant 8 : index
    %c0_181 = arith.constant 0 : index
    %277 = vector.load %arg4[%c1_179, %c8_180, %c0_181] : memref<4x9x4xf32, #tpu.memory_space<vmem>>, vector<1x1x4xf32>
    %278 = vector.shape_cast %277 : vector<1x1x4xf32> to vector<4xf32>
    %c5_182 = arith.constant 5 : index
    %c2_183 = arith.constant 2 : index
    %c2_184 = arith.constant 2 : index
    %c0_185 = arith.constant 0 : index
    %279 = vector.load %arg11[%c5_182, %c2_183, %c2_184, %c0_185] : memref<8x10x10x4xf32, #tpu.memory_space<vmem>>, vector<1x8x8x4xf32>
    %280 = vector.shape_cast %279 : vector<1x8x8x4xf32> to vector<8x8x4xf32>
    %281 = vector.shape_cast %278 : vector<4xf32> to vector<1x1x4xf32>
    %282 = vector.broadcast %281 : vector<1x1x4xf32> to vector<8x8x4xf32>
    %283 = arith.mulf %282, %280 : vector<8x8x4xf32>
    %284 = arith.addf %276, %283 : vector<8x8x4xf32>
    %c1_186 = arith.constant 1 : index
    %c0_187 = arith.constant 0 : index
    %285 = vector.load %arg5[%c1_186, %c0_187] : memref<4x4xf32, #tpu.memory_space<vmem>>, vector<1x4xf32>
    %286 = vector.shape_cast %285 : vector<1x4xf32> to vector<4xf32>
    %287 = vector.shape_cast %286 : vector<4xf32> to vector<1x1x4xf32>
    %288 = vector.broadcast %287 : vector<1x1x4xf32> to vector<8x8x4xf32>
    %289 = arith.mulf %284, %288 : vector<8x8x4xf32>
    %cst_188 = arith.constant 0.000000e+00 : f32
    %290 = vector.broadcast %cst_188 : f32 to vector<8x8x4xf32>
    %c2_189 = arith.constant 2 : index
    %c0_190 = arith.constant 0 : index
    %c0_191 = arith.constant 0 : index
    %291 = vector.load %arg4[%c2_189, %c0_190, %c0_191] : memref<4x9x4xf32, #tpu.memory_space<vmem>>, vector<1x1x4xf32>
    %292 = vector.shape_cast %291 : vector<1x1x4xf32> to vector<4xf32>
    %c6_192 = arith.constant 6 : index
    %c0_193 = arith.constant 0 : index
    %c0_194 = arith.constant 0 : index
    %c0_195 = arith.constant 0 : index
    %293 = vector.load %arg11[%c6_192, %c0_193, %c0_194, %c0_195] : memref<8x10x10x4xf32, #tpu.memory_space<vmem>>, vector<1x8x8x4xf32>
    %294 = vector.shape_cast %293 : vector<1x8x8x4xf32> to vector<8x8x4xf32>
    %295 = vector.shape_cast %292 : vector<4xf32> to vector<1x1x4xf32>
    %296 = vector.broadcast %295 : vector<1x1x4xf32> to vector<8x8x4xf32>
    %297 = arith.mulf %296, %294 : vector<8x8x4xf32>
    %298 = arith.addf %290, %297 : vector<8x8x4xf32>
    %c2_196 = arith.constant 2 : index
    %c1_197 = arith.constant 1 : index
    %c0_198 = arith.constant 0 : index
    %299 = vector.load %arg4[%c2_196, %c1_197, %c0_198] : memref<4x9x4xf32, #tpu.memory_space<vmem>>, vector<1x1x4xf32>
    %300 = vector.shape_cast %299 : vector<1x1x4xf32> to vector<4xf32>
    %c6_199 = arith.constant 6 : index
    %c0_200 = arith.constant 0 : index
    %c1_201 = arith.constant 1 : index
    %c0_202 = arith.constant 0 : index
    %301 = vector.load %arg11[%c6_199, %c0_200, %c1_201, %c0_202] : memref<8x10x10x4xf32, #tpu.memory_space<vmem>>, vector<1x8x8x4xf32>
    %302 = vector.shape_cast %301 : vector<1x8x8x4xf32> to vector<8x8x4xf32>
    %303 = vector.shape_cast %300 : vector<4xf32> to vector<1x1x4xf32>
    %304 = vector.broadcast %303 : vector<1x1x4xf32> to vector<8x8x4xf32>
    %305 = arith.mulf %304, %302 : vector<8x8x4xf32>
    %306 = arith.addf %298, %305 : vector<8x8x4xf32>
    %c2_203 = arith.constant 2 : index
    %c2_204 = arith.constant 2 : index
    %c0_205 = arith.constant 0 : index
    %307 = vector.load %arg4[%c2_203, %c2_204, %c0_205] : memref<4x9x4xf32, #tpu.memory_space<vmem>>, vector<1x1x4xf32>
    %308 = vector.shape_cast %307 : vector<1x1x4xf32> to vector<4xf32>
    %c6_206 = arith.constant 6 : index
    %c0_207 = arith.constant 0 : index
    %c2_208 = arith.constant 2 : index
    %c0_209 = arith.constant 0 : index
    %309 = vector.load %arg11[%c6_206, %c0_207, %c2_208, %c0_209] : memref<8x10x10x4xf32, #tpu.memory_space<vmem>>, vector<1x8x8x4xf32>
    %310 = vector.shape_cast %309 : vector<1x8x8x4xf32> to vector<8x8x4xf32>
    %311 = vector.shape_cast %308 : vector<4xf32> to vector<1x1x4xf32>
    %312 = vector.broadcast %311 : vector<1x1x4xf32> to vector<8x8x4xf32>
    %313 = arith.mulf %312, %310 : vector<8x8x4xf32>
    %314 = arith.addf %306, %313 : vector<8x8x4xf32>
    %c2_210 = arith.constant 2 : index
    %c3_211 = arith.constant 3 : index
    %c0_212 = arith.constant 0 : index
    %315 = vector.load %arg4[%c2_210, %c3_211, %c0_212] : memref<4x9x4xf32, #tpu.memory_space<vmem>>, vector<1x1x4xf32>
    %316 = vector.shape_cast %315 : vector<1x1x4xf32> to vector<4xf32>
    %c6_213 = arith.constant 6 : index
    %c1_214 = arith.constant 1 : index
    %c0_215 = arith.constant 0 : index
    %c0_216 = arith.constant 0 : index
    %317 = vector.load %arg11[%c6_213, %c1_214, %c0_215, %c0_216] : memref<8x10x10x4xf32, #tpu.memory_space<vmem>>, vector<1x8x8x4xf32>
    %318 = vector.shape_cast %317 : vector<1x8x8x4xf32> to vector<8x8x4xf32>
    %319 = vector.shape_cast %316 : vector<4xf32> to vector<1x1x4xf32>
    %320 = vector.broadcast %319 : vector<1x1x4xf32> to vector<8x8x4xf32>
    %321 = arith.mulf %320, %318 : vector<8x8x4xf32>
    %322 = arith.addf %314, %321 : vector<8x8x4xf32>
    %c2_217 = arith.constant 2 : index
    %c4_218 = arith.constant 4 : index
    %c0_219 = arith.constant 0 : index
    %323 = vector.load %arg4[%c2_217, %c4_218, %c0_219] : memref<4x9x4xf32, #tpu.memory_space<vmem>>, vector<1x1x4xf32>
    %324 = vector.shape_cast %323 : vector<1x1x4xf32> to vector<4xf32>
    %c6_220 = arith.constant 6 : index
    %c1_221 = arith.constant 1 : index
    %c1_222 = arith.constant 1 : index
    %c0_223 = arith.constant 0 : index
    %325 = vector.load %arg11[%c6_220, %c1_221, %c1_222, %c0_223] : memref<8x10x10x4xf32, #tpu.memory_space<vmem>>, vector<1x8x8x4xf32>
    %326 = vector.shape_cast %325 : vector<1x8x8x4xf32> to vector<8x8x4xf32>
    %327 = vector.shape_cast %324 : vector<4xf32> to vector<1x1x4xf32>
    %328 = vector.broadcast %327 : vector<1x1x4xf32> to vector<8x8x4xf32>
    %329 = arith.mulf %328, %326 : vector<8x8x4xf32>
    %330 = arith.addf %322, %329 : vector<8x8x4xf32>
    %c2_224 = arith.constant 2 : index
    %c5_225 = arith.constant 5 : index
    %c0_226 = arith.constant 0 : index
    %331 = vector.load %arg4[%c2_224, %c5_225, %c0_226] : memref<4x9x4xf32, #tpu.memory_space<vmem>>, vector<1x1x4xf32>
    %332 = vector.shape_cast %331 : vector<1x1x4xf32> to vector<4xf32>
    %c6_227 = arith.constant 6 : index
    %c1_228 = arith.constant 1 : index
    %c2_229 = arith.constant 2 : index
    %c0_230 = arith.constant 0 : index
    %333 = vector.load %arg11[%c6_227, %c1_228, %c2_229, %c0_230] : memref<8x10x10x4xf32, #tpu.memory_space<vmem>>, vector<1x8x8x4xf32>
    %334 = vector.shape_cast %333 : vector<1x8x8x4xf32> to vector<8x8x4xf32>
    %335 = vector.shape_cast %332 : vector<4xf32> to vector<1x1x4xf32>
    %336 = vector.broadcast %335 : vector<1x1x4xf32> to vector<8x8x4xf32>
    %337 = arith.mulf %336, %334 : vector<8x8x4xf32>
    %338 = arith.addf %330, %337 : vector<8x8x4xf32>
    %c2_231 = arith.constant 2 : index
    %c6_232 = arith.constant 6 : index
    %c0_233 = arith.constant 0 : index
    %339 = vector.load %arg4[%c2_231, %c6_232, %c0_233] : memref<4x9x4xf32, #tpu.memory_space<vmem>>, vector<1x1x4xf32>
    %340 = vector.shape_cast %339 : vector<1x1x4xf32> to vector<4xf32>
    %c6_234 = arith.constant 6 : index
    %c2_235 = arith.constant 2 : index
    %c0_236 = arith.constant 0 : index
    %c0_237 = arith.constant 0 : index
    %341 = vector.load %arg11[%c6_234, %c2_235, %c0_236, %c0_237] : memref<8x10x10x4xf32, #tpu.memory_space<vmem>>, vector<1x8x8x4xf32>
    %342 = vector.shape_cast %341 : vector<1x8x8x4xf32> to vector<8x8x4xf32>
    %343 = vector.shape_cast %340 : vector<4xf32> to vector<1x1x4xf32>
    %344 = vector.broadcast %343 : vector<1x1x4xf32> to vector<8x8x4xf32>
    %345 = arith.mulf %344, %342 : vector<8x8x4xf32>
    %346 = arith.addf %338, %345 : vector<8x8x4xf32>
    %c2_238 = arith.constant 2 : index
    %c7_239 = arith.constant 7 : index
    %c0_240 = arith.constant 0 : index
    %347 = vector.load %arg4[%c2_238, %c7_239, %c0_240] : memref<4x9x4xf32, #tpu.memory_space<vmem>>, vector<1x1x4xf32>
    %348 = vector.shape_cast %347 : vector<1x1x4xf32> to vector<4xf32>
    %c6_241 = arith.constant 6 : index
    %c2_242 = arith.constant 2 : index
    %c1_243 = arith.constant 1 : index
    %c0_244 = arith.constant 0 : index
    %349 = vector.load %arg11[%c6_241, %c2_242, %c1_243, %c0_244] : memref<8x10x10x4xf32, #tpu.memory_space<vmem>>, vector<1x8x8x4xf32>
    %350 = vector.shape_cast %349 : vector<1x8x8x4xf32> to vector<8x8x4xf32>
    %351 = vector.shape_cast %348 : vector<4xf32> to vector<1x1x4xf32>
    %352 = vector.broadcast %351 : vector<1x1x4xf32> to vector<8x8x4xf32>
    %353 = arith.mulf %352, %350 : vector<8x8x4xf32>
    %354 = arith.addf %346, %353 : vector<8x8x4xf32>
    %c2_245 = arith.constant 2 : index
    %c8_246 = arith.constant 8 : index
    %c0_247 = arith.constant 0 : index
    %355 = vector.load %arg4[%c2_245, %c8_246, %c0_247] : memref<4x9x4xf32, #tpu.memory_space<vmem>>, vector<1x1x4xf32>
    %356 = vector.shape_cast %355 : vector<1x1x4xf32> to vector<4xf32>
    %c6_248 = arith.constant 6 : index
    %c2_249 = arith.constant 2 : index
    %c2_250 = arith.constant 2 : index
    %c0_251 = arith.constant 0 : index
    %357 = vector.load %arg11[%c6_248, %c2_249, %c2_250, %c0_251] : memref<8x10x10x4xf32, #tpu.memory_space<vmem>>, vector<1x8x8x4xf32>
    %358 = vector.shape_cast %357 : vector<1x8x8x4xf32> to vector<8x8x4xf32>
    %359 = vector.shape_cast %356 : vector<4xf32> to vector<1x1x4xf32>
    %360 = vector.broadcast %359 : vector<1x1x4xf32> to vector<8x8x4xf32>
    %361 = arith.mulf %360, %358 : vector<8x8x4xf32>
    %362 = arith.addf %354, %361 : vector<8x8x4xf32>
    %c2_252 = arith.constant 2 : index
    %c0_253 = arith.constant 0 : index
    %363 = vector.load %arg5[%c2_252, %c0_253] : memref<4x4xf32, #tpu.memory_space<vmem>>, vector<1x4xf32>
    %364 = vector.shape_cast %363 : vector<1x4xf32> to vector<4xf32>
    %365 = vector.shape_cast %364 : vector<4xf32> to vector<1x1x4xf32>
    %366 = vector.broadcast %365 : vector<1x1x4xf32> to vector<8x8x4xf32>
    %367 = arith.mulf %362, %366 : vector<8x8x4xf32>
    %cst_254 = arith.constant 0.000000e+00 : f32
    %368 = vector.broadcast %cst_254 : f32 to vector<8x8x4xf32>
    %c3_255 = arith.constant 3 : index
    %c0_256 = arith.constant 0 : index
    %c0_257 = arith.constant 0 : index
    %369 = vector.load %arg4[%c3_255, %c0_256, %c0_257] : memref<4x9x4xf32, #tpu.memory_space<vmem>>, vector<1x1x4xf32>
    %370 = vector.shape_cast %369 : vector<1x1x4xf32> to vector<4xf32>
    %c7_258 = arith.constant 7 : index
    %c0_259 = arith.constant 0 : index
    %c0_260 = arith.constant 0 : index
    %c0_261 = arith.constant 0 : index
    %371 = vector.load %arg11[%c7_258, %c0_259, %c0_260, %c0_261] : memref<8x10x10x4xf32, #tpu.memory_space<vmem>>, vector<1x8x8x4xf32>
    %372 = vector.shape_cast %371 : vector<1x8x8x4xf32> to vector<8x8x4xf32>
    %373 = vector.shape_cast %370 : vector<4xf32> to vector<1x1x4xf32>
    %374 = vector.broadcast %373 : vector<1x1x4xf32> to vector<8x8x4xf32>
    %375 = arith.mulf %374, %372 : vector<8x8x4xf32>
    %376 = arith.addf %368, %375 : vector<8x8x4xf32>
    %c3_262 = arith.constant 3 : index
    %c1_263 = arith.constant 1 : index
    %c0_264 = arith.constant 0 : index
    %377 = vector.load %arg4[%c3_262, %c1_263, %c0_264] : memref<4x9x4xf32, #tpu.memory_space<vmem>>, vector<1x1x4xf32>
    %378 = vector.shape_cast %377 : vector<1x1x4xf32> to vector<4xf32>
    %c7_265 = arith.constant 7 : index
    %c0_266 = arith.constant 0 : index
    %c1_267 = arith.constant 1 : index
    %c0_268 = arith.constant 0 : index
    %379 = vector.load %arg11[%c7_265, %c0_266, %c1_267, %c0_268] : memref<8x10x10x4xf32, #tpu.memory_space<vmem>>, vector<1x8x8x4xf32>
    %380 = vector.shape_cast %379 : vector<1x8x8x4xf32> to vector<8x8x4xf32>
    %381 = vector.shape_cast %378 : vector<4xf32> to vector<1x1x4xf32>
    %382 = vector.broadcast %381 : vector<1x1x4xf32> to vector<8x8x4xf32>
    %383 = arith.mulf %382, %380 : vector<8x8x4xf32>
    %384 = arith.addf %376, %383 : vector<8x8x4xf32>
    %c3_269 = arith.constant 3 : index
    %c2_270 = arith.constant 2 : index
    %c0_271 = arith.constant 0 : index
    %385 = vector.load %arg4[%c3_269, %c2_270, %c0_271] : memref<4x9x4xf32, #tpu.memory_space<vmem>>, vector<1x1x4xf32>
    %386 = vector.shape_cast %385 : vector<1x1x4xf32> to vector<4xf32>
    %c7_272 = arith.constant 7 : index
    %c0_273 = arith.constant 0 : index
    %c2_274 = arith.constant 2 : index
    %c0_275 = arith.constant 0 : index
    %387 = vector.load %arg11[%c7_272, %c0_273, %c2_274, %c0_275] : memref<8x10x10x4xf32, #tpu.memory_space<vmem>>, vector<1x8x8x4xf32>
    %388 = vector.shape_cast %387 : vector<1x8x8x4xf32> to vector<8x8x4xf32>
    %389 = vector.shape_cast %386 : vector<4xf32> to vector<1x1x4xf32>
    %390 = vector.broadcast %389 : vector<1x1x4xf32> to vector<8x8x4xf32>
    %391 = arith.mulf %390, %388 : vector<8x8x4xf32>
    %392 = arith.addf %384, %391 : vector<8x8x4xf32>
    %c3_276 = arith.constant 3 : index
    %c3_277 = arith.constant 3 : index
    %c0_278 = arith.constant 0 : index
    %393 = vector.load %arg4[%c3_276, %c3_277, %c0_278] : memref<4x9x4xf32, #tpu.memory_space<vmem>>, vector<1x1x4xf32>
    %394 = vector.shape_cast %393 : vector<1x1x4xf32> to vector<4xf32>
    %c7_279 = arith.constant 7 : index
    %c1_280 = arith.constant 1 : index
    %c0_281 = arith.constant 0 : index
    %c0_282 = arith.constant 0 : index
    %395 = vector.load %arg11[%c7_279, %c1_280, %c0_281, %c0_282] : memref<8x10x10x4xf32, #tpu.memory_space<vmem>>, vector<1x8x8x4xf32>
    %396 = vector.shape_cast %395 : vector<1x8x8x4xf32> to vector<8x8x4xf32>
    %397 = vector.shape_cast %394 : vector<4xf32> to vector<1x1x4xf32>
    %398 = vector.broadcast %397 : vector<1x1x4xf32> to vector<8x8x4xf32>
    %399 = arith.mulf %398, %396 : vector<8x8x4xf32>
    %400 = arith.addf %392, %399 : vector<8x8x4xf32>
    %c3_283 = arith.constant 3 : index
    %c4_284 = arith.constant 4 : index
    %c0_285 = arith.constant 0 : index
    %401 = vector.load %arg4[%c3_283, %c4_284, %c0_285] : memref<4x9x4xf32, #tpu.memory_space<vmem>>, vector<1x1x4xf32>
    %402 = vector.shape_cast %401 : vector<1x1x4xf32> to vector<4xf32>
    %c7_286 = arith.constant 7 : index
    %c1_287 = arith.constant 1 : index
    %c1_288 = arith.constant 1 : index
    %c0_289 = arith.constant 0 : index
    %403 = vector.load %arg11[%c7_286, %c1_287, %c1_288, %c0_289] : memref<8x10x10x4xf32, #tpu.memory_space<vmem>>, vector<1x8x8x4xf32>
    %404 = vector.shape_cast %403 : vector<1x8x8x4xf32> to vector<8x8x4xf32>
    %405 = vector.shape_cast %402 : vector<4xf32> to vector<1x1x4xf32>
    %406 = vector.broadcast %405 : vector<1x1x4xf32> to vector<8x8x4xf32>
    %407 = arith.mulf %406, %404 : vector<8x8x4xf32>
    %408 = arith.addf %400, %407 : vector<8x8x4xf32>
    %c3_290 = arith.constant 3 : index
    %c5_291 = arith.constant 5 : index
    %c0_292 = arith.constant 0 : index
    %409 = vector.load %arg4[%c3_290, %c5_291, %c0_292] : memref<4x9x4xf32, #tpu.memory_space<vmem>>, vector<1x1x4xf32>
    %410 = vector.shape_cast %409 : vector<1x1x4xf32> to vector<4xf32>
    %c7_293 = arith.constant 7 : index
    %c1_294 = arith.constant 1 : index
    %c2_295 = arith.constant 2 : index
    %c0_296 = arith.constant 0 : index
    %411 = vector.load %arg11[%c7_293, %c1_294, %c2_295, %c0_296] : memref<8x10x10x4xf32, #tpu.memory_space<vmem>>, vector<1x8x8x4xf32>
    %412 = vector.shape_cast %411 : vector<1x8x8x4xf32> to vector<8x8x4xf32>
    %413 = vector.shape_cast %410 : vector<4xf32> to vector<1x1x4xf32>
    %414 = vector.broadcast %413 : vector<1x1x4xf32> to vector<8x8x4xf32>
    %415 = arith.mulf %414, %412 : vector<8x8x4xf32>
    %416 = arith.addf %408, %415 : vector<8x8x4xf32>
    %c3_297 = arith.constant 3 : index
    %c6_298 = arith.constant 6 : index
    %c0_299 = arith.constant 0 : index
    %417 = vector.load %arg4[%c3_297, %c6_298, %c0_299] : memref<4x9x4xf32, #tpu.memory_space<vmem>>, vector<1x1x4xf32>
    %418 = vector.shape_cast %417 : vector<1x1x4xf32> to vector<4xf32>
    %c7_300 = arith.constant 7 : index
    %c2_301 = arith.constant 2 : index
    %c0_302 = arith.constant 0 : index
    %c0_303 = arith.constant 0 : index
    %419 = vector.load %arg11[%c7_300, %c2_301, %c0_302, %c0_303] : memref<8x10x10x4xf32, #tpu.memory_space<vmem>>, vector<1x8x8x4xf32>
    %420 = vector.shape_cast %419 : vector<1x8x8x4xf32> to vector<8x8x4xf32>
    %421 = vector.shape_cast %418 : vector<4xf32> to vector<1x1x4xf32>
    %422 = vector.broadcast %421 : vector<1x1x4xf32> to vector<8x8x4xf32>
    %423 = arith.mulf %422, %420 : vector<8x8x4xf32>
    %424 = arith.addf %416, %423 : vector<8x8x4xf32>
    %c3_304 = arith.constant 3 : index
    %c7_305 = arith.constant 7 : index
    %c0_306 = arith.constant 0 : index
    %425 = vector.load %arg4[%c3_304, %c7_305, %c0_306] : memref<4x9x4xf32, #tpu.memory_space<vmem>>, vector<1x1x4xf32>
    %426 = vector.shape_cast %425 : vector<1x1x4xf32> to vector<4xf32>
    %c7_307 = arith.constant 7 : index
    %c2_308 = arith.constant 2 : index
    %c1_309 = arith.constant 1 : index
    %c0_310 = arith.constant 0 : index
    %427 = vector.load %arg11[%c7_307, %c2_308, %c1_309, %c0_310] : memref<8x10x10x4xf32, #tpu.memory_space<vmem>>, vector<1x8x8x4xf32>
    %428 = vector.shape_cast %427 : vector<1x8x8x4xf32> to vector<8x8x4xf32>
    %429 = vector.shape_cast %426 : vector<4xf32> to vector<1x1x4xf32>
    %430 = vector.broadcast %429 : vector<1x1x4xf32> to vector<8x8x4xf32>
    %431 = arith.mulf %430, %428 : vector<8x8x4xf32>
    %432 = arith.addf %424, %431 : vector<8x8x4xf32>
    %c3_311 = arith.constant 3 : index
    %c8_312 = arith.constant 8 : index
    %c0_313 = arith.constant 0 : index
    %433 = vector.load %arg4[%c3_311, %c8_312, %c0_313] : memref<4x9x4xf32, #tpu.memory_space<vmem>>, vector<1x1x4xf32>
    %434 = vector.shape_cast %433 : vector<1x1x4xf32> to vector<4xf32>
    %c7_314 = arith.constant 7 : index
    %c2_315 = arith.constant 2 : index
    %c2_316 = arith.constant 2 : index
    %c0_317 = arith.constant 0 : index
    %435 = vector.load %arg11[%c7_314, %c2_315, %c2_316, %c0_317] : memref<8x10x10x4xf32, #tpu.memory_space<vmem>>, vector<1x8x8x4xf32>
    %436 = vector.shape_cast %435 : vector<1x8x8x4xf32> to vector<8x8x4xf32>
    %437 = vector.shape_cast %434 : vector<4xf32> to vector<1x1x4xf32>
    %438 = vector.broadcast %437 : vector<1x1x4xf32> to vector<8x8x4xf32>
    %439 = arith.mulf %438, %436 : vector<8x8x4xf32>
    %440 = arith.addf %432, %439 : vector<8x8x4xf32>
    %c3_318 = arith.constant 3 : index
    %c0_319 = arith.constant 0 : index
    %441 = vector.load %arg5[%c3_318, %c0_319] : memref<4x4xf32, #tpu.memory_space<vmem>>, vector<1x4xf32>
    %442 = vector.shape_cast %441 : vector<1x4xf32> to vector<4xf32>
    %443 = vector.shape_cast %442 : vector<4xf32> to vector<1x1x4xf32>
    %444 = vector.broadcast %443 : vector<1x1x4xf32> to vector<8x8x4xf32>
    %445 = arith.mulf %440, %444 : vector<8x8x4xf32>
    %c0_320 = arith.constant 0 : index
    %446 = memref.load %arg3[%c0_320] : memref<16xf32, #tpu.memory_space<smem>>
    %447 = vector.broadcast %446 : f32 to vector<8x8x4xf32>
    %448 = arith.mulf %447, %211 : vector<8x8x4xf32>
    %c4_321 = arith.constant 4 : index
    %449 = memref.load %arg3[%c4_321] : memref<16xf32, #tpu.memory_space<smem>>
    %450 = vector.broadcast %449 : f32 to vector<8x8x4xf32>
    %451 = arith.mulf %450, %289 : vector<8x8x4xf32>
    %452 = arith.addf %448, %451 : vector<8x8x4xf32>
    %c8_322 = arith.constant 8 : index
    %453 = memref.load %arg3[%c8_322] : memref<16xf32, #tpu.memory_space<smem>>
    %454 = vector.broadcast %453 : f32 to vector<8x8x4xf32>
    %455 = arith.mulf %454, %367 : vector<8x8x4xf32>
    %456 = arith.addf %452, %455 : vector<8x8x4xf32>
    %c12_323 = arith.constant 12 : index
    %457 = memref.load %arg3[%c12_323] : memref<16xf32, #tpu.memory_space<smem>>
    %458 = vector.broadcast %457 : f32 to vector<8x8x4xf32>
    %459 = arith.mulf %458, %445 : vector<8x8x4xf32>
    %460 = arith.addf %456, %459 : vector<8x8x4xf32>
    %c1_324 = arith.constant 1 : index
    %461 = memref.load %arg3[%c1_324] : memref<16xf32, #tpu.memory_space<smem>>
    %462 = vector.broadcast %461 : f32 to vector<8x8x4xf32>
    %463 = arith.mulf %462, %211 : vector<8x8x4xf32>
    %c5_325 = arith.constant 5 : index
    %464 = memref.load %arg3[%c5_325] : memref<16xf32, #tpu.memory_space<smem>>
    %465 = vector.broadcast %464 : f32 to vector<8x8x4xf32>
    %466 = arith.mulf %465, %289 : vector<8x8x4xf32>
    %467 = arith.addf %463, %466 : vector<8x8x4xf32>
    %c9_326 = arith.constant 9 : index
    %468 = memref.load %arg3[%c9_326] : memref<16xf32, #tpu.memory_space<smem>>
    %469 = vector.broadcast %468 : f32 to vector<8x8x4xf32>
    %470 = arith.mulf %469, %367 : vector<8x8x4xf32>
    %471 = arith.addf %467, %470 : vector<8x8x4xf32>
    %c13_327 = arith.constant 13 : index
    %472 = memref.load %arg3[%c13_327] : memref<16xf32, #tpu.memory_space<smem>>
    %473 = vector.broadcast %472 : f32 to vector<8x8x4xf32>
    %474 = arith.mulf %473, %445 : vector<8x8x4xf32>
    %475 = arith.addf %471, %474 : vector<8x8x4xf32>
    %c2_328 = arith.constant 2 : index
    %476 = memref.load %arg3[%c2_328] : memref<16xf32, #tpu.memory_space<smem>>
    %477 = vector.broadcast %476 : f32 to vector<8x8x4xf32>
    %478 = arith.mulf %477, %211 : vector<8x8x4xf32>
    %c6_329 = arith.constant 6 : index
    %479 = memref.load %arg3[%c6_329] : memref<16xf32, #tpu.memory_space<smem>>
    %480 = vector.broadcast %479 : f32 to vector<8x8x4xf32>
    %481 = arith.mulf %480, %289 : vector<8x8x4xf32>
    %482 = arith.addf %478, %481 : vector<8x8x4xf32>
    %c10_330 = arith.constant 10 : index
    %483 = memref.load %arg3[%c10_330] : memref<16xf32, #tpu.memory_space<smem>>
    %484 = vector.broadcast %483 : f32 to vector<8x8x4xf32>
    %485 = arith.mulf %484, %367 : vector<8x8x4xf32>
    %486 = arith.addf %482, %485 : vector<8x8x4xf32>
    %c14_331 = arith.constant 14 : index
    %487 = memref.load %arg3[%c14_331] : memref<16xf32, #tpu.memory_space<smem>>
    %488 = vector.broadcast %487 : f32 to vector<8x8x4xf32>
    %489 = arith.mulf %488, %445 : vector<8x8x4xf32>
    %490 = arith.addf %486, %489 : vector<8x8x4xf32>
    %c3_332 = arith.constant 3 : index
    %491 = memref.load %arg3[%c3_332] : memref<16xf32, #tpu.memory_space<smem>>
    %492 = vector.broadcast %491 : f32 to vector<8x8x4xf32>
    %493 = arith.mulf %492, %211 : vector<8x8x4xf32>
    %c7_333 = arith.constant 7 : index
    %494 = memref.load %arg3[%c7_333] : memref<16xf32, #tpu.memory_space<smem>>
    %495 = vector.broadcast %494 : f32 to vector<8x8x4xf32>
    %496 = arith.mulf %495, %289 : vector<8x8x4xf32>
    %497 = arith.addf %493, %496 : vector<8x8x4xf32>
    %c11_334 = arith.constant 11 : index
    %498 = memref.load %arg3[%c11_334] : memref<16xf32, #tpu.memory_space<smem>>
    %499 = vector.broadcast %498 : f32 to vector<8x8x4xf32>
    %500 = arith.mulf %499, %367 : vector<8x8x4xf32>
    %501 = arith.addf %497, %500 : vector<8x8x4xf32>
    %c15_335 = arith.constant 15 : index
    %502 = memref.load %arg3[%c15_335] : memref<16xf32, #tpu.memory_space<smem>>
    %503 = vector.broadcast %502 : f32 to vector<8x8x4xf32>
    %504 = arith.mulf %503, %445 : vector<8x8x4xf32>
    %505 = arith.addf %501, %504 : vector<8x8x4xf32>
    %c0_336 = arith.constant 0 : index
    %c0_337 = arith.constant 0 : index
    %506 = vector.load %arg7[%c0_336, %c0_337] : memref<1x4xf32, #tpu.memory_space<vmem>>, vector<1x4xf32>
    %c0_338 = arith.constant 0 : index
    %c0_339 = arith.constant 0 : index
    %507 = vector.load %arg8[%c0_338, %c0_339] : memref<1x4xf32, #tpu.memory_space<vmem>>, vector<1x4xf32>
    %cst_340 = arith.constant 0.000000e+00 : f32
    %508 = vector.broadcast %cst_340 : f32 to vector<8x8x4xf32>
    %c0_341 = arith.constant 0 : index
    %c0_342 = arith.constant 0 : index
    %509 = vector.load %arg6[%c0_341, %c0_342] : memref<9x4xf32, #tpu.memory_space<vmem>>, vector<1x4xf32>
    %510 = vector.shape_cast %509 : vector<1x4xf32> to vector<4xf32>
    %c3_343 = arith.constant 3 : index
    %c0_344 = arith.constant 0 : index
    %c0_345 = arith.constant 0 : index
    %c0_346 = arith.constant 0 : index
    %511 = vector.load %arg11[%c3_343, %c0_344, %c0_345, %c0_346] : memref<8x10x10x4xf32, #tpu.memory_space<vmem>>, vector<1x8x8x4xf32>
    %512 = vector.shape_cast %511 : vector<1x8x8x4xf32> to vector<8x8x4xf32>
    %513 = vector.shape_cast %510 : vector<4xf32> to vector<1x1x4xf32>
    %514 = vector.broadcast %513 : vector<1x1x4xf32> to vector<8x8x4xf32>
    %515 = arith.mulf %514, %512 : vector<8x8x4xf32>
    %516 = arith.addf %508, %515 : vector<8x8x4xf32>
    %c1_347 = arith.constant 1 : index
    %c0_348 = arith.constant 0 : index
    %517 = vector.load %arg6[%c1_347, %c0_348] : memref<9x4xf32, #tpu.memory_space<vmem>>, vector<1x4xf32>
    %518 = vector.shape_cast %517 : vector<1x4xf32> to vector<4xf32>
    %c2_349 = arith.constant 2 : index
    %c0_350 = arith.constant 0 : index
    %c1_351 = arith.constant 1 : index
    %c0_352 = arith.constant 0 : index
    %519 = vector.load %arg11[%c2_349, %c0_350, %c1_351, %c0_352] : memref<8x10x10x4xf32, #tpu.memory_space<vmem>>, vector<1x8x8x4xf32>
    %520 = vector.shape_cast %519 : vector<1x8x8x4xf32> to vector<8x8x4xf32>
    %521 = vector.shape_cast %518 : vector<4xf32> to vector<1x1x4xf32>
    %522 = vector.broadcast %521 : vector<1x1x4xf32> to vector<8x8x4xf32>
    %523 = arith.mulf %522, %520 : vector<8x8x4xf32>
    %524 = arith.addf %516, %523 : vector<8x8x4xf32>
    %c2_353 = arith.constant 2 : index
    %c0_354 = arith.constant 0 : index
    %525 = vector.load %arg6[%c2_353, %c0_354] : memref<9x4xf32, #tpu.memory_space<vmem>>, vector<1x4xf32>
    %526 = vector.shape_cast %525 : vector<1x4xf32> to vector<4xf32>
    %c3_355 = arith.constant 3 : index
    %c0_356 = arith.constant 0 : index
    %c1_357 = arith.constant 1 : index
    %c0_358 = arith.constant 0 : index
    %527 = vector.load %arg11[%c3_355, %c0_356, %c1_357, %c0_358] : memref<8x10x10x4xf32, #tpu.memory_space<vmem>>, vector<1x8x8x4xf32>
    %528 = vector.shape_cast %527 : vector<1x8x8x4xf32> to vector<8x8x4xf32>
    %529 = vector.shape_cast %526 : vector<4xf32> to vector<1x1x4xf32>
    %530 = vector.broadcast %529 : vector<1x1x4xf32> to vector<8x8x4xf32>
    %531 = arith.mulf %530, %528 : vector<8x8x4xf32>
    %532 = arith.addf %524, %531 : vector<8x8x4xf32>
    %c3_359 = arith.constant 3 : index
    %c0_360 = arith.constant 0 : index
    %533 = vector.load %arg6[%c3_359, %c0_360] : memref<9x4xf32, #tpu.memory_space<vmem>>, vector<1x4xf32>
    %534 = vector.shape_cast %533 : vector<1x4xf32> to vector<4xf32>
    %c1_361 = arith.constant 1 : index
    %c1_362 = arith.constant 1 : index
    %c0_363 = arith.constant 0 : index
    %c0_364 = arith.constant 0 : index
    %535 = vector.load %arg11[%c1_361, %c1_362, %c0_363, %c0_364] : memref<8x10x10x4xf32, #tpu.memory_space<vmem>>, vector<1x8x8x4xf32>
    %536 = vector.shape_cast %535 : vector<1x8x8x4xf32> to vector<8x8x4xf32>
    %537 = vector.shape_cast %534 : vector<4xf32> to vector<1x1x4xf32>
    %538 = vector.broadcast %537 : vector<1x1x4xf32> to vector<8x8x4xf32>
    %539 = arith.mulf %538, %536 : vector<8x8x4xf32>
    %540 = arith.addf %532, %539 : vector<8x8x4xf32>
    %c4_365 = arith.constant 4 : index
    %c0_366 = arith.constant 0 : index
    %541 = vector.load %arg6[%c4_365, %c0_366] : memref<9x4xf32, #tpu.memory_space<vmem>>, vector<1x4xf32>
    %542 = vector.shape_cast %541 : vector<1x4xf32> to vector<4xf32>
    %c0_367 = arith.constant 0 : index
    %c1_368 = arith.constant 1 : index
    %c1_369 = arith.constant 1 : index
    %c0_370 = arith.constant 0 : index
    %543 = vector.load %arg11[%c0_367, %c1_368, %c1_369, %c0_370] : memref<8x10x10x4xf32, #tpu.memory_space<vmem>>, vector<1x8x8x4xf32>
    %544 = vector.shape_cast %543 : vector<1x8x8x4xf32> to vector<8x8x4xf32>
    %545 = vector.shape_cast %542 : vector<4xf32> to vector<1x1x4xf32>
    %546 = vector.broadcast %545 : vector<1x1x4xf32> to vector<8x8x4xf32>
    %547 = arith.mulf %546, %544 : vector<8x8x4xf32>
    %548 = arith.addf %540, %547 : vector<8x8x4xf32>
    %c5_371 = arith.constant 5 : index
    %c0_372 = arith.constant 0 : index
    %549 = vector.load %arg6[%c5_371, %c0_372] : memref<9x4xf32, #tpu.memory_space<vmem>>, vector<1x4xf32>
    %550 = vector.shape_cast %549 : vector<1x4xf32> to vector<4xf32>
    %c1_373 = arith.constant 1 : index
    %c1_374 = arith.constant 1 : index
    %c1_375 = arith.constant 1 : index
    %c0_376 = arith.constant 0 : index
    %551 = vector.load %arg11[%c1_373, %c1_374, %c1_375, %c0_376] : memref<8x10x10x4xf32, #tpu.memory_space<vmem>>, vector<1x8x8x4xf32>
    %552 = vector.shape_cast %551 : vector<1x8x8x4xf32> to vector<8x8x4xf32>
    %553 = vector.shape_cast %550 : vector<4xf32> to vector<1x1x4xf32>
    %554 = vector.broadcast %553 : vector<1x1x4xf32> to vector<8x8x4xf32>
    %555 = arith.mulf %554, %552 : vector<8x8x4xf32>
    %556 = arith.addf %548, %555 : vector<8x8x4xf32>
    %c6_377 = arith.constant 6 : index
    %c0_378 = arith.constant 0 : index
    %557 = vector.load %arg6[%c6_377, %c0_378] : memref<9x4xf32, #tpu.memory_space<vmem>>, vector<1x4xf32>
    %558 = vector.shape_cast %557 : vector<1x4xf32> to vector<4xf32>
    %c3_379 = arith.constant 3 : index
    %c1_380 = arith.constant 1 : index
    %c0_381 = arith.constant 0 : index
    %c0_382 = arith.constant 0 : index
    %559 = vector.load %arg11[%c3_379, %c1_380, %c0_381, %c0_382] : memref<8x10x10x4xf32, #tpu.memory_space<vmem>>, vector<1x8x8x4xf32>
    %560 = vector.shape_cast %559 : vector<1x8x8x4xf32> to vector<8x8x4xf32>
    %561 = vector.shape_cast %558 : vector<4xf32> to vector<1x1x4xf32>
    %562 = vector.broadcast %561 : vector<1x1x4xf32> to vector<8x8x4xf32>
    %563 = arith.mulf %562, %560 : vector<8x8x4xf32>
    %564 = arith.addf %556, %563 : vector<8x8x4xf32>
    %c7_383 = arith.constant 7 : index
    %c0_384 = arith.constant 0 : index
    %565 = vector.load %arg6[%c7_383, %c0_384] : memref<9x4xf32, #tpu.memory_space<vmem>>, vector<1x4xf32>
    %566 = vector.shape_cast %565 : vector<1x4xf32> to vector<4xf32>
    %c2_385 = arith.constant 2 : index
    %c1_386 = arith.constant 1 : index
    %c1_387 = arith.constant 1 : index
    %c0_388 = arith.constant 0 : index
    %567 = vector.load %arg11[%c2_385, %c1_386, %c1_387, %c0_388] : memref<8x10x10x4xf32, #tpu.memory_space<vmem>>, vector<1x8x8x4xf32>
    %568 = vector.shape_cast %567 : vector<1x8x8x4xf32> to vector<8x8x4xf32>
    %569 = vector.shape_cast %566 : vector<4xf32> to vector<1x1x4xf32>
    %570 = vector.broadcast %569 : vector<1x1x4xf32> to vector<8x8x4xf32>
    %571 = arith.mulf %570, %568 : vector<8x8x4xf32>
    %572 = arith.addf %564, %571 : vector<8x8x4xf32>
    %c8_389 = arith.constant 8 : index
    %c0_390 = arith.constant 0 : index
    %573 = vector.load %arg6[%c8_389, %c0_390] : memref<9x4xf32, #tpu.memory_space<vmem>>, vector<1x4xf32>
    %574 = vector.shape_cast %573 : vector<1x4xf32> to vector<4xf32>
    %c3_391 = arith.constant 3 : index
    %c1_392 = arith.constant 1 : index
    %c1_393 = arith.constant 1 : index
    %c0_394 = arith.constant 0 : index
    %575 = vector.load %arg11[%c3_391, %c1_392, %c1_393, %c0_394] : memref<8x10x10x4xf32, #tpu.memory_space<vmem>>, vector<1x8x8x4xf32>
    %576 = vector.shape_cast %575 : vector<1x8x8x4xf32> to vector<8x8x4xf32>
    %577 = vector.shape_cast %574 : vector<4xf32> to vector<1x1x4xf32>
    %578 = vector.broadcast %577 : vector<1x1x4xf32> to vector<8x8x4xf32>
    %579 = arith.mulf %578, %576 : vector<8x8x4xf32>
    %580 = arith.addf %572, %579 : vector<8x8x4xf32>
    %581 = vector.shape_cast %506 : vector<1x4xf32> to vector<1x1x4xf32>
    %582 = vector.broadcast %581 : vector<1x1x4xf32> to vector<8x8x4xf32>
    %583 = arith.addf %580, %582 : vector<8x8x4xf32>
    %584 = vector.shape_cast %507 : vector<1x4xf32> to vector<1x1x4xf32>
    %585 = vector.broadcast %584 : vector<1x1x4xf32> to vector<8x8x4xf32>
    %586 = arith.mulf %583, %585 : vector<8x8x4xf32>
    %587 = arith.addf %586, %460 : vector<8x8x4xf32>
    %c0_395 = arith.constant 0 : index
    %c0_396 = arith.constant 0 : index
    %c0_397 = arith.constant 0 : index
    %c0_398 = arith.constant 0 : index
    %588 = vector.load %arg12[%c0_395, %c0_396, %c0_397, %c0_398] : memref<4x8x8x4xf32, #tpu.memory_space<vmem>>, vector<1x8x8x4xf32>
    %589 = vector.shape_cast %588 : vector<1x8x8x4xf32> to vector<8x8x4xf32>
    %590 = vector.shape_cast %587 : vector<8x8x4xf32> to vector<1x8x8x4xf32>
    tpu.vector_store %arg12[%c0_395, %c0_396, %c0_397, %c0_398], %590 {strides = array<i32>} : memref<4x8x8x4xf32, #tpu.memory_space<vmem>>, vector<1x8x8x4xf32>,
    %cst_399 = arith.constant 0.000000e+00 : f32
    %591 = vector.broadcast %cst_399 : f32 to vector<8x8x4xf32>
    %c0_400 = arith.constant 0 : index
    %c0_401 = arith.constant 0 : index
    %592 = vector.load %arg6[%c0_400, %c0_401] : memref<9x4xf32, #tpu.memory_space<vmem>>, vector<1x4xf32>
    %593 = vector.shape_cast %592 : vector<1x4xf32> to vector<4xf32>
    %c2_402 = arith.constant 2 : index
    %c0_403 = arith.constant 0 : index
    %c1_404 = arith.constant 1 : index
    %c0_405 = arith.constant 0 : index
    %594 = vector.load %arg11[%c2_402, %c0_403, %c1_404, %c0_405] : memref<8x10x10x4xf32, #tpu.memory_space<vmem>>, vector<1x8x8x4xf32>
    %595 = vector.shape_cast %594 : vector<1x8x8x4xf32> to vector<8x8x4xf32>
    %596 = vector.shape_cast %593 : vector<4xf32> to vector<1x1x4xf32>
    %597 = vector.broadcast %596 : vector<1x1x4xf32> to vector<8x8x4xf32>
    %598 = arith.mulf %597, %595 : vector<8x8x4xf32>
    %599 = arith.addf %591, %598 : vector<8x8x4xf32>
    %c1_406 = arith.constant 1 : index
    %c0_407 = arith.constant 0 : index
    %600 = vector.load %arg6[%c1_406, %c0_407] : memref<9x4xf32, #tpu.memory_space<vmem>>, vector<1x4xf32>
    %601 = vector.shape_cast %600 : vector<1x4xf32> to vector<4xf32>
    %c3_408 = arith.constant 3 : index
    %c0_409 = arith.constant 0 : index
    %c1_410 = arith.constant 1 : index
    %c0_411 = arith.constant 0 : index
    %602 = vector.load %arg11[%c3_408, %c0_409, %c1_410, %c0_411] : memref<8x10x10x4xf32, #tpu.memory_space<vmem>>, vector<1x8x8x4xf32>
    %603 = vector.shape_cast %602 : vector<1x8x8x4xf32> to vector<8x8x4xf32>
    %604 = vector.shape_cast %601 : vector<4xf32> to vector<1x1x4xf32>
    %605 = vector.broadcast %604 : vector<1x1x4xf32> to vector<8x8x4xf32>
    %606 = arith.mulf %605, %603 : vector<8x8x4xf32>
    %607 = arith.addf %599, %606 : vector<8x8x4xf32>
    %c2_412 = arith.constant 2 : index
    %c0_413 = arith.constant 0 : index
    %608 = vector.load %arg6[%c2_412, %c0_413] : memref<9x4xf32, #tpu.memory_space<vmem>>, vector<1x4xf32>
    %609 = vector.shape_cast %608 : vector<1x4xf32> to vector<4xf32>
    %c2_414 = arith.constant 2 : index
    %c0_415 = arith.constant 0 : index
    %c2_416 = arith.constant 2 : index
    %c0_417 = arith.constant 0 : index
    %610 = vector.load %arg11[%c2_414, %c0_415, %c2_416, %c0_417] : memref<8x10x10x4xf32, #tpu.memory_space<vmem>>, vector<1x8x8x4xf32>
    %611 = vector.shape_cast %610 : vector<1x8x8x4xf32> to vector<8x8x4xf32>
    %612 = vector.shape_cast %609 : vector<4xf32> to vector<1x1x4xf32>
    %613 = vector.broadcast %612 : vector<1x1x4xf32> to vector<8x8x4xf32>
    %614 = arith.mulf %613, %611 : vector<8x8x4xf32>
    %615 = arith.addf %607, %614 : vector<8x8x4xf32>
    %c3_418 = arith.constant 3 : index
    %c0_419 = arith.constant 0 : index
    %616 = vector.load %arg6[%c3_418, %c0_419] : memref<9x4xf32, #tpu.memory_space<vmem>>, vector<1x4xf32>
    %617 = vector.shape_cast %616 : vector<1x4xf32> to vector<4xf32>
    %c0_420 = arith.constant 0 : index
    %c1_421 = arith.constant 1 : index
    %c1_422 = arith.constant 1 : index
    %c0_423 = arith.constant 0 : index
    %618 = vector.load %arg11[%c0_420, %c1_421, %c1_422, %c0_423] : memref<8x10x10x4xf32, #tpu.memory_space<vmem>>, vector<1x8x8x4xf32>
    %619 = vector.shape_cast %618 : vector<1x8x8x4xf32> to vector<8x8x4xf32>
    %620 = vector.shape_cast %617 : vector<4xf32> to vector<1x1x4xf32>
    %621 = vector.broadcast %620 : vector<1x1x4xf32> to vector<8x8x4xf32>
    %622 = arith.mulf %621, %619 : vector<8x8x4xf32>
    %623 = arith.addf %615, %622 : vector<8x8x4xf32>
    %c4_424 = arith.constant 4 : index
    %c0_425 = arith.constant 0 : index
    %624 = vector.load %arg6[%c4_424, %c0_425] : memref<9x4xf32, #tpu.memory_space<vmem>>, vector<1x4xf32>
    %625 = vector.shape_cast %624 : vector<1x4xf32> to vector<4xf32>
    %c1_426 = arith.constant 1 : index
    %c1_427 = arith.constant 1 : index
    %c1_428 = arith.constant 1 : index
    %c0_429 = arith.constant 0 : index
    %626 = vector.load %arg11[%c1_426, %c1_427, %c1_428, %c0_429] : memref<8x10x10x4xf32, #tpu.memory_space<vmem>>, vector<1x8x8x4xf32>
    %627 = vector.shape_cast %626 : vector<1x8x8x4xf32> to vector<8x8x4xf32>
    %628 = vector.shape_cast %625 : vector<4xf32> to vector<1x1x4xf32>
    %629 = vector.broadcast %628 : vector<1x1x4xf32> to vector<8x8x4xf32>
    %630 = arith.mulf %629, %627 : vector<8x8x4xf32>
    %631 = arith.addf %623, %630 : vector<8x8x4xf32>
    %c5_430 = arith.constant 5 : index
    %c0_431 = arith.constant 0 : index
    %632 = vector.load %arg6[%c5_430, %c0_431] : memref<9x4xf32, #tpu.memory_space<vmem>>, vector<1x4xf32>
    %633 = vector.shape_cast %632 : vector<1x4xf32> to vector<4xf32>
    %c0_432 = arith.constant 0 : index
    %c1_433 = arith.constant 1 : index
    %c2_434 = arith.constant 2 : index
    %c0_435 = arith.constant 0 : index
    %634 = vector.load %arg11[%c0_432, %c1_433, %c2_434, %c0_435] : memref<8x10x10x4xf32, #tpu.memory_space<vmem>>, vector<1x8x8x4xf32>
    %635 = vector.shape_cast %634 : vector<1x8x8x4xf32> to vector<8x8x4xf32>
    %636 = vector.shape_cast %633 : vector<4xf32> to vector<1x1x4xf32>
    %637 = vector.broadcast %636 : vector<1x1x4xf32> to vector<8x8x4xf32>
    %638 = arith.mulf %637, %635 : vector<8x8x4xf32>
    %639 = arith.addf %631, %638 : vector<8x8x4xf32>
    %c6_436 = arith.constant 6 : index
    %c0_437 = arith.constant 0 : index
    %640 = vector.load %arg6[%c6_436, %c0_437] : memref<9x4xf32, #tpu.memory_space<vmem>>, vector<1x4xf32>
    %641 = vector.shape_cast %640 : vector<1x4xf32> to vector<4xf32>
    %c2_438 = arith.constant 2 : index
    %c1_439 = arith.constant 1 : index
    %c1_440 = arith.constant 1 : index
    %c0_441 = arith.constant 0 : index
    %642 = vector.load %arg11[%c2_438, %c1_439, %c1_440, %c0_441] : memref<8x10x10x4xf32, #tpu.memory_space<vmem>>, vector<1x8x8x4xf32>
    %643 = vector.shape_cast %642 : vector<1x8x8x4xf32> to vector<8x8x4xf32>
    %644 = vector.shape_cast %641 : vector<4xf32> to vector<1x1x4xf32>
    %645 = vector.broadcast %644 : vector<1x1x4xf32> to vector<8x8x4xf32>
    %646 = arith.mulf %645, %643 : vector<8x8x4xf32>
    %647 = arith.addf %639, %646 : vector<8x8x4xf32>
    %c7_442 = arith.constant 7 : index
    %c0_443 = arith.constant 0 : index
    %648 = vector.load %arg6[%c7_442, %c0_443] : memref<9x4xf32, #tpu.memory_space<vmem>>, vector<1x4xf32>
    %649 = vector.shape_cast %648 : vector<1x4xf32> to vector<4xf32>
    %c3_444 = arith.constant 3 : index
    %c1_445 = arith.constant 1 : index
    %c1_446 = arith.constant 1 : index
    %c0_447 = arith.constant 0 : index
    %650 = vector.load %arg11[%c3_444, %c1_445, %c1_446, %c0_447] : memref<8x10x10x4xf32, #tpu.memory_space<vmem>>, vector<1x8x8x4xf32>
    %651 = vector.shape_cast %650 : vector<1x8x8x4xf32> to vector<8x8x4xf32>
    %652 = vector.shape_cast %649 : vector<4xf32> to vector<1x1x4xf32>
    %653 = vector.broadcast %652 : vector<1x1x4xf32> to vector<8x8x4xf32>
    %654 = arith.mulf %653, %651 : vector<8x8x4xf32>
    %655 = arith.addf %647, %654 : vector<8x8x4xf32>
    %c8_448 = arith.constant 8 : index
    %c0_449 = arith.constant 0 : index
    %656 = vector.load %arg6[%c8_448, %c0_449] : memref<9x4xf32, #tpu.memory_space<vmem>>, vector<1x4xf32>
    %657 = vector.shape_cast %656 : vector<1x4xf32> to vector<4xf32>
    %c2_450 = arith.constant 2 : index
    %c1_451 = arith.constant 1 : index
    %c2_452 = arith.constant 2 : index
    %c0_453 = arith.constant 0 : index
    %658 = vector.load %arg11[%c2_450, %c1_451, %c2_452, %c0_453] : memref<8x10x10x4xf32, #tpu.memory_space<vmem>>, vector<1x8x8x4xf32>
    %659 = vector.shape_cast %658 : vector<1x8x8x4xf32> to vector<8x8x4xf32>
    %660 = vector.shape_cast %657 : vector<4xf32> to vector<1x1x4xf32>
    %661 = vector.broadcast %660 : vector<1x1x4xf32> to vector<8x8x4xf32>
    %662 = arith.mulf %661, %659 : vector<8x8x4xf32>
    %663 = arith.addf %655, %662 : vector<8x8x4xf32>
    %664 = vector.shape_cast %506 : vector<1x4xf32> to vector<1x1x4xf32>
    %665 = vector.broadcast %664 : vector<1x1x4xf32> to vector<8x8x4xf32>
    %666 = arith.addf %663, %665 : vector<8x8x4xf32>
    %667 = vector.shape_cast %507 : vector<1x4xf32> to vector<1x1x4xf32>
    %668 = vector.broadcast %667 : vector<1x1x4xf32> to vector<8x8x4xf32>
    %669 = arith.mulf %666, %668 : vector<8x8x4xf32>
    %670 = arith.addf %669, %475 : vector<8x8x4xf32>
    %c1_454 = arith.constant 1 : index
    %c0_455 = arith.constant 0 : index
    %c0_456 = arith.constant 0 : index
    %c0_457 = arith.constant 0 : index
    %671 = vector.load %arg12[%c1_454, %c0_455, %c0_456, %c0_457] : memref<4x8x8x4xf32, #tpu.memory_space<vmem>>, vector<1x8x8x4xf32>
    %672 = vector.shape_cast %671 : vector<1x8x8x4xf32> to vector<8x8x4xf32>
    %673 = vector.shape_cast %670 : vector<8x8x4xf32> to vector<1x8x8x4xf32>
    tpu.vector_store %arg12[%c1_454, %c0_455, %c0_456, %c0_457], %673 {strides = array<i32>} : memref<4x8x8x4xf32, #tpu.memory_space<vmem>>, vector<1x8x8x4xf32>,
    %cst_458 = arith.constant 0.000000e+00 : f32
    %674 = vector.broadcast %cst_458 : f32 to vector<8x8x4xf32>
    %c0_459 = arith.constant 0 : index
    %c0_460 = arith.constant 0 : index
    %675 = vector.load %arg6[%c0_459, %c0_460] : memref<9x4xf32, #tpu.memory_space<vmem>>, vector<1x4xf32>
    %676 = vector.shape_cast %675 : vector<1x4xf32> to vector<4xf32>
    %c1_461 = arith.constant 1 : index
    %c1_462 = arith.constant 1 : index
    %c0_463 = arith.constant 0 : index
    %c0_464 = arith.constant 0 : index
    %677 = vector.load %arg11[%c1_461, %c1_462, %c0_463, %c0_464] : memref<8x10x10x4xf32, #tpu.memory_space<vmem>>, vector<1x8x8x4xf32>
    %678 = vector.shape_cast %677 : vector<1x8x8x4xf32> to vector<8x8x4xf32>
    %679 = vector.shape_cast %676 : vector<4xf32> to vector<1x1x4xf32>
    %680 = vector.broadcast %679 : vector<1x1x4xf32> to vector<8x8x4xf32>
    %681 = arith.mulf %680, %678 : vector<8x8x4xf32>
    %682 = arith.addf %674, %681 : vector<8x8x4xf32>
    %c1_465 = arith.constant 1 : index
    %c0_466 = arith.constant 0 : index
    %683 = vector.load %arg6[%c1_465, %c0_466] : memref<9x4xf32, #tpu.memory_space<vmem>>, vector<1x4xf32>
    %684 = vector.shape_cast %683 : vector<1x4xf32> to vector<4xf32>
    %c0_467 = arith.constant 0 : index
    %c1_468 = arith.constant 1 : index
    %c1_469 = arith.constant 1 : index
    %c0_470 = arith.constant 0 : index
    %685 = vector.load %arg11[%c0_467, %c1_468, %c1_469, %c0_470] : memref<8x10x10x4xf32, #tpu.memory_space<vmem>>, vector<1x8x8x4xf32>
    %686 = vector.shape_cast %685 : vector<1x8x8x4xf32> to vector<8x8x4xf32>
    %687 = vector.shape_cast %684 : vector<4xf32> to vector<1x1x4xf32>
    %688 = vector.broadcast %687 : vector<1x1x4xf32> to vector<8x8x4xf32>
    %689 = arith.mulf %688, %686 : vector<8x8x4xf32>
    %690 = arith.addf %682, %689 : vector<8x8x4xf32>
    %c2_471 = arith.constant 2 : index
    %c0_472 = arith.constant 0 : index
    %691 = vector.load %arg6[%c2_471, %c0_472] : memref<9x4xf32, #tpu.memory_space<vmem>>, vector<1x4xf32>
    %692 = vector.shape_cast %691 : vector<1x4xf32> to vector<4xf32>
    %c1_473 = arith.constant 1 : index
    %c1_474 = arith.constant 1 : index
    %c1_475 = arith.constant 1 : index
    %c0_476 = arith.constant 0 : index
    %693 = vector.load %arg11[%c1_473, %c1_474, %c1_475, %c0_476] : memref<8x10x10x4xf32, #tpu.memory_space<vmem>>, vector<1x8x8x4xf32>
    %694 = vector.shape_cast %693 : vector<1x8x8x4xf32> to vector<8x8x4xf32>
    %695 = vector.shape_cast %692 : vector<4xf32> to vector<1x1x4xf32>
    %696 = vector.broadcast %695 : vector<1x1x4xf32> to vector<8x8x4xf32>
    %697 = arith.mulf %696, %694 : vector<8x8x4xf32>
    %698 = arith.addf %690, %697 : vector<8x8x4xf32>
    %c3_477 = arith.constant 3 : index
    %c0_478 = arith.constant 0 : index
    %699 = vector.load %arg6[%c3_477, %c0_478] : memref<9x4xf32, #tpu.memory_space<vmem>>, vector<1x4xf32>
    %700 = vector.shape_cast %699 : vector<1x4xf32> to vector<4xf32>
    %c3_479 = arith.constant 3 : index
    %c1_480 = arith.constant 1 : index
    %c0_481 = arith.constant 0 : index
    %c0_482 = arith.constant 0 : index
    %701 = vector.load %arg11[%c3_479, %c1_480, %c0_481, %c0_482] : memref<8x10x10x4xf32, #tpu.memory_space<vmem>>, vector<1x8x8x4xf32>
    %702 = vector.shape_cast %701 : vector<1x8x8x4xf32> to vector<8x8x4xf32>
    %703 = vector.shape_cast %700 : vector<4xf32> to vector<1x1x4xf32>
    %704 = vector.broadcast %703 : vector<1x1x4xf32> to vector<8x8x4xf32>
    %705 = arith.mulf %704, %702 : vector<8x8x4xf32>
    %706 = arith.addf %698, %705 : vector<8x8x4xf32>
    %c4_483 = arith.constant 4 : index
    %c0_484 = arith.constant 0 : index
    %707 = vector.load %arg6[%c4_483, %c0_484] : memref<9x4xf32, #tpu.memory_space<vmem>>, vector<1x4xf32>
    %708 = vector.shape_cast %707 : vector<1x4xf32> to vector<4xf32>
    %c2_485 = arith.constant 2 : index
    %c1_486 = arith.constant 1 : index
    %c1_487 = arith.constant 1 : index
    %c0_488 = arith.constant 0 : index
    %709 = vector.load %arg11[%c2_485, %c1_486, %c1_487, %c0_488] : memref<8x10x10x4xf32, #tpu.memory_space<vmem>>, vector<1x8x8x4xf32>
    %710 = vector.shape_cast %709 : vector<1x8x8x4xf32> to vector<8x8x4xf32>
    %711 = vector.shape_cast %708 : vector<4xf32> to vector<1x1x4xf32>
    %712 = vector.broadcast %711 : vector<1x1x4xf32> to vector<8x8x4xf32>
    %713 = arith.mulf %712, %710 : vector<8x8x4xf32>
    %714 = arith.addf %706, %713 : vector<8x8x4xf32>
    %c5_489 = arith.constant 5 : index
    %c0_490 = arith.constant 0 : index
    %715 = vector.load %arg6[%c5_489, %c0_490] : memref<9x4xf32, #tpu.memory_space<vmem>>, vector<1x4xf32>
    %716 = vector.shape_cast %715 : vector<1x4xf32> to vector<4xf32>
    %c3_491 = arith.constant 3 : index
    %c1_492 = arith.constant 1 : index
    %c1_493 = arith.constant 1 : index
    %c0_494 = arith.constant 0 : index
    %717 = vector.load %arg11[%c3_491, %c1_492, %c1_493, %c0_494] : memref<8x10x10x4xf32, #tpu.memory_space<vmem>>, vector<1x8x8x4xf32>
    %718 = vector.shape_cast %717 : vector<1x8x8x4xf32> to vector<8x8x4xf32>
    %719 = vector.shape_cast %716 : vector<4xf32> to vector<1x1x4xf32>
    %720 = vector.broadcast %719 : vector<1x1x4xf32> to vector<8x8x4xf32>
    %721 = arith.mulf %720, %718 : vector<8x8x4xf32>
    %722 = arith.addf %714, %721 : vector<8x8x4xf32>
    %c6_495 = arith.constant 6 : index
    %c0_496 = arith.constant 0 : index
    %723 = vector.load %arg6[%c6_495, %c0_496] : memref<9x4xf32, #tpu.memory_space<vmem>>, vector<1x4xf32>
    %724 = vector.shape_cast %723 : vector<1x4xf32> to vector<4xf32>
    %c1_497 = arith.constant 1 : index
    %c2_498 = arith.constant 2 : index
    %c0_499 = arith.constant 0 : index
    %c0_500 = arith.constant 0 : index
    %725 = vector.load %arg11[%c1_497, %c2_498, %c0_499, %c0_500] : memref<8x10x10x4xf32, #tpu.memory_space<vmem>>, vector<1x8x8x4xf32>
    %726 = vector.shape_cast %725 : vector<1x8x8x4xf32> to vector<8x8x4xf32>
    %727 = vector.shape_cast %724 : vector<4xf32> to vector<1x1x4xf32>
    %728 = vector.broadcast %727 : vector<1x1x4xf32> to vector<8x8x4xf32>
    %729 = arith.mulf %728, %726 : vector<8x8x4xf32>
    %730 = arith.addf %722, %729 : vector<8x8x4xf32>
    %c7_501 = arith.constant 7 : index
    %c0_502 = arith.constant 0 : index
    %731 = vector.load %arg6[%c7_501, %c0_502] : memref<9x4xf32, #tpu.memory_space<vmem>>, vector<1x4xf32>
    %732 = vector.shape_cast %731 : vector<1x4xf32> to vector<4xf32>
    %c0_503 = arith.constant 0 : index
    %c2_504 = arith.constant 2 : index
    %c1_505 = arith.constant 1 : index
    %c0_506 = arith.constant 0 : index
    %733 = vector.load %arg11[%c0_503, %c2_504, %c1_505, %c0_506] : memref<8x10x10x4xf32, #tpu.memory_space<vmem>>, vector<1x8x8x4xf32>
    %734 = vector.shape_cast %733 : vector<1x8x8x4xf32> to vector<8x8x4xf32>
    %735 = vector.shape_cast %732 : vector<4xf32> to vector<1x1x4xf32>
    %736 = vector.broadcast %735 : vector<1x1x4xf32> to vector<8x8x4xf32>
    %737 = arith.mulf %736, %734 : vector<8x8x4xf32>
    %738 = arith.addf %730, %737 : vector<8x8x4xf32>
    %c8_507 = arith.constant 8 : index
    %c0_508 = arith.constant 0 : index
    %739 = vector.load %arg6[%c8_507, %c0_508] : memref<9x4xf32, #tpu.memory_space<vmem>>, vector<1x4xf32>
    %740 = vector.shape_cast %739 : vector<1x4xf32> to vector<4xf32>
    %c1_509 = arith.constant 1 : index
    %c2_510 = arith.constant 2 : index
    %c1_511 = arith.constant 1 : index
    %c0_512 = arith.constant 0 : index
    %741 = vector.load %arg11[%c1_509, %c2_510, %c1_511, %c0_512] : memref<8x10x10x4xf32, #tpu.memory_space<vmem>>, vector<1x8x8x4xf32>
    %742 = vector.shape_cast %741 : vector<1x8x8x4xf32> to vector<8x8x4xf32>
    %743 = vector.shape_cast %740 : vector<4xf32> to vector<1x1x4xf32>
    %744 = vector.broadcast %743 : vector<1x1x4xf32> to vector<8x8x4xf32>
    %745 = arith.mulf %744, %742 : vector<8x8x4xf32>
    %746 = arith.addf %738, %745 : vector<8x8x4xf32>
    %747 = vector.shape_cast %506 : vector<1x4xf32> to vector<1x1x4xf32>
    %748 = vector.broadcast %747 : vector<1x1x4xf32> to vector<8x8x4xf32>
    %749 = arith.addf %746, %748 : vector<8x8x4xf32>
    %750 = vector.shape_cast %507 : vector<1x4xf32> to vector<1x1x4xf32>
    %751 = vector.broadcast %750 : vector<1x1x4xf32> to vector<8x8x4xf32>
    %752 = arith.mulf %749, %751 : vector<8x8x4xf32>
    %753 = arith.addf %752, %490 : vector<8x8x4xf32>
    %c2_513 = arith.constant 2 : index
    %c0_514 = arith.constant 0 : index
    %c0_515 = arith.constant 0 : index
    %c0_516 = arith.constant 0 : index
    %754 = vector.load %arg12[%c2_513, %c0_514, %c0_515, %c0_516] : memref<4x8x8x4xf32, #tpu.memory_space<vmem>>, vector<1x8x8x4xf32>
    %755 = vector.shape_cast %754 : vector<1x8x8x4xf32> to vector<8x8x4xf32>
    %756 = vector.shape_cast %753 : vector<8x8x4xf32> to vector<1x8x8x4xf32>
    tpu.vector_store %arg12[%c2_513, %c0_514, %c0_515, %c0_516], %756 {strides = array<i32>} : memref<4x8x8x4xf32, #tpu.memory_space<vmem>>, vector<1x8x8x4xf32>,
    %cst_517 = arith.constant 0.000000e+00 : f32
    %757 = vector.broadcast %cst_517 : f32 to vector<8x8x4xf32>
    %c0_518 = arith.constant 0 : index
    %c0_519 = arith.constant 0 : index
    %758 = vector.load %arg6[%c0_518, %c0_519] : memref<9x4xf32, #tpu.memory_space<vmem>>, vector<1x4xf32>
    %759 = vector.shape_cast %758 : vector<1x4xf32> to vector<4xf32>
    %c0_520 = arith.constant 0 : index
    %c1_521 = arith.constant 1 : index
    %c1_522 = arith.constant 1 : index
    %c0_523 = arith.constant 0 : index
    %760 = vector.load %arg11[%c0_520, %c1_521, %c1_522, %c0_523] : memref<8x10x10x4xf32, #tpu.memory_space<vmem>>, vector<1x8x8x4xf32>
    %761 = vector.shape_cast %760 : vector<1x8x8x4xf32> to vector<8x8x4xf32>
    %762 = vector.shape_cast %759 : vector<4xf32> to vector<1x1x4xf32>
    %763 = vector.broadcast %762 : vector<1x1x4xf32> to vector<8x8x4xf32>
    %764 = arith.mulf %763, %761 : vector<8x8x4xf32>
    %765 = arith.addf %757, %764 : vector<8x8x4xf32>
    %c1_524 = arith.constant 1 : index
    %c0_525 = arith.constant 0 : index
    %766 = vector.load %arg6[%c1_524, %c0_525] : memref<9x4xf32, #tpu.memory_space<vmem>>, vector<1x4xf32>
    %767 = vector.shape_cast %766 : vector<1x4xf32> to vector<4xf32>
    %c1_526 = arith.constant 1 : index
    %c1_527 = arith.constant 1 : index
    %c1_528 = arith.constant 1 : index
    %c0_529 = arith.constant 0 : index
    %768 = vector.load %arg11[%c1_526, %c1_527, %c1_528, %c0_529] : memref<8x10x10x4xf32, #tpu.memory_space<vmem>>, vector<1x8x8x4xf32>
    %769 = vector.shape_cast %768 : vector<1x8x8x4xf32> to vector<8x8x4xf32>
    %770 = vector.shape_cast %767 : vector<4xf32> to vector<1x1x4xf32>
    %771 = vector.broadcast %770 : vector<1x1x4xf32> to vector<8x8x4xf32>
    %772 = arith.mulf %771, %769 : vector<8x8x4xf32>
    %773 = arith.addf %765, %772 : vector<8x8x4xf32>
    %c2_530 = arith.constant 2 : index
    %c0_531 = arith.constant 0 : index
    %774 = vector.load %arg6[%c2_530, %c0_531] : memref<9x4xf32, #tpu.memory_space<vmem>>, vector<1x4xf32>
    %775 = vector.shape_cast %774 : vector<1x4xf32> to vector<4xf32>
    %c0_532 = arith.constant 0 : index
    %c1_533 = arith.constant 1 : index
    %c2_534 = arith.constant 2 : index
    %c0_535 = arith.constant 0 : index
    %776 = vector.load %arg11[%c0_532, %c1_533, %c2_534, %c0_535] : memref<8x10x10x4xf32, #tpu.memory_space<vmem>>, vector<1x8x8x4xf32>
    %777 = vector.shape_cast %776 : vector<1x8x8x4xf32> to vector<8x8x4xf32>
    %778 = vector.shape_cast %775 : vector<4xf32> to vector<1x1x4xf32>
    %779 = vector.broadcast %778 : vector<1x1x4xf32> to vector<8x8x4xf32>
    %780 = arith.mulf %779, %777 : vector<8x8x4xf32>
    %781 = arith.addf %773, %780 : vector<8x8x4xf32>
    %c3_536 = arith.constant 3 : index
    %c0_537 = arith.constant 0 : index
    %782 = vector.load %arg6[%c3_536, %c0_537] : memref<9x4xf32, #tpu.memory_space<vmem>>, vector<1x4xf32>
    %783 = vector.shape_cast %782 : vector<1x4xf32> to vector<4xf32>
    %c2_538 = arith.constant 2 : index
    %c1_539 = arith.constant 1 : index
    %c1_540 = arith.constant 1 : index
    %c0_541 = arith.constant 0 : index
    %784 = vector.load %arg11[%c2_538, %c1_539, %c1_540, %c0_541] : memref<8x10x10x4xf32, #tpu.memory_space<vmem>>, vector<1x8x8x4xf32>
    %785 = vector.shape_cast %784 : vector<1x8x8x4xf32> to vector<8x8x4xf32>
    %786 = vector.shape_cast %783 : vector<4xf32> to vector<1x1x4xf32>
    %787 = vector.broadcast %786 : vector<1x1x4xf32> to vector<8x8x4xf32>
    %788 = arith.mulf %787, %785 : vector<8x8x4xf32>
    %789 = arith.addf %781, %788 : vector<8x8x4xf32>
    %c4_542 = arith.constant 4 : index
    %c0_543 = arith.constant 0 : index
    %790 = vector.load %arg6[%c4_542, %c0_543] : memref<9x4xf32, #tpu.memory_space<vmem>>, vector<1x4xf32>
    %791 = vector.shape_cast %790 : vector<1x4xf32> to vector<4xf32>
    %c3_544 = arith.constant 3 : index
    %c1_545 = arith.constant 1 : index
    %c1_546 = arith.constant 1 : index
    %c0_547 = arith.constant 0 : index
    %792 = vector.load %arg11[%c3_544, %c1_545, %c1_546, %c0_547] : memref<8x10x10x4xf32, #tpu.memory_space<vmem>>, vector<1x8x8x4xf32>
    %793 = vector.shape_cast %792 : vector<1x8x8x4xf32> to vector<8x8x4xf32>
    %794 = vector.shape_cast %791 : vector<4xf32> to vector<1x1x4xf32>
    %795 = vector.broadcast %794 : vector<1x1x4xf32> to vector<8x8x4xf32>
    %796 = arith.mulf %795, %793 : vector<8x8x4xf32>
    %797 = arith.addf %789, %796 : vector<8x8x4xf32>
    %c5_548 = arith.constant 5 : index
    %c0_549 = arith.constant 0 : index
    %798 = vector.load %arg6[%c5_548, %c0_549] : memref<9x4xf32, #tpu.memory_space<vmem>>, vector<1x4xf32>
    %799 = vector.shape_cast %798 : vector<1x4xf32> to vector<4xf32>
    %c2_550 = arith.constant 2 : index
    %c1_551 = arith.constant 1 : index
    %c2_552 = arith.constant 2 : index
    %c0_553 = arith.constant 0 : index
    %800 = vector.load %arg11[%c2_550, %c1_551, %c2_552, %c0_553] : memref<8x10x10x4xf32, #tpu.memory_space<vmem>>, vector<1x8x8x4xf32>
    %801 = vector.shape_cast %800 : vector<1x8x8x4xf32> to vector<8x8x4xf32>
    %802 = vector.shape_cast %799 : vector<4xf32> to vector<1x1x4xf32>
    %803 = vector.broadcast %802 : vector<1x1x4xf32> to vector<8x8x4xf32>
    %804 = arith.mulf %803, %801 : vector<8x8x4xf32>
    %805 = arith.addf %797, %804 : vector<8x8x4xf32>
    %c6_554 = arith.constant 6 : index
    %c0_555 = arith.constant 0 : index
    %806 = vector.load %arg6[%c6_554, %c0_555] : memref<9x4xf32, #tpu.memory_space<vmem>>, vector<1x4xf32>
    %807 = vector.shape_cast %806 : vector<1x4xf32> to vector<4xf32>
    %c0_556 = arith.constant 0 : index
    %c2_557 = arith.constant 2 : index
    %c1_558 = arith.constant 1 : index
    %c0_559 = arith.constant 0 : index
    %808 = vector.load %arg11[%c0_556, %c2_557, %c1_558, %c0_559] : memref<8x10x10x4xf32, #tpu.memory_space<vmem>>, vector<1x8x8x4xf32>
    %809 = vector.shape_cast %808 : vector<1x8x8x4xf32> to vector<8x8x4xf32>
    %810 = vector.shape_cast %807 : vector<4xf32> to vector<1x1x4xf32>
    %811 = vector.broadcast %810 : vector<1x1x4xf32> to vector<8x8x4xf32>
    %812 = arith.mulf %811, %809 : vector<8x8x4xf32>
    %813 = arith.addf %805, %812 : vector<8x8x4xf32>
    %c7_560 = arith.constant 7 : index
    %c0_561 = arith.constant 0 : index
    %814 = vector.load %arg6[%c7_560, %c0_561] : memref<9x4xf32, #tpu.memory_space<vmem>>, vector<1x4xf32>
    %815 = vector.shape_cast %814 : vector<1x4xf32> to vector<4xf32>
    %c1_562 = arith.constant 1 : index
    %c2_563 = arith.constant 2 : index
    %c1_564 = arith.constant 1 : index
    %c0_565 = arith.constant 0 : index
    %816 = vector.load %arg11[%c1_562, %c2_563, %c1_564, %c0_565] : memref<8x10x10x4xf32, #tpu.memory_space<vmem>>, vector<1x8x8x4xf32>
    %817 = vector.shape_cast %816 : vector<1x8x8x4xf32> to vector<8x8x4xf32>
    %818 = vector.shape_cast %815 : vector<4xf32> to vector<1x1x4xf32>
    %819 = vector.broadcast %818 : vector<1x1x4xf32> to vector<8x8x4xf32>
    %820 = arith.mulf %819, %817 : vector<8x8x4xf32>
    %821 = arith.addf %813, %820 : vector<8x8x4xf32>
    %c8_566 = arith.constant 8 : index
    %c0_567 = arith.constant 0 : index
    %822 = vector.load %arg6[%c8_566, %c0_567] : memref<9x4xf32, #tpu.memory_space<vmem>>, vector<1x4xf32>
    %823 = vector.shape_cast %822 : vector<1x4xf32> to vector<4xf32>
    %c0_568 = arith.constant 0 : index
    %c2_569 = arith.constant 2 : index
    %c2_570 = arith.constant 2 : index
    %c0_571 = arith.constant 0 : index
    %824 = vector.load %arg11[%c0_568, %c2_569, %c2_570, %c0_571] : memref<8x10x10x4xf32, #tpu.memory_space<vmem>>, vector<1x8x8x4xf32>
    %825 = vector.shape_cast %824 : vector<1x8x8x4xf32> to vector<8x8x4xf32>
    %826 = vector.shape_cast %823 : vector<4xf32> to vector<1x1x4xf32>
    %827 = vector.broadcast %826 : vector<1x1x4xf32> to vector<8x8x4xf32>
    %828 = arith.mulf %827, %825 : vector<8x8x4xf32>
    %829 = arith.addf %821, %828 : vector<8x8x4xf32>
    %830 = vector.shape_cast %506 : vector<1x4xf32> to vector<1x1x4xf32>
    %831 = vector.broadcast %830 : vector<1x1x4xf32> to vector<8x8x4xf32>
    %832 = arith.addf %829, %831 : vector<8x8x4xf32>
    %833 = vector.shape_cast %507 : vector<1x4xf32> to vector<1x1x4xf32>
    %834 = vector.broadcast %833 : vector<1x1x4xf32> to vector<8x8x4xf32>
    %835 = arith.mulf %832, %834 : vector<8x8x4xf32>
    %836 = arith.addf %835, %505 : vector<8x8x4xf32>
    %c3_572 = arith.constant 3 : index
    %c0_573 = arith.constant 0 : index
    %c0_574 = arith.constant 0 : index
    %c0_575 = arith.constant 0 : index
    %837 = vector.load %arg12[%c3_572, %c0_573, %c0_574, %c0_575] : memref<4x8x8x4xf32, #tpu.memory_space<vmem>>, vector<1x8x8x4xf32>
    %838 = vector.shape_cast %837 : vector<1x8x8x4xf32> to vector<8x8x4xf32>
    %839 = vector.shape_cast %836 : vector<8x8x4xf32> to vector<1x8x8x4xf32>
    tpu.vector_store %arg12[%c3_572, %c0_573, %c0_574, %c0_575], %839 {strides = array<i32>} : memref<4x8x8x4xf32, #tpu.memory_space<vmem>>, vector<1x8x8x4xf32>,
    %c0_576 = arith.constant 0 : index
    %c0_577 = arith.constant 0 : index
    %c0_578 = arith.constant 0 : index
    %c0_579 = arith.constant 0 : index
    %840 = vector.load %arg12[%c0_576, %c0_577, %c0_578, %c0_579] : memref<4x8x8x4xf32, #tpu.memory_space<vmem>>, vector<4x8x8x4xf32>
    %cst_580 = arith.constant 0.000000e+00 : f32
    %841 = vector.broadcast %cst_580 : f32 to vector<4x8x8x8xf32>
    %842 = vector.extract_strided_slice %840 {offsets = [0, 0, 0, 0], sizes = [4, 8, 8, 1], strides = [1, 1, 1, 1]} : vector<4x8x8x4xf32> to vector<4x8x8x1xf32>
    %c0_581 = arith.constant 0 : index
    %c0_582 = arith.constant 0 : index
    %843 = vector.load %arg9[%c0_581, %c0_582] : memref<4x8xf32, #tpu.memory_space<vmem>>, vector<1x8xf32>
    %844 = vector.shape_cast %843 : vector<1x8xf32> to vector<8xf32>
    %845 = vector.shape_cast %844 : vector<8xf32> to vector<1x1x1x8xf32>
    %846 = vector.broadcast %842 : vector<4x8x8x1xf32> to vector<4x8x8x8xf32>
    %847 = vector.broadcast %845 : vector<1x1x1x8xf32> to vector<4x8x8x8xf32>
    %848 = arith.mulf %846, %847 : vector<4x8x8x8xf32>
    %849 = arith.addf %841, %848 : vector<4x8x8x8xf32>
    %850 = vector.extract_strided_slice %840 {offsets = [0, 0, 0, 1], sizes = [4, 8, 8, 1], strides = [1, 1, 1, 1]} : vector<4x8x8x4xf32> to vector<4x8x8x1xf32>
    %c1_583 = arith.constant 1 : index
    %c0_584 = arith.constant 0 : index
    %851 = vector.load %arg9[%c1_583, %c0_584] : memref<4x8xf32, #tpu.memory_space<vmem>>, vector<1x8xf32>
    %852 = vector.shape_cast %851 : vector<1x8xf32> to vector<8xf32>
    %853 = vector.shape_cast %852 : vector<8xf32> to vector<1x1x1x8xf32>
    %854 = vector.broadcast %850 : vector<4x8x8x1xf32> to vector<4x8x8x8xf32>
    %855 = vector.broadcast %853 : vector<1x1x1x8xf32> to vector<4x8x8x8xf32>
    %856 = arith.mulf %854, %855 : vector<4x8x8x8xf32>
    %857 = arith.addf %849, %856 : vector<4x8x8x8xf32>
    %858 = vector.extract_strided_slice %840 {offsets = [0, 0, 0, 2], sizes = [4, 8, 8, 1], strides = [1, 1, 1, 1]} : vector<4x8x8x4xf32> to vector<4x8x8x1xf32>
    %c2_585 = arith.constant 2 : index
    %c0_586 = arith.constant 0 : index
    %859 = vector.load %arg9[%c2_585, %c0_586] : memref<4x8xf32, #tpu.memory_space<vmem>>, vector<1x8xf32>
    %860 = vector.shape_cast %859 : vector<1x8xf32> to vector<8xf32>
    %861 = vector.shape_cast %860 : vector<8xf32> to vector<1x1x1x8xf32>
    %862 = vector.broadcast %858 : vector<4x8x8x1xf32> to vector<4x8x8x8xf32>
    %863 = vector.broadcast %861 : vector<1x1x1x8xf32> to vector<4x8x8x8xf32>
    %864 = arith.mulf %862, %863 : vector<4x8x8x8xf32>
    %865 = arith.addf %857, %864 : vector<4x8x8x8xf32>
    %866 = vector.extract_strided_slice %840 {offsets = [0, 0, 0, 3], sizes = [4, 8, 8, 1], strides = [1, 1, 1, 1]} : vector<4x8x8x4xf32> to vector<4x8x8x1xf32>
    %c3_587 = arith.constant 3 : index
    %c0_588 = arith.constant 0 : index
    %867 = vector.load %arg9[%c3_587, %c0_588] : memref<4x8xf32, #tpu.memory_space<vmem>>, vector<1x8xf32>
    %868 = vector.shape_cast %867 : vector<1x8xf32> to vector<8xf32>
    %869 = vector.shape_cast %868 : vector<8xf32> to vector<1x1x1x8xf32>
    %870 = vector.broadcast %866 : vector<4x8x8x1xf32> to vector<4x8x8x8xf32>
    %871 = vector.broadcast %869 : vector<1x1x1x8xf32> to vector<4x8x8x8xf32>
    %872 = arith.mulf %870, %871 : vector<4x8x8x8xf32>
    %873 = arith.addf %865, %872 : vector<4x8x8x8xf32>
    %c0_589 = arith.constant 0 : index
    %c0_590 = arith.constant 0 : index
    %c0_591 = arith.constant 0 : index
    %c0_592 = arith.constant 0 : index
    %c0_593 = arith.constant 0 : index
    %874 = vector.load %arg10[%c0_589, %c0_590, %c0_591, %c0_592, %c0_593] : memref<1x4x8x8x8xf32, #tpu.memory_space<vmem>>, vector<1x4x8x8x8xf32>
    %875 = vector.shape_cast %874 : vector<1x4x8x8x8xf32> to vector<4x8x8x8xf32>
    %876 = vector.shape_cast %873 : vector<4x8x8x8xf32> to vector<1x4x8x8x8xf32>
    tpu.vector_store %arg10[%c0_589, %c0_590, %c0_591, %c0_592, %c0_593], %876 {strides = array<i32>} : memref<1x4x8x8x8xf32, #tpu.memory_space<vmem>>, vector<1x4x8x8x8xf32>,
    return
  }
  func.func @transform_0(%arg0: i32) -> (i32, i32, i32, i32, i32) {
    %c0_i32 = arith.constant 0 : i32
    %c0_i32_0 = arith.constant 0 : i32
    %c0_i32_1 = arith.constant 0 : i32
    %c0_i32_2 = arith.constant 0 : i32
    %c0_i32_3 = arith.constant 0 : i32
    return %arg0, %c0_i32, %c0_i32_0, %c0_i32_1, %c0_i32_2 : i32, i32, i32, i32, i32
  }
  func.func @transform_1(%arg0: i32) -> i32 {
    %c0_i32 = arith.constant 0 : i32
    %c0_i32_0 = arith.constant 0 : i32
    return %c0_i32 : i32
  }
  func.func @transform_2(%arg0: i32) -> i32 {
    %c0_i32 = arith.constant 0 : i32
    %c0_i32_0 = arith.constant 0 : i32
    return %c0_i32 : i32
  }
  func.func @transform_3(%arg0: i32) -> (i32, i32, i32) {
    %c0_i32 = arith.constant 0 : i32
    %c0_i32_0 = arith.constant 0 : i32
    %c0_i32_1 = arith.constant 0 : i32
    %c0_i32_2 = arith.constant 0 : i32
    return %c0_i32, %c0_i32_0, %c0_i32_1 : i32, i32, i32
  }
  func.func @transform_4(%arg0: i32) -> (i32, i32) {
    %c0_i32 = arith.constant 0 : i32
    %c0_i32_0 = arith.constant 0 : i32
    %c0_i32_1 = arith.constant 0 : i32
    return %c0_i32, %c0_i32_0 : i32, i32
  }
  func.func @transform_5(%arg0: i32) -> (i32, i32) {
    %c0_i32 = arith.constant 0 : i32
    %c0_i32_0 = arith.constant 0 : i32
    %c0_i32_1 = arith.constant 0 : i32
    return %c0_i32, %c0_i32_0 : i32, i32
  }
  func.func @transform_6(%arg0: i32) -> (i32, i32) {
    %c0_i32 = arith.constant 0 : i32
    %c0_i32_0 = arith.constant 0 : i32
    %c0_i32_1 = arith.constant 0 : i32
    return %c0_i32, %c0_i32_0 : i32, i32
  }
  func.func @transform_7(%arg0: i32) -> (i32, i32) {
    %c0_i32 = arith.constant 0 : i32
    %c0_i32_0 = arith.constant 0 : i32
    %c0_i32_1 = arith.constant 0 : i32
    return %c0_i32, %c0_i32_0 : i32, i32
  }
  func.func @transform_8(%arg0: i32) -> (i32, i32) {
    %c0_i32 = arith.constant 0 : i32
    %c0_i32_0 = arith.constant 0 : i32
    %c0_i32_1 = arith.constant 0 : i32
    return %c0_i32, %c0_i32_0 : i32, i32
  }
  func.func @transform_9(%arg0: i32) -> (i32, i32, i32, i32, i32) {
    %c0_i32 = arith.constant 0 : i32
    %c0_i32_0 = arith.constant 0 : i32
    %c0_i32_1 = arith.constant 0 : i32
    %c0_i32_2 = arith.constant 0 : i32
    %c0_i32_3 = arith.constant 0 : i32
    return %arg0, %c0_i32, %c0_i32_0, %c0_i32_1, %c0_i32_2 : i32, i32, i32, i32, i32
  }
}

</mosaic_0001>

<llo_original>
// kernel: forward.1
$region0: #{forward.1}
  #allocation0 [shape = 'u32[]', space=smem, size = 0x4, offset = 0x4, fixed_abs, tag = 'smem constant byte address 0x4 - core index']
  #allocation1 [shape = 'u32[144,128]{1,0:T(1,128)}', space=vmem, size = 0x12000, scoped, tag = 'internal scratch']
  #allocation2 [shape = 'f32[8,10,10,4]{3,2,1,0:T(8,128)}', space=vmem, size = 0xa0000, scoped, tag = 'scratch operand']
  #allocation3 [shape = 'f32[4,8,8,4]{3,2,1,0:T(8,128)}', space=vmem, size = 0x20000, scoped, tag = 'scratch operand']
  %s0 = inlined_call_operand.vmem [shape: f32[2,4,8,8,4], index: 0, kind: input, shape index: {}]
  %s1 = inlined_call_operand.vmem [shape: f32[16], index: 1, kind: input, shape index: {}]
  %s2 = inlined_call_operand.vmem [shape: f32[16], index: 2, kind: input, shape index: {}]
  %s3 = inlined_call_operand.vmem [shape: f32[4,9,4], index: 3, kind: input, shape index: {}]
  %s4 = inlined_call_operand.vmem [shape: f32[4,4], index: 4, kind: input, shape index: {}]
  %s5 = inlined_call_operand.vmem [shape: f32[9,4], index: 5, kind: input, shape index: {}]
  %s6 = inlined_call_operand.vmem [shape: f32[1,4], index: 6, kind: input, shape index: {}]
  %s7 = inlined_call_operand.vmem [shape: f32[1,4], index: 7, kind: input, shape index: {}]
  %s8 = inlined_call_operand.vmem [shape: f32[4,8], index: 8, kind: input, shape index: {}]
  %s9 = inlined_call_operand.vmem [shape: f32[2,4,8,8,8], index: 9, kind: output, shape index: {}]
  %s10 = sld [smem:[#allocation0]]
  $region77: #{forward.1} parent=0
    _
  %s12 = ssub.s32 1, %s10
  %s13 = scalar_select 0, %s12, %s10
  $region1: #{forward.1} parent=0
    #allocation4 [shape = 'u8[512]{0}', space=smem, size = 0x200, scoped, tag = 'input window, operand 1, single buffered']
    #allocation5 [shape = 's32[2]{0}', space=sflag, size = 0x8, scoped, tag = 'scoped memory for forward.1']
    #allocation6 [shape = 'u8[512]{0}', space=smem, size = 0x200, scoped, tag = 'input window, operand 2, single buffered']
    #allocation7 [shape = 's32[1]{0}', space=sflag, size = 0x4, scoped, tag = 'scoped memory for forward.1']
    %14 = vsyncpa [#allocation5], 0
    %15 = vsyncpa [#allocation7], 0
    loop: start=0, step=1, limit=4
    $region2: #{forward.1} parent=1 // loop_pre_header
      _
    $region3: #{forward.1} parent=1 // loop_header
      %s17 = sphi 0, %s21
      %p18 = scmp.ge.s32.totalorder %s17, 4
      %s27 = sphi 0, %s29
      %s30 = sphi 0, %s27
      %s31 = sphi 0, %s30
      %s47 = sphi 0, %s31
      %s51 = sphi 0, %s51
      %s53 = sphi 0, %s51
      %s54 = sphi 0, %s53
      %s68 = sphi 0, %s54
      %s72 = sphi 0, %s72
      %s74 = sphi 0, %s72
      %s75 = sphi 0, %s74
      %s89 = sphi 0, %s75
      %s93 = sphi 0, %s93
      %s95 = sphi 0, %s93
      %s96 = sphi 0, %s95
      %s110 = sphi 0, %s96
      %s114 = sphi 0, %s114
      %s116 = sphi 0, %s114
      %s117 = sphi 0, %s116
      %s131 = sphi 0, %s117
      %s135 = sphi 0, %s135
      %s137 = sphi 0, %s135
      %s138 = sphi 0, %s137
      %s152 = sphi 0, %s138
      %s156 = sphi 0, %s156
      %s158 = sphi 0, %s156
      %s159 = sphi 0, %s158
      %s173 = sphi 0, %s159
      %s177 = sphi 0, %s177
      %s179 = sphi 0, %s177
      %s180 = sphi 0, %s179
      %s194 = sphi 0, %s180
      %s198 = sphi 0, %s198
      %s200 = sphi 0, %s198
      %s201 = sphi 0, %s200
      %s215 = sphi 0, %s201
      %s221 = sphi 0, %s223
      %s224 = sphi 0, %s221
      %s225 = sphi 0, %s224
      %s241 = sphi 0, %s225
    $region4: #{forward.1} parent=1 // loop_header_branch
      %20 = sbr.rel (%p18) target = $region8
    $region5: #{forward.1} parent=1 // loop_body
      %s22 = ssub.s32 %s17, 1
      %s23 = ssub.s32 %s17, 2
      %s24 = sadd.s32 %s17, 1
      %s25 = ssub.s32 %s17, %s24
      %p26 = scmp.eq.s32.totalorder %s25, 0
      %s28 = sadd.s32 %s27, 1
      %s29 = scalar_select %p26, %s27, %s28
      %p32 = pneg %p26
      %p33 = scmp.eq.s32.totalorder %s17, 1
      %p34 = por %p32, %p33
      %p35 = scmp.ne.s32.totalorder %s27, %s30
      %p36 = scmp.eq.s32.totalorder %s17, 0
      %p37 = por %p35, %p36
      %p38 = scmp.ne.s32.totalorder %s27, %s30
      %p39 = scmp.eq.s32.totalorder %s22, 1
      %p40 = por %p38, %p39
      %p41 = scmp.ne.s32.totalorder %s30, %s31
      %p42 = scmp.eq.s32.totalorder %s22, 0
      %p43 = por %p41, %p42
      %p44 = scmp.ne.s32.totalorder %s30, %s31
      %p45 = scmp.eq.s32.totalorder %s23, 1
      %p46 = por %p44, %p45
      %p48 = scmp.ne.s32.totalorder %s31, %s47
      %p49 = scmp.eq.s32.totalorder %s23, 0
      %p50 = por %p48, %p49
      %s52 = sadd.s32 %s51, 1
      %p55 = scmp.eq.s32.totalorder %s17, 1
      %p56 = scmp.ne.s32.totalorder %s51, %s53
      %p57 = scmp.eq.s32.totalorder %s17, 0
      %p58 = por %p56, %p57
      %p59 = scmp.ne.s32.totalorder %s51, %s53
      %p60 = scmp.eq.s32.totalorder %s22, 1
      %p61 = por %p59, %p60
      %p62 = scmp.ne.s32.totalorder %s53, %s54
      %p63 = scmp.eq.s32.totalorder %s22, 0
      %p64 = por %p62, %p63
      %p65 = scmp.ne.s32.totalorder %s53, %s54
      %p66 = scmp.eq.s32.totalorder %s23, 1
      %p67 = por %p65, %p66
      %p69 = scmp.ne.s32.totalorder %s54, %s68
      %p70 = scmp.eq.s32.totalorder %s23, 0
      %p71 = por %p69, %p70
      %s73 = sadd.s32 %s72, 1
      %p76 = scmp.eq.s32.totalorder %s17, 1
      %p77 = scmp.ne.s32.totalorder %s72, %s74
      %p78 = scmp.eq.s32.totalorder %s17, 0
      %p79 = por %p77, %p78
      %p80 = scmp.ne.s32.totalorder %s72, %s74
      %p81 = scmp.eq.s32.totalorder %s22, 1
      %p82 = por %p80, %p81
      %p83 = scmp.ne.s32.totalorder %s74, %s75
      %p84 = scmp.eq.s32.totalorder %s22, 0
      %p85 = por %p83, %p84
      %p86 = scmp.ne.s32.totalorder %s74, %s75
      %p87 = scmp.eq.s32.totalorder %s23, 1
      %p88 = por %p86, %p87
      %p90 = scmp.ne.s32.totalorder %s75, %s89
      %p91 = scmp.eq.s32.totalorder %s23, 0
      %p92 = por %p90, %p91
      %s94 = sadd.s32 %s93, 1
      %p97 = scmp.eq.s32.totalorder %s17, 1
      %p98 = scmp.ne.s32.totalorder %s93, %s95
      %p99 = scmp.eq.s32.totalorder %s17, 0
      %p100 = por %p98, %p99
      %p101 = scmp.ne.s32.totalorder %s93, %s95
      %p102 = scmp.eq.s32.totalorder %s22, 1
      %p103 = por %p101, %p102
      %p104 = scmp.ne.s32.totalorder %s95, %s96
      %p105 = scmp.eq.s32.totalorder %s22, 0
      %p106 = por %p104, %p105
      %p107 = scmp.ne.s32.totalorder %s95, %s96
      %p108 = scmp.eq.s32.totalorder %s23, 1
      %p109 = por %p107, %p108
      %p111 = scmp.ne.s32.totalorder %s96, %s110
      %p112 = scmp.eq.s32.totalorder %s23, 0
      %p113 = por %p111, %p112
      %s115 = sadd.s32 %s114, 1
      %p118 = scmp.eq.s32.totalorder %s17, 1
      %p119 = scmp.ne.s32.totalorder %s114, %s116
      %p120 = scmp.eq.s32.totalorder %s17, 0
      %p121 = por %p119, %p120
      %p122 = scmp.ne.s32.totalorder %s114, %s116
      %p123 = scmp.eq.s32.totalorder %s22, 1
      %p124 = por %p122, %p123
      %p125 = scmp.ne.s32.totalorder %s116, %s117
      %p126 = scmp.eq.s32.totalorder %s22, 0
      %p127 = por %p125, %p126
      %p128 = scmp.ne.s32.totalorder %s116, %s117
      %p129 = scmp.eq.s32.totalorder %s23, 1
      %p130 = por %p128, %p129
      %p132 = scmp.ne.s32.totalorder %s117, %s131
      %p133 = scmp.eq.s32.totalorder %s23, 0
      %p134 = por %p132, %p133
      %s136 = sadd.s32 %s135, 1
      %p139 = scmp.eq.s32.totalorder %s17, 1
      %p140 = scmp.ne.s32.totalorder %s135, %s137
      %p141 = scmp.eq.s32.totalorder %s17, 0
      %p142 = por %p140, %p141
      %p143 = scmp.ne.s32.totalorder %s135, %s137
      %p144 = scmp.eq.s32.totalorder %s22, 1
      %p145 = por %p143, %p144
      %p146 = scmp.ne.s32.totalorder %s137, %s138
      %p147 = scmp.eq.s32.totalorder %s22, 0
      %p148 = por %p146, %p147
      %p149 = scmp.ne.s32.totalorder %s137, %s138
      %p150 = scmp.eq.s32.totalorder %s23, 1
      %p151 = por %p149, %p150
      %p153 = scmp.ne.s32.totalorder %s138, %s152
      %p154 = scmp.eq.s32.totalorder %s23, 0
      %p155 = por %p153, %p154
      %s157 = sadd.s32 %s156, 1
      %p160 = scmp.eq.s32.totalorder %s17, 1
      %p161 = scmp.ne.s32.totalorder %s156, %s158
      %p162 = scmp.eq.s32.totalorder %s17, 0
      %p163 = por %p161, %p162
      %p164 = scmp.ne.s32.totalorder %s156, %s158
      %p165 = scmp.eq.s32.totalorder %s22, 1
      %p166 = por %p164, %p165
      %p167 = scmp.ne.s32.totalorder %s158, %s159
      %p168 = scmp.eq.s32.totalorder %s22, 0
      %p169 = por %p167, %p168
      %p170 = scmp.ne.s32.totalorder %s158, %s159
      %p171 = scmp.eq.s32.totalorder %s23, 1
      %p172 = por %p170, %p171
      %p174 = scmp.ne.s32.totalorder %s159, %s173
      %p175 = scmp.eq.s32.totalorder %s23, 0
      %p176 = por %p174, %p175
      %s178 = sadd.s32 %s177, 1
      %p181 = scmp.eq.s32.totalorder %s17, 1
      %p182 = scmp.ne.s32.totalorder %s177, %s179
      %p183 = scmp.eq.s32.totalorder %s17, 0
      %p184 = por %p182, %p183
      %p185 = scmp.ne.s32.totalorder %s177, %s179
      %p186 = scmp.eq.s32.totalorder %s22, 1
      %p187 = por %p185, %p186
      %p188 = scmp.ne.s32.totalorder %s179, %s180
      %p189 = scmp.eq.s32.totalorder %s22, 0
      %p190 = por %p188, %p189
      %p191 = scmp.ne.s32.totalorder %s179, %s180
      %p192 = scmp.eq.s32.totalorder %s23, 1
      %p193 = por %p191, %p192
      %p195 = scmp.ne.s32.totalorder %s180, %s194
      %p196 = scmp.eq.s32.totalorder %s23, 0
      %p197 = por %p195, %p196
      %s199 = sadd.s32 %s198, 1
      %p202 = scmp.eq.s32.totalorder %s17, 1
      %p203 = scmp.ne.s32.totalorder %s198, %s200
      %p204 = scmp.eq.s32.totalorder %s17, 0
      %p205 = por %p203, %p204
      %p206 = scmp.ne.s32.totalorder %s198, %s200
      %p207 = scmp.eq.s32.totalorder %s22, 1
      %p208 = por %p206, %p207
      %p209 = scmp.ne.s32.totalorder %s200, %s201
      %p210 = scmp.eq.s32.totalorder %s22, 0
      %p211 = por %p209, %p210
      %p212 = scmp.ne.s32.totalorder %s200, %s201
      %p213 = scmp.eq.s32.totalorder %s23, 1
      %p214 = por %p212, %p213
      %p216 = scmp.ne.s32.totalorder %s201, %s215
      %p217 = scmp.eq.s32.totalorder %s23, 0
      %p218 = por %p216, %p217
      %s219 = ssub.s32 %s17, %s24
      %p220 = scmp.eq.s32.totalorder %s219, 0
      %s222 = sadd.s32 %s221, 1
      %s223 = scalar_select %p220, %s221, %s222
      %p226 = pneg %p220
      %p227 = scmp.eq.s32.totalorder %s17, 1
      %p228 = por %p226, %p227
      %p229 = scmp.ne.s32.totalorder %s221, %s224
      %p230 = scmp.eq.s32.totalorder %s17, 0
      %p231 = por %p229, %p230
      %p232 = scmp.ne.s32.totalorder %s221, %s224
      %p233 = scmp.eq.s32.totalorder %s22, 1
      %p234 = por %p232, %p233
      %p235 = scmp.ne.s32.totalorder %s224, %s225
      %p236 = scmp.eq.s32.totalorder %s22, 0
      %p237 = por %p235, %p236
      %p238 = scmp.ne.s32.totalorder %s224, %s225
      %p239 = scmp.eq.s32.totalorder %s23, 1
      %p240 = por %p238, %p239
      %p242 = scmp.ne.s32.totalorder %s225, %s241
      %p243 = scmp.eq.s32.totalorder %s23, 0
      %p244 = por %p242, %p243
      %p245 = scmp.le.s32.totalorder 1, %s17
      %p246 = scmp.lt.s32.totalorder %s17, 3
      %p247 = pnand %p245, %p246
      %p248 = pneg %p247
      // Predicated region
      $region9: #{forward.1} parent=5 // pred_check
        _
      $region10: #{forward.1} parent=5 // pred_check_branch
        %250 = sbr.rel (%p247) target = $region12
      $region11: #{forward.1} parent=5 // pred_region
        %s251 = ssub.s32 %s17, 1
        // Predicated region
        $region13: #{forward.1} parent=11 // pred_check
          %p252 = pneg %p64
        $region14: #{forward.1} parent=11 // pred_check_branch
          %254 = sbr.rel (%p252) target = $region16
        $region15: #{forward.1} parent=11 // pred_region
          %s256 = ssub.s32 16, 16
          %257 = vsyncadd [#allocation5], %s256
          %s259 = sshll.u32 %s1, 4
          %s260 = int_to_ptr.vmem [resolvable:$true] %s259
          %262 = dma.vmem_to_smem %s260, 16, [#allocation4], [#allocation5]
        $region16: #{forward.1} parent=11 // pred_fallthru
          _
        // Predicated region
        $region17: #{forward.1} parent=11 // pred_check
          %p263 = pneg %p85
        $region18: #{forward.1} parent=11 // pred_check_branch
          %265 = sbr.rel (%p263) target = $region20
        $region19: #{forward.1} parent=11 // pred_region
          %s267 = ssub.s32 16, 16
          %268 = vsyncadd [#allocation7], %s267
          %s270 = sshll.u32 %s2, 4
          %s271 = int_to_ptr.vmem [resolvable:$true] %s270
          %273 = dma.vmem_to_smem %s271, 16, [#allocation6], [#allocation7]
        $region20: #{forward.1} parent=11 // pred_fallthru
          _
        // Predicated region
        $region21: #{forward.1} parent=11 // pred_check
          %p274 = pneg %p106
        $region22: #{forward.1} parent=11 // pred_check_branch
          %276 = sbr.rel (%p274) target = $region24
        $region23: #{forward.1} parent=11 // pred_region
          _
        $region24: #{forward.1} parent=11 // pred_fallthru
          _
        // Predicated region
        $region25: #{forward.1} parent=11 // pred_check
          %p277 = pneg %p127
        $region26: #{forward.1} parent=11 // pred_check_branch
          %279 = sbr.rel (%p277) target = $region28
        $region27: #{forward.1} parent=11 // pred_region
          _
        $region28: #{forward.1} parent=11 // pred_fallthru
          _
        // Predicated region
        $region29: #{forward.1} parent=11 // pred_check
          %p280 = pneg %p148
        $region30: #{forward.1} parent=11 // pred_check_branch
          %282 = sbr.rel (%p280) target = $region32
        $region31: #{forward.1} parent=11 // pred_region
          _
        $region32: #{forward.1} parent=11 // pred_fallthru
          _
        // Predicated region
        $region33: #{forward.1} parent=11 // pred_check
          %p283 = pneg %p169
        $region34: #{forward.1} parent=11 // pred_check_branch
          %285 = sbr.rel (%p283) target = $region36
        $region35: #{forward.1} parent=11 // pred_region
          _
        $region36: #{forward.1} parent=11 // pred_fallthru
          _
        // Predicated region
        $region37: #{forward.1} parent=11 // pred_check
          %p286 = pneg %p190
        $region38: #{forward.1} parent=11 // pred_check_branch
          %288 = sbr.rel (%p286) target = $region40
        $region39: #{forward.1} parent=11 // pred_region
          _
        $region40: #{forward.1} parent=11 // pred_fallthru
          _
        // Predicated region
        $region41: #{forward.1} parent=11 // pred_check
          %p289 = pneg %p211
        $region42: #{forward.1} parent=11 // pred_check_branch
          %291 = sbr.rel (%p289) target = $region44
        $region43: #{forward.1} parent=11 // pred_region
          _
        $region44: #{forward.1} parent=11 // pred_fallthru
          _
      $region12: #{forward.1} parent=5 // pred_fallthru
        _
      %p292 = scmp.lt.s32.totalorder %s17, 2
      // Predicated region
      $region45: #{forward.1} parent=5 // pred_check
        %p293 = pneg %p292
      $region46: #{forward.1} parent=5 // pred_check_branch
        %295 = sbr.rel (%p293) target = $region48
      $region47: #{forward.1} parent=5 // pred_region
        // Predicated region
        $region49: #{forward.1} parent=47 // pred_check
          %p296 = pneg %p37
        $region50: #{forward.1} parent=47 // pred_check_branch
          %298 = sbr.rel (%p296) target = $region52
        $region51: #{forward.1} parent=47 // pred_region
          %p299 = scmp.lt.s32.totalorder %s17, 1
          %s300 = scalar_select %p299, %s17, 1
          %s301 = smul.addr %s300, 32
          %s302 = smul.addr %s301, 8
          %s303 = scalar_lea.vmem %s0, %s302
        $region52: #{forward.1} parent=47 // pred_fallthru
          _
      $region48: #{forward.1} parent=5 // pred_fallthru
        _
      %p304 = scmp.le.s32.totalorder 1, %s17
      %p305 = scmp.lt.s32.totalorder %s17, 3
      %p306 = pnand %p304, %p305
      %p307 = pneg %p306
      // Predicated region
      $region53: #{forward.1} parent=5 // pred_check
        _
      $region54: #{forward.1} parent=5 // pred_check_branch
        %309 = sbr.rel (%p306) target = $region56
      $region55: #{forward.1} parent=5 // pred_region
        %s310 = ssub.s32 %s17, 1
        // Predicated region
        $region57: #{forward.1} parent=55 // pred_check
          %p311 = pneg %p64
        $region58: #{forward.1} parent=55 // pred_check_branch
          %313 = sbr.rel (%p311) target = $region60
        $region59: #{forward.1} parent=55 // pred_region
          %314 = dma.done [#allocation5], 16
        $region60: #{forward.1} parent=55 // pred_fallthru
          _
        // Predicated region
        $region61: #{forward.1} parent=55 // pred_check
          %p315 = pneg %p85
        $region62: #{forward.1} parent=55 // pred_check_branch
          %317 = sbr.rel (%p315) target = $region64
        $region63: #{forward.1} parent=55 // pred_region
          %318 = dma.done [#allocation7], 16
        $region64: #{forward.1} parent=55 // pred_fallthru
          _
        %319 = sfence
        %p320 = scmp.lt.s32.totalorder %s22, 1
        %s321 = scalar_select %p320, %s22, 1
        %s322 = smul.addr %s321, 32
        %s323 = smul.addr %s322, 8
        %s324 = scalar_lea.vmem %s0, %s323
        %p325 = pneg %p43
        %p326 = pneg %p40
        %p327 = pneg %p64
        %p328 = pneg %p61
        %p329 = pneg %p85
        %p330 = pneg %p82
        %p331 = pneg %p106
        %p332 = pneg %p103
        %p333 = pneg %p127
        %p334 = pneg %p124
        %p335 = pneg %p148
        %p336 = pneg %p145
        %p337 = pneg %p169
        %p338 = pneg %p166
        %p339 = pneg %p190
        %p340 = pneg %p187
        %p341 = pneg %p211
        %p342 = pneg %p208
        %p343 = pneg %p237
        %p344 = pneg %p234
        %p345 = scmp.lt.s32.totalorder %s22, 1
        %s346 = scalar_select %p345, %s22, 1
        %s347 = smul.addr %s346, 32
        %s348 = smul.addr %s347, 8
        %s349 = scalar_lea.vmem %s9, %s348
        %p350 = scmp.lt.s32.totalorder %s22, 1
        %s351 = scalar_select %p350, %s22, 1
        %s352 = smul.addr %s351, 32
        %s353 = smul.addr %s352, 8
        %s354 = scalar_lea.vmem %s0, %s353
        %p355 = scmp.lt.s32.totalorder %s22, 1
        %s356 = scalar_select %p355, %s22, 1
        %s357 = smul.addr %s356, 32
        %s358 = smul.addr %s357, 8
        %s359 = scalar_lea.vmem %s9, %s358
        %vm360 = vcmask 31744
        %361 = vst.msk [vmem:[#allocation2] sm:$0xff] %vm360, 0.0
        %vm362 = vcmask 25600
        %363 = vst.msk [vmem:[#allocation2 + $0x8] sm:$0x3] %vm362, 0.0
        %364 = vst.msk [vmem:[#allocation2 + $0xa0] sm:$0xff] %vm360, 0.0
        %365 = vst.msk [vmem:[#allocation2 + $0xa8] sm:$0x3] %vm362, 0.0
        %366 = vst.msk [vmem:[#allocation2 + $0x140] sm:$0xff] %vm360, 0.0
        %367 = vst.msk [vmem:[#allocation2 + $0x148] sm:$0x3] %vm362, 0.0
        %368 = vst.msk [vmem:[#allocation2 + $0x1e0] sm:$0xff] %vm360, 0.0
        %369 = vst.msk [vmem:[#allocation2 + $0x1e8] sm:$0x3] %vm362, 0.0
        %370 = vst.msk [vmem:[#allocation2 + $0x280] sm:$0xff] %vm360, 0.0
        %371 = vst.msk [vmem:[#allocation2 + $0x288] sm:$0x3] %vm362, 0.0
        %372 = vst.msk [vmem:[#allocation2 + $0x320] sm:$0xff] %vm360, 0.0
        %373 = vst.msk [vmem:[#allocation2 + $0x328] sm:$0x3] %vm362, 0.0
        %374 = vst.msk [vmem:[#allocation2 + $0x3c0] sm:$0xff] %vm360, 0.0
        %375 = vst.msk [vmem:[#allocation2 + $0x3c8] sm:$0x3] %vm362, 0.0
        %376 = vst.msk [vmem:[#allocation2 + $0x460] sm:$0xff] %vm360, 0.0
        %377 = vst.msk [vmem:[#allocation2 + $0x468] sm:$0x3] %vm362, 0.0
        %s378 = scalar_lea.vmem [#allocation2], 144
        %379 = vst.msk [vmem:[%s378] sm:$0xff] %vm360, 0.0
        %380 = vst.msk [vmem:[%s378 + $0x8] sm:$0x3] %vm362, 0.0
        %381 = vst.msk [vmem:[%s378 + $0xa0] sm:$0xff] %vm360, 0.0
        %382 = vst.msk [vmem:[%s378 + $0xa8] sm:$0x3] %vm362, 0.0
        %383 = vst.msk [vmem:[%s378 + $0x140] sm:$0xff] %vm360, 0.0
        %384 = vst.msk [vmem:[%s378 + $0x148] sm:$0x3] %vm362, 0.0
        %385 = vst.msk [vmem:[%s378 + $0x1e0] sm:$0xff] %vm360, 0.0
        %386 = vst.msk [vmem:[%s378 + $0x1e8] sm:$0x3] %vm362, 0.0
        %387 = vst.msk [vmem:[%s378 + $0x280] sm:$0xff] %vm360, 0.0
        %388 = vst.msk [vmem:[%s378 + $0x288] sm:$0x3] %vm362, 0.0
        %389 = vst.msk [vmem:[%s378 + $0x320] sm:$0xff] %vm360, 0.0
        %390 = vst.msk [vmem:[%s378 + $0x328] sm:$0x3] %vm362, 0.0
        %391 = vst.msk [vmem:[%s378 + $0x3c0] sm:$0xff] %vm360, 0.0
        %392 = vst.msk [vmem:[%s378 + $0x3c8] sm:$0x3] %vm362, 0.0
        %393 = vst.msk [vmem:[%s378 + $0x460] sm:$0xff] %vm360, 0.0
        %394 = vst.msk [vmem:[%s378 + $0x468] sm:$0x3] %vm362, 0.0
        %vm395 = vcmask 24576
        %396 = vst.msk [vmem:[#allocation2] sm:$0x1] %vm395, 0.0
        %397 = vst.msk [vmem:[#allocation2 + $0x10] sm:$0x1] %vm395, 0.0
        %398 = vst.msk [vmem:[#allocation2 + $0x20] sm:$0x1] %vm395, 0.0
        %399 = vst.msk [vmem:[#allocation2 + $0x30] sm:$0x1] %vm395, 0.0
        %400 = vst.msk [vmem:[#allocation2 + $0x40] sm:$0x1] %vm395, 0.0
        %401 = vst.msk [vmem:[#allocation2 + $0x50] sm:$0x1] %vm395, 0.0
        %402 = vst.msk [vmem:[#allocation2 + $0x60] sm:$0x1] %vm395, 0.0
        %403 = vst.msk [vmem:[#allocation2 + $0x70] sm:$0x1] %vm395, 0.0
        %404 = vst.msk [vmem:[#allocation2 + $0x80] sm:$0x1] %vm395, 0.0
        %405 = vst.msk [vmem:[#allocation2 + $0x90] sm:$0x1] %vm395, 0.0
        %406 = vst.msk [vmem:[#allocation2 + $0xa0] sm:$0x1] %vm395, 0.0
        %407 = vst.msk [vmem:[#allocation2 + $0xb0] sm:$0x1] %vm395, 0.0
        %408 = vst.msk [vmem:[#allocation2 + $0xc0] sm:$0x1] %vm395, 0.0
        %409 = vst.msk [vmem:[#allocation2 + $0xd0] sm:$0x1] %vm395, 0.0
        %410 = vst.msk [vmem:[#allocation2 + $0xe0] sm:$0x1] %vm395, 0.0
        %411 = vst.msk [vmem:[#allocation2 + $0xf0] sm:$0x1] %vm395, 0.0
        %412 = vst.msk [vmem:[#allocation2 + $0x100] sm:$0x1] %vm395, 0.0
        %413 = vst.msk [vmem:[#allocation2 + $0x110] sm:$0x1] %vm395, 0.0
        %414 = vst.msk [vmem:[#allocation2 + $0x120] sm:$0x1] %vm395, 0.0
        %415 = vst.msk [vmem:[#allocation2 + $0x130] sm:$0x1] %vm395, 0.0
        %416 = vst.msk [vmem:[#allocation2 + $0x140] sm:$0x1] %vm395, 0.0
        %417 = vst.msk [vmem:[#allocation2 + $0x150] sm:$0x1] %vm395, 0.0
        %418 = vst.msk [vmem:[#allocation2 + $0x160] sm:$0x1] %vm395, 0.0
        %419 = vst.msk [vmem:[#allocation2 + $0x170] sm:$0x1] %vm395, 0.0
        %420 = vst.msk [vmem:[#allocation2 + $0x180] sm:$0x1] %vm395, 0.0
        %421 = vst.msk [vmem:[#allocation2 + $0x190] sm:$0x1] %vm395, 0.0
        %422 = vst.msk [vmem:[#allocation2 + $0x1a0] sm:$0x1] %vm395, 0.0
        %423 = vst.msk [vmem:[#allocation2 + $0x1b0] sm:$0x1] %vm395, 0.0
        %424 = vst.msk [vmem:[#allocation2 + $0x1c0] sm:$0x1] %vm395, 0.0
        %425 = vst.msk [vmem:[#allocation2 + $0x1d0] sm:$0x1] %vm395, 0.0
        %426 = vst.msk [vmem:[#allocation2 + $0x1e0] sm:$0x1] %vm395, 0.0
        %427 = vst.msk [vmem:[#allocation2 + $0x1f0] sm:$0x1] %vm395, 0.0
        %428 = vst.msk [vmem:[#allocation2 + $0x200] sm:$0x1] %vm395, 0.0
        %429 = vst.msk [vmem:[#allocation2 + $0x210] sm:$0x1] %vm395, 0.0
        %430 = vst.msk [vmem:[#allocation2 + $0x220] sm:$0x1] %vm395, 0.0
        %431 = vst.msk [vmem:[#allocation2 + $0x230] sm:$0x1] %vm395, 0.0
        %432 = vst.msk [vmem:[#allocation2 + $0x240] sm:$0x1] %vm395, 0.0
        %433 = vst.msk [vmem:[#allocation2 + $0x250] sm:$0x1] %vm395, 0.0
        %434 = vst.msk [vmem:[#allocation2 + $0x260] sm:$0x1] %vm395, 0.0
        %435 = vst.msk [vmem:[#allocation2 + $0x270] sm:$0x1] %vm395, 0.0
        %436 = vst.msk [vmem:[#allocation2 + $0x280] sm:$0x1] %vm395, 0.0
        %437 = vst.msk [vmem:[#allocation2 + $0x290] sm:$0x1] %vm395, 0.0
        %438 = vst.msk [vmem:[#allocation2 + $0x2a0] sm:$0x1] %vm395, 0.0
        %439 = vst.msk [vmem:[#allocation2 + $0x2b0] sm:$0x1] %vm395, 0.0
        %440 = vst.msk [vmem:[#allocation2 + $0x2c0] sm:$0x1] %vm395, 0.0
        %441 = vst.msk [vmem:[#allocation2 + $0x2d0] sm:$0x1] %vm395, 0.0
        %442 = vst.msk [vmem:[#allocation2 + $0x2e0] sm:$0x1] %vm395, 0.0
        %443 = vst.msk [vmem:[#allocation2 + $0x2f0] sm:$0x1] %vm395, 0.0
        %444 = vst.msk [vmem:[#allocation2 + $0x300] sm:$0x1] %vm395, 0.0
        %445 = vst.msk [vmem:[#allocation2 + $0x310] sm:$0x1] %vm395, 0.0
        %446 = vst.msk [vmem:[#allocation2 + $0x320] sm:$0x1] %vm395, 0.0
        %447 = vst.msk [vmem:[#allocation2 + $0x330] sm:$0x1] %vm395, 0.0
        %448 = vst.msk [vmem:[#allocation2 + $0x340] sm:$0x1] %vm395, 0.0
        %449 = vst.msk [vmem:[#allocation2 + $0x350] sm:$0x1] %vm395, 0.0
        %450 = vst.msk [vmem:[#allocation2 + $0x360] sm:$0x1] %vm395, 0.0
        %451 = vst.msk [vmem:[#allocation2 + $0x370] sm:$0x1] %vm395, 0.0
        %452 = vst.msk [vmem:[#allocation2 + $0x380] sm:$0x1] %vm395, 0.0
        %453 = vst.msk [vmem:[#allocation2 + $0x390] sm:$0x1] %vm395, 0.0
        %454 = vst.msk [vmem:[#allocation2 + $0x3a0] sm:$0x1] %vm395, 0.0
        %455 = vst.msk [vmem:[#allocation2 + $0x3b0] sm:$0x1] %vm395, 0.0
        %456 = vst.msk [vmem:[#allocation2 + $0x3c0] sm:$0x1] %vm395, 0.0
        %457 = vst.msk [vmem:[#allocation2 + $0x3d0] sm:$0x1] %vm395, 0.0
        %458 = vst.msk [vmem:[#allocation2 + $0x3e0] sm:$0x1] %vm395, 0.0
        %459 = vst.msk [vmem:[#allocation2 + $0x3f0] sm:$0x1] %vm395, 0.0
        %460 = vst.msk [vmem:[#allocation2 + $0x400] sm:$0x1] %vm395, 0.0
        %461 = vst.msk [vmem:[#allocation2 + $0x410] sm:$0x1] %vm395, 0.0
        %462 = vst.msk [vmem:[#allocation2 + $0x420] sm:$0x1] %vm395, 0.0
        %463 = vst.msk [vmem:[#allocation2 + $0x430] sm:$0x1] %vm395, 0.0
        %464 = vst.msk [vmem:[#allocation2 + $0x440] sm:$0x1] %vm395, 0.0
        %465 = vst.msk [vmem:[#allocation2 + $0x450] sm:$0x1] %vm395, 0.0
        %466 = vst.msk [vmem:[#allocation2 + $0x460] sm:$0x1] %vm395, 0.0
        %467 = vst.msk [vmem:[#allocation2 + $0x470] sm:$0x1] %vm395, 0.0
        %468 = vst.msk [vmem:[#allocation2 + $0x480] sm:$0x1] %vm395, 0.0
        %469 = vst.msk [vmem:[#allocation2 + $0x490] sm:$0x1] %vm395, 0.0
        %470 = vst.msk [vmem:[#allocation2 + $0x4a0] sm:$0x1] %vm395, 0.0
        %471 = vst.msk [vmem:[#allocation2 + $0x4b0] sm:$0x1] %vm395, 0.0
        %472 = vst.msk [vmem:[#allocation2 + $0x4c0] sm:$0x1] %vm395, 0.0
        %473 = vst.msk [vmem:[#allocation2 + $0x4d0] sm:$0x1] %vm395, 0.0
        %474 = vst.msk [vmem:[#allocation2 + $0x4e0] sm:$0x1] %vm395, 0.0
        %475 = vst.msk [vmem:[#allocation2 + $0x4f0] sm:$0x1] %vm395, 0.0
        %476 = vst.msk [vmem:[#allocation2 + $0x9] sm:$0x1] %vm395, 0.0
        %477 = vst.msk [vmem:[#allocation2 + $0x19] sm:$0x1] %vm395, 0.0
        %478 = vst.msk [vmem:[#allocation2 + $0x29] sm:$0x1] %vm395, 0.0
        %479 = vst.msk [vmem:[#allocation2 + $0x39] sm:$0x1] %vm395, 0.0
        %480 = vst.msk [vmem:[#allocation2 + $0x49] sm:$0x1] %vm395, 0.0
        %481 = vst.msk [vmem:[#allocation2 + $0x59] sm:$0x1] %vm395, 0.0
        %482 = vst.msk [vmem:[#allocation2 + $0x69] sm:$0x1] %vm395, 0.0
        %483 = vst.msk [vmem:[#allocation2 + $0x79] sm:$0x1] %vm395, 0.0
        %484 = vst.msk [vmem:[#allocation2 + $0x89] sm:$0x1] %vm395, 0.0
        %485 = vst.msk [vmem:[#allocation2 + $0x99] sm:$0x1] %vm395, 0.0
        %486 = vst.msk [vmem:[#allocation2 + $0xa9] sm:$0x1] %vm395, 0.0
        %487 = vst.msk [vmem:[#allocation2 + $0xb9] sm:$0x1] %vm395, 0.0
        %488 = vst.msk [vmem:[#allocation2 + $0xc9] sm:$0x1] %vm395, 0.0
        %489 = vst.msk [vmem:[#allocation2 + $0xd9] sm:$0x1] %vm395, 0.0
        %490 = vst.msk [vmem:[#allocation2 + $0xe9] sm:$0x1] %vm395, 0.0
        %491 = vst.msk [vmem:[#allocation2 + $0xf9] sm:$0x1] %vm395, 0.0
        %492 = vst.msk [vmem:[#allocation2 + $0x109] sm:$0x1] %vm395, 0.0
        %493 = vst.msk [vmem:[#allocation2 + $0x119] sm:$0x1] %vm395, 0.0
        %494 = vst.msk [vmem:[#allocation2 + $0x129] sm:$0x1] %vm395, 0.0
        %495 = vst.msk [vmem:[#allocation2 + $0x139] sm:$0x1] %vm395, 0.0
        %496 = vst.msk [vmem:[#allocation2 + $0x149] sm:$0x1] %vm395, 0.0
        %497 = vst.msk [vmem:[#allocation2 + $0x159] sm:$0x1] %vm395, 0.0
        %498 = vst.msk [vmem:[#allocation2 + $0x169] sm:$0x1] %vm395, 0.0
        %499 = vst.msk [vmem:[#allocation2 + $0x179] sm:$0x1] %vm395, 0.0
        %500 = vst.msk [vmem:[#allocation2 + $0x189] sm:$0x1] %vm395, 0.0
        %501 = vst.msk [vmem:[#allocation2 + $0x199] sm:$0x1] %vm395, 0.0
        %502 = vst.msk [vmem:[#allocation2 + $0x1a9] sm:$0x1] %vm395, 0.0
        %503 = vst.msk [vmem:[#allocation2 + $0x1b9] sm:$0x1] %vm395, 0.0
        %504 = vst.msk [vmem:[#allocation2 + $0x1c9] sm:$0x1] %vm395, 0.0
        %505 = vst.msk [vmem:[#allocation2 + $0x1d9] sm:$0x1] %vm395, 0.0
        %506 = vst.msk [vmem:[#allocation2 + $0x1e9] sm:$0x1] %vm395, 0.0
        %507 = vst.msk [vmem:[#allocation2 + $0x1f9] sm:$0x1] %vm395, 0.0
        %508 = vst.msk [vmem:[#allocation2 + $0x209] sm:$0x1] %vm395, 0.0
        %509 = vst.msk [vmem:[#allocation2 + $0x219] sm:$0x1] %vm395, 0.0
        %510 = vst.msk [vmem:[#allocation2 + $0x229] sm:$0x1] %vm395, 0.0
        %511 = vst.msk [vmem:[#allocation2 + $0x239] sm:$0x1] %vm395, 0.0
        %512 = vst.msk [vmem:[#allocation2 + $0x249] sm:$0x1] %vm395, 0.0
        %513 = vst.msk [vmem:[#allocation2 + $0x259] sm:$0x1] %vm395, 0.0
        %514 = vst.msk [vmem:[#allocation2 + $0x269] sm:$0x1] %vm395, 0.0
        %515 = vst.msk [vmem:[#allocation2 + $0x279] sm:$0x1] %vm395, 0.0
        %516 = vst.msk [vmem:[#allocation2 + $0x289] sm:$0x1] %vm395, 0.0
        %517 = vst.msk [vmem:[#allocation2 + $0x299] sm:$0x1] %vm395, 0.0
        %518 = vst.msk [vmem:[#allocation2 + $0x2a9] sm:$0x1] %vm395, 0.0
        %519 = vst.msk [vmem:[#allocation2 + $0x2b9] sm:$0x1] %vm395, 0.0
        %520 = vst.msk [vmem:[#allocation2 + $0x2c9] sm:$0x1] %vm395, 0.0
        %521 = vst.msk [vmem:[#allocation2 + $0x2d9] sm:$0x1] %vm395, 0.0
        %522 = vst.msk [vmem:[#allocation2 + $0x2e9] sm:$0x1] %vm395, 0.0
        %523 = vst.msk [vmem:[#allocation2 + $0x2f9] sm:$0x1] %vm395, 0.0
        %524 = vst.msk [vmem:[#allocation2 + $0x309] sm:$0x1] %vm395, 0.0
        %525 = vst.msk [vmem:[#allocation2 + $0x319] sm:$0x1] %vm395, 0.0
        %526 = vst.msk [vmem:[#allocation2 + $0x329] sm:$0x1] %vm395, 0.0
        %527 = vst.msk [vmem:[#allocation2 + $0x339] sm:$0x1] %vm395, 0.0
        %528 = vst.msk [vmem:[#allocation2 + $0x349] sm:$0x1] %vm395, 0.0
        %529 = vst.msk [vmem:[#allocation2 + $0x359] sm:$0x1] %vm395, 0.0
        %530 = vst.msk [vmem:[#allocation2 + $0x369] sm:$0x1] %vm395, 0.0
        %531 = vst.msk [vmem:[#allocation2 + $0x379] sm:$0x1] %vm395, 0.0
        %532 = vst.msk [vmem:[#allocation2 + $0x389] sm:$0x1] %vm395, 0.0
        %533 = vst.msk [vmem:[#allocation2 + $0x399] sm:$0x1] %vm395, 0.0
        %534 = vst.msk [vmem:[#allocation2 + $0x3a9] sm:$0x1] %vm395, 0.0
        %535 = vst.msk [vmem:[#allocation2 + $0x3b9] sm:$0x1] %vm395, 0.0
        %536 = vst.msk [vmem:[#allocation2 + $0x3c9] sm:$0x1] %vm395, 0.0
        %537 = vst.msk [vmem:[#allocation2 + $0x3d9] sm:$0x1] %vm395, 0.0
        %538 = vst.msk [vmem:[#allocation2 + $0x3e9] sm:$0x1] %vm395, 0.0
        %539 = vst.msk [vmem:[#allocation2 + $0x3f9] sm:$0x1] %vm395, 0.0
        %540 = vst.msk [vmem:[#allocation2 + $0x409] sm:$0x1] %vm395, 0.0
        %541 = vst.msk [vmem:[#allocation2 + $0x419] sm:$0x1] %vm395, 0.0
        %542 = vst.msk [vmem:[#allocation2 + $0x429] sm:$0x1] %vm395, 0.0
        %543 = vst.msk [vmem:[#allocation2 + $0x439] sm:$0x1] %vm395, 0.0
        %544 = vst.msk [vmem:[#allocation2 + $0x449] sm:$0x1] %vm395, 0.0
        %545 = vst.msk [vmem:[#allocation2 + $0x459] sm:$0x1] %vm395, 0.0
        %546 = vst.msk [vmem:[#allocation2 + $0x469] sm:$0x1] %vm395, 0.0
        %547 = vst.msk [vmem:[#allocation2 + $0x479] sm:$0x1] %vm395, 0.0
        %548 = vst.msk [vmem:[#allocation2 + $0x489] sm:$0x1] %vm395, 0.0
        %549 = vst.msk [vmem:[#allocation2 + $0x499] sm:$0x1] %vm395, 0.0
        %550 = vst.msk [vmem:[#allocation2 + $0x4a9] sm:$0x1] %vm395, 0.0
        %551 = vst.msk [vmem:[#allocation2 + $0x4b9] sm:$0x1] %vm395, 0.0
        %552 = vst.msk [vmem:[#allocation2 + $0x4c9] sm:$0x1] %vm395, 0.0
        %553 = vst.msk [vmem:[#allocation2 + $0x4d9] sm:$0x1] %vm395, 0.0
        %554 = vst.msk [vmem:[#allocation2 + $0x4e9] sm:$0x1] %vm395, 0.0
        %555 = vst.msk [vmem:[#allocation2 + $0x4f9] sm:$0x1] %vm395, 0.0
        %v556 = vld [vmem:[%s354] sm:$0xff]
        %v557 = vld [vmem:[%s354 + $0x8] sm:$0xff]
        %v558 = vld [vmem:[%s354 + $0x10] sm:$0xff]
        %v559 = vld [vmem:[%s354 + $0x18] sm:$0xff]
        %v560 = vld [vmem:[%s354 + $0x20] sm:$0xff]
        %v561 = vld [vmem:[%s354 + $0x28] sm:$0xff]
        %v562 = vld [vmem:[%s354 + $0x30] sm:$0xff]
        %v563 = vld [vmem:[%s354 + $0x38] sm:$0xff]
        %v564 = vld [vmem:[%s354 + $0x40] sm:$0xff]
        %v565 = vld [vmem:[%s354 + $0x48] sm:$0xff]
        %v566 = vld [vmem:[%s354 + $0x50] sm:$0xff]
        %v567 = vld [vmem:[%s354 + $0x58] sm:$0xff]
        %v568 = vld [vmem:[%s354 + $0x60] sm:$0xff]
        %v569 = vld [vmem:[%s354 + $0x68] sm:$0xff]
        %v570 = vld [vmem:[%s354 + $0x70] sm:$0xff]
        %v571 = vld [vmem:[%s354 + $0x78] sm:$0xff]
        %v572 = vld [vmem:[%s354 + $0x80] sm:$0xff]
        %v573 = vld [vmem:[%s354 + $0x88] sm:$0xff]
        %v574 = vld [vmem:[%s354 + $0x90] sm:$0xff]
        %v575 = vld [vmem:[%s354 + $0x98] sm:$0xff]
        %v576 = vld [vmem:[%s354 + $0xa0] sm:$0xff]
        %v577 = vld [vmem:[%s354 + $0xa8] sm:$0xff]
        %v578 = vld [vmem:[%s354 + $0xb0] sm:$0xff]
        %v579 = vld [vmem:[%s354 + $0xb8] sm:$0xff]
        %v580 = vld [vmem:[%s354 + $0xc0] sm:$0xff]
        %v581 = vld [vmem:[%s354 + $0xc8] sm:$0xff]
        %v582 = vld [vmem:[%s354 + $0xd0] sm:$0xff]
        %v583 = vld [vmem:[%s354 + $0xd8] sm:$0xff]
        %v584 = vld [vmem:[%s354 + $0xe0] sm:$0xff]
        %v585 = vld [vmem:[%s354 + $0xe8] sm:$0xff]
        %v586 = vld [vmem:[%s354 + $0xf0] sm:$0xff]
        %v587 = vld [vmem:[%s354 + $0xf8] sm:$0xff]
        %s588 = scalar_lea.vmem [#allocation2], 16
        %589 = vst.msk [vmem:[%s588 + $0x1] sm:$0xff] %vm360, %v556
        %590 = vst.msk [vmem:[%s588 + $0x11] sm:$0xff] %vm360, %v557
        %591 = vst.msk [vmem:[%s588 + $0x21] sm:$0xff] %vm360, %v558
        %592 = vst.msk [vmem:[%s588 + $0x31] sm:$0xff] %vm360, %v559
        %593 = vst.msk [vmem:[%s588 + $0x41] sm:$0xff] %vm360, %v560
        %594 = vst.msk [vmem:[%s588 + $0x51] sm:$0xff] %vm360, %v561
        %595 = vst.msk [vmem:[%s588 + $0x61] sm:$0xff] %vm360, %v562
        %596 = vst.msk [vmem:[%s588 + $0x71] sm:$0xff] %vm360, %v563
        %s597 = scalar_lea.vmem [#allocation2], 176
        %598 = vst.msk [vmem:[%s597 + $0x1] sm:$0xff] %vm360, %v564
        %599 = vst.msk [vmem:[%s597 + $0x11] sm:$0xff] %vm360, %v565
        %600 = vst.msk [vmem:[%s597 + $0x21] sm:$0xff] %vm360, %v566
        %601 = vst.msk [vmem:[%s597 + $0x31] sm:$0xff] %vm360, %v567
        %602 = vst.msk [vmem:[%s597 + $0x41] sm:$0xff] %vm360, %v568
        %603 = vst.msk [vmem:[%s597 + $0x51] sm:$0xff] %vm360, %v569
        %604 = vst.msk [vmem:[%s597 + $0x61] sm:$0xff] %vm360, %v570
        %605 = vst.msk [vmem:[%s597 + $0x71] sm:$0xff] %vm360, %v571
        %s606 = scalar_lea.vmem [#allocation2], 336
        %607 = vst.msk [vmem:[%s606 + $0x1] sm:$0xff] %vm360, %v572
        %608 = vst.msk [vmem:[%s606 + $0x11] sm:$0xff] %vm360, %v573
        %609 = vst.msk [vmem:[%s606 + $0x21] sm:$0xff] %vm360, %v574
        %610 = vst.msk [vmem:[%s606 + $0x31] sm:$0xff] %vm360, %v575
        %611 = vst.msk [vmem:[%s606 + $0x41] sm:$0xff] %vm360, %v576
        %612 = vst.msk [vmem:[%s606 + $0x51] sm:$0xff] %vm360, %v577
        %613 = vst.msk [vmem:[%s606 + $0x61] sm:$0xff] %vm360, %v578
        %614 = vst.msk [vmem:[%s606 + $0x71] sm:$0xff] %vm360, %v579
        %s615 = scalar_lea.vmem [#allocation2], 496
        %616 = vst.msk [vmem:[%s615 + $0x1] sm:$0xff] %vm360, %v580
        %617 = vst.msk [vmem:[%s615 + $0x11] sm:$0xff] %vm360, %v581
        %618 = vst.msk [vmem:[%s615 + $0x21] sm:$0xff] %vm360, %v582
        %619 = vst.msk [vmem:[%s615 + $0x31] sm:$0xff] %vm360, %v583
        %620 = vst.msk [vmem:[%s615 + $0x41] sm:$0xff] %vm360, %v584
        %621 = vst.msk [vmem:[%s615 + $0x51] sm:$0xff] %vm360, %v585
        %622 = vst.msk [vmem:[%s615 + $0x61] sm:$0xff] %vm360, %v586
        %623 = vst.msk [vmem:[%s615 + $0x71] sm:$0xff] %vm360, %v587
        %s624 = sld [smem:[#allocation4]]
        %v625 = vstv %s624
        %v626 = vmul.f32 %v625, %v556
        %v627 = vmul.f32 %v625, %v557
        %v628 = vmul.f32 %v625, %v558
        %v629 = vmul.f32 %v625, %v559
        %v630 = vmul.f32 %v625, %v560
        %v631 = vmul.f32 %v625, %v561
        %v632 = vmul.f32 %v625, %v562
        %v633 = vmul.f32 %v625, %v563
        %s634 = sld [smem:[#allocation4 + $0x1]]
        %v635 = vstv %s634
        %v636 = vmul.f32 %v635, %v564
        %v637 = vmul.f32 %v635, %v565
        %v638 = vmul.f32 %v635, %v566
        %v639 = vmul.f32 %v635, %v567
        %v640 = vmul.f32 %v635, %v568
        %v641 = vmul.f32 %v635, %v569
        %v642 = vmul.f32 %v635, %v570
        %v643 = vmul.f32 %v635, %v571
        %v644 = vadd.f32 %v626, %v636
        %v645 = vadd.f32 %v627, %v637
        %v646 = vadd.f32 %v628, %v638
        %v647 = vadd.f32 %v629, %v639
        %v648 = vadd.f32 %v630, %v640
        %v649 = vadd.f32 %v631, %v641
        %v650 = vadd.f32 %v632, %v642
        %v651 = vadd.f32 %v633, %v643
        %s652 = sld [smem:[#allocation4 + $0x2]]
        %v653 = vstv %s652
        %v654 = vmul.f32 %v653, %v572
        %v655 = vmul.f32 %v653, %v573
        %v656 = vmul.f32 %v653, %v574
        %v657 = vmul.f32 %v653, %v575
        %v658 = vmul.f32 %v653, %v576
        %v659 = vmul.f32 %v653, %v577
        %v660 = vmul.f32 %v653, %v578
        %v661 = vmul.f32 %v653, %v579
        %v662 = vadd.f32 %v644, %v654
        %v663 = vadd.f32 %v645, %v655
        %v664 = vadd.f32 %v646, %v656
        %v665 = vadd.f32 %v647, %v657
        %v666 = vadd.f32 %v648, %v658
        %v667 = vadd.f32 %v649, %v659
        %v668 = vadd.f32 %v650, %v660
        %v669 = vadd.f32 %v651, %v661
        %s670 = sld [smem:[#allocation4 + $0x3]]
        %v671 = vstv %s670
        %v672 = vmul.f32 %v671, %v580
        %v673 = vmul.f32 %v671, %v581
        %v674 = vmul.f32 %v671, %v582
        %v675 = vmul.f32 %v671, %v583
        %v676 = vmul.f32 %v671, %v584
        %v677 = vmul.f32 %v671, %v585
        %v678 = vmul.f32 %v671, %v586
        %v679 = vmul.f32 %v671, %v587
        %v680 = vadd.f32 %v662, %v672
        %v681 = vadd.f32 %v663, %v673
        %v682 = vadd.f32 %v664, %v674
        %v683 = vadd.f32 %v665, %v675
        %v684 = vadd.f32 %v666, %v676
        %v685 = vadd.f32 %v667, %v677
        %v686 = vadd.f32 %v668, %v678
        %v687 = vadd.f32 %v669, %v679
        %s688 = scalar_lea.vmem [#allocation2], 656
        %689 = vst.msk [vmem:[%s688 + $0x1] sm:$0xff] %vm360, %v680
        %690 = vst.msk [vmem:[%s688 + $0x11] sm:$0xff] %vm360, %v681
        %691 = vst.msk [vmem:[%s688 + $0x21] sm:$0xff] %vm360, %v682
        %692 = vst.msk [vmem:[%s688 + $0x31] sm:$0xff] %vm360, %v683
        %693 = vst.msk [vmem:[%s688 + $0x41] sm:$0xff] %vm360, %v684
        %694 = vst.msk [vmem:[%s688 + $0x51] sm:$0xff] %vm360, %v685
        %695 = vst.msk [vmem:[%s688 + $0x61] sm:$0xff] %vm360, %v686
        %696 = vst.msk [vmem:[%s688 + $0x71] sm:$0xff] %vm360, %v687
        %s697 = sld [smem:[#allocation4 + $0x4]]
        %v698 = vstv %s697
        %v699 = vmul.f32 %v698, %v556
        %v700 = vmul.f32 %v698, %v557
        %v701 = vmul.f32 %v698, %v558
        %v702 = vmul.f32 %v698, %v559
        %v703 = vmul.f32 %v698, %v560
        %v704 = vmul.f32 %v698, %v561
        %v705 = vmul.f32 %v698, %v562
        %v706 = vmul.f32 %v698, %v563
        %s707 = sld [smem:[#allocation4 + $0x5]]
        %v708 = vstv %s707
        %v709 = vmul.f32 %v708, %v564
        %v710 = vmul.f32 %v708, %v565
        %v711 = vmul.f32 %v708, %v566
        %v712 = vmul.f32 %v708, %v567
        %v713 = vmul.f32 %v708, %v568
        %v714 = vmul.f32 %v708, %v569
        %v715 = vmul.f32 %v708, %v570
        %v716 = vmul.f32 %v708, %v571
        %v717 = vadd.f32 %v699, %v709
        %v718 = vadd.f32 %v700, %v710
        %v719 = vadd.f32 %v701, %v711
        %v720 = vadd.f32 %v702, %v712
        %v721 = vadd.f32 %v703, %v713
        %v722 = vadd.f32 %v704, %v714
        %v723 = vadd.f32 %v705, %v715
        %v724 = vadd.f32 %v706, %v716
        %s725 = sld [smem:[#allocation4 + $0x6]]
        %v726 = vstv %s725
        %v727 = vmul.f32 %v726, %v572
        %v728 = vmul.f32 %v726, %v573
        %v729 = vmul.f32 %v726, %v574
        %v730 = vmul.f32 %v726, %v575
        %v731 = vmul.f32 %v726, %v576
        %v732 = vmul.f32 %v726, %v577
        %v733 = vmul.f32 %v726, %v578
        %v734 = vmul.f32 %v726, %v579
        %v735 = vadd.f32 %v717, %v727
        %v736 = vadd.f32 %v718, %v728
        %v737 = vadd.f32 %v719, %v729
        %v738 = vadd.f32 %v720, %v730
        %v739 = vadd.f32 %v721, %v731
        %v740 = vadd.f32 %v722, %v732
        %v741 = vadd.f32 %v723, %v733
        %v742 = vadd.f32 %v724, %v734
        %s743 = sld [smem:[#allocation4 + $0x7]]
        %v744 = vstv %s743
        %v745 = vmul.f32 %v744, %v580
        %v746 = vmul.f32 %v744, %v581
        %v747 = vmul.f32 %v744, %v582
        %v748 = vmul.f32 %v744, %v583
        %v749 = vmul.f32 %v744, %v584
        %v750 = vmul.f32 %v744, %v585
        %v751 = vmul.f32 %v744, %v586
        %v752 = vmul.f32 %v744, %v587
        %v753 = vadd.f32 %v735, %v745
        %v754 = vadd.f32 %v736, %v746
        %v755 = vadd.f32 %v737, %v747
        %v756 = vadd.f32 %v738, %v748
        %v757 = vadd.f32 %v739, %v749
        %v758 = vadd.f32 %v740, %v750
        %v759 = vadd.f32 %v741, %v751
        %v760 = vadd.f32 %v742, %v752
        %s761 = scalar_lea.vmem [#allocation2], 816
        %762 = vst.msk [vmem:[%s761 + $0x1] sm:$0xff] %vm360, %v753
        %763 = vst.msk [vmem:[%s761 + $0x11] sm:$0xff] %vm360, %v754
        %764 = vst.msk [vmem:[%s761 + $0x21] sm:$0xff] %vm360, %v755
        %765 = vst.msk [vmem:[%s761 + $0x31] sm:$0xff] %vm360, %v756
        %766 = vst.msk [vmem:[%s761 + $0x41] sm:$0xff] %vm360, %v757
        %767 = vst.msk [vmem:[%s761 + $0x51] sm:$0xff] %vm360, %v758
        %768 = vst.msk [vmem:[%s761 + $0x61] sm:$0xff] %vm360, %v759
        %769 = vst.msk [vmem:[%s761 + $0x71] sm:$0xff] %vm360, %v760
        %s770 = sld [smem:[#allocation4 + $0x8]]
        %v771 = vstv %s770
        %v772 = vmul.f32 %v771, %v556
        %v773 = vmul.f32 %v771, %v557
        %v774 = vmul.f32 %v771, %v558
        %v775 = vmul.f32 %v771, %v559
        %v776 = vmul.f32 %v771, %v560
        %v777 = vmul.f32 %v771, %v561
        %v778 = vmul.f32 %v771, %v562
        %v779 = vmul.f32 %v771, %v563
        %s780 = sld [smem:[#allocation4 + $0x9]]
        %v781 = vstv %s780
        %v782 = vmul.f32 %v781, %v564
        %v783 = vmul.f32 %v781, %v565
        %v784 = vmul.f32 %v781, %v566
        %v785 = vmul.f32 %v781, %v567
        %v786 = vmul.f32 %v781, %v568
        %v787 = vmul.f32 %v781, %v569
        %v788 = vmul.f32 %v781, %v570
        %v789 = vmul.f32 %v781, %v571
        %v790 = vadd.f32 %v772, %v782
        %v791 = vadd.f32 %v773, %v783
        %v792 = vadd.f32 %v774, %v784
        %v793 = vadd.f32 %v775, %v785
        %v794 = vadd.f32 %v776, %v786
        %v795 = vadd.f32 %v777, %v787
        %v796 = vadd.f32 %v778, %v788
        %v797 = vadd.f32 %v779, %v789
        %s798 = sld [smem:[#allocation4 + $0xa]]
        %v799 = vstv %s798
        %v800 = vmul.f32 %v799, %v572
        %v801 = vmul.f32 %v799, %v573
        %v802 = vmul.f32 %v799, %v574
        %v803 = vmul.f32 %v799, %v575
        %v804 = vmul.f32 %v799, %v576
        %v805 = vmul.f32 %v799, %v577
        %v806 = vmul.f32 %v799, %v578
        %v807 = vmul.f32 %v799, %v579
        %v808 = vadd.f32 %v790, %v800
        %v809 = vadd.f32 %v791, %v801
        %v810 = vadd.f32 %v792, %v802
        %v811 = vadd.f32 %v793, %v803
        %v812 = vadd.f32 %v794, %v804
        %v813 = vadd.f32 %v795, %v805
        %v814 = vadd.f32 %v796, %v806
        %v815 = vadd.f32 %v797, %v807
        %s816 = sld [smem:[#allocation4 + $0xb]]
        %v817 = vstv %s816
        %v818 = vmul.f32 %v817, %v580
        %v819 = vmul.f32 %v817, %v581
        %v820 = vmul.f32 %v817, %v582
        %v821 = vmul.f32 %v817, %v583
        %v822 = vmul.f32 %v817, %v584
        %v823 = vmul.f32 %v817, %v585
        %v824 = vmul.f32 %v817, %v586
        %v825 = vmul.f32 %v817, %v587
        %v826 = vadd.f32 %v808, %v818
        %v827 = vadd.f32 %v809, %v819
        %v828 = vadd.f32 %v810, %v820
        %v829 = vadd.f32 %v811, %v821
        %v830 = vadd.f32 %v812, %v822
        %v831 = vadd.f32 %v813, %v823
        %v832 = vadd.f32 %v814, %v824
        %v833 = vadd.f32 %v815, %v825
        %s834 = scalar_lea.vmem [#allocation2], 976
        %835 = vst.msk [vmem:[%s834 + $0x1] sm:$0xff] %vm360, %v826
        %836 = vst.msk [vmem:[%s834 + $0x11] sm:$0xff] %vm360, %v827
        %837 = vst.msk [vmem:[%s834 + $0x21] sm:$0xff] %vm360, %v828
        %838 = vst.msk [vmem:[%s834 + $0x31] sm:$0xff] %vm360, %v829
        %839 = vst.msk [vmem:[%s834 + $0x41] sm:$0xff] %vm360, %v830
        %840 = vst.msk [vmem:[%s834 + $0x51] sm:$0xff] %vm360, %v831
        %841 = vst.msk [vmem:[%s834 + $0x61] sm:$0xff] %vm360, %v832
        %842 = vst.msk [vmem:[%s834 + $0x71] sm:$0xff] %vm360, %v833
        %s843 = sld [smem:[#allocation4 + $0xc]]
        %v844 = vstv %s843
        %v845 = vmul.f32 %v844, %v556
        %v846 = vmul.f32 %v844, %v557
        %v847 = vmul.f32 %v844, %v558
        %v848 = vmul.f32 %v844, %v559
        %v849 = vmul.f32 %v844, %v560
        %v850 = vmul.f32 %v844, %v561
        %v851 = vmul.f32 %v844, %v562
        %v852 = vmul.f32 %v844, %v563
        %s853 = sld [smem:[#allocation4 + $0xd]]
        %v854 = vstv %s853
        %v855 = vmul.f32 %v854, %v564
        %v856 = vmul.f32 %v854, %v565
        %v857 = vmul.f32 %v854, %v566
        %v858 = vmul.f32 %v854, %v567
        %v859 = vmul.f32 %v854, %v568
        %v860 = vmul.f32 %v854, %v569
        %v861 = vmul.f32 %v854, %v570
        %v862 = vmul.f32 %v854, %v571
        %v863 = vadd.f32 %v845, %v855
        %v864 = vadd.f32 %v846, %v856
        %v865 = vadd.f32 %v847, %v857
        %v866 = vadd.f32 %v848, %v858
        %v867 = vadd.f32 %v849, %v859
        %v868 = vadd.f32 %v850, %v860
        %v869 = vadd.f32 %v851, %v861
        %v870 = vadd.f32 %v852, %v862
        %s871 = sld [smem:[#allocation4 + $0xe]]
        %v872 = vstv %s871
        %v873 = vmul.f32 %v872, %v572
        %v874 = vmul.f32 %v872, %v573
        %v875 = vmul.f32 %v872, %v574
        %v876 = vmul.f32 %v872, %v575
        %v877 = vmul.f32 %v872, %v576
        %v878 = vmul.f32 %v872, %v577
        %v879 = vmul.f32 %v872, %v578
        %v880 = vmul.f32 %v872, %v579
        %v881 = vadd.f32 %v863, %v873
        %v882 = vadd.f32 %v864, %v874
        %v883 = vadd.f32 %v865, %v875
        %v884 = vadd.f32 %v866, %v876
        %v885 = vadd.f32 %v867, %v877
        %v886 = vadd.f32 %v868, %v878
        %v887 = vadd.f32 %v869, %v879
        %v888 = vadd.f32 %v870, %v880
        %s889 = sld [smem:[#allocation4 + $0xf]]
        %v890 = vstv %s889
        %v891 = vmul.f32 %v890, %v580
        %v892 = vmul.f32 %v890, %v581
        %v893 = vmul.f32 %v890, %v582
        %v894 = vmul.f32 %v890, %v583
        %v895 = vmul.f32 %v890, %v584
        %v896 = vmul.f32 %v890, %v585
        %v897 = vmul.f32 %v890, %v586
        %v898 = vmul.f32 %v890, %v587
        %v899 = vadd.f32 %v881, %v891
        %v900 = vadd.f32 %v882, %v892
        %v901 = vadd.f32 %v883, %v893
        %v902 = vadd.f32 %v884, %v894
        %v903 = vadd.f32 %v885, %v895
        %v904 = vadd.f32 %v886, %v896
        %v905 = vadd.f32 %v887, %v897
        %v906 = vadd.f32 %v888, %v898
        %s907 = scalar_lea.vmem [#allocation2], 1136
        %908 = vst.msk [vmem:[%s907 + $0x1] sm:$0xff] %vm360, %v899
        %909 = vst.msk [vmem:[%s907 + $0x11] sm:$0xff] %vm360, %v900
        %910 = vst.msk [vmem:[%s907 + $0x21] sm:$0xff] %vm360, %v901
        %911 = vst.msk [vmem:[%s907 + $0x31] sm:$0xff] %vm360, %v902
        %912 = vst.msk [vmem:[%s907 + $0x41] sm:$0xff] %vm360, %v903
        %913 = vst.msk [vmem:[%s907 + $0x51] sm:$0xff] %vm360, %v904
        %914 = vst.msk [vmem:[%s907 + $0x61] sm:$0xff] %vm360, %v905
        %915 = vst.msk [vmem:[%s907 + $0x71] sm:$0xff] %vm360, %v906
        %v916 = vld [vmem:[%s3] sm:$0x1]
        %s917 = scalar_lea.vmem [#allocation2], 640
        %v918 = vld [vmem:[%s917] sm:$0xff]
        %v919 = vld [vmem:[%s917 + $0x10] sm:$0xff]
        %v920 = vld [vmem:[%s917 + $0x20] sm:$0xff]
        %v921 = vld [vmem:[%s917 + $0x30] sm:$0xff]
        %v922 = vld [vmem:[%s917 + $0x40] sm:$0xff]
        %v923 = vld [vmem:[%s917 + $0x50] sm:$0xff]
        %v924 = vld [vmem:[%s917 + $0x60] sm:$0xff]
        %v925 = vld [vmem:[%s917 + $0x70] sm:$0xff]
        %v926 = vlaneseq
        %v927 = vshrl.u32 %v926, 7
        %v928 = vsub.s32 0, %v927
        %v929 = vrot.slane %v916, %v928
        %v930 = vmul.f32 %v929, %v918
        %v931 = vmul.f32 %v929, %v919
        %v932 = vmul.f32 %v929, %v920
        %v933 = vmul.f32 %v929, %v921
        %v934 = vmul.f32 %v929, %v922
        %v935 = vmul.f32 %v929, %v923
        %v936 = vmul.f32 %v929, %v924
        %v937 = vmul.f32 %v929, %v925
        %v938 = vadd.f32 %v930, 0.0
        %v939 = vadd.f32 %v931, 0.0
        %v940 = vadd.f32 %v932, 0.0
        %v941 = vadd.f32 %v933, 0.0
        %v942 = vadd.f32 %v934, 0.0
        %v943 = vadd.f32 %v935, 0.0
        %v944 = vadd.f32 %v936, 0.0
        %v945 = vadd.f32 %v937, 0.0
        %v946 = vld [vmem:[%s3 + $0x1] sm:$0x1]
        %v947 = vld [vmem:[%s917 + $0x1] sm:$0xff]
        %v948 = vld [vmem:[%s917 + $0x11] sm:$0xff]
        %v949 = vld [vmem:[%s917 + $0x21] sm:$0xff]
        %v950 = vld [vmem:[%s917 + $0x31] sm:$0xff]
        %v951 = vld [vmem:[%s917 + $0x41] sm:$0xff]
        %v952 = vld [vmem:[%s917 + $0x51] sm:$0xff]
        %v953 = vld [vmem:[%s917 + $0x61] sm:$0xff]
        %v954 = vld [vmem:[%s917 + $0x71] sm:$0xff]
        %v955 = vlaneseq
        %v956 = vshrl.u32 %v955, 7
        %v957 = vsub.s32 0, %v956
        %v958 = vrot.slane %v946, %v957
        %v959 = vmul.f32 %v958, %v947
        %v960 = vmul.f32 %v958, %v948
        %v961 = vmul.f32 %v958, %v949
        %v962 = vmul.f32 %v958, %v950
        %v963 = vmul.f32 %v958, %v951
        %v964 = vmul.f32 %v958, %v952
        %v965 = vmul.f32 %v958, %v953
        %v966 = vmul.f32 %v958, %v954
        %v967 = vadd.f32 %v938, %v959
        %v968 = vadd.f32 %v939, %v960
        %v969 = vadd.f32 %v940, %v961
        %v970 = vadd.f32 %v941, %v962
        %v971 = vadd.f32 %v942, %v963
        %v972 = vadd.f32 %v943, %v964
        %v973 = vadd.f32 %v944, %v965
        %v974 = vadd.f32 %v945, %v966
        %v975 = vld [vmem:[%s3 + $0x2] sm:$0x1]
        %v976 = vld [vmem:[%s917 + $0x2] sm:$0xff]
        %v977 = vld [vmem:[%s917 + $0x12] sm:$0xff]
        %v978 = vld [vmem:[%s917 + $0x22] sm:$0xff]
        %v979 = vld [vmem:[%s917 + $0x32] sm:$0xff]
        %v980 = vld [vmem:[%s917 + $0x42] sm:$0xff]
        %v981 = vld [vmem:[%s917 + $0x52] sm:$0xff]
        %v982 = vld [vmem:[%s917 + $0x62] sm:$0xff]
        %v983 = vld [vmem:[%s917 + $0x72] sm:$0xff]
        %v984 = vlaneseq
        %v985 = vshrl.u32 %v984, 7
        %v986 = vsub.s32 0, %v985
        %v987 = vrot.slane %v975, %v986
        %v988 = vmul.f32 %v987, %v976
        %v989 = vmul.f32 %v987, %v977
        %v990 = vmul.f32 %v987, %v978
        %v991 = vmul.f32 %v987, %v979
        %v992 = vmul.f32 %v987, %v980
        %v993 = vmul.f32 %v987, %v981
        %v994 = vmul.f32 %v987, %v982
        %v995 = vmul.f32 %v987, %v983
        %v996 = vadd.f32 %v967, %v988
        %v997 = vadd.f32 %v968, %v989
        %v998 = vadd.f32 %v969, %v990
        %v999 = vadd.f32 %v970, %v991
        %v1000 = vadd.f32 %v971, %v992
        %v1001 = vadd.f32 %v972, %v993
        %v1002 = vadd.f32 %v973, %v994
        %v1003 = vadd.f32 %v974, %v995
        %v1004 = vld [vmem:[%s3 + $0x3] sm:$0x1]
        %v1005 = vld [vmem:[%s688] sm:$0xff]
        %v1006 = vld [vmem:[%s688 + $0x10] sm:$0xff]
        %v1007 = vld [vmem:[%s688 + $0x20] sm:$0xff]
        %v1008 = vld [vmem:[%s688 + $0x30] sm:$0xff]
        %v1009 = vld [vmem:[%s688 + $0x40] sm:$0xff]
        %v1010 = vld [vmem:[%s688 + $0x50] sm:$0xff]
        %v1011 = vld [vmem:[%s688 + $0x60] sm:$0xff]
        %v1012 = vld [vmem:[%s688 + $0x70] sm:$0xff]
        %v1013 = vlaneseq
        %v1014 = vshrl.u32 %v1013, 7
        %v1015 = vsub.s32 0, %v1014
        %v1016 = vrot.slane %v1004, %v1015
        %v1017 = vmul.f32 %v1016, %v1005
        %v1018 = vmul.f32 %v1016, %v1006
        %v1019 = vmul.f32 %v1016, %v1007
        %v1020 = vmul.f32 %v1016, %v1008
        %v1021 = vmul.f32 %v1016, %v1009
        %v1022 = vmul.f32 %v1016, %v1010
        %v1023 = vmul.f32 %v1016, %v1011
        %v1024 = vmul.f32 %v1016, %v1012
        %v1025 = vadd.f32 %v996, %v1017
        %v1026 = vadd.f32 %v997, %v1018
        %v1027 = vadd.f32 %v998, %v1019
        %v1028 = vadd.f32 %v999, %v1020
        %v1029 = vadd.f32 %v1000, %v1021
        %v1030 = vadd.f32 %v1001, %v1022
        %v1031 = vadd.f32 %v1002, %v1023
        %v1032 = vadd.f32 %v1003, %v1024
        %v1033 = vld [vmem:[%s3 + $0x4] sm:$0x1]
        %v1034 = vld [vmem:[%s688 + $0x1] sm:$0xff]
        %v1035 = vld [vmem:[%s688 + $0x11] sm:$0xff]
        %v1036 = vld [vmem:[%s688 + $0x21] sm:$0xff]
        %v1037 = vld [vmem:[%s688 + $0x31] sm:$0xff]
        %v1038 = vld [vmem:[%s688 + $0x41] sm:$0xff]
        %v1039 = vld [vmem:[%s688 + $0x51] sm:$0xff]
        %v1040 = vld [vmem:[%s688 + $0x61] sm:$0xff]
        %v1041 = vld [vmem:[%s688 + $0x71] sm:$0xff]
        %v1042 = vlaneseq
        %v1043 = vshrl.u32 %v1042, 7
        %v1044 = vsub.s32 0, %v1043
        %v1045 = vrot.slane %v1033, %v1044
        %v1046 = vmul.f32 %v1045, %v1034
        %v1047 = vmul.f32 %v1045, %v1035
        %v1048 = vmul.f32 %v1045, %v1036
        %v1049 = vmul.f32 %v1045, %v1037
        %v1050 = vmul.f32 %v1045, %v1038
        %v1051 = vmul.f32 %v1045, %v1039
        %v1052 = vmul.f32 %v1045, %v1040
        %v1053 = vmul.f32 %v1045, %v1041
        %v1054 = vadd.f32 %v1025, %v1046
        %v1055 = vadd.f32 %v1026, %v1047
        %v1056 = vadd.f32 %v1027, %v1048
        %v1057 = vadd.f32 %v1028, %v1049
        %v1058 = vadd.f32 %v1029, %v1050
        %v1059 = vadd.f32 %v1030, %v1051
        %v1060 = vadd.f32 %v1031, %v1052
        %v1061 = vadd.f32 %v1032, %v1053
        %v1062 = vld [vmem:[%s3 + $0x5] sm:$0x1]
        %v1063 = vld [vmem:[%s688 + $0x2] sm:$0xff]
        %v1064 = vld [vmem:[%s688 + $0x12] sm:$0xff]
        %v1065 = vld [vmem:[%s688 + $0x22] sm:$0xff]
        %v1066 = vld [vmem:[%s688 + $0x32] sm:$0xff]
        %v1067 = vld [vmem:[%s688 + $0x42] sm:$0xff]
        %v1068 = vld [vmem:[%s688 + $0x52] sm:$0xff]
        %v1069 = vld [vmem:[%s688 + $0x62] sm:$0xff]
        %v1070 = vld [vmem:[%s688 + $0x72] sm:$0xff]
        %v1071 = vlaneseq
        %v1072 = vshrl.u32 %v1071, 7
        %v1073 = vsub.s32 0, %v1072
        %v1074 = vrot.slane %v1062, %v1073
        %v1075 = vmul.f32 %v1074, %v1063
        %v1076 = vmul.f32 %v1074, %v1064
        %v1077 = vmul.f32 %v1074, %v1065
        %v1078 = vmul.f32 %v1074, %v1066
        %v1079 = vmul.f32 %v1074, %v1067
        %v1080 = vmul.f32 %v1074, %v1068
        %v1081 = vmul.f32 %v1074, %v1069
        %v1082 = vmul.f32 %v1074, %v1070
        %v1083 = vadd.f32 %v1054, %v1075
        %v1084 = vadd.f32 %v1055, %v1076
        %v1085 = vadd.f32 %v1056, %v1077
        %v1086 = vadd.f32 %v1057, %v1078
        %v1087 = vadd.f32 %v1058, %v1079
        %v1088 = vadd.f32 %v1059, %v1080
        %v1089 = vadd.f32 %v1060, %v1081
        %v1090 = vadd.f32 %v1061, %v1082
        %v1091 = vld [vmem:[%s3 + $0x6] sm:$0x1]
        %s1092 = scalar_lea.vmem [#allocation2], 672
        %v1093 = vld [vmem:[%s1092] sm:$0xff]
        %v1094 = vld [vmem:[%s1092 + $0x10] sm:$0xff]
        %v1095 = vld [vmem:[%s1092 + $0x20] sm:$0xff]
        %v1096 = vld [vmem:[%s1092 + $0x30] sm:$0xff]
        %v1097 = vld [vmem:[%s1092 + $0x40] sm:$0xff]
        %v1098 = vld [vmem:[%s1092 + $0x50] sm:$0xff]
        %v1099 = vld [vmem:[%s1092 + $0x60] sm:$0xff]
        %v1100 = vld [vmem:[%s1092 + $0x70] sm:$0xff]
        %v1101 = vlaneseq
        %v1102 = vshrl.u32 %v1101, 7
        %v1103 = vsub.s32 0, %v1102
        %v1104 = vrot.slane %v1091, %v1103
        %v1105 = vmul.f32 %v1104, %v1093
        %v1106 = vmul.f32 %v1104, %v1094
        %v1107 = vmul.f32 %v1104, %v1095
        %v1108 = vmul.f32 %v1104, %v1096
        %v1109 = vmul.f32 %v1104, %v1097
        %v1110 = vmul.f32 %v1104, %v1098
        %v1111 = vmul.f32 %v1104, %v1099
        %v1112 = vmul.f32 %v1104, %v1100
        %v1113 = vadd.f32 %v1083, %v1105
        %v1114 = vadd.f32 %v1084, %v1106
        %v1115 = vadd.f32 %v1085, %v1107
        %v1116 = vadd.f32 %v1086, %v1108
        %v1117 = vadd.f32 %v1087, %v1109
        %v1118 = vadd.f32 %v1088, %v1110
        %v1119 = vadd.f32 %v1089, %v1111
        %v1120 = vadd.f32 %v1090, %v1112
        %v1121 = vld [vmem:[%s3 + $0x7] sm:$0x1]
        %v1122 = vld [vmem:[%s1092 + $0x1] sm:$0xff]
        %v1123 = vld [vmem:[%s1092 + $0x11] sm:$0xff]
        %v1124 = vld [vmem:[%s1092 + $0x21] sm:$0xff]
        %v1125 = vld [vmem:[%s1092 + $0x31] sm:$0xff]
        %v1126 = vld [vmem:[%s1092 + $0x41] sm:$0xff]
        %v1127 = vld [vmem:[%s1092 + $0x51] sm:$0xff]
        %v1128 = vld [vmem:[%s1092 + $0x61] sm:$0xff]
        %v1129 = vld [vmem:[%s1092 + $0x71] sm:$0xff]
        %v1130 = vlaneseq
        %v1131 = vshrl.u32 %v1130, 7
        %v1132 = vsub.s32 0, %v1131
        %v1133 = vrot.slane %v1121, %v1132
        %v1134 = vmul.f32 %v1133, %v1122
        %v1135 = vmul.f32 %v1133, %v1123
        %v1136 = vmul.f32 %v1133, %v1124
        %v1137 = vmul.f32 %v1133, %v1125
        %v1138 = vmul.f32 %v1133, %v1126
        %v1139 = vmul.f32 %v1133, %v1127
        %v1140 = vmul.f32 %v1133, %v1128
        %v1141 = vmul.f32 %v1133, %v1129
        %v1142 = vadd.f32 %v1113, %v1134
        %v1143 = vadd.f32 %v1114, %v1135
        %v1144 = vadd.f32 %v1115, %v1136
        %v1145 = vadd.f32 %v1116, %v1137
        %v1146 = vadd.f32 %v1117, %v1138
        %v1147 = vadd.f32 %v1118, %v1139
        %v1148 = vadd.f32 %v1119, %v1140
        %v1149 = vadd.f32 %v1120, %v1141
        %v1150 = vld [vmem:[%s3 + $0x8] sm:$0x1]
        %v1151 = vld [vmem:[%s1092 + $0x2] sm:$0xff]
        %v1152 = vld [vmem:[%s1092 + $0x12] sm:$0xff]
        %v1153 = vld [vmem:[%s1092 + $0x22] sm:$0xff]
        %v1154 = vld [vmem:[%s1092 + $0x32] sm:$0xff]
        %v1155 = vld [vmem:[%s1092 + $0x42] sm:$0xff]
        %v1156 = vld [vmem:[%s1092 + $0x52] sm:$0xff]
        %v1157 = vld [vmem:[%s1092 + $0x62] sm:$0xff]
        %v1158 = vld [vmem:[%s1092 + $0x72] sm:$0xff]
        %v1159 = vlaneseq
        %v1160 = vshrl.u32 %v1159, 7
        %v1161 = vsub.s32 0, %v1160
        %v1162 = vrot.slane %v1150, %v1161
        %v1163 = vmul.f32 %v1162, %v1151
        %v1164 = vmul.f32 %v1162, %v1152
        %v1165 = vmul.f32 %v1162, %v1153
        %v1166 = vmul.f32 %v1162, %v1154
        %v1167 = vmul.f32 %v1162, %v1155
        %v1168 = vmul.f32 %v1162, %v1156
        %v1169 = vmul.f32 %v1162, %v1157
        %v1170 = vmul.f32 %v1162, %v1158
        %v1171 = vadd.f32 %v1142, %v1163
        %v1172 = vadd.f32 %v1143, %v1164
        %v1173 = vadd.f32 %v1144, %v1165
        %v1174 = vadd.f32 %v1145, %v1166
        %v1175 = vadd.f32 %v1146, %v1167
        %v1176 = vadd.f32 %v1147, %v1168
        %v1177 = vadd.f32 %v1148, %v1169
        %v1178 = vadd.f32 %v1149, %v1170
        %v1179 = vld [vmem:[%s4] sm:$0x1]
        %v1180 = vlaneseq
        %v1181 = vshrl.u32 %v1180, 7
        %v1182 = vsub.s32 0, %v1181
        %v1183 = vrot.slane %v1179, %v1182
        %v1184 = vmul.f32 %v1171, %v1183
        %v1185 = vmul.f32 %v1172, %v1183
        %v1186 = vmul.f32 %v1173, %v1183
        %v1187 = vmul.f32 %v1174, %v1183
        %v1188 = vmul.f32 %v1175, %v1183
        %v1189 = vmul.f32 %v1176, %v1183
        %v1190 = vmul.f32 %v1177, %v1183
        %v1191 = vmul.f32 %v1178, %v1183
        %s1192 = scalar_lea.vmem %s3, 16
        %v1193 = vld [vmem:[%s1192] sm:$0x1]
        %s1194 = scalar_lea.vmem [#allocation2], 800
        %v1195 = vld [vmem:[%s1194] sm:$0xff]
        %v1196 = vld [vmem:[%s1194 + $0x10] sm:$0xff]
        %v1197 = vld [vmem:[%s1194 + $0x20] sm:$0xff]
        %v1198 = vld [vmem:[%s1194 + $0x30] sm:$0xff]
        %v1199 = vld [vmem:[%s1194 + $0x40] sm:$0xff]
        %v1200 = vld [vmem:[%s1194 + $0x50] sm:$0xff]
        %v1201 = vld [vmem:[%s1194 + $0x60] sm:$0xff]
        %v1202 = vld [vmem:[%s1194 + $0x70] sm:$0xff]
        %v1203 = vlaneseq
        %v1204 = vshrl.u32 %v1203, 7
        %v1205 = vsub.s32 0, %v1204
        %v1206 = vrot.slane %v1193, %v1205
        %v1207 = vmul.f32 %v1206, %v1195
        %v1208 = vmul.f32 %v1206, %v1196
        %v1209 = vmul.f32 %v1206, %v1197
        %v1210 = vmul.f32 %v1206, %v1198
        %v1211 = vmul.f32 %v1206, %v1199
        %v1212 = vmul.f32 %v1206, %v1200
        %v1213 = vmul.f32 %v1206, %v1201
        %v1214 = vmul.f32 %v1206, %v1202
        %v1215 = vadd.f32 %v1207, 0.0
        %v1216 = vadd.f32 %v1208, 0.0
        %v1217 = vadd.f32 %v1209, 0.0
        %v1218 = vadd.f32 %v1210, 0.0
        %v1219 = vadd.f32 %v1211, 0.0
        %v1220 = vadd.f32 %v1212, 0.0
        %v1221 = vadd.f32 %v1213, 0.0
        %v1222 = vadd.f32 %v1214, 0.0
        %v1223 = vld [vmem:[%s1192 + $0x1] sm:$0x1]
        %v1224 = vld [vmem:[%s1194 + $0x1] sm:$0xff]
        %v1225 = vld [vmem:[%s1194 + $0x11] sm:$0xff]
        %v1226 = vld [vmem:[%s1194 + $0x21] sm:$0xff]
        %v1227 = vld [vmem:[%s1194 + $0x31] sm:$0xff]
        %v1228 = vld [vmem:[%s1194 + $0x41] sm:$0xff]
        %v1229 = vld [vmem:[%s1194 + $0x51] sm:$0xff]
        %v1230 = vld [vmem:[%s1194 + $0x61] sm:$0xff]
        %v1231 = vld [vmem:[%s1194 + $0x71] sm:$0xff]
        %v1232 = vlaneseq
        %v1233 = vshrl.u32 %v1232, 7
        %v1234 = vsub.s32 0, %v1233
        %v1235 = vrot.slane %v1223, %v1234
        %v1236 = vmul.f32 %v1235, %v1224
        %v1237 = vmul.f32 %v1235, %v1225
        %v1238 = vmul.f32 %v1235, %v1226
        %v1239 = vmul.f32 %v1235, %v1227
        %v1240 = vmul.f32 %v1235, %v1228
        %v1241 = vmul.f32 %v1235, %v1229
        %v1242 = vmul.f32 %v1235, %v1230
        %v1243 = vmul.f32 %v1235, %v1231
        %v1244 = vadd.f32 %v1215, %v1236
        %v1245 = vadd.f32 %v1216, %v1237
        %v1246 = vadd.f32 %v1217, %v1238
        %v1247 = vadd.f32 %v1218, %v1239
        %v1248 = vadd.f32 %v1219, %v1240
        %v1249 = vadd.f32 %v1220, %v1241
        %v1250 = vadd.f32 %v1221, %v1242
        %v1251 = vadd.f32 %v1222, %v1243
        %v1252 = vld [vmem:[%s1192 + $0x2] sm:$0x1]
        %v1253 = vld [vmem:[%s1194 + $0x2] sm:$0xff]
        %v1254 = vld [vmem:[%s1194 + $0x12] sm:$0xff]
        %v1255 = vld [vmem:[%s1194 + $0x22] sm:$0xff]
        %v1256 = vld [vmem:[%s1194 + $0x32] sm:$0xff]
        %v1257 = vld [vmem:[%s1194 + $0x42] sm:$0xff]
        %v1258 = vld [vmem:[%s1194 + $0x52] sm:$0xff]
        %v1259 = vld [vmem:[%s1194 + $0x62] sm:$0xff]
        %v1260 = vld [vmem:[%s1194 + $0x72] sm:$0xff]
        %v1261 = vlaneseq
        %v1262 = vshrl.u32 %v1261, 7
        %v1263 = vsub.s32 0, %v1262
        %v1264 = vrot.slane %v1252, %v1263
        %v1265 = vmul.f32 %v1264, %v1253
        %v1266 = vmul.f32 %v1264, %v1254
        %v1267 = vmul.f32 %v1264, %v1255
        %v1268 = vmul.f32 %v1264, %v1256
        %v1269 = vmul.f32 %v1264, %v1257
        %v1270 = vmul.f32 %v1264, %v1258
        %v1271 = vmul.f32 %v1264, %v1259
        %v1272 = vmul.f32 %v1264, %v1260
        %v1273 = vadd.f32 %v1244, %v1265
        %v1274 = vadd.f32 %v1245, %v1266
        %v1275 = vadd.f32 %v1246, %v1267
        %v1276 = vadd.f32 %v1247, %v1268
        %v1277 = vadd.f32 %v1248, %v1269
        %v1278 = vadd.f32 %v1249, %v1270
        %v1279 = vadd.f32 %v1250, %v1271
        %v1280 = vadd.f32 %v1251, %v1272
        %v1281 = vld [vmem:[%s1192 + $0x3] sm:$0x1]
        %v1282 = vld [vmem:[%s761] sm:$0xff]
        %v1283 = vld [vmem:[%s761 + $0x10] sm:$0xff]
        %v1284 = vld [vmem:[%s761 + $0x20] sm:$0xff]
        %v1285 = vld [vmem:[%s761 + $0x30] sm:$0xff]
        %v1286 = vld [vmem:[%s761 + $0x40] sm:$0xff]
        %v1287 = vld [vmem:[%s761 + $0x50] sm:$0xff]
        %v1288 = vld [vmem:[%s761 + $0x60] sm:$0xff]
        %v1289 = vld [vmem:[%s761 + $0x70] sm:$0xff]
        %v1290 = vlaneseq
        %v1291 = vshrl.u32 %v1290, 7
        %v1292 = vsub.s32 0, %v1291
        %v1293 = vrot.slane %v1281, %v1292
        %v1294 = vmul.f32 %v1293, %v1282
        %v1295 = vmul.f32 %v1293, %v1283
        %v1296 = vmul.f32 %v1293, %v1284
        %v1297 = vmul.f32 %v1293, %v1285
        %v1298 = vmul.f32 %v1293, %v1286
        %v1299 = vmul.f32 %v1293, %v1287
        %v1300 = vmul.f32 %v1293, %v1288
        %v1301 = vmul.f32 %v1293, %v1289
        %v1302 = vadd.f32 %v1273, %v1294
        %v1303 = vadd.f32 %v1274, %v1295
        %v1304 = vadd.f32 %v1275, %v1296
        %v1305 = vadd.f32 %v1276, %v1297
        %v1306 = vadd.f32 %v1277, %v1298
        %v1307 = vadd.f32 %v1278, %v1299
        %v1308 = vadd.f32 %v1279, %v1300
        %v1309 = vadd.f32 %v1280, %v1301
        %v1310 = vld [vmem:[%s1192 + $0x4] sm:$0x1]
        %v1311 = vld [vmem:[%s761 + $0x1] sm:$0xff]
        %v1312 = vld [vmem:[%s761 + $0x11] sm:$0xff]
        %v1313 = vld [vmem:[%s761 + $0x21] sm:$0xff]
        %v1314 = vld [vmem:[%s761 + $0x31] sm:$0xff]
        %v1315 = vld [vmem:[%s761 + $0x41] sm:$0xff]
        %v1316 = vld [vmem:[%s761 + $0x51] sm:$0xff]
        %v1317 = vld [vmem:[%s761 + $0x61] sm:$0xff]
        %v1318 = vld [vmem:[%s761 + $0x71] sm:$0xff]
        %v1319 = vlaneseq
        %v1320 = vshrl.u32 %v1319, 7
        %v1321 = vsub.s32 0, %v1320
        %v1322 = vrot.slane %v1310, %v1321
        %v1323 = vmul.f32 %v1322, %v1311
        %v1324 = vmul.f32 %v1322, %v1312
        %v1325 = vmul.f32 %v1322, %v1313
        %v1326 = vmul.f32 %v1322, %v1314
        %v1327 = vmul.f32 %v1322, %v1315
        %v1328 = vmul.f32 %v1322, %v1316
        %v1329 = vmul.f32 %v1322, %v1317
        %v1330 = vmul.f32 %v1322, %v1318
        %v1331 = vadd.f32 %v1302, %v1323
        %v1332 = vadd.f32 %v1303, %v1324
        %v1333 = vadd.f32 %v1304, %v1325
        %v1334 = vadd.f32 %v1305, %v1326
        %v1335 = vadd.f32 %v1306, %v1327
        %v1336 = vadd.f32 %v1307, %v1328
        %v1337 = vadd.f32 %v1308, %v1329
        %v1338 = vadd.f32 %v1309, %v1330
        %v1339 = vld [vmem:[%s1192 + $0x5] sm:$0x1]
        %v1340 = vld [vmem:[%s761 + $0x2] sm:$0xff]
        %v1341 = vld [vmem:[%s761 + $0x12] sm:$0xff]
        %v1342 = vld [vmem:[%s761 + $0x22] sm:$0xff]
        %v1343 = vld [vmem:[%s761 + $0x32] sm:$0xff]
        %v1344 = vld [vmem:[%s761 + $0x42] sm:$0xff]
        %v1345 = vld [vmem:[%s761 + $0x52] sm:$0xff]
        %v1346 = vld [vmem:[%s761 + $0x62] sm:$0xff]
        %v1347 = vld [vmem:[%s761 + $0x72] sm:$0xff]
        %v1348 = vlaneseq
        %v1349 = vshrl.u32 %v1348, 7
        %v1350 = vsub.s32 0, %v1349
        %v1351 = vrot.slane %v1339, %v1350
        %v1352 = vmul.f32 %v1351, %v1340
        %v1353 = vmul.f32 %v1351, %v1341
        %v1354 = vmul.f32 %v1351, %v1342
        %v1355 = vmul.f32 %v1351, %v1343
        %v1356 = vmul.f32 %v1351, %v1344
        %v1357 = vmul.f32 %v1351, %v1345
        %v1358 = vmul.f32 %v1351, %v1346
        %v1359 = vmul.f32 %v1351, %v1347
        %v1360 = vadd.f32 %v1331, %v1352
        %v1361 = vadd.f32 %v1332, %v1353
        %v1362 = vadd.f32 %v1333, %v1354
        %v1363 = vadd.f32 %v1334, %v1355
        %v1364 = vadd.f32 %v1335, %v1356
        %v1365 = vadd.f32 %v1336, %v1357
        %v1366 = vadd.f32 %v1337, %v1358
        %v1367 = vadd.f32 %v1338, %v1359
        %v1368 = vld [vmem:[%s1192 + $0x6] sm:$0x1]
        %s1369 = scalar_lea.vmem [#allocation2], 832
        %v1370 = vld [vmem:[%s1369] sm:$0xff]
        %v1371 = vld [vmem:[%s1369 + $0x10] sm:$0xff]
        %v1372 = vld [vmem:[%s1369 + $0x20] sm:$0xff]
        %v1373 = vld [vmem:[%s1369 + $0x30] sm:$0xff]
        %v1374 = vld [vmem:[%s1369 + $0x40] sm:$0xff]
        %v1375 = vld [vmem:[%s1369 + $0x50] sm:$0xff]
        %v1376 = vld [vmem:[%s1369 + $0x60] sm:$0xff]
        %v1377 = vld [vmem:[%s1369 + $0x70] sm:$0xff]
        %v1378 = vlaneseq
        %v1379 = vshrl.u32 %v1378, 7
        %v1380 = vsub.s32 0, %v1379
        %v1381 = vrot.slane %v1368, %v1380
        %v1382 = vmul.f32 %v1381, %v1370
        %v1383 = vmul.f32 %v1381, %v1371
        %v1384 = vmul.f32 %v1381, %v1372
        %v1385 = vmul.f32 %v1381, %v1373
        %v1386 = vmul.f32 %v1381, %v1374
        %v1387 = vmul.f32 %v1381, %v1375
        %v1388 = vmul.f32 %v1381, %v1376
        %v1389 = vmul.f32 %v1381, %v1377
        %v1390 = vadd.f32 %v1360, %v1382
        %v1391 = vadd.f32 %v1361, %v1383
        %v1392 = vadd.f32 %v1362, %v1384
        %v1393 = vadd.f32 %v1363, %v1385
        %v1394 = vadd.f32 %v1364, %v1386
        %v1395 = vadd.f32 %v1365, %v1387
        %v1396 = vadd.f32 %v1366, %v1388
        %v1397 = vadd.f32 %v1367, %v1389
        %v1398 = vld [vmem:[%s1192 + $0x7] sm:$0x1]
        %v1399 = vld [vmem:[%s1369 + $0x1] sm:$0xff]
        %v1400 = vld [vmem:[%s1369 + $0x11] sm:$0xff]
        %v1401 = vld [vmem:[%s1369 + $0x21] sm:$0xff]
        %v1402 = vld [vmem:[%s1369 + $0x31] sm:$0xff]
        %v1403 = vld [vmem:[%s1369 + $0x41] sm:$0xff]
        %v1404 = vld [vmem:[%s1369 + $0x51] sm:$0xff]
        %v1405 = vld [vmem:[%s1369 + $0x61] sm:$0xff]
        %v1406 = vld [vmem:[%s1369 + $0x71] sm:$0xff]
        %v1407 = vlaneseq
        %v1408 = vshrl.u32 %v1407, 7
        %v1409 = vsub.s32 0, %v1408
        %v1410 = vrot.slane %v1398, %v1409
        %v1411 = vmul.f32 %v1410, %v1399
        %v1412 = vmul.f32 %v1410, %v1400
        %v1413 = vmul.f32 %v1410, %v1401
        %v1414 = vmul.f32 %v1410, %v1402
        %v1415 = vmul.f32 %v1410, %v1403
        %v1416 = vmul.f32 %v1410, %v1404
        %v1417 = vmul.f32 %v1410, %v1405
        %v1418 = vmul.f32 %v1410, %v1406
        %v1419 = vadd.f32 %v1390, %v1411
        %v1420 = vadd.f32 %v1391, %v1412
        %v1421 = vadd.f32 %v1392, %v1413
        %v1422 = vadd.f32 %v1393, %v1414
        %v1423 = vadd.f32 %v1394, %v1415
        %v1424 = vadd.f32 %v1395, %v1416
        %v1425 = vadd.f32 %v1396, %v1417
        %v1426 = vadd.f32 %v1397, %v1418
        %v1427 = vld [vmem:[%s1192 + $0x8] sm:$0x1]
        %v1428 = vld [vmem:[%s1369 + $0x2] sm:$0xff]
        %v1429 = vld [vmem:[%s1369 + $0x12] sm:$0xff]
        %v1430 = vld [vmem:[%s1369 + $0x22] sm:$0xff]
        %v1431 = vld [vmem:[%s1369 + $0x32] sm:$0xff]
        %v1432 = vld [vmem:[%s1369 + $0x42] sm:$0xff]
        %v1433 = vld [vmem:[%s1369 + $0x52] sm:$0xff]
        %v1434 = vld [vmem:[%s1369 + $0x62] sm:$0xff]
        %v1435 = vld [vmem:[%s1369 + $0x72] sm:$0xff]
        %v1436 = vlaneseq
        %v1437 = vshrl.u32 %v1436, 7
        %v1438 = vsub.s32 0, %v1437
        %v1439 = vrot.slane %v1427, %v1438
        %v1440 = vmul.f32 %v1439, %v1428
        %v1441 = vmul.f32 %v1439, %v1429
        %v1442 = vmul.f32 %v1439, %v1430
        %v1443 = vmul.f32 %v1439, %v1431
        %v1444 = vmul.f32 %v1439, %v1432
        %v1445 = vmul.f32 %v1439, %v1433
        %v1446 = vmul.f32 %v1439, %v1434
        %v1447 = vmul.f32 %v1439, %v1435
        %v1448 = vadd.f32 %v1419, %v1440
        %v1449 = vadd.f32 %v1420, %v1441
        %v1450 = vadd.f32 %v1421, %v1442
        %v1451 = vadd.f32 %v1422, %v1443
        %v1452 = vadd.f32 %v1423, %v1444
        %v1453 = vadd.f32 %v1424, %v1445
        %v1454 = vadd.f32 %v1425, %v1446
        %v1455 = vadd.f32 %v1426, %v1447
        %v1456 = vld [vmem:[%s4 + $0x1] sm:$0x1]
        %v1457 = vlaneseq
        %v1458 = vshrl.u32 %v1457, 7
        %v1459 = vsub.s32 0, %v1458
        %v1460 = vrot.slane %v1456, %v1459
        %v1461 = vmul.f32 %v1448, %v1460
        %v1462 = vmul.f32 %v1449, %v1460
        %v1463 = vmul.f32 %v1450, %v1460
        %v1464 = vmul.f32 %v1451, %v1460
        %v1465 = vmul.f32 %v1452, %v1460
        %v1466 = vmul.f32 %v1453, %v1460
        %v1467 = vmul.f32 %v1454, %v1460
        %v1468 = vmul.f32 %v1455, %v1460
        %s1469 = scalar_lea.vmem %s3, 32
        %v1470 = vld [vmem:[%s1469] sm:$0x1]
        %s1471 = scalar_lea.vmem [#allocation2], 960
        %v1472 = vld [vmem:[%s1471] sm:$0xff]
        %v1473 = vld [vmem:[%s1471 + $0x10] sm:$0xff]
        %v1474 = vld [vmem:[%s1471 + $0x20] sm:$0xff]
        %v1475 = vld [vmem:[%s1471 + $0x30] sm:$0xff]
        %v1476 = vld [vmem:[%s1471 + $0x40] sm:$0xff]
        %v1477 = vld [vmem:[%s1471 + $0x50] sm:$0xff]
        %v1478 = vld [vmem:[%s1471 + $0x60] sm:$0xff]
        %v1479 = vld [vmem:[%s1471 + $0x70] sm:$0xff]
        %v1480 = vlaneseq
        %v1481 = vshrl.u32 %v1480, 7
        %v1482 = vsub.s32 0, %v1481
        %v1483 = vrot.slane %v1470, %v1482
        %v1484 = vmul.f32 %v1483, %v1472
        %v1485 = vmul.f32 %v1483, %v1473
        %v1486 = vmul.f32 %v1483, %v1474
        %v1487 = vmul.f32 %v1483, %v1475
        %v1488 = vmul.f32 %v1483, %v1476
        %v1489 = vmul.f32 %v1483, %v1477
        %v1490 = vmul.f32 %v1483, %v1478
        %v1491 = vmul.f32 %v1483, %v1479
        %v1492 = vadd.f32 %v1484, 0.0
        %v1493 = vadd.f32 %v1485, 0.0
        %v1494 = vadd.f32 %v1486, 0.0
        %v1495 = vadd.f32 %v1487, 0.0
        %v1496 = vadd.f32 %v1488, 0.0
        %v1497 = vadd.f32 %v1489, 0.0
        %v1498 = vadd.f32 %v1490, 0.0
        %v1499 = vadd.f32 %v1491, 0.0
        %v1500 = vld [vmem:[%s1469 + $0x1] sm:$0x1]
        %v1501 = vld [vmem:[%s1471 + $0x1] sm:$0xff]
        %v1502 = vld [vmem:[%s1471 + $0x11] sm:$0xff]
        %v1503 = vld [vmem:[%s1471 + $0x21] sm:$0xff]
        %v1504 = vld [vmem:[%s1471 + $0x31] sm:$0xff]
        %v1505 = vld [vmem:[%s1471 + $0x41] sm:$0xff]
        %v1506 = vld [vmem:[%s1471 + $0x51] sm:$0xff]
        %v1507 = vld [vmem:[%s1471 + $0x61] sm:$0xff]
        %v1508 = vld [vmem:[%s1471 + $0x71] sm:$0xff]
        %v1509 = vlaneseq
        %v1510 = vshrl.u32 %v1509, 7
        %v1511 = vsub.s32 0, %v1510
        %v1512 = vrot.slane %v1500, %v1511
        %v1513 = vmul.f32 %v1512, %v1501
        %v1514 = vmul.f32 %v1512, %v1502
        %v1515 = vmul.f32 %v1512, %v1503
        %v1516 = vmul.f32 %v1512, %v1504
        %v1517 = vmul.f32 %v1512, %v1505
        %v1518 = vmul.f32 %v1512, %v1506
        %v1519 = vmul.f32 %v1512, %v1507
        %v1520 = vmul.f32 %v1512, %v1508
        %v1521 = vadd.f32 %v1492, %v1513
        %v1522 = vadd.f32 %v1493, %v1514
        %v1523 = vadd.f32 %v1494, %v1515
        %v1524 = vadd.f32 %v1495, %v1516
        %v1525 = vadd.f32 %v1496, %v1517
        %v1526 = vadd.f32 %v1497, %v1518
        %v1527 = vadd.f32 %v1498, %v1519
        %v1528 = vadd.f32 %v1499, %v1520
        %v1529 = vld [vmem:[%s1469 + $0x2] sm:$0x1]
        %v1530 = vld [vmem:[%s1471 + $0x2] sm:$0xff]
        %v1531 = vld [vmem:[%s1471 + $0x12] sm:$0xff]
        %v1532 = vld [vmem:[%s1471 + $0x22] sm:$0xff]
        %v1533 = vld [vmem:[%s1471 + $0x32] sm:$0xff]
        %v1534 = vld [vmem:[%s1471 + $0x42] sm:$0xff]
        %v1535 = vld [vmem:[%s1471 + $0x52] sm:$0xff]
        %v1536 = vld [vmem:[%s1471 + $0x62] sm:$0xff]
        %v1537 = vld [vmem:[%s1471 + $0x72] sm:$0xff]
        %v1538 = vlaneseq
        %v1539 = vshrl.u32 %v1538, 7
        %v1540 = vsub.s32 0, %v1539
        %v1541 = vrot.slane %v1529, %v1540
        %v1542 = vmul.f32 %v1541, %v1530
        %v1543 = vmul.f32 %v1541, %v1531
        %v1544 = vmul.f32 %v1541, %v1532
        %v1545 = vmul.f32 %v1541, %v1533
        %v1546 = vmul.f32 %v1541, %v1534
        %v1547 = vmul.f32 %v1541, %v1535
        %v1548 = vmul.f32 %v1541, %v1536
        %v1549 = vmul.f32 %v1541, %v1537
        %v1550 = vadd.f32 %v1521, %v1542
        %v1551 = vadd.f32 %v1522, %v1543
        %v1552 = vadd.f32 %v1523, %v1544
        %v1553 = vadd.f32 %v1524, %v1545
        %v1554 = vadd.f32 %v1525, %v1546
        %v1555 = vadd.f32 %v1526, %v1547
        %v1556 = vadd.f32 %v1527, %v1548
        %v1557 = vadd.f32 %v1528, %v1549
        %v1558 = vld [vmem:[%s1469 + $0x3] sm:$0x1]
        %v1559 = vld [vmem:[%s834] sm:$0xff]
        %v1560 = vld [vmem:[%s834 + $0x10] sm:$0xff]
        %v1561 = vld [vmem:[%s834 + $0x20] sm:$0xff]
        %v1562 = vld [vmem:[%s834 + $0x30] sm:$0xff]
        %v1563 = vld [vmem:[%s834 + $0x40] sm:$0xff]
        %v1564 = vld [vmem:[%s834 + $0x50] sm:$0xff]
        %v1565 = vld [vmem:[%s834 + $0x60] sm:$0xff]
        %v1566 = vld [vmem:[%s834 + $0x70] sm:$0xff]
        %v1567 = vlaneseq
        %v1568 = vshrl.u32 %v1567, 7
        %v1569 = vsub.s32 0, %v1568
        %v1570 = vrot.slane %v1558, %v1569
        %v1571 = vmul.f32 %v1570, %v1559
        %v1572 = vmul.f32 %v1570, %v1560
        %v1573 = vmul.f32 %v1570, %v1561
        %v1574 = vmul.f32 %v1570, %v1562
        %v1575 = vmul.f32 %v1570, %v1563
        %v1576 = vmul.f32 %v1570, %v1564
        %v1577 = vmul.f32 %v1570, %v1565
        %v1578 = vmul.f32 %v1570, %v1566
        %v1579 = vadd.f32 %v1550, %v1571
        %v1580 = vadd.f32 %v1551, %v1572
        %v1581 = vadd.f32 %v1552, %v1573
        %v1582 = vadd.f32 %v1553, %v1574
        %v1583 = vadd.f32 %v1554, %v1575
        %v1584 = vadd.f32 %v1555, %v1576
        %v1585 = vadd.f32 %v1556, %v1577
        %v1586 = vadd.f32 %v1557, %v1578
        %v1587 = vld [vmem:[%s1469 + $0x4] sm:$0x1]
        %v1588 = vld [vmem:[%s834 + $0x1] sm:$0xff]
        %v1589 = vld [vmem:[%s834 + $0x11] sm:$0xff]
        %v1590 = vld [vmem:[%s834 + $0x21] sm:$0xff]
        %v1591 = vld [vmem:[%s834 + $0x31] sm:$0xff]
        %v1592 = vld [vmem:[%s834 + $0x41] sm:$0xff]
        %v1593 = vld [vmem:[%s834 + $0x51] sm:$0xff]
        %v1594 = vld [vmem:[%s834 + $0x61] sm:$0xff]
        %v1595 = vld [vmem:[%s834 + $0x71] sm:$0xff]
        %v1596 = vlaneseq
        %v1597 = vshrl.u32 %v1596, 7
        %v1598 = vsub.s32 0, %v1597
        %v1599 = vrot.slane %v1587, %v1598
        %v1600 = vmul.f32 %v1599, %v1588
        %v1601 = vmul.f32 %v1599, %v1589
        %v1602 = vmul.f32 %v1599, %v1590
        %v1603 = vmul.f32 %v1599, %v1591
        %v1604 = vmul.f32 %v1599, %v1592
        %v1605 = vmul.f32 %v1599, %v1593
        %v1606 = vmul.f32 %v1599, %v1594
        %v1607 = vmul.f32 %v1599, %v1595
        %v1608 = vadd.f32 %v1579, %v1600
        %v1609 = vadd.f32 %v1580, %v1601
        %v1610 = vadd.f32 %v1581, %v1602
        %v1611 = vadd.f32 %v1582, %v1603
        %v1612 = vadd.f32 %v1583, %v1604
        %v1613 = vadd.f32 %v1584, %v1605
        %v1614 = vadd.f32 %v1585, %v1606
        %v1615 = vadd.f32 %v1586, %v1607
        %v1616 = vld [vmem:[%s1469 + $0x5] sm:$0x1]
        %v1617 = vld [vmem:[%s834 + $0x2] sm:$0xff]
        %v1618 = vld [vmem:[%s834 + $0x12] sm:$0xff]
        %v1619 = vld [vmem:[%s834 + $0x22] sm:$0xff]
        %v1620 = vld [vmem:[%s834 + $0x32] sm:$0xff]
        %v1621 = vld [vmem:[%s834 + $0x42] sm:$0xff]
        %v1622 = vld [vmem:[%s834 + $0x52] sm:$0xff]
        %v1623 = vld [vmem:[%s834 + $0x62] sm:$0xff]
        %v1624 = vld [vmem:[%s834 + $0x72] sm:$0xff]
        %v1625 = vlaneseq
        %v1626 = vshrl.u32 %v1625, 7
        %v1627 = vsub.s32 0, %v1626
        %v1628 = vrot.slane %v1616, %v1627
        %v1629 = vmul.f32 %v1628, %v1617
        %v1630 = vmul.f32 %v1628, %v1618
        %v1631 = vmul.f32 %v1628, %v1619
        %v1632 = vmul.f32 %v1628, %v1620
        %v1633 = vmul.f32 %v1628, %v1621
        %v1634 = vmul.f32 %v1628, %v1622
        %v1635 = vmul.f32 %v1628, %v1623
        %v1636 = vmul.f32 %v1628, %v1624
        %v1637 = vadd.f32 %v1608, %v1629
        %v1638 = vadd.f32 %v1609, %v1630
        %v1639 = vadd.f32 %v1610, %v1631
        %v1640 = vadd.f32 %v1611, %v1632
        %v1641 = vadd.f32 %v1612, %v1633
        %v1642 = vadd.f32 %v1613, %v1634
        %v1643 = vadd.f32 %v1614, %v1635
        %v1644 = vadd.f32 %v1615, %v1636
        %v1645 = vld [vmem:[%s1469 + $0x6] sm:$0x1]
        %s1646 = scalar_lea.vmem [#allocation2], 992
        %v1647 = vld [vmem:[%s1646] sm:$0xff]
        %v1648 = vld [vmem:[%s1646 + $0x10] sm:$0xff]
        %v1649 = vld [vmem:[%s1646 + $0x20] sm:$0xff]
        %v1650 = vld [vmem:[%s1646 + $0x30] sm:$0xff]
        %v1651 = vld [vmem:[%s1646 + $0x40] sm:$0xff]
        %v1652 = vld [vmem:[%s1646 + $0x50] sm:$0xff]
        %v1653 = vld [vmem:[%s1646 + $0x60] sm:$0xff]
        %v1654 = vld [vmem:[%s1646 + $0x70] sm:$0xff]
        %v1655 = vlaneseq
        %v1656 = vshrl.u32 %v1655, 7
        %v1657 = vsub.s32 0, %v1656
        %v1658 = vrot.slane %v1645, %v1657
        %v1659 = vmul.f32 %v1658, %v1647
        %v1660 = vmul.f32 %v1658, %v1648
        %v1661 = vmul.f32 %v1658, %v1649
        %v1662 = vmul.f32 %v1658, %v1650
        %v1663 = vmul.f32 %v1658, %v1651
        %v1664 = vmul.f32 %v1658, %v1652
        %v1665 = vmul.f32 %v1658, %v1653
        %v1666 = vmul.f32 %v1658, %v1654
        %v1667 = vadd.f32 %v1637, %v1659
        %v1668 = vadd.f32 %v1638, %v1660
        %v1669 = vadd.f32 %v1639, %v1661
        %v1670 = vadd.f32 %v1640, %v1662
        %v1671 = vadd.f32 %v1641, %v1663
        %v1672 = vadd.f32 %v1642, %v1664
        %v1673 = vadd.f32 %v1643, %v1665
        %v1674 = vadd.f32 %v1644, %v1666
        %v1675 = vld [vmem:[%s1469 + $0x7] sm:$0x1]
        %v1676 = vld [vmem:[%s1646 + $0x1] sm:$0xff]
        %v1677 = vld [vmem:[%s1646 + $0x11] sm:$0xff]
        %v1678 = vld [vmem:[%s1646 + $0x21] sm:$0xff]
        %v1679 = vld [vmem:[%s1646 + $0x31] sm:$0xff]
        %v1680 = vld [vmem:[%s1646 + $0x41] sm:$0xff]
        %v1681 = vld [vmem:[%s1646 + $0x51] sm:$0xff]
        %v1682 = vld [vmem:[%s1646 + $0x61] sm:$0xff]
        %v1683 = vld [vmem:[%s1646 + $0x71] sm:$0xff]
        %v1684 = vlaneseq
        %v1685 = vshrl.u32 %v1684, 7
        %v1686 = vsub.s32 0, %v1685
        %v1687 = vrot.slane %v1675, %v1686
        %v1688 = vmul.f32 %v1687, %v1676
        %v1689 = vmul.f32 %v1687, %v1677
        %v1690 = vmul.f32 %v1687, %v1678
        %v1691 = vmul.f32 %v1687, %v1679
        %v1692 = vmul.f32 %v1687, %v1680
        %v1693 = vmul.f32 %v1687, %v1681
        %v1694 = vmul.f32 %v1687, %v1682
        %v1695 = vmul.f32 %v1687, %v1683
        %v1696 = vadd.f32 %v1667, %v1688
        %v1697 = vadd.f32 %v1668, %v1689
        %v1698 = vadd.f32 %v1669, %v1690
        %v1699 = vadd.f32 %v1670, %v1691
        %v1700 = vadd.f32 %v1671, %v1692
        %v1701 = vadd.f32 %v1672, %v1693
        %v1702 = vadd.f32 %v1673, %v1694
        %v1703 = vadd.f32 %v1674, %v1695
        %v1704 = vld [vmem:[%s1469 + $0x8] sm:$0x1]
        %v1705 = vld [vmem:[%s1646 + $0x2] sm:$0xff]
        %v1706 = vld [vmem:[%s1646 + $0x12] sm:$0xff]
        %v1707 = vld [vmem:[%s1646 + $0x22] sm:$0xff]
        %v1708 = vld [vmem:[%s1646 + $0x32] sm:$0xff]
        %v1709 = vld [vmem:[%s1646 + $0x42] sm:$0xff]
        %v1710 = vld [vmem:[%s1646 + $0x52] sm:$0xff]
        %v1711 = vld [vmem:[%s1646 + $0x62] sm:$0xff]
        %v1712 = vld [vmem:[%s1646 + $0x72] sm:$0xff]
        %v1713 = vlaneseq
        %v1714 = vshrl.u32 %v1713, 7
        %v1715 = vsub.s32 0, %v1714
        %v1716 = vrot.slane %v1704, %v1715
        %v1717 = vmul.f32 %v1716, %v1705
        %v1718 = vmul.f32 %v1716, %v1706
        %v1719 = vmul.f32 %v1716, %v1707
        %v1720 = vmul.f32 %v1716, %v1708
        %v1721 = vmul.f32 %v1716, %v1709
        %v1722 = vmul.f32 %v1716, %v1710
        %v1723 = vmul.f32 %v1716, %v1711
        %v1724 = vmul.f32 %v1716, %v1712
        %v1725 = vadd.f32 %v1696, %v1717
        %v1726 = vadd.f32 %v1697, %v1718
        %v1727 = vadd.f32 %v1698, %v1719
        %v1728 = vadd.f32 %v1699, %v1720
        %v1729 = vadd.f32 %v1700, %v1721
        %v1730 = vadd.f32 %v1701, %v1722
        %v1731 = vadd.f32 %v1702, %v1723
        %v1732 = vadd.f32 %v1703, %v1724
        %v1733 = vld [vmem:[%s4 + $0x2] sm:$0x1]
        %v1734 = vlaneseq
        %v1735 = vshrl.u32 %v1734, 7
        %v1736 = vsub.s32 0, %v1735
        %v1737 = vrot.slane %v1733, %v1736
        %v1738 = vmul.f32 %v1725, %v1737
        %v1739 = vmul.f32 %v1726, %v1737
        %v1740 = vmul.f32 %v1727, %v1737
        %v1741 = vmul.f32 %v1728, %v1737
        %v1742 = vmul.f32 %v1729, %v1737
        %v1743 = vmul.f32 %v1730, %v1737
        %v1744 = vmul.f32 %v1731, %v1737
        %v1745 = vmul.f32 %v1732, %v1737
        %s1746 = scalar_lea.vmem %s3, 48
        %v1747 = vld [vmem:[%s1746] sm:$0x1]
        %s1748 = scalar_lea.vmem [#allocation2], 1120
        %v1749 = vld [vmem:[%s1748] sm:$0xff]
        %v1750 = vld [vmem:[%s1748 + $0x10] sm:$0xff]
        %v1751 = vld [vmem:[%s1748 + $0x20] sm:$0xff]
        %v1752 = vld [vmem:[%s1748 + $0x30] sm:$0xff]
        %v1753 = vld [vmem:[%s1748 + $0x40] sm:$0xff]
        %v1754 = vld [vmem:[%s1748 + $0x50] sm:$0xff]
        %v1755 = vld [vmem:[%s1748 + $0x60] sm:$0xff]
        %v1756 = vld [vmem:[%s1748 + $0x70] sm:$0xff]
        %v1757 = vlaneseq
        %v1758 = vshrl.u32 %v1757, 7
        %v1759 = vsub.s32 0, %v1758
        %v1760 = vrot.slane %v1747, %v1759
        %v1761 = vmul.f32 %v1760, %v1749
        %v1762 = vmul.f32 %v1760, %v1750
        %v1763 = vmul.f32 %v1760, %v1751
        %v1764 = vmul.f32 %v1760, %v1752
        %v1765 = vmul.f32 %v1760, %v1753
        %v1766 = vmul.f32 %v1760, %v1754
        %v1767 = vmul.f32 %v1760, %v1755
        %v1768 = vmul.f32 %v1760, %v1756
        %v1769 = vadd.f32 %v1761, 0.0
        %v1770 = vadd.f32 %v1762, 0.0
        %v1771 = vadd.f32 %v1763, 0.0
        %v1772 = vadd.f32 %v1764, 0.0
        %v1773 = vadd.f32 %v1765, 0.0
        %v1774 = vadd.f32 %v1766, 0.0
        %v1775 = vadd.f32 %v1767, 0.0
        %v1776 = vadd.f32 %v1768, 0.0
        %v1777 = vld [vmem:[%s1746 + $0x1] sm:$0x1]
        %v1778 = vld [vmem:[%s1748 + $0x1] sm:$0xff]
        %v1779 = vld [vmem:[%s1748 + $0x11] sm:$0xff]
        %v1780 = vld [vmem:[%s1748 + $0x21] sm:$0xff]
        %v1781 = vld [vmem:[%s1748 + $0x31] sm:$0xff]
        %v1782 = vld [vmem:[%s1748 + $0x41] sm:$0xff]
        %v1783 = vld [vmem:[%s1748 + $0x51] sm:$0xff]
        %v1784 = vld [vmem:[%s1748 + $0x61] sm:$0xff]
        %v1785 = vld [vmem:[%s1748 + $0x71] sm:$0xff]
        %v1786 = vlaneseq
        %v1787 = vshrl.u32 %v1786, 7
        %v1788 = vsub.s32 0, %v1787
        %v1789 = vrot.slane %v1777, %v1788
        %v1790 = vmul.f32 %v1789, %v1778
        %v1791 = vmul.f32 %v1789, %v1779
        %v1792 = vmul.f32 %v1789, %v1780
        %v1793 = vmul.f32 %v1789, %v1781
        %v1794 = vmul.f32 %v1789, %v1782
        %v1795 = vmul.f32 %v1789, %v1783
        %v1796 = vmul.f32 %v1789, %v1784
        %v1797 = vmul.f32 %v1789, %v1785
        %v1798 = vadd.f32 %v1769, %v1790
        %v1799 = vadd.f32 %v1770, %v1791
        %v1800 = vadd.f32 %v1771, %v1792
        %v1801 = vadd.f32 %v1772, %v1793
        %v1802 = vadd.f32 %v1773, %v1794
        %v1803 = vadd.f32 %v1774, %v1795
        %v1804 = vadd.f32 %v1775, %v1796
        %v1805 = vadd.f32 %v1776, %v1797
        %v1806 = vld [vmem:[%s1746 + $0x2] sm:$0x1]
        %v1807 = vld [vmem:[%s1748 + $0x2] sm:$0xff]
        %v1808 = vld [vmem:[%s1748 + $0x12] sm:$0xff]
        %v1809 = vld [vmem:[%s1748 + $0x22] sm:$0xff]
        %v1810 = vld [vmem:[%s1748 + $0x32] sm:$0xff]
        %v1811 = vld [vmem:[%s1748 + $0x42] sm:$0xff]
        %v1812 = vld [vmem:[%s1748 + $0x52] sm:$0xff]
        %v1813 = vld [vmem:[%s1748 + $0x62] sm:$0xff]
        %v1814 = vld [vmem:[%s1748 + $0x72] sm:$0xff]
        %v1815 = vlaneseq
        %v1816 = vshrl.u32 %v1815, 7
        %v1817 = vsub.s32 0, %v1816
        %v1818 = vrot.slane %v1806, %v1817
        %v1819 = vmul.f32 %v1818, %v1807
        %v1820 = vmul.f32 %v1818, %v1808
        %v1821 = vmul.f32 %v1818, %v1809
        %v1822 = vmul.f32 %v1818, %v1810
        %v1823 = vmul.f32 %v1818, %v1811
        %v1824 = vmul.f32 %v1818, %v1812
        %v1825 = vmul.f32 %v1818, %v1813
        %v1826 = vmul.f32 %v1818, %v1814
        %v1827 = vadd.f32 %v1798, %v1819
        %v1828 = vadd.f32 %v1799, %v1820
        %v1829 = vadd.f32 %v1800, %v1821
        %v1830 = vadd.f32 %v1801, %v1822
        %v1831 = vadd.f32 %v1802, %v1823
        %v1832 = vadd.f32 %v1803, %v1824
        %v1833 = vadd.f32 %v1804, %v1825
        %v1834 = vadd.f32 %v1805, %v1826
        %v1835 = vld [vmem:[%s1746 + $0x3] sm:$0x1]
        %v1836 = vld [vmem:[%s907] sm:$0xff]
        %v1837 = vld [vmem:[%s907 + $0x10] sm:$0xff]
        %v1838 = vld [vmem:[%s907 + $0x20] sm:$0xff]
        %v1839 = vld [vmem:[%s907 + $0x30] sm:$0xff]
        %v1840 = vld [vmem:[%s907 + $0x40] sm:$0xff]
        %v1841 = vld [vmem:[%s907 + $0x50] sm:$0xff]
        %v1842 = vld [vmem:[%s907 + $0x60] sm:$0xff]
        %v1843 = vld [vmem:[%s907 + $0x70] sm:$0xff]
        %v1844 = vlaneseq
        %v1845 = vshrl.u32 %v1844, 7
        %v1846 = vsub.s32 0, %v1845
        %v1847 = vrot.slane %v1835, %v1846
        %v1848 = vmul.f32 %v1847, %v1836
        %v1849 = vmul.f32 %v1847, %v1837
        %v1850 = vmul.f32 %v1847, %v1838
        %v1851 = vmul.f32 %v1847, %v1839
        %v1852 = vmul.f32 %v1847, %v1840
        %v1853 = vmul.f32 %v1847, %v1841
        %v1854 = vmul.f32 %v1847, %v1842
        %v1855 = vmul.f32 %v1847, %v1843
        %v1856 = vadd.f32 %v1827, %v1848
        %v1857 = vadd.f32 %v1828, %v1849
        %v1858 = vadd.f32 %v1829, %v1850
        %v1859 = vadd.f32 %v1830, %v1851
        %v1860 = vadd.f32 %v1831, %v1852
        %v1861 = vadd.f32 %v1832, %v1853
        %v1862 = vadd.f32 %v1833, %v1854
        %v1863 = vadd.f32 %v1834, %v1855
        %v1864 = vld [vmem:[%s1746 + $0x4] sm:$0x1]
        %v1865 = vld [vmem:[%s907 + $0x1] sm:$0xff]
        %v1866 = vld [vmem:[%s907 + $0x11] sm:$0xff]
        %v1867 = vld [vmem:[%s907 + $0x21] sm:$0xff]
        %v1868 = vld [vmem:[%s907 + $0x31] sm:$0xff]
        %v1869 = vld [vmem:[%s907 + $0x41] sm:$0xff]
        %v1870 = vld [vmem:[%s907 + $0x51] sm:$0xff]
        %v1871 = vld [vmem:[%s907 + $0x61] sm:$0xff]
        %v1872 = vld [vmem:[%s907 + $0x71] sm:$0xff]
        %v1873 = vlaneseq
        %v1874 = vshrl.u32 %v1873, 7
        %v1875 = vsub.s32 0, %v1874
        %v1876 = vrot.slane %v1864, %v1875
        %v1877 = vmul.f32 %v1876, %v1865
        %v1878 = vmul.f32 %v1876, %v1866
        %v1879 = vmul.f32 %v1876, %v1867
        %v1880 = vmul.f32 %v1876, %v1868
        %v1881 = vmul.f32 %v1876, %v1869
        %v1882 = vmul.f32 %v1876, %v1870
        %v1883 = vmul.f32 %v1876, %v1871
        %v1884 = vmul.f32 %v1876, %v1872
        %v1885 = vadd.f32 %v1856, %v1877
        %v1886 = vadd.f32 %v1857, %v1878
        %v1887 = vadd.f32 %v1858, %v1879
        %v1888 = vadd.f32 %v1859, %v1880
        %v1889 = vadd.f32 %v1860, %v1881
        %v1890 = vadd.f32 %v1861, %v1882
        %v1891 = vadd.f32 %v1862, %v1883
        %v1892 = vadd.f32 %v1863, %v1884
        %v1893 = vld [vmem:[%s1746 + $0x5] sm:$0x1]
        %v1894 = vld [vmem:[%s907 + $0x2] sm:$0xff]
        %v1895 = vld [vmem:[%s907 + $0x12] sm:$0xff]
        %v1896 = vld [vmem:[%s907 + $0x22] sm:$0xff]
        %v1897 = vld [vmem:[%s907 + $0x32] sm:$0xff]
        %v1898 = vld [vmem:[%s907 + $0x42] sm:$0xff]
        %v1899 = vld [vmem:[%s907 + $0x52] sm:$0xff]
        %v1900 = vld [vmem:[%s907 + $0x62] sm:$0xff]
        %v1901 = vld [vmem:[%s907 + $0x72] sm:$0xff]
        %v1902 = vlaneseq
        %v1903 = vshrl.u32 %v1902, 7
        %v1904 = vsub.s32 0, %v1903
        %v1905 = vrot.slane %v1893, %v1904
        %v1906 = vmul.f32 %v1905, %v1894
        %v1907 = vmul.f32 %v1905, %v1895
        %v1908 = vmul.f32 %v1905, %v1896
        %v1909 = vmul.f32 %v1905, %v1897
        %v1910 = vmul.f32 %v1905, %v1898
        %v1911 = vmul.f32 %v1905, %v1899
        %v1912 = vmul.f32 %v1905, %v1900
        %v1913 = vmul.f32 %v1905, %v1901
        %v1914 = vadd.f32 %v1885, %v1906
        %v1915 = vadd.f32 %v1886, %v1907
        %v1916 = vadd.f32 %v1887, %v1908
        %v1917 = vadd.f32 %v1888, %v1909
        %v1918 = vadd.f32 %v1889, %v1910
        %v1919 = vadd.f32 %v1890, %v1911
        %v1920 = vadd.f32 %v1891, %v1912
        %v1921 = vadd.f32 %v1892, %v1913
        %v1922 = vld [vmem:[%s1746 + $0x6] sm:$0x1]
        %s1923 = scalar_lea.vmem [#allocation2], 1152
        %v1924 = vld [vmem:[%s1923] sm:$0xff]
        %v1925 = vld [vmem:[%s1923 + $0x10] sm:$0xff]
        %v1926 = vld [vmem:[%s1923 + $0x20] sm:$0xff]
        %v1927 = vld [vmem:[%s1923 + $0x30] sm:$0xff]
        %v1928 = vld [vmem:[%s1923 + $0x40] sm:$0xff]
        %v1929 = vld [vmem:[%s1923 + $0x50] sm:$0xff]
        %v1930 = vld [vmem:[%s1923 + $0x60] sm:$0xff]
        %v1931 = vld [vmem:[%s1923 + $0x70] sm:$0xff]
        %v1932 = vlaneseq
        %v1933 = vshrl.u32 %v1932, 7
        %v1934 = vsub.s32 0, %v1933
        %v1935 = vrot.slane %v1922, %v1934
        %v1936 = vmul.f32 %v1935, %v1924
        %v1937 = vmul.f32 %v1935, %v1925
        %v1938 = vmul.f32 %v1935, %v1926
        %v1939 = vmul.f32 %v1935, %v1927
        %v1940 = vmul.f32 %v1935, %v1928
        %v1941 = vmul.f32 %v1935, %v1929
        %v1942 = vmul.f32 %v1935, %v1930
        %v1943 = vmul.f32 %v1935, %v1931
        %v1944 = vadd.f32 %v1914, %v1936
        %v1945 = vadd.f32 %v1915, %v1937
        %v1946 = vadd.f32 %v1916, %v1938
        %v1947 = vadd.f32 %v1917, %v1939
        %v1948 = vadd.f32 %v1918, %v1940
        %v1949 = vadd.f32 %v1919, %v1941
        %v1950 = vadd.f32 %v1920, %v1942
        %v1951 = vadd.f32 %v1921, %v1943
        %v1952 = vld [vmem:[%s1746 + $0x7] sm:$0x1]
        %v1953 = vld [vmem:[%s1923 + $0x1] sm:$0xff]
        %v1954 = vld [vmem:[%s1923 + $0x11] sm:$0xff]
        %v1955 = vld [vmem:[%s1923 + $0x21] sm:$0xff]
        %v1956 = vld [vmem:[%s1923 + $0x31] sm:$0xff]
        %v1957 = vld [vmem:[%s1923 + $0x41] sm:$0xff]
        %v1958 = vld [vmem:[%s1923 + $0x51] sm:$0xff]
        %v1959 = vld [vmem:[%s1923 + $0x61] sm:$0xff]
        %v1960 = vld [vmem:[%s1923 + $0x71] sm:$0xff]
        %v1961 = vlaneseq
        %v1962 = vshrl.u32 %v1961, 7
        %v1963 = vsub.s32 0, %v1962
        %v1964 = vrot.slane %v1952, %v1963
        %v1965 = vmul.f32 %v1964, %v1953
        %v1966 = vmul.f32 %v1964, %v1954
        %v1967 = vmul.f32 %v1964, %v1955
        %v1968 = vmul.f32 %v1964, %v1956
        %v1969 = vmul.f32 %v1964, %v1957
        %v1970 = vmul.f32 %v1964, %v1958
        %v1971 = vmul.f32 %v1964, %v1959
        %v1972 = vmul.f32 %v1964, %v1960
        %v1973 = vadd.f32 %v1944, %v1965
        %v1974 = vadd.f32 %v1945, %v1966
        %v1975 = vadd.f32 %v1946, %v1967
        %v1976 = vadd.f32 %v1947, %v1968
        %v1977 = vadd.f32 %v1948, %v1969
        %v1978 = vadd.f32 %v1949, %v1970
        %v1979 = vadd.f32 %v1950, %v1971
        %v1980 = vadd.f32 %v1951, %v1972
        %v1981 = vld [vmem:[%s1746 + $0x8] sm:$0x1]
        %v1982 = vld [vmem:[%s1923 + $0x2] sm:$0xff]
        %v1983 = vld [vmem:[%s1923 + $0x12] sm:$0xff]
        %v1984 = vld [vmem:[%s1923 + $0x22] sm:$0xff]
        %v1985 = vld [vmem:[%s1923 + $0x32] sm:$0xff]
        %v1986 = vld [vmem:[%s1923 + $0x42] sm:$0xff]
        %v1987 = vld [vmem:[%s1923 + $0x52] sm:$0xff]
        %v1988 = vld [vmem:[%s1923 + $0x62] sm:$0xff]
        %v1989 = vld [vmem:[%s1923 + $0x72] sm:$0xff]
        %v1990 = vlaneseq
        %v1991 = vshrl.u32 %v1990, 7
        %v1992 = vsub.s32 0, %v1991
        %v1993 = vrot.slane %v1981, %v1992
        %v1994 = vmul.f32 %v1993, %v1982
        %v1995 = vmul.f32 %v1993, %v1983
        %v1996 = vmul.f32 %v1993, %v1984
        %v1997 = vmul.f32 %v1993, %v1985
        %v1998 = vmul.f32 %v1993, %v1986
        %v1999 = vmul.f32 %v1993, %v1987
        %v2000 = vmul.f32 %v1993, %v1988
        %v2001 = vmul.f32 %v1993, %v1989
        %v2002 = vadd.f32 %v1973, %v1994
        %v2003 = vadd.f32 %v1974, %v1995
        %v2004 = vadd.f32 %v1975, %v1996
        %v2005 = vadd.f32 %v1976, %v1997
        %v2006 = vadd.f32 %v1977, %v1998
        %v2007 = vadd.f32 %v1978, %v1999
        %v2008 = vadd.f32 %v1979, %v2000
        %v2009 = vadd.f32 %v1980, %v2001
        %v2010 = vld [vmem:[%s4 + $0x3] sm:$0x1]
        %v2011 = vlaneseq
        %v2012 = vshrl.u32 %v2011, 7
        %v2013 = vsub.s32 0, %v2012
        %v2014 = vrot.slane %v2010, %v2013
        %v2015 = vmul.f32 %v2002, %v2014
        %v2016 = vmul.f32 %v2003, %v2014
        %v2017 = vmul.f32 %v2004, %v2014
        %v2018 = vmul.f32 %v2005, %v2014
        %v2019 = vmul.f32 %v2006, %v2014
        %v2020 = vmul.f32 %v2007, %v2014
        %v2021 = vmul.f32 %v2008, %v2014
        %v2022 = vmul.f32 %v2009, %v2014
        %s2023 = sld [smem:[#allocation6]]
        %v2024 = vstv %s2023
        %v2025 = vmul.f32 %v2024, %v1184
        %v2026 = vmul.f32 %v2024, %v1185
        %v2027 = vmul.f32 %v2024, %v1186
        %v2028 = vmul.f32 %v2024, %v1187
        %v2029 = vmul.f32 %v2024, %v1188
        %v2030 = vmul.f32 %v2024, %v1189
        %v2031 = vmul.f32 %v2024, %v1190
        %v2032 = vmul.f32 %v2024, %v1191
        %s2033 = sld [smem:[#allocation6 + $0x4]]
        %v2034 = vstv %s2033
        %v2035 = vmul.f32 %v2034, %v1461
        %v2036 = vmul.f32 %v2034, %v1462
        %v2037 = vmul.f32 %v2034, %v1463
        %v2038 = vmul.f32 %v2034, %v1464
        %v2039 = vmul.f32 %v2034, %v1465
        %v2040 = vmul.f32 %v2034, %v1466
        %v2041 = vmul.f32 %v2034, %v1467
        %v2042 = vmul.f32 %v2034, %v1468
        %v2043 = vadd.f32 %v2025, %v2035
        %v2044 = vadd.f32 %v2026, %v2036
        %v2045 = vadd.f32 %v2027, %v2037
        %v2046 = vadd.f32 %v2028, %v2038
        %v2047 = vadd.f32 %v2029, %v2039
        %v2048 = vadd.f32 %v2030, %v2040
        %v2049 = vadd.f32 %v2031, %v2041
        %v2050 = vadd.f32 %v2032, %v2042
        %s2051 = sld [smem:[#allocation6 + $0x8]]
        %v2052 = vstv %s2051
        %v2053 = vmul.f32 %v2052, %v1738
        %v2054 = vmul.f32 %v2052, %v1739
        %v2055 = vmul.f32 %v2052, %v1740
        %v2056 = vmul.f32 %v2052, %v1741
        %v2057 = vmul.f32 %v2052, %v1742
        %v2058 = vmul.f32 %v2052, %v1743
        %v2059 = vmul.f32 %v2052, %v1744
        %v2060 = vmul.f32 %v2052, %v1745
        %v2061 = vadd.f32 %v2043, %v2053
        %v2062 = vadd.f32 %v2044, %v2054
        %v2063 = vadd.f32 %v2045, %v2055
        %v2064 = vadd.f32 %v2046, %v2056
        %v2065 = vadd.f32 %v2047, %v2057
        %v2066 = vadd.f32 %v2048, %v2058
        %v2067 = vadd.f32 %v2049, %v2059
        %v2068 = vadd.f32 %v2050, %v2060
        %s2069 = sld [smem:[#allocation6 + $0xc]]
        %v2070 = vstv %s2069
        %v2071 = vmul.f32 %v2070, %v2015
        %v2072 = vmul.f32 %v2070, %v2016
        %v2073 = vmul.f32 %v2070, %v2017
        %v2074 = vmul.f32 %v2070, %v2018
        %v2075 = vmul.f32 %v2070, %v2019
        %v2076 = vmul.f32 %v2070, %v2020
        %v2077 = vmul.f32 %v2070, %v2021
        %v2078 = vmul.f32 %v2070, %v2022
        %v2079 = vadd.f32 %v2061, %v2071
        %v2080 = vadd.f32 %v2062, %v2072
        %v2081 = vadd.f32 %v2063, %v2073
        %v2082 = vadd.f32 %v2064, %v2074
        %v2083 = vadd.f32 %v2065, %v2075
        %v2084 = vadd.f32 %v2066, %v2076
        %v2085 = vadd.f32 %v2067, %v2077
        %v2086 = vadd.f32 %v2068, %v2078
        %s2087 = sld [smem:[#allocation6 + $0x1]]
        %v2088 = vstv %s2087
        %v2089 = vmul.f32 %v2088, %v1184
        %v2090 = vmul.f32 %v2088, %v1185
        %v2091 = vmul.f32 %v2088, %v1186
        %v2092 = vmul.f32 %v2088, %v1187
        %v2093 = vmul.f32 %v2088, %v1188
        %v2094 = vmul.f32 %v2088, %v1189
        %v2095 = vmul.f32 %v2088, %v1190
        %v2096 = vmul.f32 %v2088, %v1191
        %s2097 = sld [smem:[#allocation6 + $0x5]]
        %v2098 = vstv %s2097
        %v2099 = vmul.f32 %v2098, %v1461
        %v2100 = vmul.f32 %v2098, %v1462
        %v2101 = vmul.f32 %v2098, %v1463
        %v2102 = vmul.f32 %v2098, %v1464
        %v2103 = vmul.f32 %v2098, %v1465
        %v2104 = vmul.f32 %v2098, %v1466
        %v2105 = vmul.f32 %v2098, %v1467
        %v2106 = vmul.f32 %v2098, %v1468
        %v2107 = vadd.f32 %v2089, %v2099
        %v2108 = vadd.f32 %v2090, %v2100
        %v2109 = vadd.f32 %v2091, %v2101
        %v2110 = vadd.f32 %v2092, %v2102
        %v2111 = vadd.f32 %v2093, %v2103
        %v2112 = vadd.f32 %v2094, %v2104
        %v2113 = vadd.f32 %v2095, %v2105
        %v2114 = vadd.f32 %v2096, %v2106
        %s2115 = sld [smem:[#allocation6 + $0x9]]
        %v2116 = vstv %s2115
        %v2117 = vmul.f32 %v2116, %v1738
        %v2118 = vmul.f32 %v2116, %v1739
        %v2119 = vmul.f32 %v2116, %v1740
        %v2120 = vmul.f32 %v2116, %v1741
        %v2121 = vmul.f32 %v2116, %v1742
        %v2122 = vmul.f32 %v2116, %v1743
        %v2123 = vmul.f32 %v2116, %v1744
        %v2124 = vmul.f32 %v2116, %v1745
        %v2125 = vadd.f32 %v2107, %v2117
        %v2126 = vadd.f32 %v2108, %v2118
        %v2127 = vadd.f32 %v2109, %v2119
        %v2128 = vadd.f32 %v2110, %v2120
        %v2129 = vadd.f32 %v2111, %v2121
        %v2130 = vadd.f32 %v2112, %v2122
        %v2131 = vadd.f32 %v2113, %v2123
        %v2132 = vadd.f32 %v2114, %v2124
        %s2133 = sld [smem:[#allocation6 + $0xd]]
        %v2134 = vstv %s2133
        %v2135 = vmul.f32 %v2134, %v2015
        %v2136 = vmul.f32 %v2134, %v2016
        %v2137 = vmul.f32 %v2134, %v2017
        %v2138 = vmul.f32 %v2134, %v2018
        %v2139 = vmul.f32 %v2134, %v2019
        %v2140 = vmul.f32 %v2134, %v2020
        %v2141 = vmul.f32 %v2134, %v2021
        %v2142 = vmul.f32 %v2134, %v2022
        %v2143 = vadd.f32 %v2125, %v2135
        %v2144 = vadd.f32 %v2126, %v2136
        %v2145 = vadd.f32 %v2127, %v2137
        %v2146 = vadd.f32 %v2128, %v2138
        %v2147 = vadd.f32 %v2129, %v2139
        %v2148 = vadd.f32 %v2130, %v2140
        %v2149 = vadd.f32 %v2131, %v2141
        %v2150 = vadd.f32 %v2132, %v2142
        %s2151 = sld [smem:[#allocation6 + $0x2]]
        %v2152 = vstv %s2151
        %v2153 = vmul.f32 %v2152, %v1184
        %v2154 = vmul.f32 %v2152, %v1185
        %v2155 = vmul.f32 %v2152, %v1186
        %v2156 = vmul.f32 %v2152, %v1187
        %v2157 = vmul.f32 %v2152, %v1188
        %v2158 = vmul.f32 %v2152, %v1189
        %v2159 = vmul.f32 %v2152, %v1190
        %v2160 = vmul.f32 %v2152, %v1191
        %s2161 = sld [smem:[#allocation6 + $0x6]]
        %v2162 = vstv %s2161
        %v2163 = vmul.f32 %v2162, %v1461
        %v2164 = vmul.f32 %v2162, %v1462
        %v2165 = vmul.f32 %v2162, %v1463
        %v2166 = vmul.f32 %v2162, %v1464
        %v2167 = vmul.f32 %v2162, %v1465
        %v2168 = vmul.f32 %v2162, %v1466
        %v2169 = vmul.f32 %v2162, %v1467
        %v2170 = vmul.f32 %v2162, %v1468
        %v2171 = vadd.f32 %v2153, %v2163
        %v2172 = vadd.f32 %v2154, %v2164
        %v2173 = vadd.f32 %v2155, %v2165
        %v2174 = vadd.f32 %v2156, %v2166
        %v2175 = vadd.f32 %v2157, %v2167
        %v2176 = vadd.f32 %v2158, %v2168
        %v2177 = vadd.f32 %v2159, %v2169
        %v2178 = vadd.f32 %v2160, %v2170
        %s2179 = sld [smem:[#allocation6 + $0xa]]
        %v2180 = vstv %s2179
        %v2181 = vmul.f32 %v2180, %v1738
        %v2182 = vmul.f32 %v2180, %v1739
        %v2183 = vmul.f32 %v2180, %v1740
        %v2184 = vmul.f32 %v2180, %v1741
        %v2185 = vmul.f32 %v2180, %v1742
        %v2186 = vmul.f32 %v2180, %v1743
        %v2187 = vmul.f32 %v2180, %v1744
        %v2188 = vmul.f32 %v2180, %v1745
        %v2189 = vadd.f32 %v2171, %v2181
        %v2190 = vadd.f32 %v2172, %v2182
        %v2191 = vadd.f32 %v2173, %v2183
        %v2192 = vadd.f32 %v2174, %v2184
        %v2193 = vadd.f32 %v2175, %v2185
        %v2194 = vadd.f32 %v2176, %v2186
        %v2195 = vadd.f32 %v2177, %v2187
        %v2196 = vadd.f32 %v2178, %v2188
        %s2197 = sld [smem:[#allocation6 + $0xe]]
        %v2198 = vstv %s2197
        %v2199 = vmul.f32 %v2198, %v2015
        %v2200 = vmul.f32 %v2198, %v2016
        %v2201 = vmul.f32 %v2198, %v2017
        %v2202 = vmul.f32 %v2198, %v2018
        %v2203 = vmul.f32 %v2198, %v2019
        %v2204 = vmul.f32 %v2198, %v2020
        %v2205 = vmul.f32 %v2198, %v2021
        %v2206 = vmul.f32 %v2198, %v2022
        %v2207 = vadd.f32 %v2189, %v2199
        %v2208 = vadd.f32 %v2190, %v2200
        %v2209 = vadd.f32 %v2191, %v2201
        %v2210 = vadd.f32 %v2192, %v2202
        %v2211 = vadd.f32 %v2193, %v2203
        %v2212 = vadd.f32 %v2194, %v2204
        %v2213 = vadd.f32 %v2195, %v2205
        %v2214 = vadd.f32 %v2196, %v2206
        %s2215 = sld [smem:[#allocation6 + $0x3]]
        %v2216 = vstv %s2215
        %v2217 = vmul.f32 %v2216, %v1184
        %v2218 = vmul.f32 %v2216, %v1185
        %v2219 = vmul.f32 %v2216, %v1186
        %v2220 = vmul.f32 %v2216, %v1187
        %v2221 = vmul.f32 %v2216, %v1188
        %v2222 = vmul.f32 %v2216, %v1189
        %v2223 = vmul.f32 %v2216, %v1190
        %v2224 = vmul.f32 %v2216, %v1191
        %s2225 = sld [smem:[#allocation6 + $0x7]]
        %v2226 = vstv %s2225
        %v2227 = vmul.f32 %v2226, %v1461
        %v2228 = vmul.f32 %v2226, %v1462
        %v2229 = vmul.f32 %v2226, %v1463
        %v2230 = vmul.f32 %v2226, %v1464
        %v2231 = vmul.f32 %v2226, %v1465
        %v2232 = vmul.f32 %v2226, %v1466
        %v2233 = vmul.f32 %v2226, %v1467
        %v2234 = vmul.f32 %v2226, %v1468
        %v2235 = vadd.f32 %v2217, %v2227
        %v2236 = vadd.f32 %v2218, %v2228
        %v2237 = vadd.f32 %v2219, %v2229
        %v2238 = vadd.f32 %v2220, %v2230
        %v2239 = vadd.f32 %v2221, %v2231
        %v2240 = vadd.f32 %v2222, %v2232
        %v2241 = vadd.f32 %v2223, %v2233
        %v2242 = vadd.f32 %v2224, %v2234
        %s2243 = sld [smem:[#allocation6 + $0xb]]
        %v2244 = vstv %s2243
        %v2245 = vmul.f32 %v2244, %v1738
        %v2246 = vmul.f32 %v2244, %v1739
        %v2247 = vmul.f32 %v2244, %v1740
        %v2248 = vmul.f32 %v2244, %v1741
        %v2249 = vmul.f32 %v2244, %v1742
        %v2250 = vmul.f32 %v2244, %v1743
        %v2251 = vmul.f32 %v2244, %v1744
        %v2252 = vmul.f32 %v2244, %v1745
        %v2253 = vadd.f32 %v2235, %v2245
        %v2254 = vadd.f32 %v2236, %v2246
        %v2255 = vadd.f32 %v2237, %v2247
        %v2256 = vadd.f32 %v2238, %v2248
        %v2257 = vadd.f32 %v2239, %v2249
        %v2258 = vadd.f32 %v2240, %v2250
        %v2259 = vadd.f32 %v2241, %v2251
        %v2260 = vadd.f32 %v2242, %v2252
        %s2261 = sld [smem:[#allocation6 + $0xf]]
        %v2262 = vstv %s2261
        %v2263 = vmul.f32 %v2262, %v2015
        %v2264 = vmul.f32 %v2262, %v2016
        %v2265 = vmul.f32 %v2262, %v2017
        %v2266 = vmul.f32 %v2262, %v2018
        %v2267 = vmul.f32 %v2262, %v2019
        %v2268 = vmul.f32 %v2262, %v2020
        %v2269 = vmul.f32 %v2262, %v2021
        %v2270 = vmul.f32 %v2262, %v2022
        %v2271 = vadd.f32 %v2253, %v2263
        %v2272 = vadd.f32 %v2254, %v2264
        %v2273 = vadd.f32 %v2255, %v2265
        %v2274 = vadd.f32 %v2256, %v2266
        %v2275 = vadd.f32 %v2257, %v2267
        %v2276 = vadd.f32 %v2258, %v2268
        %v2277 = vadd.f32 %v2259, %v2269
        %v2278 = vadd.f32 %v2260, %v2270
        %v2279 = vld [vmem:[%s6] sm:$0x1]
        %v2280 = vld [vmem:[%s7] sm:$0x1]
        %v2281 = vld [vmem:[%s5] sm:$0x1]
        %s2282 = scalar_lea.vmem [#allocation2], 480
        %v2283 = vld [vmem:[%s2282] sm:$0xff]
        %v2284 = vld [vmem:[%s2282 + $0x10] sm:$0xff]
        %v2285 = vld [vmem:[%s2282 + $0x20] sm:$0xff]
        %v2286 = vld [vmem:[%s2282 + $0x30] sm:$0xff]
        %v2287 = vld [vmem:[%s2282 + $0x40] sm:$0xff]
        %v2288 = vld [vmem:[%s2282 + $0x50] sm:$0xff]
        %v2289 = vld [vmem:[%s2282 + $0x60] sm:$0xff]
        %v2290 = vld [vmem:[%s2282 + $0x70] sm:$0xff]
        %v2291 = vlaneseq
        %v2292 = vshrl.u32 %v2291, 7
        %v2293 = vsub.s32 0, %v2292
        %v2294 = vrot.slane %v2281, %v2293
        %v2295 = vmul.f32 %v2294, %v2283
        %v2296 = vmul.f32 %v2294, %v2284
        %v2297 = vmul.f32 %v2294, %v2285
        %v2298 = vmul.f32 %v2294, %v2286
        %v2299 = vmul.f32 %v2294, %v2287
        %v2300 = vmul.f32 %v2294, %v2288
        %v2301 = vmul.f32 %v2294, %v2289
        %v2302 = vmul.f32 %v2294, %v2290
        %v2303 = vadd.f32 %v2295, 0.0
        %v2304 = vadd.f32 %v2296, 0.0
        %v2305 = vadd.f32 %v2297, 0.0
        %v2306 = vadd.f32 %v2298, 0.0
        %v2307 = vadd.f32 %v2299, 0.0
        %v2308 = vadd.f32 %v2300, 0.0
        %v2309 = vadd.f32 %v2301, 0.0
        %v2310 = vadd.f32 %v2302, 0.0
        %v2311 = vld [vmem:[%s5 + $0x1] sm:$0x1]
        %s2312 = scalar_lea.vmem [#allocation2], 320
        %v2313 = vld [vmem:[%s2312 + $0x1] sm:$0xff]
        %v2314 = vld [vmem:[%s2312 + $0x11] sm:$0xff]
        %v2315 = vld [vmem:[%s2312 + $0x21] sm:$0xff]
        %v2316 = vld [vmem:[%s2312 + $0x31] sm:$0xff]
        %v2317 = vld [vmem:[%s2312 + $0x41] sm:$0xff]
        %v2318 = vld [vmem:[%s2312 + $0x51] sm:$0xff]
        %v2319 = vld [vmem:[%s2312 + $0x61] sm:$0xff]
        %v2320 = vld [vmem:[%s2312 + $0x71] sm:$0xff]
        %v2321 = vlaneseq
        %v2322 = vshrl.u32 %v2321, 7
        %v2323 = vsub.s32 0, %v2322
        %v2324 = vrot.slane %v2311, %v2323
        %v2325 = vmul.f32 %v2324, %v2313
        %v2326 = vmul.f32 %v2324, %v2314
        %v2327 = vmul.f32 %v2324, %v2315
        %v2328 = vmul.f32 %v2324, %v2316
        %v2329 = vmul.f32 %v2324, %v2317
        %v2330 = vmul.f32 %v2324, %v2318
        %v2331 = vmul.f32 %v2324, %v2319
        %v2332 = vmul.f32 %v2324, %v2320
        %v2333 = vadd.f32 %v2303, %v2325
        %v2334 = vadd.f32 %v2304, %v2326
        %v2335 = vadd.f32 %v2305, %v2327
        %v2336 = vadd.f32 %v2306, %v2328
        %v2337 = vadd.f32 %v2307, %v2329
        %v2338 = vadd.f32 %v2308, %v2330
        %v2339 = vadd.f32 %v2309, %v2331
        %v2340 = vadd.f32 %v2310, %v2332
        %v2341 = vld [vmem:[%s5 + $0x2] sm:$0x1]
        %v2342 = vld [vmem:[%s2282 + $0x1] sm:$0xff]
        %v2343 = vld [vmem:[%s2282 + $0x11] sm:$0xff]
        %v2344 = vld [vmem:[%s2282 + $0x21] sm:$0xff]
        %v2345 = vld [vmem:[%s2282 + $0x31] sm:$0xff]
        %v2346 = vld [vmem:[%s2282 + $0x41] sm:$0xff]
        %v2347 = vld [vmem:[%s2282 + $0x51] sm:$0xff]
        %v2348 = vld [vmem:[%s2282 + $0x61] sm:$0xff]
        %v2349 = vld [vmem:[%s2282 + $0x71] sm:$0xff]
        %v2350 = vlaneseq
        %v2351 = vshrl.u32 %v2350, 7
        %v2352 = vsub.s32 0, %v2351
        %v2353 = vrot.slane %v2341, %v2352
        %v2354 = vmul.f32 %v2353, %v2342
        %v2355 = vmul.f32 %v2353, %v2343
        %v2356 = vmul.f32 %v2353, %v2344
        %v2357 = vmul.f32 %v2353, %v2345
        %v2358 = vmul.f32 %v2353, %v2346
        %v2359 = vmul.f32 %v2353, %v2347
        %v2360 = vmul.f32 %v2353, %v2348
        %v2361 = vmul.f32 %v2353, %v2349
        %v2362 = vadd.f32 %v2333, %v2354
        %v2363 = vadd.f32 %v2334, %v2355
        %v2364 = vadd.f32 %v2335, %v2356
        %v2365 = vadd.f32 %v2336, %v2357
        %v2366 = vadd.f32 %v2337, %v2358
        %v2367 = vadd.f32 %v2338, %v2359
        %v2368 = vadd.f32 %v2339, %v2360
        %v2369 = vadd.f32 %v2340, %v2361
        %v2370 = vld [vmem:[%s5 + $0x3] sm:$0x1]
        %v2371 = vld [vmem:[%s597] sm:$0xff]
        %v2372 = vld [vmem:[%s597 + $0x10] sm:$0xff]
        %v2373 = vld [vmem:[%s597 + $0x20] sm:$0xff]
        %v2374 = vld [vmem:[%s597 + $0x30] sm:$0xff]
        %v2375 = vld [vmem:[%s597 + $0x40] sm:$0xff]
        %v2376 = vld [vmem:[%s597 + $0x50] sm:$0xff]
        %v2377 = vld [vmem:[%s597 + $0x60] sm:$0xff]
        %v2378 = vld [vmem:[%s597 + $0x70] sm:$0xff]
        %v2379 = vlaneseq
        %v2380 = vshrl.u32 %v2379, 7
        %v2381 = vsub.s32 0, %v2380
        %v2382 = vrot.slane %v2370, %v2381
        %v2383 = vmul.f32 %v2382, %v2371
        %v2384 = vmul.f32 %v2382, %v2372
        %v2385 = vmul.f32 %v2382, %v2373
        %v2386 = vmul.f32 %v2382, %v2374
        %v2387 = vmul.f32 %v2382, %v2375
        %v2388 = vmul.f32 %v2382, %v2376
        %v2389 = vmul.f32 %v2382, %v2377
        %v2390 = vmul.f32 %v2382, %v2378
        %v2391 = vadd.f32 %v2362, %v2383
        %v2392 = vadd.f32 %v2363, %v2384
        %v2393 = vadd.f32 %v2364, %v2385
        %v2394 = vadd.f32 %v2365, %v2386
        %v2395 = vadd.f32 %v2366, %v2387
        %v2396 = vadd.f32 %v2367, %v2388
        %v2397 = vadd.f32 %v2368, %v2389
        %v2398 = vadd.f32 %v2369, %v2390
        %v2399 = vld [vmem:[%s5 + $0x4] sm:$0x1]
        %v2400 = vld [vmem:[%s588 + $0x1] sm:$0xff]
        %v2401 = vld [vmem:[%s588 + $0x11] sm:$0xff]
        %v2402 = vld [vmem:[%s588 + $0x21] sm:$0xff]
        %v2403 = vld [vmem:[%s588 + $0x31] sm:$0xff]
        %v2404 = vld [vmem:[%s588 + $0x41] sm:$0xff]
        %v2405 = vld [vmem:[%s588 + $0x51] sm:$0xff]
        %v2406 = vld [vmem:[%s588 + $0x61] sm:$0xff]
        %v2407 = vld [vmem:[%s588 + $0x71] sm:$0xff]
        %v2408 = vlaneseq
        %v2409 = vshrl.u32 %v2408, 7
        %v2410 = vsub.s32 0, %v2409
        %v2411 = vrot.slane %v2399, %v2410
        %v2412 = vmul.f32 %v2411, %v2400
        %v2413 = vmul.f32 %v2411, %v2401
        %v2414 = vmul.f32 %v2411, %v2402
        %v2415 = vmul.f32 %v2411, %v2403
        %v2416 = vmul.f32 %v2411, %v2404
        %v2417 = vmul.f32 %v2411, %v2405
        %v2418 = vmul.f32 %v2411, %v2406
        %v2419 = vmul.f32 %v2411, %v2407
        %v2420 = vadd.f32 %v2391, %v2412
        %v2421 = vadd.f32 %v2392, %v2413
        %v2422 = vadd.f32 %v2393, %v2414
        %v2423 = vadd.f32 %v2394, %v2415
        %v2424 = vadd.f32 %v2395, %v2416
        %v2425 = vadd.f32 %v2396, %v2417
        %v2426 = vadd.f32 %v2397, %v2418
        %v2427 = vadd.f32 %v2398, %v2419
        %v2428 = vld [vmem:[%s5 + $0x5] sm:$0x1]
        %v2429 = vld [vmem:[%s597 + $0x1] sm:$0xff]
        %v2430 = vld [vmem:[%s597 + $0x11] sm:$0xff]
        %v2431 = vld [vmem:[%s597 + $0x21] sm:$0xff]
        %v2432 = vld [vmem:[%s597 + $0x31] sm:$0xff]
        %v2433 = vld [vmem:[%s597 + $0x41] sm:$0xff]
        %v2434 = vld [vmem:[%s597 + $0x51] sm:$0xff]
        %v2435 = vld [vmem:[%s597 + $0x61] sm:$0xff]
        %v2436 = vld [vmem:[%s597 + $0x71] sm:$0xff]
        %v2437 = vlaneseq
        %v2438 = vshrl.u32 %v2437, 7
        %v2439 = vsub.s32 0, %v2438
        %v2440 = vrot.slane %v2428, %v2439
        %v2441 = vmul.f32 %v2440, %v2429
        %v2442 = vmul.f32 %v2440, %v2430
        %v2443 = vmul.f32 %v2440, %v2431
        %v2444 = vmul.f32 %v2440, %v2432
        %v2445 = vmul.f32 %v2440, %v2433
        %v2446 = vmul.f32 %v2440, %v2434
        %v2447 = vmul.f32 %v2440, %v2435
        %v2448 = vmul.f32 %v2440, %v2436
        %v2449 = vadd.f32 %v2420, %v2441
        %v2450 = vadd.f32 %v2421, %v2442
        %v2451 = vadd.f32 %v2422, %v2443
        %v2452 = vadd.f32 %v2423, %v2444
        %v2453 = vadd.f32 %v2424, %v2445
        %v2454 = vadd.f32 %v2425, %v2446
        %v2455 = vadd.f32 %v2426, %v2447
        %v2456 = vadd.f32 %v2427, %v2448
        %v2457 = vld [vmem:[%s5 + $0x6] sm:$0x1]
        %v2458 = vld [vmem:[%s615] sm:$0xff]
        %v2459 = vld [vmem:[%s615 + $0x10] sm:$0xff]
        %v2460 = vld [vmem:[%s615 + $0x20] sm:$0xff]
        %v2461 = vld [vmem:[%s615 + $0x30] sm:$0xff]
        %v2462 = vld [vmem:[%s615 + $0x40] sm:$0xff]
        %v2463 = vld [vmem:[%s615 + $0x50] sm:$0xff]
        %v2464 = vld [vmem:[%s615 + $0x60] sm:$0xff]
        %v2465 = vld [vmem:[%s615 + $0x70] sm:$0xff]
        %v2466 = vlaneseq
        %v2467 = vshrl.u32 %v2466, 7
        %v2468 = vsub.s32 0, %v2467
        %v2469 = vrot.slane %v2457, %v2468
        %v2470 = vmul.f32 %v2469, %v2458
        %v2471 = vmul.f32 %v2469, %v2459
        %v2472 = vmul.f32 %v2469, %v2460
        %v2473 = vmul.f32 %v2469, %v2461
        %v2474 = vmul.f32 %v2469, %v2462
        %v2475 = vmul.f32 %v2469, %v2463
        %v2476 = vmul.f32 %v2469, %v2464
        %v2477 = vmul.f32 %v2469, %v2465
        %v2478 = vadd.f32 %v2449, %v2470
        %v2479 = vadd.f32 %v2450, %v2471
        %v2480 = vadd.f32 %v2451, %v2472
        %v2481 = vadd.f32 %v2452, %v2473
        %v2482 = vadd.f32 %v2453, %v2474
        %v2483 = vadd.f32 %v2454, %v2475
        %v2484 = vadd.f32 %v2455, %v2476
        %v2485 = vadd.f32 %v2456, %v2477
        %v2486 = vld [vmem:[%s5 + $0x7] sm:$0x1]
        %v2487 = vld [vmem:[%s606 + $0x1] sm:$0xff]
        %v2488 = vld [vmem:[%s606 + $0x11] sm:$0xff]
        %v2489 = vld [vmem:[%s606 + $0x21] sm:$0xff]
        %v2490 = vld [vmem:[%s606 + $0x31] sm:$0xff]
        %v2491 = vld [vmem:[%s606 + $0x41] sm:$0xff]
        %v2492 = vld [vmem:[%s606 + $0x51] sm:$0xff]
        %v2493 = vld [vmem:[%s606 + $0x61] sm:$0xff]
        %v2494 = vld [vmem:[%s606 + $0x71] sm:$0xff]
        %v2495 = vlaneseq
        %v2496 = vshrl.u32 %v2495, 7
        %v2497 = vsub.s32 0, %v2496
        %v2498 = vrot.slane %v2486, %v2497
        %v2499 = vmul.f32 %v2498, %v2487
        %v2500 = vmul.f32 %v2498, %v2488
        %v2501 = vmul.f32 %v2498, %v2489
        %v2502 = vmul.f32 %v2498, %v2490
        %v2503 = vmul.f32 %v2498, %v2491
        %v2504 = vmul.f32 %v2498, %v2492
        %v2505 = vmul.f32 %v2498, %v2493
        %v2506 = vmul.f32 %v2498, %v2494
        %v2507 = vadd.f32 %v2478, %v2499
        %v2508 = vadd.f32 %v2479, %v2500
        %v2509 = vadd.f32 %v2480, %v2501
        %v2510 = vadd.f32 %v2481, %v2502
        %v2511 = vadd.f32 %v2482, %v2503
        %v2512 = vadd.f32 %v2483, %v2504
        %v2513 = vadd.f32 %v2484, %v2505
        %v2514 = vadd.f32 %v2485, %v2506
        %v2515 = vld [vmem:[%s5 + $0x8] sm:$0x1]
        %v2516 = vld [vmem:[%s615 + $0x1] sm:$0xff]
        %v2517 = vld [vmem:[%s615 + $0x11] sm:$0xff]
        %v2518 = vld [vmem:[%s615 + $0x21] sm:$0xff]
        %v2519 = vld [vmem:[%s615 + $0x31] sm:$0xff]
        %v2520 = vld [vmem:[%s615 + $0x41] sm:$0xff]
        %v2521 = vld [vmem:[%s615 + $0x51] sm:$0xff]
        %v2522 = vld [vmem:[%s615 + $0x61] sm:$0xff]
        %v2523 = vld [vmem:[%s615 + $0x71] sm:$0xff]
        %v2524 = vlaneseq
        %v2525 = vshrl.u32 %v2524, 7
        %v2526 = vsub.s32 0, %v2525
        %v2527 = vrot.slane %v2515, %v2526
        %v2528 = vmul.f32 %v2527, %v2516
        %v2529 = vmul.f32 %v2527, %v2517
        %v2530 = vmul.f32 %v2527, %v2518
        %v2531 = vmul.f32 %v2527, %v2519
        %v2532 = vmul.f32 %v2527, %v2520
        %v2533 = vmul.f32 %v2527, %v2521
        %v2534 = vmul.f32 %v2527, %v2522
        %v2535 = vmul.f32 %v2527, %v2523
        %v2536 = vadd.f32 %v2507, %v2528
        %v2537 = vadd.f32 %v2508, %v2529
        %v2538 = vadd.f32 %v2509, %v2530
        %v2539 = vadd.f32 %v2510, %v2531
        %v2540 = vadd.f32 %v2511, %v2532
        %v2541 = vadd.f32 %v2512, %v2533
        %v2542 = vadd.f32 %v2513, %v2534
        %v2543 = vadd.f32 %v2514, %v2535
        %v2545 = vlaneseq
        %v2546 = vshrl.u32 %v2545, 7
        %v2547 = vsub.s32 0, %v2546
        %v2548 = vrot.slane %v2279, %v2547
        %v2550 = vadd.f32 %v2536, %v2548
        %v2551 = vadd.f32 %v2537, %v2548
        %v2552 = vadd.f32 %v2538, %v2548
        %v2553 = vadd.f32 %v2539, %v2548
        %v2554 = vadd.f32 %v2540, %v2548
        %v2555 = vadd.f32 %v2541, %v2548
        %v2556 = vadd.f32 %v2542, %v2548
        %v2557 = vadd.f32 %v2543, %v2548
        %v2559 = vlaneseq
        %v2560 = vshrl.u32 %v2559, 7
        %v2561 = vsub.s32 0, %v2560
        %v2562 = vrot.slane %v2280, %v2561
        %v2564 = vmul.f32 %v2550, %v2562
        %v2565 = vmul.f32 %v2551, %v2562
        %v2566 = vmul.f32 %v2552, %v2562
        %v2567 = vmul.f32 %v2553, %v2562
        %v2568 = vmul.f32 %v2554, %v2562
        %v2569 = vmul.f32 %v2555, %v2562
        %v2570 = vmul.f32 %v2556, %v2562
        %v2571 = vmul.f32 %v2557, %v2562
        %v2572 = vadd.f32 %v2564, %v2079
        %v2573 = vadd.f32 %v2565, %v2080
        %v2574 = vadd.f32 %v2566, %v2081
        %v2575 = vadd.f32 %v2567, %v2082
        %v2576 = vadd.f32 %v2568, %v2083
        %v2577 = vadd.f32 %v2569, %v2084
        %v2578 = vadd.f32 %v2570, %v2085
        %v2579 = vadd.f32 %v2571, %v2086
        %2580 = vst.msk [vmem:[#allocation3] sm:$0xff] %vm360, %v2572
        %2581 = vst.msk [vmem:[#allocation3 + $0x8] sm:$0xff] %vm360, %v2573
        %2582 = vst.msk [vmem:[#allocation3 + $0x10] sm:$0xff] %vm360, %v2574
        %2583 = vst.msk [vmem:[#allocation3 + $0x18] sm:$0xff] %vm360, %v2575
        %2584 = vst.msk [vmem:[#allocation3 + $0x20] sm:$0xff] %vm360, %v2576
        %2585 = vst.msk [vmem:[#allocation3 + $0x28] sm:$0xff] %vm360, %v2577
        %2586 = vst.msk [vmem:[#allocation3 + $0x30] sm:$0xff] %vm360, %v2578
        %2587 = vst.msk [vmem:[#allocation3 + $0x38] sm:$0xff] %vm360, %v2579
        %v2588 = vld [vmem:[%s5] sm:$0x1]
        %v2589 = vld [vmem:[%s2312 + $0x1] sm:$0xff]
        %v2590 = vld [vmem:[%s2312 + $0x11] sm:$0xff]
        %v2591 = vld [vmem:[%s2312 + $0x21] sm:$0xff]
        %v2592 = vld [vmem:[%s2312 + $0x31] sm:$0xff]
        %v2593 = vld [vmem:[%s2312 + $0x41] sm:$0xff]
        %v2594 = vld [vmem:[%s2312 + $0x51] sm:$0xff]
        %v2595 = vld [vmem:[%s2312 + $0x61] sm:$0xff]
        %v2596 = vld [vmem:[%s2312 + $0x71] sm:$0xff]
        %v2597 = vlaneseq
        %v2598 = vshrl.u32 %v2597, 7
        %v2599 = vsub.s32 0, %v2598
        %v2600 = vrot.slane %v2588, %v2599
        %v2601 = vmul.f32 %v2600, %v2589
        %v2602 = vmul.f32 %v2600, %v2590
        %v2603 = vmul.f32 %v2600, %v2591
        %v2604 = vmul.f32 %v2600, %v2592
        %v2605 = vmul.f32 %v2600, %v2593
        %v2606 = vmul.f32 %v2600, %v2594
        %v2607 = vmul.f32 %v2600, %v2595
        %v2608 = vmul.f32 %v2600, %v2596
        %v2609 = vadd.f32 %v2601, 0.0
        %v2610 = vadd.f32 %v2602, 0.0
        %v2611 = vadd.f32 %v2603, 0.0
        %v2612 = vadd.f32 %v2604, 0.0
        %v2613 = vadd.f32 %v2605, 0.0
        %v2614 = vadd.f32 %v2606, 0.0
        %v2615 = vadd.f32 %v2607, 0.0
        %v2616 = vadd.f32 %v2608, 0.0
        %v2617 = vld [vmem:[%s5 + $0x1] sm:$0x1]
        %v2618 = vld [vmem:[%s2282 + $0x1] sm:$0xff]
        %v2619 = vld [vmem:[%s2282 + $0x11] sm:$0xff]
        %v2620 = vld [vmem:[%s2282 + $0x21] sm:$0xff]
        %v2621 = vld [vmem:[%s2282 + $0x31] sm:$0xff]
        %v2622 = vld [vmem:[%s2282 + $0x41] sm:$0xff]
        %v2623 = vld [vmem:[%s2282 + $0x51] sm:$0xff]
        %v2624 = vld [vmem:[%s2282 + $0x61] sm:$0xff]
        %v2625 = vld [vmem:[%s2282 + $0x71] sm:$0xff]
        %v2626 = vlaneseq
        %v2627 = vshrl.u32 %v2626, 7
        %v2628 = vsub.s32 0, %v2627
        %v2629 = vrot.slane %v2617, %v2628
        %v2630 = vmul.f32 %v2629, %v2618
        %v2631 = vmul.f32 %v2629, %v2619
        %v2632 = vmul.f32 %v2629, %v2620
        %v2633 = vmul.f32 %v2629, %v2621
        %v2634 = vmul.f32 %v2629, %v2622
        %v2635 = vmul.f32 %v2629, %v2623
        %v2636 = vmul.f32 %v2629, %v2624
        %v2637 = vmul.f32 %v2629, %v2625
        %v2638 = vadd.f32 %v2609, %v2630
        %v2639 = vadd.f32 %v2610, %v2631
        %v2640 = vadd.f32 %v2611, %v2632
        %v2641 = vadd.f32 %v2612, %v2633
        %v2642 = vadd.f32 %v2613, %v2634
        %v2643 = vadd.f32 %v2614, %v2635
        %v2644 = vadd.f32 %v2615, %v2636
        %v2645 = vadd.f32 %v2616, %v2637
        %v2646 = vld [vmem:[%s5 + $0x2] sm:$0x1]
        %v2647 = vld [vmem:[%s2312 + $0x2] sm:$0xff]
        %v2648 = vld [vmem:[%s2312 + $0x12] sm:$0xff]
        %v2649 = vld [vmem:[%s2312 + $0x22] sm:$0xff]
        %v2650 = vld [vmem:[%s2312 + $0x32] sm:$0xff]
        %v2651 = vld [vmem:[%s2312 + $0x42] sm:$0xff]
        %v2652 = vld [vmem:[%s2312 + $0x52] sm:$0xff]
        %v2653 = vld [vmem:[%s2312 + $0x62] sm:$0xff]
        %v2654 = vld [vmem:[%s2312 + $0x72] sm:$0xff]
        %v2655 = vlaneseq
        %v2656 = vshrl.u32 %v2655, 7
        %v2657 = vsub.s32 0, %v2656
        %v2658 = vrot.slane %v2646, %v2657
        %v2659 = vmul.f32 %v2658, %v2647
        %v2660 = vmul.f32 %v2658, %v2648
        %v2661 = vmul.f32 %v2658, %v2649
        %v2662 = vmul.f32 %v2658, %v2650
        %v2663 = vmul.f32 %v2658, %v2651
        %v2664 = vmul.f32 %v2658, %v2652
        %v2665 = vmul.f32 %v2658, %v2653
        %v2666 = vmul.f32 %v2658, %v2654
        %v2667 = vadd.f32 %v2638, %v2659
        %v2668 = vadd.f32 %v2639, %v2660
        %v2669 = vadd.f32 %v2640, %v2661
        %v2670 = vadd.f32 %v2641, %v2662
        %v2671 = vadd.f32 %v2642, %v2663
        %v2672 = vadd.f32 %v2643, %v2664
        %v2673 = vadd.f32 %v2644, %v2665
        %v2674 = vadd.f32 %v2645, %v2666
        %v2675 = vld [vmem:[%s5 + $0x3] sm:$0x1]
        %v2676 = vld [vmem:[%s588 + $0x1] sm:$0xff]
        %v2677 = vld [vmem:[%s588 + $0x11] sm:$0xff]
        %v2678 = vld [vmem:[%s588 + $0x21] sm:$0xff]
        %v2679 = vld [vmem:[%s588 + $0x31] sm:$0xff]
        %v2680 = vld [vmem:[%s588 + $0x41] sm:$0xff]
        %v2681 = vld [vmem:[%s588 + $0x51] sm:$0xff]
        %v2682 = vld [vmem:[%s588 + $0x61] sm:$0xff]
        %v2683 = vld [vmem:[%s588 + $0x71] sm:$0xff]
        %v2684 = vlaneseq
        %v2685 = vshrl.u32 %v2684, 7
        %v2686 = vsub.s32 0, %v2685
        %v2687 = vrot.slane %v2675, %v2686
        %v2688 = vmul.f32 %v2687, %v2676
        %v2689 = vmul.f32 %v2687, %v2677
        %v2690 = vmul.f32 %v2687, %v2678
        %v2691 = vmul.f32 %v2687, %v2679
        %v2692 = vmul.f32 %v2687, %v2680
        %v2693 = vmul.f32 %v2687, %v2681
        %v2694 = vmul.f32 %v2687, %v2682
        %v2695 = vmul.f32 %v2687, %v2683
        %v2696 = vadd.f32 %v2667, %v2688
        %v2697 = vadd.f32 %v2668, %v2689
        %v2698 = vadd.f32 %v2669, %v2690
        %v2699 = vadd.f32 %v2670, %v2691
        %v2700 = vadd.f32 %v2671, %v2692
        %v2701 = vadd.f32 %v2672, %v2693
        %v2702 = vadd.f32 %v2673, %v2694
        %v2703 = vadd.f32 %v2674, %v2695
        %v2704 = vld [vmem:[%s5 + $0x4] sm:$0x1]
        %v2705 = vld [vmem:[%s597 + $0x1] sm:$0xff]
        %v2706 = vld [vmem:[%s597 + $0x11] sm:$0xff]
        %v2707 = vld [vmem:[%s597 + $0x21] sm:$0xff]
        %v2708 = vld [vmem:[%s597 + $0x31] sm:$0xff]
        %v2709 = vld [vmem:[%s597 + $0x41] sm:$0xff]
        %v2710 = vld [vmem:[%s597 + $0x51] sm:$0xff]
        %v2711 = vld [vmem:[%s597 + $0x61] sm:$0xff]
        %v2712 = vld [vmem:[%s597 + $0x71] sm:$0xff]
        %v2713 = vlaneseq
        %v2714 = vshrl.u32 %v2713, 7
        %v2715 = vsub.s32 0, %v2714
        %v2716 = vrot.slane %v2704, %v2715
        %v2717 = vmul.f32 %v2716, %v2705
        %v2718 = vmul.f32 %v2716, %v2706
        %v2719 = vmul.f32 %v2716, %v2707
        %v2720 = vmul.f32 %v2716, %v2708
        %v2721 = vmul.f32 %v2716, %v2709
        %v2722 = vmul.f32 %v2716, %v2710
        %v2723 = vmul.f32 %v2716, %v2711
        %v2724 = vmul.f32 %v2716, %v2712
        %v2725 = vadd.f32 %v2696, %v2717
        %v2726 = vadd.f32 %v2697, %v2718
        %v2727 = vadd.f32 %v2698, %v2719
        %v2728 = vadd.f32 %v2699, %v2720
        %v2729 = vadd.f32 %v2700, %v2721
        %v2730 = vadd.f32 %v2701, %v2722
        %v2731 = vadd.f32 %v2702, %v2723
        %v2732 = vadd.f32 %v2703, %v2724
        %v2733 = vld [vmem:[%s5 + $0x5] sm:$0x1]
        %v2734 = vld [vmem:[%s588 + $0x2] sm:$0xff]
        %v2735 = vld [vmem:[%s588 + $0x12] sm:$0xff]
        %v2736 = vld [vmem:[%s588 + $0x22] sm:$0xff]
        %v2737 = vld [vmem:[%s588 + $0x32] sm:$0xff]
        %v2738 = vld [vmem:[%s588 + $0x42] sm:$0xff]
        %v2739 = vld [vmem:[%s588 + $0x52] sm:$0xff]
        %v2740 = vld [vmem:[%s588 + $0x62] sm:$0xff]
        %v2741 = vld [vmem:[%s588 + $0x72] sm:$0xff]
        %v2742 = vlaneseq
        %v2743 = vshrl.u32 %v2742, 7
        %v2744 = vsub.s32 0, %v2743
        %v2745 = vrot.slane %v2733, %v2744
        %v2746 = vmul.f32 %v2745, %v2734
        %v2747 = vmul.f32 %v2745, %v2735
        %v2748 = vmul.f32 %v2745, %v2736
        %v2749 = vmul.f32 %v2745, %v2737
        %v2750 = vmul.f32 %v2745, %v2738
        %v2751 = vmul.f32 %v2745, %v2739
        %v2752 = vmul.f32 %v2745, %v2740
        %v2753 = vmul.f32 %v2745, %v2741
        %v2754 = vadd.f32 %v2725, %v2746
        %v2755 = vadd.f32 %v2726, %v2747
        %v2756 = vadd.f32 %v2727, %v2748
        %v2757 = vadd.f32 %v2728, %v2749
        %v2758 = vadd.f32 %v2729, %v2750
        %v2759 = vadd.f32 %v2730, %v2751
        %v2760 = vadd.f32 %v2731, %v2752
        %v2761 = vadd.f32 %v2732, %v2753
        %v2762 = vld [vmem:[%s5 + $0x6] sm:$0x1]
        %v2763 = vld [vmem:[%s606 + $0x1] sm:$0xff]
        %v2764 = vld [vmem:[%s606 + $0x11] sm:$0xff]
        %v2765 = vld [vmem:[%s606 + $0x21] sm:$0xff]
        %v2766 = vld [vmem:[%s606 + $0x31] sm:$0xff]
        %v2767 = vld [vmem:[%s606 + $0x41] sm:$0xff]
        %v2768 = vld [vmem:[%s606 + $0x51] sm:$0xff]
        %v2769 = vld [vmem:[%s606 + $0x61] sm:$0xff]
        %v2770 = vld [vmem:[%s606 + $0x71] sm:$0xff]
        %v2771 = vlaneseq
        %v2772 = vshrl.u32 %v2771, 7
        %v2773 = vsub.s32 0, %v2772
        %v2774 = vrot.slane %v2762, %v2773
        %v2775 = vmul.f32 %v2774, %v2763
        %v2776 = vmul.f32 %v2774, %v2764
        %v2777 = vmul.f32 %v2774, %v2765
        %v2778 = vmul.f32 %v2774, %v2766
        %v2779 = vmul.f32 %v2774, %v2767
        %v2780 = vmul.f32 %v2774, %v2768
        %v2781 = vmul.f32 %v2774, %v2769
        %v2782 = vmul.f32 %v2774, %v2770
        %v2783 = vadd.f32 %v2754, %v2775
        %v2784 = vadd.f32 %v2755, %v2776
        %v2785 = vadd.f32 %v2756, %v2777
        %v2786 = vadd.f32 %v2757, %v2778
        %v2787 = vadd.f32 %v2758, %v2779
        %v2788 = vadd.f32 %v2759, %v2780
        %v2789 = vadd.f32 %v2760, %v2781
        %v2790 = vadd.f32 %v2761, %v2782
        %v2791 = vld [vmem:[%s5 + $0x7] sm:$0x1]
        %v2792 = vld [vmem:[%s615 + $0x1] sm:$0xff]
        %v2793 = vld [vmem:[%s615 + $0x11] sm:$0xff]
        %v2794 = vld [vmem:[%s615 + $0x21] sm:$0xff]
        %v2795 = vld [vmem:[%s615 + $0x31] sm:$0xff]
        %v2796 = vld [vmem:[%s615 + $0x41] sm:$0xff]
        %v2797 = vld [vmem:[%s615 + $0x51] sm:$0xff]
        %v2798 = vld [vmem:[%s615 + $0x61] sm:$0xff]
        %v2799 = vld [vmem:[%s615 + $0x71] sm:$0xff]
        %v2800 = vlaneseq
        %v2801 = vshrl.u32 %v2800, 7
        %v2802 = vsub.s32 0, %v2801
        %v2803 = vrot.slane %v2791, %v2802
        %v2804 = vmul.f32 %v2803, %v2792
        %v2805 = vmul.f32 %v2803, %v2793
        %v2806 = vmul.f32 %v2803, %v2794
        %v2807 = vmul.f32 %v2803, %v2795
        %v2808 = vmul.f32 %v2803, %v2796
        %v2809 = vmul.f32 %v2803, %v2797
        %v2810 = vmul.f32 %v2803, %v2798
        %v2811 = vmul.f32 %v2803, %v2799
        %v2812 = vadd.f32 %v2783, %v2804
        %v2813 = vadd.f32 %v2784, %v2805
        %v2814 = vadd.f32 %v2785, %v2806
        %v2815 = vadd.f32 %v2786, %v2807
        %v2816 = vadd.f32 %v2787, %v2808
        %v2817 = vadd.f32 %v2788, %v2809
        %v2818 = vadd.f32 %v2789, %v2810
        %v2819 = vadd.f32 %v2790, %v2811
        %v2820 = vld [vmem:[%s5 + $0x8] sm:$0x1]
        %v2821 = vld [vmem:[%s606 + $0x2] sm:$0xff]
        %v2822 = vld [vmem:[%s606 + $0x12] sm:$0xff]
        %v2823 = vld [vmem:[%s606 + $0x22] sm:$0xff]
        %v2824 = vld [vmem:[%s606 + $0x32] sm:$0xff]
        %v2825 = vld [vmem:[%s606 + $0x42] sm:$0xff]
        %v2826 = vld [vmem:[%s606 + $0x52] sm:$0xff]
        %v2827 = vld [vmem:[%s606 + $0x62] sm:$0xff]
        %v2828 = vld [vmem:[%s606 + $0x72] sm:$0xff]
        %v2829 = vlaneseq
        %v2830 = vshrl.u32 %v2829, 7
        %v2831 = vsub.s32 0, %v2830
        %v2832 = vrot.slane %v2820, %v2831
        %v2833 = vmul.f32 %v2832, %v2821
        %v2834 = vmul.f32 %v2832, %v2822
        %v2835 = vmul.f32 %v2832, %v2823
        %v2836 = vmul.f32 %v2832, %v2824
        %v2837 = vmul.f32 %v2832, %v2825
        %v2838 = vmul.f32 %v2832, %v2826
        %v2839 = vmul.f32 %v2832, %v2827
        %v2840 = vmul.f32 %v2832, %v2828
        %v2841 = vadd.f32 %v2812, %v2833
        %v2842 = vadd.f32 %v2813, %v2834
        %v2843 = vadd.f32 %v2814, %v2835
        %v2844 = vadd.f32 %v2815, %v2836
        %v2845 = vadd.f32 %v2816, %v2837
        %v2846 = vadd.f32 %v2817, %v2838
        %v2847 = vadd.f32 %v2818, %v2839
        %v2848 = vadd.f32 %v2819, %v2840
        %v2849 = vadd.f32 %v2841, %v2548
        %v2850 = vadd.f32 %v2842, %v2548
        %v2851 = vadd.f32 %v2843, %v2548
        %v2852 = vadd.f32 %v2844, %v2548
        %v2853 = vadd.f32 %v2845, %v2548
        %v2854 = vadd.f32 %v2846, %v2548
        %v2855 = vadd.f32 %v2847, %v2548
        %v2856 = vadd.f32 %v2848, %v2548
        %v2857 = vmul.f32 %v2849, %v2562
        %v2858 = vmul.f32 %v2850, %v2562
        %v2859 = vmul.f32 %v2851, %v2562
        %v2860 = vmul.f32 %v2852, %v2562
        %v2861 = vmul.f32 %v2853, %v2562
        %v2862 = vmul.f32 %v2854, %v2562
        %v2863 = vmul.f32 %v2855, %v2562
        %v2864 = vmul.f32 %v2856, %v2562
        %v2865 = vadd.f32 %v2857, %v2143
        %v2866 = vadd.f32 %v2858, %v2144
        %v2867 = vadd.f32 %v2859, %v2145
        %v2868 = vadd.f32 %v2860, %v2146
        %v2869 = vadd.f32 %v2861, %v2147
        %v2870 = vadd.f32 %v2862, %v2148
        %v2871 = vadd.f32 %v2863, %v2149
        %v2872 = vadd.f32 %v2864, %v2150
        %s2873 = scalar_lea.vmem [#allocation3], 64
        %2874 = vst.msk [vmem:[%s2873] sm:$0xff] %vm360, %v2865
        %2875 = vst.msk [vmem:[%s2873 + $0x8] sm:$0xff] %vm360, %v2866
        %2876 = vst.msk [vmem:[%s2873 + $0x10] sm:$0xff] %vm360, %v2867
        %2877 = vst.msk [vmem:[%s2873 + $0x18] sm:$0xff] %vm360, %v2868
        %2878 = vst.msk [vmem:[%s2873 + $0x20] sm:$0xff] %vm360, %v2869
        %2879 = vst.msk [vmem:[%s2873 + $0x28] sm:$0xff] %vm360, %v2870
        %2880 = vst.msk [vmem:[%s2873 + $0x30] sm:$0xff] %vm360, %v2871
        %2881 = vst.msk [vmem:[%s2873 + $0x38] sm:$0xff] %vm360, %v2872
        %v2882 = vld [vmem:[%s5] sm:$0x1]
        %v2883 = vld [vmem:[%s597] sm:$0xff]
        %v2884 = vld [vmem:[%s597 + $0x10] sm:$0xff]
        %v2885 = vld [vmem:[%s597 + $0x20] sm:$0xff]
        %v2886 = vld [vmem:[%s597 + $0x30] sm:$0xff]
        %v2887 = vld [vmem:[%s597 + $0x40] sm:$0xff]
        %v2888 = vld [vmem:[%s597 + $0x50] sm:$0xff]
        %v2889 = vld [vmem:[%s597 + $0x60] sm:$0xff]
        %v2890 = vld [vmem:[%s597 + $0x70] sm:$0xff]
        %v2891 = vlaneseq
        %v2892 = vshrl.u32 %v2891, 7
        %v2893 = vsub.s32 0, %v2892
        %v2894 = vrot.slane %v2882, %v2893
        %v2895 = vmul.f32 %v2894, %v2883
        %v2896 = vmul.f32 %v2894, %v2884
        %v2897 = vmul.f32 %v2894, %v2885
        %v2898 = vmul.f32 %v2894, %v2886
        %v2899 = vmul.f32 %v2894, %v2887
        %v2900 = vmul.f32 %v2894, %v2888
        %v2901 = vmul.f32 %v2894, %v2889
        %v2902 = vmul.f32 %v2894, %v2890
        %v2903 = vadd.f32 %v2895, 0.0
        %v2904 = vadd.f32 %v2896, 0.0
        %v2905 = vadd.f32 %v2897, 0.0
        %v2906 = vadd.f32 %v2898, 0.0
        %v2907 = vadd.f32 %v2899, 0.0
        %v2908 = vadd.f32 %v2900, 0.0
        %v2909 = vadd.f32 %v2901, 0.0
        %v2910 = vadd.f32 %v2902, 0.0
        %v2911 = vld [vmem:[%s5 + $0x1] sm:$0x1]
        %v2912 = vld [vmem:[%s588 + $0x1] sm:$0xff]
        %v2913 = vld [vmem:[%s588 + $0x11] sm:$0xff]
        %v2914 = vld [vmem:[%s588 + $0x21] sm:$0xff]
        %v2915 = vld [vmem:[%s588 + $0x31] sm:$0xff]
        %v2916 = vld [vmem:[%s588 + $0x41] sm:$0xff]
        %v2917 = vld [vmem:[%s588 + $0x51] sm:$0xff]
        %v2918 = vld [vmem:[%s588 + $0x61] sm:$0xff]
        %v2919 = vld [vmem:[%s588 + $0x71] sm:$0xff]
        %v2920 = vlaneseq
        %v2921 = vshrl.u32 %v2920, 7
        %v2922 = vsub.s32 0, %v2921
        %v2923 = vrot.slane %v2911, %v2922
        %v2924 = vmul.f32 %v2923, %v2912
        %v2925 = vmul.f32 %v2923, %v2913
        %v2926 = vmul.f32 %v2923, %v2914
        %v2927 = vmul.f32 %v2923, %v2915
        %v2928 = vmul.f32 %v2923, %v2916
        %v2929 = vmul.f32 %v2923, %v2917
        %v2930 = vmul.f32 %v2923, %v2918
        %v2931 = vmul.f32 %v2923, %v2919
        %v2932 = vadd.f32 %v2903, %v2924
        %v2933 = vadd.f32 %v2904, %v2925
        %v2934 = vadd.f32 %v2905, %v2926
        %v2935 = vadd.f32 %v2906, %v2927
        %v2936 = vadd.f32 %v2907, %v2928
        %v2937 = vadd.f32 %v2908, %v2929
        %v2938 = vadd.f32 %v2909, %v2930
        %v2939 = vadd.f32 %v2910, %v2931
        %v2940 = vld [vmem:[%s5 + $0x2] sm:$0x1]
        %v2941 = vld [vmem:[%s597 + $0x1] sm:$0xff]
        %v2942 = vld [vmem:[%s597 + $0x11] sm:$0xff]
        %v2943 = vld [vmem:[%s597 + $0x21] sm:$0xff]
        %v2944 = vld [vmem:[%s597 + $0x31] sm:$0xff]
        %v2945 = vld [vmem:[%s597 + $0x41] sm:$0xff]
        %v2946 = vld [vmem:[%s597 + $0x51] sm:$0xff]
        %v2947 = vld [vmem:[%s597 + $0x61] sm:$0xff]
        %v2948 = vld [vmem:[%s597 + $0x71] sm:$0xff]
        %v2949 = vlaneseq
        %v2950 = vshrl.u32 %v2949, 7
        %v2951 = vsub.s32 0, %v2950
        %v2952 = vrot.slane %v2940, %v2951
        %v2953 = vmul.f32 %v2952, %v2941
        %v2954 = vmul.f32 %v2952, %v2942
        %v2955 = vmul.f32 %v2952, %v2943
        %v2956 = vmul.f32 %v2952, %v2944
        %v2957 = vmul.f32 %v2952, %v2945
        %v2958 = vmul.f32 %v2952, %v2946
        %v2959 = vmul.f32 %v2952, %v2947
        %v2960 = vmul.f32 %v2952, %v2948
        %v2961 = vadd.f32 %v2932, %v2953
        %v2962 = vadd.f32 %v2933, %v2954
        %v2963 = vadd.f32 %v2934, %v2955
        %v2964 = vadd.f32 %v2935, %v2956
        %v2965 = vadd.f32 %v2936, %v2957
        %v2966 = vadd.f32 %v2937, %v2958
        %v2967 = vadd.f32 %v2938, %v2959
        %v2968 = vadd.f32 %v2939, %v2960
        %v2969 = vld [vmem:[%s5 + $0x3] sm:$0x1]
        %v2970 = vld [vmem:[%s615] sm:$0xff]
        %v2971 = vld [vmem:[%s615 + $0x10] sm:$0xff]
        %v2972 = vld [vmem:[%s615 + $0x20] sm:$0xff]
        %v2973 = vld [vmem:[%s615 + $0x30] sm:$0xff]
        %v2974 = vld [vmem:[%s615 + $0x40] sm:$0xff]
        %v2975 = vld [vmem:[%s615 + $0x50] sm:$0xff]
        %v2976 = vld [vmem:[%s615 + $0x60] sm:$0xff]
        %v2977 = vld [vmem:[%s615 + $0x70] sm:$0xff]
        %v2978 = vlaneseq
        %v2979 = vshrl.u32 %v2978, 7
        %v2980 = vsub.s32 0, %v2979
        %v2981 = vrot.slane %v2969, %v2980
        %v2982 = vmul.f32 %v2981, %v2970
        %v2983 = vmul.f32 %v2981, %v2971
        %v2984 = vmul.f32 %v2981, %v2972
        %v2985 = vmul.f32 %v2981, %v2973
        %v2986 = vmul.f32 %v2981, %v2974
        %v2987 = vmul.f32 %v2981, %v2975
        %v2988 = vmul.f32 %v2981, %v2976
        %v2989 = vmul.f32 %v2981, %v2977
        %v2990 = vadd.f32 %v2961, %v2982
        %v2991 = vadd.f32 %v2962, %v2983
        %v2992 = vadd.f32 %v2963, %v2984
        %v2993 = vadd.f32 %v2964, %v2985
        %v2994 = vadd.f32 %v2965, %v2986
        %v2995 = vadd.f32 %v2966, %v2987
        %v2996 = vadd.f32 %v2967, %v2988
        %v2997 = vadd.f32 %v2968, %v2989
        %v2998 = vld [vmem:[%s5 + $0x4] sm:$0x1]
        %v2999 = vld [vmem:[%s606 + $0x1] sm:$0xff]
        %v3000 = vld [vmem:[%s606 + $0x11] sm:$0xff]
        %v3001 = vld [vmem:[%s606 + $0x21] sm:$0xff]
        %v3002 = vld [vmem:[%s606 + $0x31] sm:$0xff]
        %v3003 = vld [vmem:[%s606 + $0x41] sm:$0xff]
        %v3004 = vld [vmem:[%s606 + $0x51] sm:$0xff]
        %v3005 = vld [vmem:[%s606 + $0x61] sm:$0xff]
        %v3006 = vld [vmem:[%s606 + $0x71] sm:$0xff]
        %v3007 = vlaneseq
        %v3008 = vshrl.u32 %v3007, 7
        %v3009 = vsub.s32 0, %v3008
        %v3010 = vrot.slane %v2998, %v3009
        %v3011 = vmul.f32 %v3010, %v2999
        %v3012 = vmul.f32 %v3010, %v3000
        %v3013 = vmul.f32 %v3010, %v3001
        %v3014 = vmul.f32 %v3010, %v3002
        %v3015 = vmul.f32 %v3010, %v3003
        %v3016 = vmul.f32 %v3010, %v3004
        %v3017 = vmul.f32 %v3010, %v3005
        %v3018 = vmul.f32 %v3010, %v3006
        %v3019 = vadd.f32 %v2990, %v3011
        %v3020 = vadd.f32 %v2991, %v3012
        %v3021 = vadd.f32 %v2992, %v3013
        %v3022 = vadd.f32 %v2993, %v3014
        %v3023 = vadd.f32 %v2994, %v3015
        %v3024 = vadd.f32 %v2995, %v3016
        %v3025 = vadd.f32 %v2996, %v3017
        %v3026 = vadd.f32 %v2997, %v3018
        %v3027 = vld [vmem:[%s5 + $0x5] sm:$0x1]
        %v3028 = vld [vmem:[%s615 + $0x1] sm:$0xff]
        %v3029 = vld [vmem:[%s615 + $0x11] sm:$0xff]
        %v3030 = vld [vmem:[%s615 + $0x21] sm:$0xff]
        %v3031 = vld [vmem:[%s615 + $0x31] sm:$0xff]
        %v3032 = vld [vmem:[%s615 + $0x41] sm:$0xff]
        %v3033 = vld [vmem:[%s615 + $0x51] sm:$0xff]
        %v3034 = vld [vmem:[%s615 + $0x61] sm:$0xff]
        %v3035 = vld [vmem:[%s615 + $0x71] sm:$0xff]
        %v3036 = vlaneseq
        %v3037 = vshrl.u32 %v3036, 7
        %v3038 = vsub.s32 0, %v3037
        %v3039 = vrot.slane %v3027, %v3038
        %v3040 = vmul.f32 %v3039, %v3028
        %v3041 = vmul.f32 %v3039, %v3029
        %v3042 = vmul.f32 %v3039, %v3030
        %v3043 = vmul.f32 %v3039, %v3031
        %v3044 = vmul.f32 %v3039, %v3032
        %v3045 = vmul.f32 %v3039, %v3033
        %v3046 = vmul.f32 %v3039, %v3034
        %v3047 = vmul.f32 %v3039, %v3035
        %v3048 = vadd.f32 %v3019, %v3040
        %v3049 = vadd.f32 %v3020, %v3041
        %v3050 = vadd.f32 %v3021, %v3042
        %v3051 = vadd.f32 %v3022, %v3043
        %v3052 = vadd.f32 %v3023, %v3044
        %v3053 = vadd.f32 %v3024, %v3045
        %v3054 = vadd.f32 %v3025, %v3046
        %v3055 = vadd.f32 %v3026, %v3047
        %v3056 = vld [vmem:[%s5 + $0x6] sm:$0x1]
        %s3057 = scalar_lea.vmem [#allocation2], 192
        %v3058 = vld [vmem:[%s3057] sm:$0xff]
        %v3059 = vld [vmem:[%s3057 + $0x10] sm:$0xff]
        %v3060 = vld [vmem:[%s3057 + $0x20] sm:$0xff]
        %v3061 = vld [vmem:[%s3057 + $0x30] sm:$0xff]
        %v3062 = vld [vmem:[%s3057 + $0x40] sm:$0xff]
        %v3063 = vld [vmem:[%s3057 + $0x50] sm:$0xff]
        %v3064 = vld [vmem:[%s3057 + $0x60] sm:$0xff]
        %v3065 = vld [vmem:[%s3057 + $0x70] sm:$0xff]
        %v3066 = vlaneseq
        %v3067 = vshrl.u32 %v3066, 7
        %v3068 = vsub.s32 0, %v3067
        %v3069 = vrot.slane %v3056, %v3068
        %v3070 = vmul.f32 %v3069, %v3058
        %v3071 = vmul.f32 %v3069, %v3059
        %v3072 = vmul.f32 %v3069, %v3060
        %v3073 = vmul.f32 %v3069, %v3061
        %v3074 = vmul.f32 %v3069, %v3062
        %v3075 = vmul.f32 %v3069, %v3063
        %v3076 = vmul.f32 %v3069, %v3064
        %v3077 = vmul.f32 %v3069, %v3065
        %v3078 = vadd.f32 %v3048, %v3070
        %v3079 = vadd.f32 %v3049, %v3071
        %v3080 = vadd.f32 %v3050, %v3072
        %v3081 = vadd.f32 %v3051, %v3073
        %v3082 = vadd.f32 %v3052, %v3074
        %v3083 = vadd.f32 %v3053, %v3075
        %v3084 = vadd.f32 %v3054, %v3076
        %v3085 = vadd.f32 %v3055, %v3077
        %v3086 = vld [vmem:[%s5 + $0x7] sm:$0x1]
        %s3087 = scalar_lea.vmem [#allocation2], 32
        %v3088 = vld [vmem:[%s3087 + $0x1] sm:$0xff]
        %v3089 = vld [vmem:[%s3087 + $0x11] sm:$0xff]
        %v3090 = vld [vmem:[%s3087 + $0x21] sm:$0xff]
        %v3091 = vld [vmem:[%s3087 + $0x31] sm:$0xff]
        %v3092 = vld [vmem:[%s3087 + $0x41] sm:$0xff]
        %v3093 = vld [vmem:[%s3087 + $0x51] sm:$0xff]
        %v3094 = vld [vmem:[%s3087 + $0x61] sm:$0xff]
        %v3095 = vld [vmem:[%s3087 + $0x71] sm:$0xff]
        %v3096 = vlaneseq
        %v3097 = vshrl.u32 %v3096, 7
        %v3098 = vsub.s32 0, %v3097
        %v3099 = vrot.slane %v3086, %v3098
        %v3100 = vmul.f32 %v3099, %v3088
        %v3101 = vmul.f32 %v3099, %v3089
        %v3102 = vmul.f32 %v3099, %v3090
        %v3103 = vmul.f32 %v3099, %v3091
        %v3104 = vmul.f32 %v3099, %v3092
        %v3105 = vmul.f32 %v3099, %v3093
        %v3106 = vmul.f32 %v3099, %v3094
        %v3107 = vmul.f32 %v3099, %v3095
        %v3108 = vadd.f32 %v3078, %v3100
        %v3109 = vadd.f32 %v3079, %v3101
        %v3110 = vadd.f32 %v3080, %v3102
        %v3111 = vadd.f32 %v3081, %v3103
        %v3112 = vadd.f32 %v3082, %v3104
        %v3113 = vadd.f32 %v3083, %v3105
        %v3114 = vadd.f32 %v3084, %v3106
        %v3115 = vadd.f32 %v3085, %v3107
        %v3116 = vld [vmem:[%s5 + $0x8] sm:$0x1]
        %v3117 = vld [vmem:[%s3057 + $0x1] sm:$0xff]
        %v3118 = vld [vmem:[%s3057 + $0x11] sm:$0xff]
        %v3119 = vld [vmem:[%s3057 + $0x21] sm:$0xff]
        %v3120 = vld [vmem:[%s3057 + $0x31] sm:$0xff]
        %v3121 = vld [vmem:[%s3057 + $0x41] sm:$0xff]
        %v3122 = vld [vmem:[%s3057 + $0x51] sm:$0xff]
        %v3123 = vld [vmem:[%s3057 + $0x61] sm:$0xff]
        %v3124 = vld [vmem:[%s3057 + $0x71] sm:$0xff]
        %v3125 = vlaneseq
        %v3126 = vshrl.u32 %v3125, 7
        %v3127 = vsub.s32 0, %v3126
        %v3128 = vrot.slane %v3116, %v3127
        %v3129 = vmul.f32 %v3128, %v3117
        %v3130 = vmul.f32 %v3128, %v3118
        %v3131 = vmul.f32 %v3128, %v3119
        %v3132 = vmul.f32 %v3128, %v3120
        %v3133 = vmul.f32 %v3128, %v3121
        %v3134 = vmul.f32 %v3128, %v3122
        %v3135 = vmul.f32 %v3128, %v3123
        %v3136 = vmul.f32 %v3128, %v3124
        %v3137 = vadd.f32 %v3108, %v3129
        %v3138 = vadd.f32 %v3109, %v3130
        %v3139 = vadd.f32 %v3110, %v3131
        %v3140 = vadd.f32 %v3111, %v3132
        %v3141 = vadd.f32 %v3112, %v3133
        %v3142 = vadd.f32 %v3113, %v3134
        %v3143 = vadd.f32 %v3114, %v3135
        %v3144 = vadd.f32 %v3115, %v3136
        %v3145 = vadd.f32 %v3137, %v2548
        %v3146 = vadd.f32 %v3138, %v2548
        %v3147 = vadd.f32 %v3139, %v2548
        %v3148 = vadd.f32 %v3140, %v2548
        %v3149 = vadd.f32 %v3141, %v2548
        %v3150 = vadd.f32 %v3142, %v2548
        %v3151 = vadd.f32 %v3143, %v2548
        %v3152 = vadd.f32 %v3144, %v2548
        %v3153 = vmul.f32 %v3145, %v2562
        %v3154 = vmul.f32 %v3146, %v2562
        %v3155 = vmul.f32 %v3147, %v2562
        %v3156 = vmul.f32 %v3148, %v2562
        %v3157 = vmul.f32 %v3149, %v2562
        %v3158 = vmul.f32 %v3150, %v2562
        %v3159 = vmul.f32 %v3151, %v2562
        %v3160 = vmul.f32 %v3152, %v2562
        %v3161 = vadd.f32 %v3153, %v2207
        %v3162 = vadd.f32 %v3154, %v2208
        %v3163 = vadd.f32 %v3155, %v2209
        %v3164 = vadd.f32 %v3156, %v2210
        %v3165 = vadd.f32 %v3157, %v2211
        %v3166 = vadd.f32 %v3158, %v2212
        %v3167 = vadd.f32 %v3159, %v2213
        %v3168 = vadd.f32 %v3160, %v2214
        %s3169 = scalar_lea.vmem [#allocation3], 128
        %3170 = vst.msk [vmem:[%s3169] sm:$0xff] %vm360, %v3161
        %3171 = vst.msk [vmem:[%s3169 + $0x8] sm:$0xff] %vm360, %v3162
        %3172 = vst.msk [vmem:[%s3169 + $0x10] sm:$0xff] %vm360, %v3163
        %3173 = vst.msk [vmem:[%s3169 + $0x18] sm:$0xff] %vm360, %v3164
        %3174 = vst.msk [vmem:[%s3169 + $0x20] sm:$0xff] %vm360, %v3165
        %3175 = vst.msk [vmem:[%s3169 + $0x28] sm:$0xff] %vm360, %v3166
        %3176 = vst.msk [vmem:[%s3169 + $0x30] sm:$0xff] %vm360, %v3167
        %3177 = vst.msk [vmem:[%s3169 + $0x38] sm:$0xff] %vm360, %v3168
        %v3178 = vld [vmem:[%s5] sm:$0x1]
        %v3179 = vld [vmem:[%s588 + $0x1] sm:$0xff]
        %v3180 = vld [vmem:[%s588 + $0x11] sm:$0xff]
        %v3181 = vld [vmem:[%s588 + $0x21] sm:$0xff]
        %v3182 = vld [vmem:[%s588 + $0x31] sm:$0xff]
        %v3183 = vld [vmem:[%s588 + $0x41] sm:$0xff]
        %v3184 = vld [vmem:[%s588 + $0x51] sm:$0xff]
        %v3185 = vld [vmem:[%s588 + $0x61] sm:$0xff]
        %v3186 = vld [vmem:[%s588 + $0x71] sm:$0xff]
        %v3187 = vlaneseq
        %v3188 = vshrl.u32 %v3187, 7
        %v3189 = vsub.s32 0, %v3188
        %v3190 = vrot.slane %v3178, %v3189
        %v3191 = vmul.f32 %v3190, %v3179
        %v3192 = vmul.f32 %v3190, %v3180
        %v3193 = vmul.f32 %v3190, %v3181
        %v3194 = vmul.f32 %v3190, %v3182
        %v3195 = vmul.f32 %v3190, %v3183
        %v3196 = vmul.f32 %v3190, %v3184
        %v3197 = vmul.f32 %v3190, %v3185
        %v3198 = vmul.f32 %v3190, %v3186
        %v3199 = vadd.f32 %v3191, 0.0
        %v3200 = vadd.f32 %v3192, 0.0
        %v3201 = vadd.f32 %v3193, 0.0
        %v3202 = vadd.f32 %v3194, 0.0
        %v3203 = vadd.f32 %v3195, 0.0
        %v3204 = vadd.f32 %v3196, 0.0
        %v3205 = vadd.f32 %v3197, 0.0
        %v3206 = vadd.f32 %v3198, 0.0
        %v3207 = vld [vmem:[%s5 + $0x1] sm:$0x1]
        %v3208 = vld [vmem:[%s597 + $0x1] sm:$0xff]
        %v3209 = vld [vmem:[%s597 + $0x11] sm:$0xff]
        %v3210 = vld [vmem:[%s597 + $0x21] sm:$0xff]
        %v3211 = vld [vmem:[%s597 + $0x31] sm:$0xff]
        %v3212 = vld [vmem:[%s597 + $0x41] sm:$0xff]
        %v3213 = vld [vmem:[%s597 + $0x51] sm:$0xff]
        %v3214 = vld [vmem:[%s597 + $0x61] sm:$0xff]
        %v3215 = vld [vmem:[%s597 + $0x71] sm:$0xff]
        %v3216 = vlaneseq
        %v3217 = vshrl.u32 %v3216, 7
        %v3218 = vsub.s32 0, %v3217
        %v3219 = vrot.slane %v3207, %v3218
        %v3220 = vmul.f32 %v3219, %v3208
        %v3221 = vmul.f32 %v3219, %v3209
        %v3222 = vmul.f32 %v3219, %v3210
        %v3223 = vmul.f32 %v3219, %v3211
        %v3224 = vmul.f32 %v3219, %v3212
        %v3225 = vmul.f32 %v3219, %v3213
        %v3226 = vmul.f32 %v3219, %v3214
        %v3227 = vmul.f32 %v3219, %v3215
        %v3228 = vadd.f32 %v3199, %v3220
        %v3229 = vadd.f32 %v3200, %v3221
        %v3230 = vadd.f32 %v3201, %v3222
        %v3231 = vadd.f32 %v3202, %v3223
        %v3232 = vadd.f32 %v3203, %v3224
        %v3233 = vadd.f32 %v3204, %v3225
        %v3234 = vadd.f32 %v3205, %v3226
        %v3235 = vadd.f32 %v3206, %v3227
        %v3236 = vld [vmem:[%s5 + $0x2] sm:$0x1]
        %v3237 = vld [vmem:[%s588 + $0x2] sm:$0xff]
        %v3238 = vld [vmem:[%s588 + $0x12] sm:$0xff]
        %v3239 = vld [vmem:[%s588 + $0x22] sm:$0xff]
        %v3240 = vld [vmem:[%s588 + $0x32] sm:$0xff]
        %v3241 = vld [vmem:[%s588 + $0x42] sm:$0xff]
        %v3242 = vld [vmem:[%s588 + $0x52] sm:$0xff]
        %v3243 = vld [vmem:[%s588 + $0x62] sm:$0xff]
        %v3244 = vld [vmem:[%s588 + $0x72] sm:$0xff]
        %v3245 = vlaneseq
        %v3246 = vshrl.u32 %v3245, 7
        %v3247 = vsub.s32 0, %v3246
        %v3248 = vrot.slane %v3236, %v3247
        %v3249 = vmul.f32 %v3248, %v3237
        %v3250 = vmul.f32 %v3248, %v3238
        %v3251 = vmul.f32 %v3248, %v3239
        %v3252 = vmul.f32 %v3248, %v3240
        %v3253 = vmul.f32 %v3248, %v3241
        %v3254 = vmul.f32 %v3248, %v3242
        %v3255 = vmul.f32 %v3248, %v3243
        %v3256 = vmul.f32 %v3248, %v3244
        %v3257 = vadd.f32 %v3228, %v3249
        %v3258 = vadd.f32 %v3229, %v3250
        %v3259 = vadd.f32 %v3230, %v3251
        %v3260 = vadd.f32 %v3231, %v3252
        %v3261 = vadd.f32 %v3232, %v3253
        %v3262 = vadd.f32 %v3233, %v3254
        %v3263 = vadd.f32 %v3234, %v3255
        %v3264 = vadd.f32 %v3235, %v3256
        %v3265 = vld [vmem:[%s5 + $0x3] sm:$0x1]
        %v3266 = vld [vmem:[%s606 + $0x1] sm:$0xff]
        %v3267 = vld [vmem:[%s606 + $0x11] sm:$0xff]
        %v3268 = vld [vmem:[%s606 + $0x21] sm:$0xff]
        %v3269 = vld [vmem:[%s606 + $0x31] sm:$0xff]
        %v3270 = vld [vmem:[%s606 + $0x41] sm:$0xff]
        %v3271 = vld [vmem:[%s606 + $0x51] sm:$0xff]
        %v3272 = vld [vmem:[%s606 + $0x61] sm:$0xff]
        %v3273 = vld [vmem:[%s606 + $0x71] sm:$0xff]
        %v3274 = vlaneseq
        %v3275 = vshrl.u32 %v3274, 7
        %v3276 = vsub.s32 0, %v3275
        %v3277 = vrot.slane %v3265, %v3276
        %v3278 = vmul.f32 %v3277, %v3266
        %v3279 = vmul.f32 %v3277, %v3267
        %v3280 = vmul.f32 %v3277, %v3268
        %v3281 = vmul.f32 %v3277, %v3269
        %v3282 = vmul.f32 %v3277, %v3270
        %v3283 = vmul.f32 %v3277, %v3271
        %v3284 = vmul.f32 %v3277, %v3272
        %v3285 = vmul.f32 %v3277, %v3273
        %v3286 = vadd.f32 %v3257, %v3278
        %v3287 = vadd.f32 %v3258, %v3279
        %v3288 = vadd.f32 %v3259, %v3280
        %v3289 = vadd.f32 %v3260, %v3281
        %v3290 = vadd.f32 %v3261, %v3282
        %v3291 = vadd.f32 %v3262, %v3283
        %v3292 = vadd.f32 %v3263, %v3284
        %v3293 = vadd.f32 %v3264, %v3285
        %v3294 = vld [vmem:[%s5 + $0x4] sm:$0x1]
        %v3295 = vld [vmem:[%s615 + $0x1] sm:$0xff]
        %v3296 = vld [vmem:[%s615 + $0x11] sm:$0xff]
        %v3297 = vld [vmem:[%s615 + $0x21] sm:$0xff]
        %v3298 = vld [vmem:[%s615 + $0x31] sm:$0xff]
        %v3299 = vld [vmem:[%s615 + $0x41] sm:$0xff]
        %v3300 = vld [vmem:[%s615 + $0x51] sm:$0xff]
        %v3301 = vld [vmem:[%s615 + $0x61] sm:$0xff]
        %v3302 = vld [vmem:[%s615 + $0x71] sm:$0xff]
        %v3303 = vlaneseq
        %v3304 = vshrl.u32 %v3303, 7
        %v3305 = vsub.s32 0, %v3304
        %v3306 = vrot.slane %v3294, %v3305
        %v3307 = vmul.f32 %v3306, %v3295
        %v3308 = vmul.f32 %v3306, %v3296
        %v3309 = vmul.f32 %v3306, %v3297
        %v3310 = vmul.f32 %v3306, %v3298
        %v3311 = vmul.f32 %v3306, %v3299
        %v3312 = vmul.f32 %v3306, %v3300
        %v3313 = vmul.f32 %v3306, %v3301
        %v3314 = vmul.f32 %v3306, %v3302
        %v3315 = vadd.f32 %v3286, %v3307
        %v3316 = vadd.f32 %v3287, %v3308
        %v3317 = vadd.f32 %v3288, %v3309
        %v3318 = vadd.f32 %v3289, %v3310
        %v3319 = vadd.f32 %v3290, %v3311
        %v3320 = vadd.f32 %v3291, %v3312
        %v3321 = vadd.f32 %v3292, %v3313
        %v3322 = vadd.f32 %v3293, %v3314
        %v3323 = vld [vmem:[%s5 + $0x5] sm:$0x1]
        %v3324 = vld [vmem:[%s606 + $0x2] sm:$0xff]
        %v3325 = vld [vmem:[%s606 + $0x12] sm:$0xff]
        %v3326 = vld [vmem:[%s606 + $0x22] sm:$0xff]
        %v3327 = vld [vmem:[%s606 + $0x32] sm:$0xff]
        %v3328 = vld [vmem:[%s606 + $0x42] sm:$0xff]
        %v3329 = vld [vmem:[%s606 + $0x52] sm:$0xff]
        %v3330 = vld [vmem:[%s606 + $0x62] sm:$0xff]
        %v3331 = vld [vmem:[%s606 + $0x72] sm:$0xff]
        %v3332 = vlaneseq
        %v3333 = vshrl.u32 %v3332, 7
        %v3334 = vsub.s32 0, %v3333
        %v3335 = vrot.slane %v3323, %v3334
        %v3336 = vmul.f32 %v3335, %v3324
        %v3337 = vmul.f32 %v3335, %v3325
        %v3338 = vmul.f32 %v3335, %v3326
        %v3339 = vmul.f32 %v3335, %v3327
        %v3340 = vmul.f32 %v3335, %v3328
        %v3341 = vmul.f32 %v3335, %v3329
        %v3342 = vmul.f32 %v3335, %v3330
        %v3343 = vmul.f32 %v3335, %v3331
        %v3344 = vadd.f32 %v3315, %v3336
        %v3345 = vadd.f32 %v3316, %v3337
        %v3346 = vadd.f32 %v3317, %v3338
        %v3347 = vadd.f32 %v3318, %v3339
        %v3348 = vadd.f32 %v3319, %v3340
        %v3349 = vadd.f32 %v3320, %v3341
        %v3350 = vadd.f32 %v3321, %v3342
        %v3351 = vadd.f32 %v3322, %v3343
        %v3352 = vld [vmem:[%s5 + $0x6] sm:$0x1]
        %v3353 = vld [vmem:[%s3087 + $0x1] sm:$0xff]
        %v3354 = vld [vmem:[%s3087 + $0x11] sm:$0xff]
        %v3355 = vld [vmem:[%s3087 + $0x21] sm:$0xff]
        %v3356 = vld [vmem:[%s3087 + $0x31] sm:$0xff]
        %v3357 = vld [vmem:[%s3087 + $0x41] sm:$0xff]
        %v3358 = vld [vmem:[%s3087 + $0x51] sm:$0xff]
        %v3359 = vld [vmem:[%s3087 + $0x61] sm:$0xff]
        %v3360 = vld [vmem:[%s3087 + $0x71] sm:$0xff]
        %v3361 = vlaneseq
        %v3362 = vshrl.u32 %v3361, 7
        %v3363 = vsub.s32 0, %v3362
        %v3364 = vrot.slane %v3352, %v3363
        %v3365 = vmul.f32 %v3364, %v3353
        %v3366 = vmul.f32 %v3364, %v3354
        %v3367 = vmul.f32 %v3364, %v3355
        %v3368 = vmul.f32 %v3364, %v3356
        %v3369 = vmul.f32 %v3364, %v3357
        %v3370 = vmul.f32 %v3364, %v3358
        %v3371 = vmul.f32 %v3364, %v3359
        %v3372 = vmul.f32 %v3364, %v3360
        %v3373 = vadd.f32 %v3344, %v3365
        %v3374 = vadd.f32 %v3345, %v3366
        %v3375 = vadd.f32 %v3346, %v3367
        %v3376 = vadd.f32 %v3347, %v3368
        %v3377 = vadd.f32 %v3348, %v3369
        %v3378 = vadd.f32 %v3349, %v3370
        %v3379 = vadd.f32 %v3350, %v3371
        %v3380 = vadd.f32 %v3351, %v3372
        %v3381 = vld [vmem:[%s5 + $0x7] sm:$0x1]
        %v3382 = vld [vmem:[%s3057 + $0x1] sm:$0xff]
        %v3383 = vld [vmem:[%s3057 + $0x11] sm:$0xff]
        %v3384 = vld [vmem:[%s3057 + $0x21] sm:$0xff]
        %v3385 = vld [vmem:[%s3057 + $0x31] sm:$0xff]
        %v3386 = vld [vmem:[%s3057 + $0x41] sm:$0xff]
        %v3387 = vld [vmem:[%s3057 + $0x51] sm:$0xff]
        %v3388 = vld [vmem:[%s3057 + $0x61] sm:$0xff]
        %v3389 = vld [vmem:[%s3057 + $0x71] sm:$0xff]
        %v3390 = vlaneseq
        %v3391 = vshrl.u32 %v3390, 7
        %v3392 = vsub.s32 0, %v3391
        %v3393 = vrot.slane %v3381, %v3392
        %v3394 = vmul.f32 %v3393, %v3382
        %v3395 = vmul.f32 %v3393, %v3383
        %v3396 = vmul.f32 %v3393, %v3384
        %v3397 = vmul.f32 %v3393, %v3385
        %v3398 = vmul.f32 %v3393, %v3386
        %v3399 = vmul.f32 %v3393, %v3387
        %v3400 = vmul.f32 %v3393, %v3388
        %v3401 = vmul.f32 %v3393, %v3389
        %v3402 = vadd.f32 %v3373, %v3394
        %v3403 = vadd.f32 %v3374, %v3395
        %v3404 = vadd.f32 %v3375, %v3396
        %v3405 = vadd.f32 %v3376, %v3397
        %v3406 = vadd.f32 %v3377, %v3398
        %v3407 = vadd.f32 %v3378, %v3399
        %v3408 = vadd.f32 %v3379, %v3400
        %v3409 = vadd.f32 %v3380, %v3401
        %v3410 = vld [vmem:[%s5 + $0x8] sm:$0x1]
        %v3411 = vld [vmem:[%s3087 + $0x2] sm:$0xff]
        %v3412 = vld [vmem:[%s3087 + $0x12] sm:$0xff]
        %v3413 = vld [vmem:[%s3087 + $0x22] sm:$0xff]
        %v3414 = vld [vmem:[%s3087 + $0x32] sm:$0xff]
        %v3415 = vld [vmem:[%s3087 + $0x42] sm:$0xff]
        %v3416 = vld [vmem:[%s3087 + $0x52] sm:$0xff]
        %v3417 = vld [vmem:[%s3087 + $0x62] sm:$0xff]
        %v3418 = vld [vmem:[%s3087 + $0x72] sm:$0xff]
        %v3419 = vlaneseq
        %v3420 = vshrl.u32 %v3419, 7
        %v3421 = vsub.s32 0, %v3420
        %v3422 = vrot.slane %v3410, %v3421
        %v3423 = vmul.f32 %v3422, %v3411
        %v3424 = vmul.f32 %v3422, %v3412
        %v3425 = vmul.f32 %v3422, %v3413
        %v3426 = vmul.f32 %v3422, %v3414
        %v3427 = vmul.f32 %v3422, %v3415
        %v3428 = vmul.f32 %v3422, %v3416
        %v3429 = vmul.f32 %v3422, %v3417
        %v3430 = vmul.f32 %v3422, %v3418
        %v3431 = vadd.f32 %v3402, %v3423
        %v3432 = vadd.f32 %v3403, %v3424
        %v3433 = vadd.f32 %v3404, %v3425
        %v3434 = vadd.f32 %v3405, %v3426
        %v3435 = vadd.f32 %v3406, %v3427
        %v3436 = vadd.f32 %v3407, %v3428
        %v3437 = vadd.f32 %v3408, %v3429
        %v3438 = vadd.f32 %v3409, %v3430
        %v3439 = vadd.f32 %v3431, %v2548
        %v3440 = vadd.f32 %v3432, %v2548
        %v3441 = vadd.f32 %v3433, %v2548
        %v3442 = vadd.f32 %v3434, %v2548
        %v3443 = vadd.f32 %v3435, %v2548
        %v3444 = vadd.f32 %v3436, %v2548
        %v3445 = vadd.f32 %v3437, %v2548
        %v3446 = vadd.f32 %v3438, %v2548
        %v3447 = vmul.f32 %v3439, %v2562
        %v3448 = vmul.f32 %v3440, %v2562
        %v3449 = vmul.f32 %v3441, %v2562
        %v3450 = vmul.f32 %v3442, %v2562
        %v3451 = vmul.f32 %v3443, %v2562
        %v3452 = vmul.f32 %v3444, %v2562
        %v3453 = vmul.f32 %v3445, %v2562
        %v3454 = vmul.f32 %v3446, %v2562
        %v3455 = vadd.f32 %v3447, %v2271
        %v3456 = vadd.f32 %v3448, %v2272
        %v3457 = vadd.f32 %v3449, %v2273
        %v3458 = vadd.f32 %v3450, %v2274
        %v3459 = vadd.f32 %v3451, %v2275
        %v3460 = vadd.f32 %v3452, %v2276
        %v3461 = vadd.f32 %v3453, %v2277
        %v3462 = vadd.f32 %v3454, %v2278
        %s3463 = scalar_lea.vmem [#allocation3], 192
        %3464 = vst.msk [vmem:[%s3463] sm:$0xff] %vm360, %v3455
        %3465 = vst.msk [vmem:[%s3463 + $0x8] sm:$0xff] %vm360, %v3456
        %3466 = vst.msk [vmem:[%s3463 + $0x10] sm:$0xff] %vm360, %v3457
        %3467 = vst.msk [vmem:[%s3463 + $0x18] sm:$0xff] %vm360, %v3458
        %3468 = vst.msk [vmem:[%s3463 + $0x20] sm:$0xff] %vm360, %v3459
        %3469 = vst.msk [vmem:[%s3463 + $0x28] sm:$0xff] %vm360, %v3460
        %3470 = vst.msk [vmem:[%s3463 + $0x30] sm:$0xff] %vm360, %v3461
        %3471 = vst.msk [vmem:[%s3463 + $0x38] sm:$0xff] %vm360, %v3462
        %v3472 = vld [vmem:[#allocation3] sm:$0xff]
        %v3473 = vld [vmem:[#allocation3 + $0x8] sm:$0xff]
        %v3474 = vld [vmem:[#allocation3 + $0x10] sm:$0xff]
        %v3475 = vld [vmem:[#allocation3 + $0x18] sm:$0xff]
        %v3476 = vld [vmem:[#allocation3 + $0x20] sm:$0xff]
        %v3477 = vld [vmem:[#allocation3 + $0x28] sm:$0xff]
        %v3478 = vld [vmem:[#allocation3 + $0x30] sm:$0xff]
        %v3479 = vld [vmem:[#allocation3 + $0x38] sm:$0xff]
        %v3480 = vld [vmem:[#allocation3 + $0x40] sm:$0xff]
        %v3481 = vld [vmem:[#allocation3 + $0x48] sm:$0xff]
        %v3482 = vld [vmem:[#allocation3 + $0x50] sm:$0xff]
        %v3483 = vld [vmem:[#allocation3 + $0x58] sm:$0xff]
        %v3484 = vld [vmem:[#allocation3 + $0x60] sm:$0xff]
        %v3485 = vld [vmem:[#allocation3 + $0x68] sm:$0xff]
        %v3486 = vld [vmem:[#allocation3 + $0x70] sm:$0xff]
        %v3487 = vld [vmem:[#allocation3 + $0x78] sm:$0xff]
        %v3488 = vld [vmem:[#allocation3 + $0x80] sm:$0xff]
        %v3489 = vld [vmem:[#allocation3 + $0x88] sm:$0xff]
        %v3490 = vld [vmem:[#allocation3 + $0x90] sm:$0xff]
        %v3491 = vld [vmem:[#allocation3 + $0x98] sm:$0xff]
        %v3492 = vld [vmem:[#allocation3 + $0xa0] sm:$0xff]
        %v3493 = vld [vmem:[#allocation3 + $0xa8] sm:$0xff]
        %v3494 = vld [vmem:[#allocation3 + $0xb0] sm:$0xff]
        %v3495 = vld [vmem:[#allocation3 + $0xb8] sm:$0xff]
        %v3496 = vld [vmem:[#allocation3 + $0xc0] sm:$0xff]
        %v3497 = vld [vmem:[#allocation3 + $0xc8] sm:$0xff]
        %v3498 = vld [vmem:[#allocation3 + $0xd0] sm:$0xff]
        %v3499 = vld [vmem:[#allocation3 + $0xd8] sm:$0xff]
        %v3500 = vld [vmem:[#allocation3 + $0xe0] sm:$0xff]
        %v3501 = vld [vmem:[#allocation3 + $0xe8] sm:$0xff]
        %v3502 = vld [vmem:[#allocation3 + $0xf0] sm:$0xff]
        %v3503 = vld [vmem:[#allocation3 + $0xf8] sm:$0xff]
        %v3504 = vld [vmem:[%s8] sm:$0x1]
        %3506 = vset.pattern.permute.xlu0 0
        %3507 = vperm.xlu0 %3506, %v3472
        %v3508 = vpop.permute.xlu0 %3507
        %3511 = vset.pattern.permute.xlu0 0
        %3512 = vperm.xlu0 %3511, %v3473
        %v3513 = vpop.permute.xlu0 %3512
        %3516 = vset.pattern.permute.xlu0 0
        %3517 = vperm.xlu0 %3516, %v3474
        %v3518 = vpop.permute.xlu0 %3517
        %3521 = vset.pattern.permute.xlu0 0
        %3522 = vperm.xlu0 %3521, %v3475
        %v3523 = vpop.permute.xlu0 %3522
        %3526 = vset.pattern.permute.xlu0 0
        %3527 = vperm.xlu0 %3526, %v3476
        %v3528 = vpop.permute.xlu0 %3527
        %3531 = vset.pattern.permute.xlu0 0
        %3532 = vperm.xlu0 %3531, %v3477
        %v3533 = vpop.permute.xlu0 %3532
        %3536 = vset.pattern.permute.xlu0 0
        %3537 = vperm.xlu0 %3536, %v3478
        %v3538 = vpop.permute.xlu0 %3537
        %3541 = vset.pattern.permute.xlu0 0
        %3542 = vperm.xlu0 %3541, %v3479
        %v3543 = vpop.permute.xlu0 %3542
        %3546 = vset.pattern.permute.xlu0 0
        %3547 = vperm.xlu0 %3546, %v3480
        %v3548 = vpop.permute.xlu0 %3547
        %3551 = vset.pattern.permute.xlu0 0
        %3552 = vperm.xlu0 %3551, %v3481
        %v3553 = vpop.permute.xlu0 %3552
        %3556 = vset.pattern.permute.xlu0 0
        %3557 = vperm.xlu0 %3556, %v3482
        %v3558 = vpop.permute.xlu0 %3557
        %3561 = vset.pattern.permute.xlu0 0
        %3562 = vperm.xlu0 %3561, %v3483
        %v3563 = vpop.permute.xlu0 %3562
        %3566 = vset.pattern.permute.xlu0 0
        %3567 = vperm.xlu0 %3566, %v3484
        %v3568 = vpop.permute.xlu0 %3567
        %3571 = vset.pattern.permute.xlu0 0
        %3572 = vperm.xlu0 %3571, %v3485
        %v3573 = vpop.permute.xlu0 %3572
        %3576 = vset.pattern.permute.xlu0 0
        %3577 = vperm.xlu0 %3576, %v3486
        %v3578 = vpop.permute.xlu0 %3577
        %3581 = vset.pattern.permute.xlu0 0
        %3582 = vperm.xlu0 %3581, %v3487
        %v3583 = vpop.permute.xlu0 %3582
        %3586 = vset.pattern.permute.xlu0 0
        %3587 = vperm.xlu0 %3586, %v3488
        %v3588 = vpop.permute.xlu0 %3587
        %3591 = vset.pattern.permute.xlu0 0
        %3592 = vperm.xlu0 %3591, %v3489
        %v3593 = vpop.permute.xlu0 %3592
        %3596 = vset.pattern.permute.xlu0 0
        %3597 = vperm.xlu0 %3596, %v3490
        %v3598 = vpop.permute.xlu0 %3597
        %3601 = vset.pattern.permute.xlu0 0
        %3602 = vperm.xlu0 %3601, %v3491
        %v3603 = vpop.permute.xlu0 %3602
        %3606 = vset.pattern.permute.xlu0 0
        %3607 = vperm.xlu0 %3606, %v3492
        %v3608 = vpop.permute.xlu0 %3607
        %3611 = vset.pattern.permute.xlu0 0
        %3612 = vperm.xlu0 %3611, %v3493
        %v3613 = vpop.permute.xlu0 %3612
        %3616 = vset.pattern.permute.xlu0 0
        %3617 = vperm.xlu0 %3616, %v3494
        %v3618 = vpop.permute.xlu0 %3617
        %3621 = vset.pattern.permute.xlu0 0
        %3622 = vperm.xlu0 %3621, %v3495
        %v3623 = vpop.permute.xlu0 %3622
        %3626 = vset.pattern.permute.xlu0 0
        %3627 = vperm.xlu0 %3626, %v3496
        %v3628 = vpop.permute.xlu0 %3627
        %3631 = vset.pattern.permute.xlu0 0
        %3632 = vperm.xlu0 %3631, %v3497
        %v3633 = vpop.permute.xlu0 %3632
        %3636 = vset.pattern.permute.xlu0 0
        %3637 = vperm.xlu0 %3636, %v3498
        %v3638 = vpop.permute.xlu0 %3637
        %3641 = vset.pattern.permute.xlu0 0
        %3642 = vperm.xlu0 %3641, %v3499
        %v3643 = vpop.permute.xlu0 %3642
        %3646 = vset.pattern.permute.xlu0 0
        %3647 = vperm.xlu0 %3646, %v3500
        %v3648 = vpop.permute.xlu0 %3647
        %3651 = vset.pattern.permute.xlu0 0
        %3652 = vperm.xlu0 %3651, %v3501
        %v3653 = vpop.permute.xlu0 %3652
        %3656 = vset.pattern.permute.xlu0 0
        %3657 = vperm.xlu0 %3656, %v3502
        %v3658 = vpop.permute.xlu0 %3657
        %3661 = vset.pattern.permute.xlu0 0
        %3662 = vperm.xlu0 %3661, %v3503
        %v3663 = vpop.permute.xlu0 %3662
        %v3665 = vlaneseq
        %v3666 = vshrl.u32 %v3665, 7
        %v3667 = vsub.s32 0, %v3666
        %v3668 = vrot.slane %v3504, %v3667
        %v3669 = vmul.f32 %v3508, %v3668
        %v3670 = vmul.f32 %v3513, %v3668
        %v3671 = vmul.f32 %v3518, %v3668
        %v3672 = vmul.f32 %v3523, %v3668
        %v3673 = vmul.f32 %v3528, %v3668
        %v3674 = vmul.f32 %v3533, %v3668
        %v3675 = vmul.f32 %v3538, %v3668
        %v3676 = vmul.f32 %v3543, %v3668
        %v3677 = vmul.f32 %v3548, %v3668
        %v3678 = vmul.f32 %v3553, %v3668
        %v3679 = vmul.f32 %v3558, %v3668
        %v3680 = vmul.f32 %v3563, %v3668
        %v3681 = vmul.f32 %v3568, %v3668
        %v3682 = vmul.f32 %v3573, %v3668
        %v3683 = vmul.f32 %v3578, %v3668
        %v3684 = vmul.f32 %v3583, %v3668
        %v3685 = vmul.f32 %v3588, %v3668
        %v3686 = vmul.f32 %v3593, %v3668
        %v3687 = vmul.f32 %v3598, %v3668
        %v3688 = vmul.f32 %v3603, %v3668
        %v3689 = vmul.f32 %v3608, %v3668
        %v3690 = vmul.f32 %v3613, %v3668
        %v3691 = vmul.f32 %v3618, %v3668
        %v3692 = vmul.f32 %v3623, %v3668
        %v3693 = vmul.f32 %v3628, %v3668
        %v3694 = vmul.f32 %v3633, %v3668
        %v3695 = vmul.f32 %v3638, %v3668
        %v3696 = vmul.f32 %v3643, %v3668
        %v3697 = vmul.f32 %v3648, %v3668
        %v3698 = vmul.f32 %v3653, %v3668
        %v3699 = vmul.f32 %v3658, %v3668
        %v3700 = vmul.f32 %v3663, %v3668
        %v3701 = vadd.f32 %v3669, 0.0
        %v3702 = vadd.f32 %v3670, 0.0
        %v3703 = vadd.f32 %v3671, 0.0
        %v3704 = vadd.f32 %v3672, 0.0
        %v3705 = vadd.f32 %v3673, 0.0
        %v3706 = vadd.f32 %v3674, 0.0
        %v3707 = vadd.f32 %v3675, 0.0
        %v3708 = vadd.f32 %v3676, 0.0
        %v3709 = vadd.f32 %v3677, 0.0
        %v3710 = vadd.f32 %v3678, 0.0
        %v3711 = vadd.f32 %v3679, 0.0
        %v3712 = vadd.f32 %v3680, 0.0
        %v3713 = vadd.f32 %v3681, 0.0
        %v3714 = vadd.f32 %v3682, 0.0
        %v3715 = vadd.f32 %v3683, 0.0
        %v3716 = vadd.f32 %v3684, 0.0
        %v3717 = vadd.f32 %v3685, 0.0
        %v3718 = vadd.f32 %v3686, 0.0
        %v3719 = vadd.f32 %v3687, 0.0
        %v3720 = vadd.f32 %v3688, 0.0
        %v3721 = vadd.f32 %v3689, 0.0
        %v3722 = vadd.f32 %v3690, 0.0
        %v3723 = vadd.f32 %v3691, 0.0
        %v3724 = vadd.f32 %v3692, 0.0
        %v3725 = vadd.f32 %v3693, 0.0
        %v3726 = vadd.f32 %v3694, 0.0
        %v3727 = vadd.f32 %v3695, 0.0
        %v3728 = vadd.f32 %v3696, 0.0
        %v3729 = vadd.f32 %v3697, 0.0
        %v3730 = vadd.f32 %v3698, 0.0
        %v3731 = vadd.f32 %v3699, 0.0
        %v3732 = vadd.f32 %v3700, 0.0
        %v3733 = vld [vmem:[%s8 + $0x1] sm:$0x1]
        %3734 = vset.pattern.permute.xlu0 1
        %3735 = vperm.xlu0 %3734, %v3472
        %v3736 = vpop.permute.xlu0 %3735
        %3738 = vset.pattern.permute.xlu0 1
        %3739 = vperm.xlu0 %3738, %v3473
        %v3740 = vpop.permute.xlu0 %3739
        %3742 = vset.pattern.permute.xlu0 1
        %3743 = vperm.xlu0 %3742, %v3474
        %v3744 = vpop.permute.xlu0 %3743
        %3746 = vset.pattern.permute.xlu0 1
        %3747 = vperm.xlu0 %3746, %v3475
        %v3748 = vpop.permute.xlu0 %3747
        %3750 = vset.pattern.permute.xlu0 1
        %3751 = vperm.xlu0 %3750, %v3476
        %v3752 = vpop.permute.xlu0 %3751
        %3754 = vset.pattern.permute.xlu0 1
        %3755 = vperm.xlu0 %3754, %v3477
        %v3756 = vpop.permute.xlu0 %3755
        %3758 = vset.pattern.permute.xlu0 1
        %3759 = vperm.xlu0 %3758, %v3478
        %v3760 = vpop.permute.xlu0 %3759
        %3762 = vset.pattern.permute.xlu0 1
        %3763 = vperm.xlu0 %3762, %v3479
        %v3764 = vpop.permute.xlu0 %3763
        %3766 = vset.pattern.permute.xlu0 1
        %3767 = vperm.xlu0 %3766, %v3480
        %v3768 = vpop.permute.xlu0 %3767
        %3770 = vset.pattern.permute.xlu0 1
        %3771 = vperm.xlu0 %3770, %v3481
        %v3772 = vpop.permute.xlu0 %3771
        %3774 = vset.pattern.permute.xlu0 1
        %3775 = vperm.xlu0 %3774, %v3482
        %v3776 = vpop.permute.xlu0 %3775
        %3778 = vset.pattern.permute.xlu0 1
        %3779 = vperm.xlu0 %3778, %v3483
        %v3780 = vpop.permute.xlu0 %3779
        %3782 = vset.pattern.permute.xlu0 1
        %3783 = vperm.xlu0 %3782, %v3484
        %v3784 = vpop.permute.xlu0 %3783
        %3786 = vset.pattern.permute.xlu0 1
        %3787 = vperm.xlu0 %3786, %v3485
        %v3788 = vpop.permute.xlu0 %3787
        %3790 = vset.pattern.permute.xlu0 1
        %3791 = vperm.xlu0 %3790, %v3486
        %v3792 = vpop.permute.xlu0 %3791
        %3794 = vset.pattern.permute.xlu0 1
        %3795 = vperm.xlu0 %3794, %v3487
        %v3796 = vpop.permute.xlu0 %3795
        %3798 = vset.pattern.permute.xlu0 1
        %3799 = vperm.xlu0 %3798, %v3488
        %v3800 = vpop.permute.xlu0 %3799
        %3802 = vset.pattern.permute.xlu0 1
        %3803 = vperm.xlu0 %3802, %v3489
        %v3804 = vpop.permute.xlu0 %3803
        %3806 = vset.pattern.permute.xlu0 1
        %3807 = vperm.xlu0 %3806, %v3490
        %v3808 = vpop.permute.xlu0 %3807
        %3810 = vset.pattern.permute.xlu0 1
        %3811 = vperm.xlu0 %3810, %v3491
        %v3812 = vpop.permute.xlu0 %3811
        %3814 = vset.pattern.permute.xlu0 1
        %3815 = vperm.xlu0 %3814, %v3492
        %v3816 = vpop.permute.xlu0 %3815
        %3818 = vset.pattern.permute.xlu0 1
        %3819 = vperm.xlu0 %3818, %v3493
        %v3820 = vpop.permute.xlu0 %3819
        %3822 = vset.pattern.permute.xlu0 1
        %3823 = vperm.xlu0 %3822, %v3494
        %v3824 = vpop.permute.xlu0 %3823
        %3826 = vset.pattern.permute.xlu0 1
        %3827 = vperm.xlu0 %3826, %v3495
        %v3828 = vpop.permute.xlu0 %3827
        %3830 = vset.pattern.permute.xlu0 1
        %3831 = vperm.xlu0 %3830, %v3496
        %v3832 = vpop.permute.xlu0 %3831
        %3834 = vset.pattern.permute.xlu0 1
        %3835 = vperm.xlu0 %3834, %v3497
        %v3836 = vpop.permute.xlu0 %3835
        %3838 = vset.pattern.permute.xlu0 1
        %3839 = vperm.xlu0 %3838, %v3498
        %v3840 = vpop.permute.xlu0 %3839
        %3842 = vset.pattern.permute.xlu0 1
        %3843 = vperm.xlu0 %3842, %v3499
        %v3844 = vpop.permute.xlu0 %3843
        %3846 = vset.pattern.permute.xlu0 1
        %3847 = vperm.xlu0 %3846, %v3500
        %v3848 = vpop.permute.xlu0 %3847
        %3850 = vset.pattern.permute.xlu0 1
        %3851 = vperm.xlu0 %3850, %v3501
        %v3852 = vpop.permute.xlu0 %3851
        %3854 = vset.pattern.permute.xlu0 1
        %3855 = vperm.xlu0 %3854, %v3502
        %v3856 = vpop.permute.xlu0 %3855
        %3858 = vset.pattern.permute.xlu0 1
        %3859 = vperm.xlu0 %3858, %v3503
        %v3860 = vpop.permute.xlu0 %3859
        %v3862 = vlaneseq
        %v3863 = vshrl.u32 %v3862, 7
        %v3864 = vsub.s32 0, %v3863
        %v3865 = vrot.slane %v3733, %v3864
        %v3866 = vmul.f32 %v3736, %v3865
        %v3867 = vmul.f32 %v3740, %v3865
        %v3868 = vmul.f32 %v3744, %v3865
        %v3869 = vmul.f32 %v3748, %v3865
        %v3870 = vmul.f32 %v3752, %v3865
        %v3871 = vmul.f32 %v3756, %v3865
        %v3872 = vmul.f32 %v3760, %v3865
        %v3873 = vmul.f32 %v3764, %v3865
        %v3874 = vmul.f32 %v3768, %v3865
        %v3875 = vmul.f32 %v3772, %v3865
        %v3876 = vmul.f32 %v3776, %v3865
        %v3877 = vmul.f32 %v3780, %v3865
        %v3878 = vmul.f32 %v3784, %v3865
        %v3879 = vmul.f32 %v3788, %v3865
        %v3880 = vmul.f32 %v3792, %v3865
        %v3881 = vmul.f32 %v3796, %v3865
        %v3882 = vmul.f32 %v3800, %v3865
        %v3883 = vmul.f32 %v3804, %v3865
        %v3884 = vmul.f32 %v3808, %v3865
        %v3885 = vmul.f32 %v3812, %v3865
        %v3886 = vmul.f32 %v3816, %v3865
        %v3887 = vmul.f32 %v3820, %v3865
        %v3888 = vmul.f32 %v3824, %v3865
        %v3889 = vmul.f32 %v3828, %v3865
        %v3890 = vmul.f32 %v3832, %v3865
        %v3891 = vmul.f32 %v3836, %v3865
        %v3892 = vmul.f32 %v3840, %v3865
        %v3893 = vmul.f32 %v3844, %v3865
        %v3894 = vmul.f32 %v3848, %v3865
        %v3895 = vmul.f32 %v3852, %v3865
        %v3896 = vmul.f32 %v3856, %v3865
        %v3897 = vmul.f32 %v3860, %v3865
        %v3898 = vadd.f32 %v3701, %v3866
        %v3899 = vadd.f32 %v3702, %v3867
        %v3900 = vadd.f32 %v3703, %v3868
        %v3901 = vadd.f32 %v3704, %v3869
        %v3902 = vadd.f32 %v3705, %v3870
        %v3903 = vadd.f32 %v3706, %v3871
        %v3904 = vadd.f32 %v3707, %v3872
        %v3905 = vadd.f32 %v3708, %v3873
        %v3906 = vadd.f32 %v3709, %v3874
        %v3907 = vadd.f32 %v3710, %v3875
        %v3908 = vadd.f32 %v3711, %v3876
        %v3909 = vadd.f32 %v3712, %v3877
        %v3910 = vadd.f32 %v3713, %v3878
        %v3911 = vadd.f32 %v3714, %v3879
        %v3912 = vadd.f32 %v3715, %v3880
        %v3913 = vadd.f32 %v3716, %v3881
        %v3914 = vadd.f32 %v3717, %v3882
        %v3915 = vadd.f32 %v3718, %v3883
        %v3916 = vadd.f32 %v3719, %v3884
        %v3917 = vadd.f32 %v3720, %v3885
        %v3918 = vadd.f32 %v3721, %v3886
        %v3919 = vadd.f32 %v3722, %v3887
        %v3920 = vadd.f32 %v3723, %v3888
        %v3921 = vadd.f32 %v3724, %v3889
        %v3922 = vadd.f32 %v3725, %v3890
        %v3923 = vadd.f32 %v3726, %v3891
        %v3924 = vadd.f32 %v3727, %v3892
        %v3925 = vadd.f32 %v3728, %v3893
        %v3926 = vadd.f32 %v3729, %v3894
        %v3927 = vadd.f32 %v3730, %v3895
        %v3928 = vadd.f32 %v3731, %v3896
        %v3929 = vadd.f32 %v3732, %v3897
        %v3930 = vld [vmem:[%s8 + $0x2] sm:$0x1]
        %3931 = vset.pattern.permute.xlu0 2
        %3932 = vperm.xlu0 %3931, %v3472
        %v3933 = vpop.permute.xlu0 %3932
        %3935 = vset.pattern.permute.xlu0 2
        %3936 = vperm.xlu0 %3935, %v3473
        %v3937 = vpop.permute.xlu0 %3936
        %3939 = vset.pattern.permute.xlu0 2
        %3940 = vperm.xlu0 %3939, %v3474
        %v3941 = vpop.permute.xlu0 %3940
        %3943 = vset.pattern.permute.xlu0 2
        %3944 = vperm.xlu0 %3943, %v3475
        %v3945 = vpop.permute.xlu0 %3944
        %3947 = vset.pattern.permute.xlu0 2
        %3948 = vperm.xlu0 %3947, %v3476
        %v3949 = vpop.permute.xlu0 %3948
        %3951 = vset.pattern.permute.xlu0 2
        %3952 = vperm.xlu0 %3951, %v3477
        %v3953 = vpop.permute.xlu0 %3952
        %3955 = vset.pattern.permute.xlu0 2
        %3956 = vperm.xlu0 %3955, %v3478
        %v3957 = vpop.permute.xlu0 %3956
        %3959 = vset.pattern.permute.xlu0 2
        %3960 = vperm.xlu0 %3959, %v3479
        %v3961 = vpop.permute.xlu0 %3960
        %3963 = vset.pattern.permute.xlu0 2
        %3964 = vperm.xlu0 %3963, %v3480
        %v3965 = vpop.permute.xlu0 %3964
        %3967 = vset.pattern.permute.xlu0 2
        %3968 = vperm.xlu0 %3967, %v3481
        %v3969 = vpop.permute.xlu0 %3968
        %3971 = vset.pattern.permute.xlu0 2
        %3972 = vperm.xlu0 %3971, %v3482
        %v3973 = vpop.permute.xlu0 %3972
        %3975 = vset.pattern.permute.xlu0 2
        %3976 = vperm.xlu0 %3975, %v3483
        %v3977 = vpop.permute.xlu0 %3976
        %3979 = vset.pattern.permute.xlu0 2
        %3980 = vperm.xlu0 %3979, %v3484
        %v3981 = vpop.permute.xlu0 %3980
        %3983 = vset.pattern.permute.xlu0 2
        %3984 = vperm.xlu0 %3983, %v3485
        %v3985 = vpop.permute.xlu0 %3984
        %3987 = vset.pattern.permute.xlu0 2
        %3988 = vperm.xlu0 %3987, %v3486
        %v3989 = vpop.permute.xlu0 %3988
        %3991 = vset.pattern.permute.xlu0 2
        %3992 = vperm.xlu0 %3991, %v3487
        %v3993 = vpop.permute.xlu0 %3992
        %3995 = vset.pattern.permute.xlu0 2
        %3996 = vperm.xlu0 %3995, %v3488
        %v3997 = vpop.permute.xlu0 %3996
        %3999 = vset.pattern.permute.xlu0 2
        %4000 = vperm.xlu0 %3999, %v3489
        %v4001 = vpop.permute.xlu0 %4000
        %4003 = vset.pattern.permute.xlu0 2
        %4004 = vperm.xlu0 %4003, %v3490
        %v4005 = vpop.permute.xlu0 %4004
        %4007 = vset.pattern.permute.xlu0 2
        %4008 = vperm.xlu0 %4007, %v3491
        %v4009 = vpop.permute.xlu0 %4008
        %4011 = vset.pattern.permute.xlu0 2
        %4012 = vperm.xlu0 %4011, %v3492
        %v4013 = vpop.permute.xlu0 %4012
        %4015 = vset.pattern.permute.xlu0 2
        %4016 = vperm.xlu0 %4015, %v3493
        %v4017 = vpop.permute.xlu0 %4016
        %4019 = vset.pattern.permute.xlu0 2
        %4020 = vperm.xlu0 %4019, %v3494
        %v4021 = vpop.permute.xlu0 %4020
        %4023 = vset.pattern.permute.xlu0 2
        %4024 = vperm.xlu0 %4023, %v3495
        %v4025 = vpop.permute.xlu0 %4024
        %4027 = vset.pattern.permute.xlu0 2
        %4028 = vperm.xlu0 %4027, %v3496
        %v4029 = vpop.permute.xlu0 %4028
        %4031 = vset.pattern.permute.xlu0 2
        %4032 = vperm.xlu0 %4031, %v3497
        %v4033 = vpop.permute.xlu0 %4032
        %4035 = vset.pattern.permute.xlu0 2
        %4036 = vperm.xlu0 %4035, %v3498
        %v4037 = vpop.permute.xlu0 %4036
        %4039 = vset.pattern.permute.xlu0 2
        %4040 = vperm.xlu0 %4039, %v3499
        %v4041 = vpop.permute.xlu0 %4040
        %4043 = vset.pattern.permute.xlu0 2
        %4044 = vperm.xlu0 %4043, %v3500
        %v4045 = vpop.permute.xlu0 %4044
        %4047 = vset.pattern.permute.xlu0 2
        %4048 = vperm.xlu0 %4047, %v3501
        %v4049 = vpop.permute.xlu0 %4048
        %4051 = vset.pattern.permute.xlu0 2
        %4052 = vperm.xlu0 %4051, %v3502
        %v4053 = vpop.permute.xlu0 %4052
        %4055 = vset.pattern.permute.xlu0 2
        %4056 = vperm.xlu0 %4055, %v3503
        %v4057 = vpop.permute.xlu0 %4056
        %v4059 = vlaneseq
        %v4060 = vshrl.u32 %v4059, 7
        %v4061 = vsub.s32 0, %v4060
        %v4062 = vrot.slane %v3930, %v4061
        %v4063 = vmul.f32 %v3933, %v4062
        %v4064 = vmul.f32 %v3937, %v4062
        %v4065 = vmul.f32 %v3941, %v4062
        %v4066 = vmul.f32 %v3945, %v4062
        %v4067 = vmul.f32 %v3949, %v4062
        %v4068 = vmul.f32 %v3953, %v4062
        %v4069 = vmul.f32 %v3957, %v4062
        %v4070 = vmul.f32 %v3961, %v4062
        %v4071 = vmul.f32 %v3965, %v4062
        %v4072 = vmul.f32 %v3969, %v4062
        %v4073 = vmul.f32 %v3973, %v4062
        %v4074 = vmul.f32 %v3977, %v4062
        %v4075 = vmul.f32 %v3981, %v4062
        %v4076 = vmul.f32 %v3985, %v4062
        %v4077 = vmul.f32 %v3989, %v4062
        %v4078 = vmul.f32 %v3993, %v4062
        %v4079 = vmul.f32 %v3997, %v4062
        %v4080 = vmul.f32 %v4001, %v4062
        %v4081 = vmul.f32 %v4005, %v4062
        %v4082 = vmul.f32 %v4009, %v4062
        %v4083 = vmul.f32 %v4013, %v4062
        %v4084 = vmul.f32 %v4017, %v4062
        %v4085 = vmul.f32 %v4021, %v4062
        %v4086 = vmul.f32 %v4025, %v4062
        %v4087 = vmul.f32 %v4029, %v4062
        %v4088 = vmul.f32 %v4033, %v4062
        %v4089 = vmul.f32 %v4037, %v4062
        %v4090 = vmul.f32 %v4041, %v4062
        %v4091 = vmul.f32 %v4045, %v4062
        %v4092 = vmul.f32 %v4049, %v4062
        %v4093 = vmul.f32 %v4053, %v4062
        %v4094 = vmul.f32 %v4057, %v4062
        %v4095 = vadd.f32 %v3898, %v4063
        %v4096 = vadd.f32 %v3899, %v4064
        %v4097 = vadd.f32 %v3900, %v4065
        %v4098 = vadd.f32 %v3901, %v4066
        %v4099 = vadd.f32 %v3902, %v4067
        %v4100 = vadd.f32 %v3903, %v4068
        %v4101 = vadd.f32 %v3904, %v4069
        %v4102 = vadd.f32 %v3905, %v4070
        %v4103 = vadd.f32 %v3906, %v4071
        %v4104 = vadd.f32 %v3907, %v4072
        %v4105 = vadd.f32 %v3908, %v4073
        %v4106 = vadd.f32 %v3909, %v4074
        %v4107 = vadd.f32 %v3910, %v4075
        %v4108 = vadd.f32 %v3911, %v4076
        %v4109 = vadd.f32 %v3912, %v4077
        %v4110 = vadd.f32 %v3913, %v4078
        %v4111 = vadd.f32 %v3914, %v4079
        %v4112 = vadd.f32 %v3915, %v4080
        %v4113 = vadd.f32 %v3916, %v4081
        %v4114 = vadd.f32 %v3917, %v4082
        %v4115 = vadd.f32 %v3918, %v4083
        %v4116 = vadd.f32 %v3919, %v4084
        %v4117 = vadd.f32 %v3920, %v4085
        %v4118 = vadd.f32 %v3921, %v4086
        %v4119 = vadd.f32 %v3922, %v4087
        %v4120 = vadd.f32 %v3923, %v4088
        %v4121 = vadd.f32 %v3924, %v4089
        %v4122 = vadd.f32 %v3925, %v4090
        %v4123 = vadd.f32 %v3926, %v4091
        %v4124 = vadd.f32 %v3927, %v4092
        %v4125 = vadd.f32 %v3928, %v4093
        %v4126 = vadd.f32 %v3929, %v4094
        %v4127 = vld [vmem:[%s8 + $0x3] sm:$0x1]
        %4128 = vset.pattern.permute.xlu0 3
        %4129 = vperm.xlu0 %4128, %v3472
        %v4130 = vpop.permute.xlu0 %4129
        %4132 = vset.pattern.permute.xlu0 3
        %4133 = vperm.xlu0 %4132, %v3473
        %v4134 = vpop.permute.xlu0 %4133
        %4136 = vset.pattern.permute.xlu0 3
        %4137 = vperm.xlu0 %4136, %v3474
        %v4138 = vpop.permute.xlu0 %4137
        %4140 = vset.pattern.permute.xlu0 3
        %4141 = vperm.xlu0 %4140, %v3475
        %v4142 = vpop.permute.xlu0 %4141
        %4144 = vset.pattern.permute.xlu0 3
        %4145 = vperm.xlu0 %4144, %v3476
        %v4146 = vpop.permute.xlu0 %4145
        %4148 = vset.pattern.permute.xlu0 3
        %4149 = vperm.xlu0 %4148, %v3477
        %v4150 = vpop.permute.xlu0 %4149
        %4152 = vset.pattern.permute.xlu0 3
        %4153 = vperm.xlu0 %4152, %v3478
        %v4154 = vpop.permute.xlu0 %4153
        %4156 = vset.pattern.permute.xlu0 3
        %4157 = vperm.xlu0 %4156, %v3479
        %v4158 = vpop.permute.xlu0 %4157
        %4160 = vset.pattern.permute.xlu0 3
        %4161 = vperm.xlu0 %4160, %v3480
        %v4162 = vpop.permute.xlu0 %4161
        %4164 = vset.pattern.permute.xlu0 3
        %4165 = vperm.xlu0 %4164, %v3481
        %v4166 = vpop.permute.xlu0 %4165
        %4168 = vset.pattern.permute.xlu0 3
        %4169 = vperm.xlu0 %4168, %v3482
        %v4170 = vpop.permute.xlu0 %4169
        %4172 = vset.pattern.permute.xlu0 3
        %4173 = vperm.xlu0 %4172, %v3483
        %v4174 = vpop.permute.xlu0 %4173
        %4176 = vset.pattern.permute.xlu0 3
        %4177 = vperm.xlu0 %4176, %v3484
        %v4178 = vpop.permute.xlu0 %4177
        %4180 = vset.pattern.permute.xlu0 3
        %4181 = vperm.xlu0 %4180, %v3485
        %v4182 = vpop.permute.xlu0 %4181
        %4184 = vset.pattern.permute.xlu0 3
        %4185 = vperm.xlu0 %4184, %v3486
        %v4186 = vpop.permute.xlu0 %4185
        %4188 = vset.pattern.permute.xlu0 3
        %4189 = vperm.xlu0 %4188, %v3487
        %v4190 = vpop.permute.xlu0 %4189
        %4192 = vset.pattern.permute.xlu0 3
        %4193 = vperm.xlu0 %4192, %v3488
        %v4194 = vpop.permute.xlu0 %4193
        %4196 = vset.pattern.permute.xlu0 3
        %4197 = vperm.xlu0 %4196, %v3489
        %v4198 = vpop.permute.xlu0 %4197
        %4200 = vset.pattern.permute.xlu0 3
        %4201 = vperm.xlu0 %4200, %v3490
        %v4202 = vpop.permute.xlu0 %4201
        %4204 = vset.pattern.permute.xlu0 3
        %4205 = vperm.xlu0 %4204, %v3491
        %v4206 = vpop.permute.xlu0 %4205
        %4208 = vset.pattern.permute.xlu0 3
        %4209 = vperm.xlu0 %4208, %v3492
        %v4210 = vpop.permute.xlu0 %4209
        %4212 = vset.pattern.permute.xlu0 3
        %4213 = vperm.xlu0 %4212, %v3493
        %v4214 = vpop.permute.xlu0 %4213
        %4216 = vset.pattern.permute.xlu0 3
        %4217 = vperm.xlu0 %4216, %v3494
        %v4218 = vpop.permute.xlu0 %4217
        %4220 = vset.pattern.permute.xlu0 3
        %4221 = vperm.xlu0 %4220, %v3495
        %v4222 = vpop.permute.xlu0 %4221
        %4224 = vset.pattern.permute.xlu0 3
        %4225 = vperm.xlu0 %4224, %v3496
        %v4226 = vpop.permute.xlu0 %4225
        %4228 = vset.pattern.permute.xlu0 3
        %4229 = vperm.xlu0 %4228, %v3497
        %v4230 = vpop.permute.xlu0 %4229
        %4232 = vset.pattern.permute.xlu0 3
        %4233 = vperm.xlu0 %4232, %v3498
        %v4234 = vpop.permute.xlu0 %4233
        %4236 = vset.pattern.permute.xlu0 3
        %4237 = vperm.xlu0 %4236, %v3499
        %v4238 = vpop.permute.xlu0 %4237
        %4240 = vset.pattern.permute.xlu0 3
        %4241 = vperm.xlu0 %4240, %v3500
        %v4242 = vpop.permute.xlu0 %4241
        %4244 = vset.pattern.permute.xlu0 3
        %4245 = vperm.xlu0 %4244, %v3501
        %v4246 = vpop.permute.xlu0 %4245
        %4248 = vset.pattern.permute.xlu0 3
        %4249 = vperm.xlu0 %4248, %v3502
        %v4250 = vpop.permute.xlu0 %4249
        %4252 = vset.pattern.permute.xlu0 3
        %4253 = vperm.xlu0 %4252, %v3503
        %v4254 = vpop.permute.xlu0 %4253
        %v4256 = vlaneseq
        %v4257 = vshrl.u32 %v4256, 7
        %v4258 = vsub.s32 0, %v4257
        %v4259 = vrot.slane %v4127, %v4258
        %v4260 = vmul.f32 %v4130, %v4259
        %v4261 = vmul.f32 %v4134, %v4259
        %v4262 = vmul.f32 %v4138, %v4259
        %v4263 = vmul.f32 %v4142, %v4259
        %v4264 = vmul.f32 %v4146, %v4259
        %v4265 = vmul.f32 %v4150, %v4259
        %v4266 = vmul.f32 %v4154, %v4259
        %v4267 = vmul.f32 %v4158, %v4259
        %v4268 = vmul.f32 %v4162, %v4259
        %v4269 = vmul.f32 %v4166, %v4259
        %v4270 = vmul.f32 %v4170, %v4259
        %v4271 = vmul.f32 %v4174, %v4259
        %v4272 = vmul.f32 %v4178, %v4259
        %v4273 = vmul.f32 %v4182, %v4259
        %v4274 = vmul.f32 %v4186, %v4259
        %v4275 = vmul.f32 %v4190, %v4259
        %v4276 = vmul.f32 %v4194, %v4259
        %v4277 = vmul.f32 %v4198, %v4259
        %v4278 = vmul.f32 %v4202, %v4259
        %v4279 = vmul.f32 %v4206, %v4259
        %v4280 = vmul.f32 %v4210, %v4259
        %v4281 = vmul.f32 %v4214, %v4259
        %v4282 = vmul.f32 %v4218, %v4259
        %v4283 = vmul.f32 %v4222, %v4259
        %v4284 = vmul.f32 %v4226, %v4259
        %v4285 = vmul.f32 %v4230, %v4259
        %v4286 = vmul.f32 %v4234, %v4259
        %v4287 = vmul.f32 %v4238, %v4259
        %v4288 = vmul.f32 %v4242, %v4259
        %v4289 = vmul.f32 %v4246, %v4259
        %v4290 = vmul.f32 %v4250, %v4259
        %v4291 = vmul.f32 %v4254, %v4259
        %v4292 = vadd.f32 %v4095, %v4260
        %v4293 = vadd.f32 %v4096, %v4261
        %v4294 = vadd.f32 %v4097, %v4262
        %v4295 = vadd.f32 %v4098, %v4263
        %v4296 = vadd.f32 %v4099, %v4264
        %v4297 = vadd.f32 %v4100, %v4265
        %v4298 = vadd.f32 %v4101, %v4266
        %v4299 = vadd.f32 %v4102, %v4267
        %v4300 = vadd.f32 %v4103, %v4268
        %v4301 = vadd.f32 %v4104, %v4269
        %v4302 = vadd.f32 %v4105, %v4270
        %v4303 = vadd.f32 %v4106, %v4271
        %v4304 = vadd.f32 %v4107, %v4272
        %v4305 = vadd.f32 %v4108, %v4273
        %v4306 = vadd.f32 %v4109, %v4274
        %v4307 = vadd.f32 %v4110, %v4275
        %v4308 = vadd.f32 %v4111, %v4276
        %v4309 = vadd.f32 %v4112, %v4277
        %v4310 = vadd.f32 %v4113, %v4278
        %v4311 = vadd.f32 %v4114, %v4279
        %v4312 = vadd.f32 %v4115, %v4280
        %v4313 = vadd.f32 %v4116, %v4281
        %v4314 = vadd.f32 %v4117, %v4282
        %v4315 = vadd.f32 %v4118, %v4283
        %v4316 = vadd.f32 %v4119, %v4284
        %v4317 = vadd.f32 %v4120, %v4285
        %v4318 = vadd.f32 %v4121, %v4286
        %v4319 = vadd.f32 %v4122, %v4287
        %v4320 = vadd.f32 %v4123, %v4288
        %v4321 = vadd.f32 %v4124, %v4289
        %v4322 = vadd.f32 %v4125, %v4290
        %v4323 = vadd.f32 %v4126, %v4291
        %vm4324 = vcmask 64512
        %4325 = vst.msk [vmem:[%s359] sm:$0xff] %vm4324, %v4292
        %4326 = vst.msk [vmem:[%s359 + $0x8] sm:$0xff] %vm4324, %v4293
        %4327 = vst.msk [vmem:[%s359 + $0x10] sm:$0xff] %vm4324, %v4294
        %4328 = vst.msk [vmem:[%s359 + $0x18] sm:$0xff] %vm4324, %v4295
        %4329 = vst.msk [vmem:[%s359 + $0x20] sm:$0xff] %vm4324, %v4296
        %4330 = vst.msk [vmem:[%s359 + $0x28] sm:$0xff] %vm4324, %v4297
        %4331 = vst.msk [vmem:[%s359 + $0x30] sm:$0xff] %vm4324, %v4298
        %4332 = vst.msk [vmem:[%s359 + $0x38] sm:$0xff] %vm4324, %v4299
        %4333 = vst.msk [vmem:[%s359 + $0x40] sm:$0xff] %vm4324, %v4300
        %4334 = vst.msk [vmem:[%s359 + $0x48] sm:$0xff] %vm4324, %v4301
        %4335 = vst.msk [vmem:[%s359 + $0x50] sm:$0xff] %vm4324, %v4302
        %4336 = vst.msk [vmem:[%s359 + $0x58] sm:$0xff] %vm4324, %v4303
        %4337 = vst.msk [vmem:[%s359 + $0x60] sm:$0xff] %vm4324, %v4304
        %4338 = vst.msk [vmem:[%s359 + $0x68] sm:$0xff] %vm4324, %v4305
        %4339 = vst.msk [vmem:[%s359 + $0x70] sm:$0xff] %vm4324, %v4306
        %4340 = vst.msk [vmem:[%s359 + $0x78] sm:$0xff] %vm4324, %v4307
        %4341 = vst.msk [vmem:[%s359 + $0x80] sm:$0xff] %vm4324, %v4308
        %4342 = vst.msk [vmem:[%s359 + $0x88] sm:$0xff] %vm4324, %v4309
        %4343 = vst.msk [vmem:[%s359 + $0x90] sm:$0xff] %vm4324, %v4310
        %4344 = vst.msk [vmem:[%s359 + $0x98] sm:$0xff] %vm4324, %v4311
        %4345 = vst.msk [vmem:[%s359 + $0xa0] sm:$0xff] %vm4324, %v4312
        %4346 = vst.msk [vmem:[%s359 + $0xa8] sm:$0xff] %vm4324, %v4313
        %4347 = vst.msk [vmem:[%s359 + $0xb0] sm:$0xff] %vm4324, %v4314
        %4348 = vst.msk [vmem:[%s359 + $0xb8] sm:$0xff] %vm4324, %v4315
        %4349 = vst.msk [vmem:[%s359 + $0xc0] sm:$0xff] %vm4324, %v4316
        %4350 = vst.msk [vmem:[%s359 + $0xc8] sm:$0xff] %vm4324, %v4317
        %4351 = vst.msk [vmem:[%s359 + $0xd0] sm:$0xff] %vm4324, %v4318
        %4352 = vst.msk [vmem:[%s359 + $0xd8] sm:$0xff] %vm4324, %v4319
        %4353 = vst.msk [vmem:[%s359 + $0xe0] sm:$0xff] %vm4324, %v4320
        %4354 = vst.msk [vmem:[%s359 + $0xe8] sm:$0xff] %vm4324, %v4321
        %4355 = vst.msk [vmem:[%s359 + $0xf0] sm:$0xff] %vm4324, %v4322
        %4356 = vst.msk [vmem:[%s359 + $0xf8] sm:$0xff] %vm4324, %v4323
        %p4357 = scmp.lt.s32.totalorder %s22, 1
        %s4358 = scalar_select %p4357, %s22, 1
        %s4359 = smul.addr %s4358, 32
        %s4360 = smul.addr %s4359, 8
        %s4361 = scalar_lea.vmem %s9, %s4360
        // Predicated region
        $region65: #{forward.1} parent=55 // pred_check
          %p4362 = pneg %p234
        $region66: #{forward.1} parent=55 // pred_check_branch
          %4364 = sbr.rel (%p4362) target = $region68
        $region67: #{forward.1} parent=55 // pred_region
          _
        $region68: #{forward.1} parent=55 // pred_fallthru
          _
      $region56: #{forward.1} parent=5 // pred_fallthru
        _
      %p4365 = scmp.le.s32.totalorder 2, %s17
      // Predicated region
      $region69: #{forward.1} parent=5 // pred_check
        %p4366 = pneg %p4365
      $region70: #{forward.1} parent=5 // pred_check_branch
        %4368 = sbr.rel (%p4366) target = $region72
      $region71: #{forward.1} parent=5 // pred_region
        %s4369 = ssub.s32 %s17, 2
        // Predicated region
        $region73: #{forward.1} parent=71 // pred_check
          %p4370 = pneg %p240
        $region74: #{forward.1} parent=71 // pred_check_branch
          %4372 = sbr.rel (%p4370) target = $region76
        $region75: #{forward.1} parent=71 // pred_region
          %p4373 = scmp.lt.s32.totalorder %s23, 1
          %s4374 = scalar_select %p4373, %s23, 1
          %s4375 = smul.addr %s4374, 32
          %s4376 = smul.addr %s4375, 8
          %s4377 = scalar_lea.vmem %s9, %s4376
        $region76: #{forward.1} parent=71 // pred_fallthru
          _
      $region72: #{forward.1} parent=5 // pred_fallthru
        _
    $region6: #{forward.1} parent=1 // loop_footer
      %s21 = sadd.s32 1, %s17
    $region7: #{forward.1} parent=1 // loop_footer_branch
      %16 = sbr.rel target = $region3
    $region8: #{forward.1} parent=1 // loop_exit
      _
    %4378 = vsyncpa [#allocation5], 1
    %s4379 = scalar_lea.sflag [#allocation5], 1
    %4380 = vsyncpa %s4379, 1
    %4381 = vsyncpa [#allocation7], 1

</llo_original>
